<compile_context>
chip_gen: v6e
topology: v6e:2x2x1
jax: 0.10.0
libtpu: 0.0.40
codegen_flags: <defaults>
</compile_context>

<pallas_src>
import functools

import jax
import jax.numpy as jnp
import numpy as np
from jax import lax
from jax.experimental import pallas as pl
from jax.experimental.pallas import tpu as pltpu

VOCAB = 256
LANES = 128


def _round_up(x, m):
    return (x + m - 1) // m * m


def _pick_tile_batch(batch, seq_len):
    """Largest divisor of batch with blt <= ~2048 rows and n_tiles >= 2;
    prefer multiples of 8 (sublane-aligned stores / GAP reshape)."""
    divs = [d for d in range(1, batch + 1) if batch % d == 0]
    cands = [d for d in divs
             if d * seq_len <= 2048 and (batch // d >= 2 or batch == 1)]
    if not cands:
        cands = [1]
    pref = [d for d in cands if d % 8 == 0]
    return max(pref or cands)


def _resnet1d_kernel(ids_ref, emb_tbl_ref, stem_w_ref, stem_b_ref,
                     blk_w1_ref, blk_b1_ref, blk_w2_ref, blk_b2_ref,
                     head_w_ref, head_b_ref,
                     out_ref, emb_out_ref,
                     *, tile_batch, seq_len, num_blocks, compute_dtype):
    blt = tile_batch * seq_len                      # rows in this batch tile
    vocab = emb_tbl_ref.shape[0]
    cdt = compute_dtype                             # MXU operand dtype

    # ---- embedding lookup as one-hot matmul (MXU); V=256 spans 2 lane groups.
    # (out-of-range ids map to a zero row instead of erroring like nn.Embedding)
    ids = ids_ref[0]                                                 # (blt, 1) int32
    onehot = (ids == lax.broadcasted_iota(jnp.int32, (blt, vocab), 1)
              ).astype(cdt)                                          # 0/1 exact in bf16
    x = jnp.dot(onehot, emb_tbl_ref[...],
                preferred_element_type=jnp.float32)                  # (blt, Ep) f32

    # ---- per-sample boundary masks for k=3 "same" conv (built once per tile).
    # Correct only because each sample's L rows are contiguous inside a tile
    # (row-major reshape in the wrapper) and the circular-wrap rows are exactly
    # the masked rows.
    row = lax.broadcasted_iota(jnp.int32, (blt, 1), 0)
    prev_ok = (row % seq_len != 0).astype(jnp.float32)               # zero at l == 0
    next_ok = (row % seq_len != seq_len - 1).astype(jnp.float32)     # zero at l == L-1

    def conv3(h, w0, w1, w2, b):
        # +/-1 sequence shift via XLU sublane roll + boundary mask, then three
        # accumulating MXU dots (no 3x activation concat copy; f32 accumulate).
        h_prev = pltpu.roll(h, shift=1, axis=0) * prev_ok            # f32 VPU
        h_next = pltpu.roll(h, shift=blt - 1, axis=0) * next_ok
        acc = jnp.dot(h.astype(cdt), w1, preferred_element_type=jnp.float32)
        acc = acc + jnp.dot(h_prev.astype(cdt), w0,
                            preferred_element_type=jnp.float32)
        acc = acc + jnp.dot(h_next.astype(cdt), w2,
                            preferred_element_type=jnp.float32)
        return acc + b

    # ---- stem conv + relu ---------------------------------------------------
    x = jnp.maximum(
        conv3(x, stem_w_ref[0], stem_w_ref[1], stem_w_ref[2], stem_b_ref[...]),
        0.0)                                                         # (blt, Hp)

    # ---- residual blocks ----------------------------------------------------
    def block(i, x):
        h = jnp.maximum(
            conv3(x, blk_w1_ref[i, 0], blk_w1_ref[i, 1], blk_w1_ref[i, 2],
                  blk_b1_ref[i]), 0.0)
        h = conv3(h, blk_w2_ref[i, 0], blk_w2_ref[i, 1], blk_w2_ref[i, 2],
                  blk_b2_ref[i])
        return jnp.maximum(x + h, 0.0)

    if num_blocks <= 4:
        for i in range(num_blocks):                  # static unroll: LLO visibility
            x = block(i, x)
    else:
        x = lax.fori_loop(0, num_blocks, block, x)   # bounded live ranges

    # ---- global average pool over L: reshape + sublane reduce (no MXU) ------
    hp = x.shape[-1]
    emb = jnp.sum(x.reshape(tile_batch, seq_len, hp), axis=1) * (1.0 / seq_len)

    # ---- linear head --------------------------------------------------------
    out = jnp.dot(emb.astype(cdt), head_w_ref[...],
                  preferred_element_type=jnp.float32) + head_b_ref[...]

    out_ref[0] = out                                                 # (TB, Dp)
    emb_out_ref[0] = emb                                             # (TB, Hp)


def embedding_to_resnet1d(ids, params, *, batch, seq_len, num_blocks,
                          hidden, out_dim, tile_batch=None, use_bf16=False,
                          single_buffer_weights=True):
    """ids: (B, L) int32 token ids in [0, 256). Returns (x, embedding)."""
    emb_dim = params["emb_tbl"].shape[1]
    ep = _round_up(emb_dim, LANES)          # lane-pad channels to 128
    hp = _round_up(hidden, LANES)
    dp = _round_up(out_dim, LANES)

    if tile_batch is None:
        tile_batch = _pick_tile_batch(batch, seq_len)
    assert batch % tile_batch == 0, "batch must divide by tile_batch"
    n_tiles = batch // tile_batch
    blt = tile_batch * seq_len              # whole samples per tile -> conv needs no halo

    wdt = jnp.bfloat16 if use_bf16 else jnp.float32   # MXU operand / weight dtype
    cdt = wdt

    def pad2(w, r, c, dtype=jnp.float32):
        return jnp.zeros((r, c), dtype).at[:w.shape[0], :w.shape[1]].set(
            w.astype(dtype))

    def pad_conv(w, cin_p, cout_p):
        # (3, Cin, Cout) -> (3, cin_p, cout_p); tap k multiplies x[l + k - 1].
        return jnp.stack([pad2(w[k], cin_p, cout_p, wdt) for k in range(3)])

    emb_tbl = pad2(params["emb_tbl"], VOCAB, ep, wdt)
    stem_w = pad_conv(params["stem_w"], ep, hp)
    stem_b = pad2(params["stem_b"], 1, hp)                     # biases stay f32
    blk_w1 = jnp.stack([pad_conv(params["blk_w1"][i], hp, hp)
                        for i in range(num_blocks)])
    blk_b1 = jnp.stack([pad2(params["blk_b1"][i], 1, hp)
                        for i in range(num_blocks)])
    blk_w2 = jnp.stack([pad_conv(params["blk_w2"][i], hp, hp)
                        for i in range(num_blocks)])
    blk_b2 = jnp.stack([pad2(params["blk_b2"][i], 1, hp)
                        for i in range(num_blocks)])
    head_w = pad2(params["head_w"], hp, dp, wdt)
    head_b = pad2(params["head_b"], 1, dp)

    # Samples stay contiguous inside a tile (row-major reshape), so the k=3
    # "same" boundary condition is preserved under batch tiling.
    ids3 = ids.astype(jnp.int32).reshape(n_tiles, blt, 1)

    kernel = functools.partial(_resnet1d_kernel, tile_batch=tile_batch,
                               seq_len=seq_len, num_blocks=num_blocks,
                               compute_dtype=cdt)

    # ---- explicit scoped-VMEM budget (weights + activations + I/O, headroom) -
    wbytes = 2 if use_bf16 else 4
    n_wbufs = 1 if single_buffer_weights else 2
    weight_bytes = (VOCAB * ep + 3 * ep * hp
                    + num_blocks * 2 * 3 * hp * hp + hp * dp) * wbytes
    bias_bytes = (hp * (1 + 2 * num_blocks) + dp) * 4
    act_bytes = blt * (VOCAB + ep + 6 * hp) * 4          # onehot + conv working set
    io_bytes = 2 * (blt * LANES * 4 + tile_batch * (hp + dp) * 4)
    need = n_wbufs * weight_bytes + 2 * bias_bytes + act_bytes + io_bytes
    vmem_limit = int(min(max(2 * need + (8 << 20), 32 << 20), 120 << 20))

    out_shapes = (jax.ShapeDtypeStruct((n_tiles, tile_batch, dp), jnp.float32),
                  jax.ShapeDtypeStruct((n_tiles, tile_batch, hp), jnp.float32))

    def _call(single_buffer):
        def const_spec(shape):
            nd = len(shape)
            idx = lambda i, _nd=nd: (0,) * _nd
            if single_buffer:
                # weights never change across the grid -> don't double-buffer them
                return pl.BlockSpec(shape, idx, pipeline_mode=pl.Buffered(1))
            return pl.BlockSpec(shape, idx)

        return pl.pallas_call(
            kernel,
            out_shape=out_shapes,
            grid=(n_tiles,),
            in_specs=[
                pl.BlockSpec((1, blt, 1), lambda i: (i, 0, 0)),      # ids (per tile)
                const_spec((VOCAB, ep)),                             # embedding table
                const_spec((3, ep, hp)),                             # stem W (per tap)
                const_spec((1, hp)),                                 # stem b
                const_spec((num_blocks, 3, hp, hp)),                 # block conv1 W
                const_spec((num_blocks, 1, hp)),                     # block conv1 b
                const_spec((num_blocks, 3, hp, hp)),                 # block conv2 W
                const_spec((num_blocks, 1, hp)),                     # block conv2 b
                const_spec((hp, dp)),                                # head W
                const_spec((1, dp)),                                 # head b
            ],
            out_specs=(pl.BlockSpec((1, tile_batch, dp), lambda i: (i, 0, 0)),
                       pl.BlockSpec((1, tile_batch, hp), lambda i: (i, 0, 0))),
            compiler_params=pltpu.CompilerParams(
                dimension_semantics=("parallel",),
                vmem_limit_bytes=vmem_limit),
        )(ids3, emb_tbl, stem_w, stem_b, blk_w1, blk_b1, blk_w2, blk_b2,
          head_w, head_b)

    if single_buffer_weights:
        try:
            out3, emb3 = _call(True)
        except Exception:
            # pipeline_mode=pl.Buffered(1) not accepted by this jax build;
            # fall back to default (double-buffered) weight specs.
            out3, emb3 = _call(False)
    else:
        out3, emb3 = _call(False)

    out = out3.reshape(batch, dp)[:, :out_dim]
    emb = emb3.reshape(batch, hp)[:, :hidden]
    return out, emb


# ------------------------- pure-JAX reference --------------------------------
def _ref_conv3(x, w, b):           # x: (B, L, C) channels-last
    xp = jnp.pad(x, ((0, 0), (1, 1), (0, 0)))
    return (jnp.einsum("blc,cd->bld", xp[:, :-2], w[0])
            + jnp.einsum("blc,cd->bld", xp[:, 1:-1], w[1])
            + jnp.einsum("blc,cd->bld", xp[:, 2:], w[2]) + b)


def _reference(ids, params, num_blocks):
    x = jnp.take(params["emb_tbl"], ids, axis=0)                     # (B, L, E)
    x = jnp.maximum(_ref_conv3(x, params["stem_w"], params["stem_b"]), 0.0)
    for i in range(num_blocks):
        h = jnp.maximum(_ref_conv3(x, params["blk_w1"][i], params["blk_b1"][i]), 0.0)
        h = _ref_conv3(h, params["blk_w2"][i], params["blk_b2"][i])
        x = jnp.maximum(x + h, 0.0)
    emb = jnp.mean(x, axis=1)                                        # (B, H)
    out = emb @ params["head_w"] + params["head_b"]                  # (B, D)
    return out, emb


if __name__ == "__main__":
    B, L = 4, 16          # batch, sequence length
    E, H, D = 8, 16, 10   # embedding_dim, hidden channels, head output dim
    NB = 2                # number of residual blocks

    key = jax.random.PRNGKey(0)
    ks = jax.random.split(key, 10)

    params = {
        "emb_tbl": jax.random.normal(ks[0], (VOCAB, E), jnp.float32) * 0.1,
        "stem_w":  jax.random.normal(ks[1], (3, E, H), jnp.float32) * 0.1,
        "stem_b":  jax.random.normal(ks[2], (1, H), jnp.float32) * 0.1,
        "blk_w1":  jax.random.normal(ks[3], (NB, 3, H, H), jnp.float32) * 0.1,
        "blk_b1":  jax.random.normal(ks[4], (NB, 1, H), jnp.float32) * 0.1,
        "blk_w2":  jax.random.normal(ks[5], (NB, 3, H, H), jnp.float32) * 0.1,
        "blk_b2":  jax.random.normal(ks[6], (NB, 1, H), jnp.float32) * 0.1,
        "head_w":  jax.random.normal(ks[7], (H, D), jnp.float32) * 0.1,
        "head_b":  jax.random.normal(ks[8], (1, D), jnp.float32) * 0.1,
    }
    ids = jax.random.randint(ks[9], (B, L), 0, VOCAB, dtype=jnp.int32)

    ref_out, ref_emb = _reference(ids, params, NB)

    # f32 MXU path (tight check)
    out, emb = embedding_to_resnet1d(ids, params, batch=B, seq_len=L,
                                     num_blocks=NB, hidden=H, out_dim=D)
    out, emb = jax.block_until_ready((out, emb))
    np.testing.assert_allclose(np.asarray(out), np.asarray(ref_out),
                               rtol=1e-4, atol=1e-4)
    np.testing.assert_allclose(np.asarray(emb), np.asarray(ref_emb),
                               rtol=1e-4, atol=1e-4)

    # bf16 MXU path (f32 accumulation; looser check vs the f32 reference)
    out_bf, emb_bf = embedding_to_resnet1d(ids, params, batch=B, seq_len=L,
                                           num_blocks=NB, hidden=H, out_dim=D,
                                           use_bf16=True)
    out_bf, emb_bf = jax.block_until_ready((out_bf, emb_bf))
    np.testing.assert_allclose(np.asarray(out_bf), np.asarray(ref_out),
                               rtol=5e-2, atol=5e-2)
    np.testing.assert_allclose(np.asarray(emb_bf), np.asarray(ref_emb),
                               rtol=5e-2, atol=5e-2)

    print("KERNEL_OK")
</pallas_src>

<mosaic_0001>
module attributes {stable_mosaic.version = 11 : i64} {
  func.func @_resnet1d_kernel(%arg0: i32, %arg1: memref<1x32x1xi32, #tpu.memory_space<vmem>>, %arg2: memref<256x128xf32, #tpu.memory_space<vmem>>, %arg3: memref<3x128x128xf32, #tpu.memory_space<vmem>>, %arg4: memref<1x128xf32, #tpu.memory_space<vmem>>, %arg5: memref<2x3x128x128xf32, #tpu.memory_space<vmem>>, %arg6: memref<2x1x128xf32, #tpu.memory_space<vmem>>, %arg7: memref<2x3x128x128xf32, #tpu.memory_space<vmem>>, %arg8: memref<2x1x128xf32, #tpu.memory_space<vmem>>, %arg9: memref<128x128xf32, #tpu.memory_space<vmem>>, %arg10: memref<1x128xf32, #tpu.memory_space<vmem>>, %arg11: memref<1x2x128xf32, #tpu.memory_space<vmem>>, %arg12: memref<1x2x128xf32, #tpu.memory_space<vmem>>) attributes {dimension_semantics = [#tpu.dimension_semantics<parallel>], iteration_bounds = array<i64: 2>, scalar_prefetch = 0 : i64, scratch_operands = 0 : i64, tpu.core_type = #tpu.core_type<tc>, window_params = [{transform_indices = @transform_0, window_bounds = array<i64: 1, 32, 1>}, {pipeline_mode = #tpu.pipeline_mode<synchronous>, transform_indices = @transform_1, window_bounds = array<i64: 256, 128>}, {pipeline_mode = #tpu.pipeline_mode<synchronous>, transform_indices = @transform_2, window_bounds = array<i64: 3, 128, 128>}, {pipeline_mode = #tpu.pipeline_mode<synchronous>, transform_indices = @transform_3, window_bounds = array<i64: 1, 128>}, {pipeline_mode = #tpu.pipeline_mode<synchronous>, transform_indices = @transform_4, window_bounds = array<i64: 2, 3, 128, 128>}, {pipeline_mode = #tpu.pipeline_mode<synchronous>, transform_indices = @transform_5, window_bounds = array<i64: 2, 1, 128>}, {pipeline_mode = #tpu.pipeline_mode<synchronous>, transform_indices = @transform_6, window_bounds = array<i64: 2, 3, 128, 128>}, {pipeline_mode = #tpu.pipeline_mode<synchronous>, transform_indices = @transform_7, window_bounds = array<i64: 2, 1, 128>}, {pipeline_mode = #tpu.pipeline_mode<synchronous>, transform_indices = @transform_8, window_bounds = array<i64: 128, 128>}, {pipeline_mode = #tpu.pipeline_mode<synchronous>, transform_indices = @transform_9, window_bounds = array<i64: 1, 128>}, {transform_indices = @transform_10, window_bounds = array<i64: 1, 2, 128>}, {transform_indices = @transform_11, window_bounds = array<i64: 1, 2, 128>}]} {
    %c0 = arith.constant 0 : index
    %c0_0 = arith.constant 0 : index
    %c0_1 = arith.constant 0 : index
    %0 = vector.load %arg1[%c0, %c0_0, %c0_1] : memref<1x32x1xi32, #tpu.memory_space<vmem>>, vector<1x32x1xi32>
    %1 = vector.shape_cast %0 : vector<1x32x1xi32> to vector<32x1xi32>
    %2 = tpu.iota {dimensions = array<i32: 1>} : vector<32x256xi32>
    %3 = vector.broadcast %1 : vector<32x1xi32> to vector<32x256xi32>
    %4 = arith.cmpi eq, %3, %2 : vector<32x256xi32>
    %5 = arith.extui %4 : vector<32x256xi1> to vector<32x256xi32>
    %6 = arith.sitofp %5 : vector<32x256xi32> to vector<32x256xf32>
    %c0_2 = arith.constant 0 : index
    %c0_3 = arith.constant 0 : index
    %7 = vector.load %arg2[%c0_2, %c0_3] : memref<256x128xf32, #tpu.memory_space<vmem>>, vector<256x128xf32>
    %cst = arith.constant dense<0.000000e+00> : vector<32x128xf32>
    %8 = tpu.matmul %6, %7, %cst {dimension_numbers = #tpu.dot_dimension_numbers<[1], [0], [0], [1], [0, 0, 1, 1], [], []>} : vector<32x256xf32>, vector<256x128xf32>, vector<32x128xf32> -> vector<32x128xf32>
    %9 = tpu.iota {dimensions = array<i32: 0>} : vector<32x1xi32>
    %c16_i32 = arith.constant 16 : i32
    %c0_i32 = arith.constant 0 : i32
    %10 = arith.cmpi eq, %c16_i32, %c0_i32 : i32
    %c1_i32 = arith.constant 1 : i32
    %11 = arith.select %10, %c1_i32, %c16_i32 : i32
    %12 = vector.broadcast %11 : i32 to vector<32x1xi32>
    %13 = arith.remsi %9, %12 : vector<32x1xi32>
    %c0_i32_4 = arith.constant 0 : i32
    %14 = vector.broadcast %c0_i32_4 : i32 to vector<32x1xi32>
    %15 = arith.cmpi ne, %13, %14 : vector<32x1xi32>
    %c0_i32_5 = arith.constant 0 : i32
    %16 = vector.broadcast %c0_i32_5 : i32 to vector<32x1xi32>
    %17 = arith.cmpi slt, %13, %16 : vector<32x1xi32>
    %c0_i32_6 = arith.constant 0 : i32
    %18 = arith.cmpi slt, %11, %c0_i32_6 : i32
    %19 = vector.broadcast %18 : i1 to vector<32x1xi1>
    %20 = vector.broadcast %19 : vector<32x1xi1> to vector<32x1xi1>
    %21 = arith.xori %17, %20 : vector<32x1xi1>
    %22 = arith.andi %21, %15 : vector<32x1xi1>
    %23 = vector.broadcast %11 : i32 to vector<32x1xi32>
    %24 = arith.addi %13, %23 : vector<32x1xi32>
    %25 = arith.select %22, %24, %13 : vector<32x1xi1>, vector<32x1xi32>
    %c0_i32_7 = arith.constant 0 : i32
    %26 = vector.broadcast %c0_i32_7 : i32 to vector<32x1xi32>
    %27 = arith.cmpi ne, %25, %26 : vector<32x1xi32>
    %28 = arith.extui %27 : vector<32x1xi1> to vector<32x1xi32>
    %29 = arith.sitofp %28 : vector<32x1xi32> to vector<32x1xf32>
    %c16_i32_8 = arith.constant 16 : i32
    %c0_i32_9 = arith.constant 0 : i32
    %30 = arith.cmpi eq, %c16_i32_8, %c0_i32_9 : i32
    %c1_i32_10 = arith.constant 1 : i32
    %31 = arith.select %30, %c1_i32_10, %c16_i32_8 : i32
    %32 = vector.broadcast %31 : i32 to vector<32x1xi32>
    %33 = arith.remsi %9, %32 : vector<32x1xi32>
    %c0_i32_11 = arith.constant 0 : i32
    %34 = vector.broadcast %c0_i32_11 : i32 to vector<32x1xi32>
    %35 = arith.cmpi ne, %33, %34 : vector<32x1xi32>
    %c0_i32_12 = arith.constant 0 : i32
    %36 = vector.broadcast %c0_i32_12 : i32 to vector<32x1xi32>
    %37 = arith.cmpi slt, %33, %36 : vector<32x1xi32>
    %c0_i32_13 = arith.constant 0 : i32
    %38 = arith.cmpi slt, %31, %c0_i32_13 : i32
    %39 = vector.broadcast %38 : i1 to vector<32x1xi1>
    %40 = vector.broadcast %39 : vector<32x1xi1> to vector<32x1xi1>
    %41 = arith.xori %37, %40 : vector<32x1xi1>
    %42 = arith.andi %41, %35 : vector<32x1xi1>
    %43 = vector.broadcast %31 : i32 to vector<32x1xi32>
    %44 = arith.addi %33, %43 : vector<32x1xi32>
    %45 = arith.select %42, %44, %33 : vector<32x1xi1>, vector<32x1xi32>
    %c15_i32 = arith.constant 15 : i32
    %46 = vector.broadcast %c15_i32 : i32 to vector<32x1xi32>
    %47 = arith.cmpi ne, %45, %46 : vector<32x1xi32>
    %48 = arith.extui %47 : vector<32x1xi1> to vector<32x1xi32>
    %49 = arith.sitofp %48 : vector<32x1xi32> to vector<32x1xf32>
    %c0_14 = arith.constant 0 : index
    %c0_15 = arith.constant 0 : index
    %c0_16 = arith.constant 0 : index
    %50 = vector.load %arg3[%c0_14, %c0_15, %c0_16] : memref<3x128x128xf32, #tpu.memory_space<vmem>>, vector<1x128x128xf32>
    %51 = vector.shape_cast %50 : vector<1x128x128xf32> to vector<128x128xf32>
    %c1 = arith.constant 1 : index
    %c0_17 = arith.constant 0 : index
    %c0_18 = arith.constant 0 : index
    %52 = vector.load %arg3[%c1, %c0_17, %c0_18] : memref<3x128x128xf32, #tpu.memory_space<vmem>>, vector<1x128x128xf32>
    %53 = vector.shape_cast %52 : vector<1x128x128xf32> to vector<128x128xf32>
    %c2 = arith.constant 2 : index
    %c0_19 = arith.constant 0 : index
    %c0_20 = arith.constant 0 : index
    %54 = vector.load %arg3[%c2, %c0_19, %c0_20] : memref<3x128x128xf32, #tpu.memory_space<vmem>>, vector<1x128x128xf32>
    %55 = vector.shape_cast %54 : vector<1x128x128xf32> to vector<128x128xf32>
    %c0_21 = arith.constant 0 : index
    %c0_22 = arith.constant 0 : index
    %56 = vector.load %arg4[%c0_21, %c0_22] : memref<1x128xf32, #tpu.memory_space<vmem>>, vector<1x128xf32>
    %c1_i32_23 = arith.constant 1 : i32
    %57 = tpu.dynamic_rotate %8 by %c1_i32_23 dim 0 : vector<32x128xf32>, i32 -> vector<32x128xf32>
    %58 = vector.broadcast %29 : vector<32x1xf32> to vector<32x128xf32>
    %59 = arith.mulf %57, %58 : vector<32x128xf32>
    %c31_i32 = arith.constant 31 : i32
    %60 = tpu.dynamic_rotate %8 by %c31_i32 dim 0 : vector<32x128xf32>, i32 -> vector<32x128xf32>
    %61 = vector.broadcast %49 : vector<32x1xf32> to vector<32x128xf32>
    %62 = arith.mulf %60, %61 : vector<32x128xf32>
    %cst_24 = arith.constant dense<0.000000e+00> : vector<32x128xf32>
    %63 = tpu.matmul %8, %53, %cst_24 {dimension_numbers = #tpu.dot_dimension_numbers<[1], [0], [0], [1], [0, 0, 1, 1], [], []>} : vector<32x128xf32>, vector<128x128xf32>, vector<32x128xf32> -> vector<32x128xf32>
    %cst_25 = arith.constant dense<0.000000e+00> : vector<32x128xf32>
    %64 = tpu.matmul %59, %51, %cst_25 {dimension_numbers = #tpu.dot_dimension_numbers<[1], [0], [0], [1], [0, 0, 1, 1], [], []>} : vector<32x128xf32>, vector<128x128xf32>, vector<32x128xf32> -> vector<32x128xf32>
    %65 = arith.addf %63, %64 : vector<32x128xf32>
    %cst_26 = arith.constant dense<0.000000e+00> : vector<32x128xf32>
    %66 = tpu.matmul %62, %55, %cst_26 {dimension_numbers = #tpu.dot_dimension_numbers<[1], [0], [0], [1], [0, 0, 1, 1], [], []>} : vector<32x128xf32>, vector<128x128xf32>, vector<32x128xf32> -> vector<32x128xf32>
    %67 = arith.addf %65, %66 : vector<32x128xf32>
    %68 = vector.broadcast %56 : vector<1x128xf32> to vector<32x128xf32>
    %69 = arith.addf %67, %68 : vector<32x128xf32>
    %cst_27 = arith.constant 0.000000e+00 : f32
    %70 = vector.broadcast %cst_27 : f32 to vector<32x128xf32>
    %71 = arith.maximumf %69, %70 : vector<32x128xf32>
    %c0_28 = arith.constant 0 : index
    %c0_29 = arith.constant 0 : index
    %c0_30 = arith.constant 0 : index
    %c0_31 = arith.constant 0 : index
    %72 = vector.load %arg5[%c0_28, %c0_29, %c0_30, %c0_31] : memref<2x3x128x128xf32, #tpu.memory_space<vmem>>, vector<1x1x128x128xf32>
    %73 = vector.shape_cast %72 : vector<1x1x128x128xf32> to vector<128x128xf32>
    %c0_32 = arith.constant 0 : index
    %c1_33 = arith.constant 1 : index
    %c0_34 = arith.constant 0 : index
    %c0_35 = arith.constant 0 : index
    %74 = vector.load %arg5[%c0_32, %c1_33, %c0_34, %c0_35] : memref<2x3x128x128xf32, #tpu.memory_space<vmem>>, vector<1x1x128x128xf32>
    %75 = vector.shape_cast %74 : vector<1x1x128x128xf32> to vector<128x128xf32>
    %c0_36 = arith.constant 0 : index
    %c2_37 = arith.constant 2 : index
    %c0_38 = arith.constant 0 : index
    %c0_39 = arith.constant 0 : index
    %76 = vector.load %arg5[%c0_36, %c2_37, %c0_38, %c0_39] : memref<2x3x128x128xf32, #tpu.memory_space<vmem>>, vector<1x1x128x128xf32>
    %77 = vector.shape_cast %76 : vector<1x1x128x128xf32> to vector<128x128xf32>
    %c0_40 = arith.constant 0 : index
    %c0_41 = arith.constant 0 : index
    %c0_42 = arith.constant 0 : index
    %78 = vector.load %arg6[%c0_40, %c0_41, %c0_42] : memref<2x1x128xf32, #tpu.memory_space<vmem>>, vector<1x1x128xf32>
    %79 = vector.shape_cast %78 : vector<1x1x128xf32> to vector<1x128xf32>
    %c1_i32_43 = arith.constant 1 : i32
    %80 = tpu.dynamic_rotate %71 by %c1_i32_43 dim 0 : vector<32x128xf32>, i32 -> vector<32x128xf32>
    %81 = vector.broadcast %29 : vector<32x1xf32> to vector<32x128xf32>
    %82 = arith.mulf %80, %81 : vector<32x128xf32>
    %c31_i32_44 = arith.constant 31 : i32
    %83 = tpu.dynamic_rotate %71 by %c31_i32_44 dim 0 : vector<32x128xf32>, i32 -> vector<32x128xf32>
    %84 = vector.broadcast %49 : vector<32x1xf32> to vector<32x128xf32>
    %85 = arith.mulf %83, %84 : vector<32x128xf32>
    %cst_45 = arith.constant dense<0.000000e+00> : vector<32x128xf32>
    %86 = tpu.matmul %71, %75, %cst_45 {dimension_numbers = #tpu.dot_dimension_numbers<[1], [0], [0], [1], [0, 0, 1, 1], [], []>} : vector<32x128xf32>, vector<128x128xf32>, vector<32x128xf32> -> vector<32x128xf32>
    %cst_46 = arith.constant dense<0.000000e+00> : vector<32x128xf32>
    %87 = tpu.matmul %82, %73, %cst_46 {dimension_numbers = #tpu.dot_dimension_numbers<[1], [0], [0], [1], [0, 0, 1, 1], [], []>} : vector<32x128xf32>, vector<128x128xf32>, vector<32x128xf32> -> vector<32x128xf32>
    %88 = arith.addf %86, %87 : vector<32x128xf32>
    %cst_47 = arith.constant dense<0.000000e+00> : vector<32x128xf32>
    %89 = tpu.matmul %85, %77, %cst_47 {dimension_numbers = #tpu.dot_dimension_numbers<[1], [0], [0], [1], [0, 0, 1, 1], [], []>} : vector<32x128xf32>, vector<128x128xf32>, vector<32x128xf32> -> vector<32x128xf32>
    %90 = arith.addf %88, %89 : vector<32x128xf32>
    %91 = vector.broadcast %79 : vector<1x128xf32> to vector<32x128xf32>
    %92 = arith.addf %90, %91 : vector<32x128xf32>
    %cst_48 = arith.constant 0.000000e+00 : f32
    %93 = vector.broadcast %cst_48 : f32 to vector<32x128xf32>
    %94 = arith.maximumf %92, %93 : vector<32x128xf32>
    %c0_49 = arith.constant 0 : index
    %c0_50 = arith.constant 0 : index
    %c0_51 = arith.constant 0 : index
    %c0_52 = arith.constant 0 : index
    %95 = vector.load %arg7[%c0_49, %c0_50, %c0_51, %c0_52] : memref<2x3x128x128xf32, #tpu.memory_space<vmem>>, vector<1x1x128x128xf32>
    %96 = vector.shape_cast %95 : vector<1x1x128x128xf32> to vector<128x128xf32>
    %c0_53 = arith.constant 0 : index
    %c1_54 = arith.constant 1 : index
    %c0_55 = arith.constant 0 : index
    %c0_56 = arith.constant 0 : index
    %97 = vector.load %arg7[%c0_53, %c1_54, %c0_55, %c0_56] : memref<2x3x128x128xf32, #tpu.memory_space<vmem>>, vector<1x1x128x128xf32>
    %98 = vector.shape_cast %97 : vector<1x1x128x128xf32> to vector<128x128xf32>
    %c0_57 = arith.constant 0 : index
    %c2_58 = arith.constant 2 : index
    %c0_59 = arith.constant 0 : index
    %c0_60 = arith.constant 0 : index
    %99 = vector.load %arg7[%c0_57, %c2_58, %c0_59, %c0_60] : memref<2x3x128x128xf32, #tpu.memory_space<vmem>>, vector<1x1x128x128xf32>
    %100 = vector.shape_cast %99 : vector<1x1x128x128xf32> to vector<128x128xf32>
    %c0_61 = arith.constant 0 : index
    %c0_62 = arith.constant 0 : index
    %c0_63 = arith.constant 0 : index
    %101 = vector.load %arg8[%c0_61, %c0_62, %c0_63] : memref<2x1x128xf32, #tpu.memory_space<vmem>>, vector<1x1x128xf32>
    %102 = vector.shape_cast %101 : vector<1x1x128xf32> to vector<1x128xf32>
    %c1_i32_64 = arith.constant 1 : i32
    %103 = tpu.dynamic_rotate %94 by %c1_i32_64 dim 0 : vector<32x128xf32>, i32 -> vector<32x128xf32>
    %104 = vector.broadcast %29 : vector<32x1xf32> to vector<32x128xf32>
    %105 = arith.mulf %103, %104 : vector<32x128xf32>
    %c31_i32_65 = arith.constant 31 : i32
    %106 = tpu.dynamic_rotate %94 by %c31_i32_65 dim 0 : vector<32x128xf32>, i32 -> vector<32x128xf32>
    %107 = vector.broadcast %49 : vector<32x1xf32> to vector<32x128xf32>
    %108 = arith.mulf %106, %107 : vector<32x128xf32>
    %cst_66 = arith.constant dense<0.000000e+00> : vector<32x128xf32>
    %109 = tpu.matmul %94, %98, %cst_66 {dimension_numbers = #tpu.dot_dimension_numbers<[1], [0], [0], [1], [0, 0, 1, 1], [], []>} : vector<32x128xf32>, vector<128x128xf32>, vector<32x128xf32> -> vector<32x128xf32>
    %cst_67 = arith.constant dense<0.000000e+00> : vector<32x128xf32>
    %110 = tpu.matmul %105, %96, %cst_67 {dimension_numbers = #tpu.dot_dimension_numbers<[1], [0], [0], [1], [0, 0, 1, 1], [], []>} : vector<32x128xf32>, vector<128x128xf32>, vector<32x128xf32> -> vector<32x128xf32>
    %111 = arith.addf %109, %110 : vector<32x128xf32>
    %cst_68 = arith.constant dense<0.000000e+00> : vector<32x128xf32>
    %112 = tpu.matmul %108, %100, %cst_68 {dimension_numbers = #tpu.dot_dimension_numbers<[1], [0], [0], [1], [0, 0, 1, 1], [], []>} : vector<32x128xf32>, vector<128x128xf32>, vector<32x128xf32> -> vector<32x128xf32>
    %113 = arith.addf %111, %112 : vector<32x128xf32>
    %114 = vector.broadcast %102 : vector<1x128xf32> to vector<32x128xf32>
    %115 = arith.addf %113, %114 : vector<32x128xf32>
    %116 = arith.addf %71, %115 : vector<32x128xf32>
    %cst_69 = arith.constant 0.000000e+00 : f32
    %117 = vector.broadcast %cst_69 : f32 to vector<32x128xf32>
    %118 = arith.maximumf %116, %117 : vector<32x128xf32>
    %c1_70 = arith.constant 1 : index
    %c0_71 = arith.constant 0 : index
    %c0_72 = arith.constant 0 : index
    %c0_73 = arith.constant 0 : index
    %119 = vector.load %arg5[%c1_70, %c0_71, %c0_72, %c0_73] : memref<2x3x128x128xf32, #tpu.memory_space<vmem>>, vector<1x1x128x128xf32>
    %120 = vector.shape_cast %119 : vector<1x1x128x128xf32> to vector<128x128xf32>
    %c1_74 = arith.constant 1 : index
    %c1_75 = arith.constant 1 : index
    %c0_76 = arith.constant 0 : index
    %c0_77 = arith.constant 0 : index
    %121 = vector.load %arg5[%c1_74, %c1_75, %c0_76, %c0_77] : memref<2x3x128x128xf32, #tpu.memory_space<vmem>>, vector<1x1x128x128xf32>
    %122 = vector.shape_cast %121 : vector<1x1x128x128xf32> to vector<128x128xf32>
    %c1_78 = arith.constant 1 : index
    %c2_79 = arith.constant 2 : index
    %c0_80 = arith.constant 0 : index
    %c0_81 = arith.constant 0 : index
    %123 = vector.load %arg5[%c1_78, %c2_79, %c0_80, %c0_81] : memref<2x3x128x128xf32, #tpu.memory_space<vmem>>, vector<1x1x128x128xf32>
    %124 = vector.shape_cast %123 : vector<1x1x128x128xf32> to vector<128x128xf32>
    %c1_82 = arith.constant 1 : index
    %c0_83 = arith.constant 0 : index
    %c0_84 = arith.constant 0 : index
    %125 = vector.load %arg6[%c1_82, %c0_83, %c0_84] : memref<2x1x128xf32, #tpu.memory_space<vmem>>, vector<1x1x128xf32>
    %126 = vector.shape_cast %125 : vector<1x1x128xf32> to vector<1x128xf32>
    %c1_i32_85 = arith.constant 1 : i32
    %127 = tpu.dynamic_rotate %118 by %c1_i32_85 dim 0 : vector<32x128xf32>, i32 -> vector<32x128xf32>
    %128 = vector.broadcast %29 : vector<32x1xf32> to vector<32x128xf32>
    %129 = arith.mulf %127, %128 : vector<32x128xf32>
    %c31_i32_86 = arith.constant 31 : i32
    %130 = tpu.dynamic_rotate %118 by %c31_i32_86 dim 0 : vector<32x128xf32>, i32 -> vector<32x128xf32>
    %131 = vector.broadcast %49 : vector<32x1xf32> to vector<32x128xf32>
    %132 = arith.mulf %130, %131 : vector<32x128xf32>
    %cst_87 = arith.constant dense<0.000000e+00> : vector<32x128xf32>
    %133 = tpu.matmul %118, %122, %cst_87 {dimension_numbers = #tpu.dot_dimension_numbers<[1], [0], [0], [1], [0, 0, 1, 1], [], []>} : vector<32x128xf32>, vector<128x128xf32>, vector<32x128xf32> -> vector<32x128xf32>
    %cst_88 = arith.constant dense<0.000000e+00> : vector<32x128xf32>
    %134 = tpu.matmul %129, %120, %cst_88 {dimension_numbers = #tpu.dot_dimension_numbers<[1], [0], [0], [1], [0, 0, 1, 1], [], []>} : vector<32x128xf32>, vector<128x128xf32>, vector<32x128xf32> -> vector<32x128xf32>
    %135 = arith.addf %133, %134 : vector<32x128xf32>
    %cst_89 = arith.constant dense<0.000000e+00> : vector<32x128xf32>
    %136 = tpu.matmul %132, %124, %cst_89 {dimension_numbers = #tpu.dot_dimension_numbers<[1], [0], [0], [1], [0, 0, 1, 1], [], []>} : vector<32x128xf32>, vector<128x128xf32>, vector<32x128xf32> -> vector<32x128xf32>
    %137 = arith.addf %135, %136 : vector<32x128xf32>
    %138 = vector.broadcast %126 : vector<1x128xf32> to vector<32x128xf32>
    %139 = arith.addf %137, %138 : vector<32x128xf32>
    %cst_90 = arith.constant 0.000000e+00 : f32
    %140 = vector.broadcast %cst_90 : f32 to vector<32x128xf32>
    %141 = arith.maximumf %139, %140 : vector<32x128xf32>
    %c1_91 = arith.constant 1 : index
    %c0_92 = arith.constant 0 : index
    %c0_93 = arith.constant 0 : index
    %c0_94 = arith.constant 0 : index
    %142 = vector.load %arg7[%c1_91, %c0_92, %c0_93, %c0_94] : memref<2x3x128x128xf32, #tpu.memory_space<vmem>>, vector<1x1x128x128xf32>
    %143 = vector.shape_cast %142 : vector<1x1x128x128xf32> to vector<128x128xf32>
    %c1_95 = arith.constant 1 : index
    %c1_96 = arith.constant 1 : index
    %c0_97 = arith.constant 0 : index
    %c0_98 = arith.constant 0 : index
    %144 = vector.load %arg7[%c1_95, %c1_96, %c0_97, %c0_98] : memref<2x3x128x128xf32, #tpu.memory_space<vmem>>, vector<1x1x128x128xf32>
    %145 = vector.shape_cast %144 : vector<1x1x128x128xf32> to vector<128x128xf32>
    %c1_99 = arith.constant 1 : index
    %c2_100 = arith.constant 2 : index
    %c0_101 = arith.constant 0 : index
    %c0_102 = arith.constant 0 : index
    %146 = vector.load %arg7[%c1_99, %c2_100, %c0_101, %c0_102] : memref<2x3x128x128xf32, #tpu.memory_space<vmem>>, vector<1x1x128x128xf32>
    %147 = vector.shape_cast %146 : vector<1x1x128x128xf32> to vector<128x128xf32>
    %c1_103 = arith.constant 1 : index
    %c0_104 = arith.constant 0 : index
    %c0_105 = arith.constant 0 : index
    %148 = vector.load %arg8[%c1_103, %c0_104, %c0_105] : memref<2x1x128xf32, #tpu.memory_space<vmem>>, vector<1x1x128xf32>
    %149 = vector.shape_cast %148 : vector<1x1x128xf32> to vector<1x128xf32>
    %c1_i32_106 = arith.constant 1 : i32
    %150 = tpu.dynamic_rotate %141 by %c1_i32_106 dim 0 : vector<32x128xf32>, i32 -> vector<32x128xf32>
    %151 = vector.broadcast %29 : vector<32x1xf32> to vector<32x128xf32>
    %152 = arith.mulf %150, %151 : vector<32x128xf32>
    %c31_i32_107 = arith.constant 31 : i32
    %153 = tpu.dynamic_rotate %141 by %c31_i32_107 dim 0 : vector<32x128xf32>, i32 -> vector<32x128xf32>
    %154 = vector.broadcast %49 : vector<32x1xf32> to vector<32x128xf32>
    %155 = arith.mulf %153, %154 : vector<32x128xf32>
    %cst_108 = arith.constant dense<0.000000e+00> : vector<32x128xf32>
    %156 = tpu.matmul %141, %145, %cst_108 {dimension_numbers = #tpu.dot_dimension_numbers<[1], [0], [0], [1], [0, 0, 1, 1], [], []>} : vector<32x128xf32>, vector<128x128xf32>, vector<32x128xf32> -> vector<32x128xf32>
    %cst_109 = arith.constant dense<0.000000e+00> : vector<32x128xf32>
    %157 = tpu.matmul %152, %143, %cst_109 {dimension_numbers = #tpu.dot_dimension_numbers<[1], [0], [0], [1], [0, 0, 1, 1], [], []>} : vector<32x128xf32>, vector<128x128xf32>, vector<32x128xf32> -> vector<32x128xf32>
    %158 = arith.addf %156, %157 : vector<32x128xf32>
    %cst_110 = arith.constant dense<0.000000e+00> : vector<32x128xf32>
    %159 = tpu.matmul %155, %147, %cst_110 {dimension_numbers = #tpu.dot_dimension_numbers<[1], [0], [0], [1], [0, 0, 1, 1], [], []>} : vector<32x128xf32>, vector<128x128xf32>, vector<32x128xf32> -> vector<32x128xf32>
    %160 = arith.addf %158, %159 : vector<32x128xf32>
    %161 = vector.broadcast %149 : vector<1x128xf32> to vector<32x128xf32>
    %162 = arith.addf %160, %161 : vector<32x128xf32>
    %163 = arith.addf %118, %162 : vector<32x128xf32>
    %cst_111 = arith.constant 0.000000e+00 : f32
    %164 = vector.broadcast %cst_111 : f32 to vector<32x128xf32>
    %165 = arith.maximumf %163, %164 : vector<32x128xf32>
    %166 = vector.shape_cast %165 : vector<32x128xf32> to vector<2x16x128xf32>
    %cst_112 = arith.constant dense<0.000000e+00> : vector<2x128xf32>
    %167 = vector.multi_reduction <add>, %166, %cst_112 [1] : vector<2x16x128xf32> to vector<2x128xf32>
    %cst_113 = arith.constant 6.250000e-02 : f32
    %168 = vector.broadcast %cst_113 : f32 to vector<2x128xf32>
    %169 = arith.mulf %167, %168 : vector<2x128xf32>
    %c0_114 = arith.constant 0 : index
    %c0_115 = arith.constant 0 : index
    %170 = vector.load %arg9[%c0_114, %c0_115] : memref<128x128xf32, #tpu.memory_space<vmem>>, vector<128x128xf32>
    %cst_116 = arith.constant dense<0.000000e+00> : vector<2x128xf32>
    %171 = tpu.matmul %169, %170, %cst_116 {dimension_numbers = #tpu.dot_dimension_numbers<[1], [0], [0], [1], [0, 0, 1, 1], [], []>} : vector<2x128xf32>, vector<128x128xf32>, vector<2x128xf32> -> vector<2x128xf32>
    %c0_117 = arith.constant 0 : index
    %c0_118 = arith.constant 0 : index
    %172 = vector.load %arg10[%c0_117, %c0_118] : memref<1x128xf32, #tpu.memory_space<vmem>>, vector<1x128xf32>
    %173 = vector.broadcast %172 : vector<1x128xf32> to vector<2x128xf32>
    %174 = arith.addf %171, %173 : vector<2x128xf32>
    %c0_119 = arith.constant 0 : index
    %c0_120 = arith.constant 0 : index
    %c0_121 = arith.constant 0 : index
    %175 = vector.load %arg11[%c0_119, %c0_120, %c0_121] : memref<1x2x128xf32, #tpu.memory_space<vmem>>, vector<1x2x128xf32>
    %176 = vector.shape_cast %175 : vector<1x2x128xf32> to vector<2x128xf32>
    %177 = vector.shape_cast %174 : vector<2x128xf32> to vector<1x2x128xf32>
    tpu.vector_store %arg11[%c0_119, %c0_120, %c0_121], %177 {strides = array<i32>} : memref<1x2x128xf32, #tpu.memory_space<vmem>>, vector<1x2x128xf32>,
    %c0_122 = arith.constant 0 : index
    %c0_123 = arith.constant 0 : index
    %c0_124 = arith.constant 0 : index
    %178 = vector.load %arg12[%c0_122, %c0_123, %c0_124] : memref<1x2x128xf32, #tpu.memory_space<vmem>>, vector<1x2x128xf32>
    %179 = vector.shape_cast %178 : vector<1x2x128xf32> to vector<2x128xf32>
    %180 = vector.shape_cast %169 : vector<2x128xf32> to vector<1x2x128xf32>
    tpu.vector_store %arg12[%c0_122, %c0_123, %c0_124], %180 {strides = array<i32>} : memref<1x2x128xf32, #tpu.memory_space<vmem>>, vector<1x2x128xf32>,
    return
  }
  func.func @transform_0(%arg0: i32) -> (i32, i32, i32) {
    %c0_i32 = arith.constant 0 : i32
    %c0_i32_0 = arith.constant 0 : i32
    %c0_i32_1 = arith.constant 0 : i32
    return %arg0, %c0_i32, %c0_i32_0 : i32, i32, i32
  }
  func.func @transform_1(%arg0: i32) -> (i32, i32) {
    %c0_i32 = arith.constant 0 : i32
    %c0_i32_0 = arith.constant 0 : i32
    %c0_i32_1 = arith.constant 0 : i32
    return %c0_i32, %c0_i32_0 : i32, i32
  }
  func.func @transform_2(%arg0: i32) -> (i32, i32, i32) {
    %c0_i32 = arith.constant 0 : i32
    %c0_i32_0 = arith.constant 0 : i32
    %c0_i32_1 = arith.constant 0 : i32
    %c0_i32_2 = arith.constant 0 : i32
    return %c0_i32, %c0_i32_0, %c0_i32_1 : i32, i32, i32
  }
  func.func @transform_3(%arg0: i32) -> (i32, i32) {
    %c0_i32 = arith.constant 0 : i32
    %c0_i32_0 = arith.constant 0 : i32
    %c0_i32_1 = arith.constant 0 : i32
    return %c0_i32, %c0_i32_0 : i32, i32
  }
  func.func @transform_4(%arg0: i32) -> (i32, i32, i32, i32) {
    %c0_i32 = arith.constant 0 : i32
    %c0_i32_0 = arith.constant 0 : i32
    %c0_i32_1 = arith.constant 0 : i32
    %c0_i32_2 = arith.constant 0 : i32
    %c0_i32_3 = arith.constant 0 : i32
    return %c0_i32, %c0_i32_0, %c0_i32_1, %c0_i32_2 : i32, i32, i32, i32
  }
  func.func @transform_5(%arg0: i32) -> (i32, i32, i32) {
    %c0_i32 = arith.constant 0 : i32
    %c0_i32_0 = arith.constant 0 : i32
    %c0_i32_1 = arith.constant 0 : i32
    %c0_i32_2 = arith.constant 0 : i32
    return %c0_i32, %c0_i32_0, %c0_i32_1 : i32, i32, i32
  }
  func.func @transform_6(%arg0: i32) -> (i32, i32, i32, i32) {
    %c0_i32 = arith.constant 0 : i32
    %c0_i32_0 = arith.constant 0 : i32
    %c0_i32_1 = arith.constant 0 : i32
    %c0_i32_2 = arith.constant 0 : i32
    %c0_i32_3 = arith.constant 0 : i32
    return %c0_i32, %c0_i32_0, %c0_i32_1, %c0_i32_2 : i32, i32, i32, i32
  }
  func.func @transform_7(%arg0: i32) -> (i32, i32, i32) {
    %c0_i32 = arith.constant 0 : i32
    %c0_i32_0 = arith.constant 0 : i32
    %c0_i32_1 = arith.constant 0 : i32
    %c0_i32_2 = arith.constant 0 : i32
    return %c0_i32, %c0_i32_0, %c0_i32_1 : i32, i32, i32
  }
  func.func @transform_8(%arg0: i32) -> (i32, i32) {
    %c0_i32 = arith.constant 0 : i32
    %c0_i32_0 = arith.constant 0 : i32
    %c0_i32_1 = arith.constant 0 : i32
    return %c0_i32, %c0_i32_0 : i32, i32
  }
  func.func @transform_9(%arg0: i32) -> (i32, i32) {
    %c0_i32 = arith.constant 0 : i32
    %c0_i32_0 = arith.constant 0 : i32
    %c0_i32_1 = arith.constant 0 : i32
    return %c0_i32, %c0_i32_0 : i32, i32
  }
  func.func @transform_10(%arg0: i32) -> (i32, i32, i32) {
    %c0_i32 = arith.constant 0 : i32
    %c0_i32_0 = arith.constant 0 : i32
    %c0_i32_1 = arith.constant 0 : i32
    return %arg0, %c0_i32, %c0_i32_0 : i32, i32, i32
  }
  func.func @transform_11(%arg0: i32) -> (i32, i32, i32) {
    %c0_i32 = arith.constant 0 : i32
    %c0_i32_0 = arith.constant 0 : i32
    %c0_i32_1 = arith.constant 0 : i32
    return %arg0, %c0_i32, %c0_i32_0 : i32, i32, i32
  }
}

module attributes {stable_mosaic.version = 11 : i64} {
  func.func @_resnet1d_kernel(%arg0: i32, %arg1: memref<1x32x1xi32, #tpu.memory_space<vmem>>, %arg2: memref<256x128xf32, #tpu.memory_space<vmem>>, %arg3: memref<3x128x128xf32, #tpu.memory_space<vmem>>, %arg4: memref<1x128xf32, #tpu.memory_space<vmem>>, %arg5: memref<2x3x128x128xf32, #tpu.memory_space<vmem>>, %arg6: memref<2x1x128xf32, #tpu.memory_space<vmem>>, %arg7: memref<2x3x128x128xf32, #tpu.memory_space<vmem>>, %arg8: memref<2x1x128xf32, #tpu.memory_space<vmem>>, %arg9: memref<128x128xf32, #tpu.memory_space<vmem>>, %arg10: memref<1x128xf32, #tpu.memory_space<vmem>>, %arg11: memref<1x2x128xf32, #tpu.memory_space<vmem>>, %arg12: memref<1x2x128xf32, #tpu.memory_space<vmem>>) attributes {dimension_semantics = [#tpu.dimension_semantics<parallel>], iteration_bounds = array<i64: 2>, scalar_prefetch = 0 : i64, scratch_operands = 0 : i64, tpu.core_type = #tpu.core_type<tc>, window_params = [{transform_indices = @transform_0, window_bounds = array<i64: 1, 32, 1>}, {pipeline_mode = #tpu.pipeline_mode<synchronous>, transform_indices = @transform_1, window_bounds = array<i64: 256, 128>}, {pipeline_mode = #tpu.pipeline_mode<synchronous>, transform_indices = @transform_2, window_bounds = array<i64: 3, 128, 128>}, {pipeline_mode = #tpu.pipeline_mode<synchronous>, transform_indices = @transform_3, window_bounds = array<i64: 1, 128>}, {pipeline_mode = #tpu.pipeline_mode<synchronous>, transform_indices = @transform_4, window_bounds = array<i64: 2, 3, 128, 128>}, {pipeline_mode = #tpu.pipeline_mode<synchronous>, transform_indices = @transform_5, window_bounds = array<i64: 2, 1, 128>}, {pipeline_mode = #tpu.pipeline_mode<synchronous>, transform_indices = @transform_6, window_bounds = array<i64: 2, 3, 128, 128>}, {pipeline_mode = #tpu.pipeline_mode<synchronous>, transform_indices = @transform_7, window_bounds = array<i64: 2, 1, 128>}, {pipeline_mode = #tpu.pipeline_mode<synchronous>, transform_indices = @transform_8, window_bounds = array<i64: 128, 128>}, {pipeline_mode = #tpu.pipeline_mode<synchronous>, transform_indices = @transform_9, window_bounds = array<i64: 1, 128>}, {transform_indices = @transform_10, window_bounds = array<i64: 1, 2, 128>}, {transform_indices = @transform_11, window_bounds = array<i64: 1, 2, 128>}]} {
    %c0 = arith.constant 0 : index
    %c0_0 = arith.constant 0 : index
    %c0_1 = arith.constant 0 : index
    %0 = vector.load %arg1[%c0, %c0_0, %c0_1] : memref<1x32x1xi32, #tpu.memory_space<vmem>>, vector<1x32x1xi32>
    %1 = vector.shape_cast %0 : vector<1x32x1xi32> to vector<32x1xi32>
    %2 = tpu.iota {dimensions = array<i32: 1>} : vector<32x256xi32>
    %3 = vector.broadcast %1 : vector<32x1xi32> to vector<32x256xi32>
    %4 = arith.cmpi eq, %3, %2 : vector<32x256xi32>
    %5 = arith.extui %4 : vector<32x256xi1> to vector<32x256xi32>
    %6 = arith.sitofp %5 : vector<32x256xi32> to vector<32x256xf32>
    %c0_2 = arith.constant 0 : index
    %c0_3 = arith.constant 0 : index
    %7 = vector.load %arg2[%c0_2, %c0_3] : memref<256x128xf32, #tpu.memory_space<vmem>>, vector<256x128xf32>
    %cst = arith.constant dense<0.000000e+00> : vector<32x128xf32>
    %8 = tpu.matmul %6, %7, %cst {dimension_numbers = #tpu.dot_dimension_numbers<[1], [0], [0], [1], [0, 0, 1, 1], [], []>} : vector<32x256xf32>, vector<256x128xf32>, vector<32x128xf32> -> vector<32x128xf32>
    %9 = tpu.iota {dimensions = array<i32: 0>} : vector<32x1xi32>
    %c16_i32 = arith.constant 16 : i32
    %c0_i32 = arith.constant 0 : i32
    %10 = arith.cmpi eq, %c16_i32, %c0_i32 : i32
    %c1_i32 = arith.constant 1 : i32
    %11 = arith.select %10, %c1_i32, %c16_i32 : i32
    %12 = vector.broadcast %11 : i32 to vector<32x1xi32>
    %13 = arith.remsi %9, %12 : vector<32x1xi32>
    %c0_i32_4 = arith.constant 0 : i32
    %14 = vector.broadcast %c0_i32_4 : i32 to vector<32x1xi32>
    %15 = arith.cmpi ne, %13, %14 : vector<32x1xi32>
    %c0_i32_5 = arith.constant 0 : i32
    %16 = vector.broadcast %c0_i32_5 : i32 to vector<32x1xi32>
    %17 = arith.cmpi slt, %13, %16 : vector<32x1xi32>
    %c0_i32_6 = arith.constant 0 : i32
    %18 = arith.cmpi slt, %11, %c0_i32_6 : i32
    %19 = vector.broadcast %18 : i1 to vector<32x1xi1>
    %20 = vector.broadcast %19 : vector<32x1xi1> to vector<32x1xi1>
    %21 = arith.xori %17, %20 : vector<32x1xi1>
    %22 = arith.andi %21, %15 : vector<32x1xi1>
    %23 = vector.broadcast %11 : i32 to vector<32x1xi32>
    %24 = arith.addi %13, %23 : vector<32x1xi32>
    %25 = arith.select %22, %24, %13 : vector<32x1xi1>, vector<32x1xi32>
    %c0_i32_7 = arith.constant 0 : i32
    %26 = vector.broadcast %c0_i32_7 : i32 to vector<32x1xi32>
    %27 = arith.cmpi ne, %25, %26 : vector<32x1xi32>
    %28 = arith.extui %27 : vector<32x1xi1> to vector<32x1xi32>
    %29 = arith.sitofp %28 : vector<32x1xi32> to vector<32x1xf32>
    %c16_i32_8 = arith.constant 16 : i32
    %c0_i32_9 = arith.constant 0 : i32
    %30 = arith.cmpi eq, %c16_i32_8, %c0_i32_9 : i32
    %c1_i32_10 = arith.constant 1 : i32
    %31 = arith.select %30, %c1_i32_10, %c16_i32_8 : i32
    %32 = vector.broadcast %31 : i32 to vector<32x1xi32>
    %33 = arith.remsi %9, %32 : vector<32x1xi32>
    %c0_i32_11 = arith.constant 0 : i32
    %34 = vector.broadcast %c0_i32_11 : i32 to vector<32x1xi32>
    %35 = arith.cmpi ne, %33, %34 : vector<32x1xi32>
    %c0_i32_12 = arith.constant 0 : i32
    %36 = vector.broadcast %c0_i32_12 : i32 to vector<32x1xi32>
    %37 = arith.cmpi slt, %33, %36 : vector<32x1xi32>
    %c0_i32_13 = arith.constant 0 : i32
    %38 = arith.cmpi slt, %31, %c0_i32_13 : i32
    %39 = vector.broadcast %38 : i1 to vector<32x1xi1>
    %40 = vector.broadcast %39 : vector<32x1xi1> to vector<32x1xi1>
    %41 = arith.xori %37, %40 : vector<32x1xi1>
    %42 = arith.andi %41, %35 : vector<32x1xi1>
    %43 = vector.broadcast %31 : i32 to vector<32x1xi32>
    %44 = arith.addi %33, %43 : vector<32x1xi32>
    %45 = arith.select %42, %44, %33 : vector<32x1xi1>, vector<32x1xi32>
    %c15_i32 = arith.constant 15 : i32
    %46 = vector.broadcast %c15_i32 : i32 to vector<32x1xi32>
    %47 = arith.cmpi ne, %45, %46 : vector<32x1xi32>
    %48 = arith.extui %47 : vector<32x1xi1> to vector<32x1xi32>
    %49 = arith.sitofp %48 : vector<32x1xi32> to vector<32x1xf32>
    %c0_14 = arith.constant 0 : index
    %c0_15 = arith.constant 0 : index
    %c0_16 = arith.constant 0 : index
    %50 = vector.load %arg3[%c0_14, %c0_15, %c0_16] : memref<3x128x128xf32, #tpu.memory_space<vmem>>, vector<1x128x128xf32>
    %51 = vector.shape_cast %50 : vector<1x128x128xf32> to vector<128x128xf32>
    %c1 = arith.constant 1 : index
    %c0_17 = arith.constant 0 : index
    %c0_18 = arith.constant 0 : index
    %52 = vector.load %arg3[%c1, %c0_17, %c0_18] : memref<3x128x128xf32, #tpu.memory_space<vmem>>, vector<1x128x128xf32>
    %53 = vector.shape_cast %52 : vector<1x128x128xf32> to vector<128x128xf32>
    %c2 = arith.constant 2 : index
    %c0_19 = arith.constant 0 : index
    %c0_20 = arith.constant 0 : index
    %54 = vector.load %arg3[%c2, %c0_19, %c0_20] : memref<3x128x128xf32, #tpu.memory_space<vmem>>, vector<1x128x128xf32>
    %55 = vector.shape_cast %54 : vector<1x128x128xf32> to vector<128x128xf32>
    %c0_21 = arith.constant 0 : index
    %c0_22 = arith.constant 0 : index
    %56 = vector.load %arg4[%c0_21, %c0_22] : memref<1x128xf32, #tpu.memory_space<vmem>>, vector<1x128xf32>
    %c1_i32_23 = arith.constant 1 : i32
    %57 = tpu.dynamic_rotate %8 by %c1_i32_23 dim 0 : vector<32x128xf32>, i32 -> vector<32x128xf32>
    %58 = vector.broadcast %29 : vector<32x1xf32> to vector<32x128xf32>
    %59 = arith.mulf %57, %58 : vector<32x128xf32>
    %c31_i32 = arith.constant 31 : i32
    %60 = tpu.dynamic_rotate %8 by %c31_i32 dim 0 : vector<32x128xf32>, i32 -> vector<32x128xf32>
    %61 = vector.broadcast %49 : vector<32x1xf32> to vector<32x128xf32>
    %62 = arith.mulf %60, %61 : vector<32x128xf32>
    %cst_24 = arith.constant dense<0.000000e+00> : vector<32x128xf32>
    %63 = tpu.matmul %8, %53, %cst_24 {dimension_numbers = #tpu.dot_dimension_numbers<[1], [0], [0], [1], [0, 0, 1, 1], [], []>} : vector<32x128xf32>, vector<128x128xf32>, vector<32x128xf32> -> vector<32x128xf32>
    %cst_25 = arith.constant dense<0.000000e+00> : vector<32x128xf32>
    %64 = tpu.matmul %59, %51, %cst_25 {dimension_numbers = #tpu.dot_dimension_numbers<[1], [0], [0], [1], [0, 0, 1, 1], [], []>} : vector<32x128xf32>, vector<128x128xf32>, vector<32x128xf32> -> vector<32x128xf32>
    %65 = arith.addf %63, %64 : vector<32x128xf32>
    %cst_26 = arith.constant dense<0.000000e+00> : vector<32x128xf32>
    %66 = tpu.matmul %62, %55, %cst_26 {dimension_numbers = #tpu.dot_dimension_numbers<[1], [0], [0], [1], [0, 0, 1, 1], [], []>} : vector<32x128xf32>, vector<128x128xf32>, vector<32x128xf32> -> vector<32x128xf32>
    %67 = arith.addf %65, %66 : vector<32x128xf32>
    %68 = vector.broadcast %56 : vector<1x128xf32> to vector<32x128xf32>
    %69 = arith.addf %67, %68 : vector<32x128xf32>
    %cst_27 = arith.constant 0.000000e+00 : f32
    %70 = vector.broadcast %cst_27 : f32 to vector<32x128xf32>
    %71 = arith.maximumf %69, %70 : vector<32x128xf32>
    %c0_28 = arith.constant 0 : index
    %c0_29 = arith.constant 0 : index
    %c0_30 = arith.constant 0 : index
    %c0_31 = arith.constant 0 : index
    %72 = vector.load %arg5[%c0_28, %c0_29, %c0_30, %c0_31] : memref<2x3x128x128xf32, #tpu.memory_space<vmem>>, vector<1x1x128x128xf32>
    %73 = vector.shape_cast %72 : vector<1x1x128x128xf32> to vector<128x128xf32>
    %c0_32 = arith.constant 0 : index
    %c1_33 = arith.constant 1 : index
    %c0_34 = arith.constant 0 : index
    %c0_35 = arith.constant 0 : index
    %74 = vector.load %arg5[%c0_32, %c1_33, %c0_34, %c0_35] : memref<2x3x128x128xf32, #tpu.memory_space<vmem>>, vector<1x1x128x128xf32>
    %75 = vector.shape_cast %74 : vector<1x1x128x128xf32> to vector<128x128xf32>
    %c0_36 = arith.constant 0 : index
    %c2_37 = arith.constant 2 : index
    %c0_38 = arith.constant 0 : index
    %c0_39 = arith.constant 0 : index
    %76 = vector.load %arg5[%c0_36, %c2_37, %c0_38, %c0_39] : memref<2x3x128x128xf32, #tpu.memory_space<vmem>>, vector<1x1x128x128xf32>
    %77 = vector.shape_cast %76 : vector<1x1x128x128xf32> to vector<128x128xf32>
    %c0_40 = arith.constant 0 : index
    %c0_41 = arith.constant 0 : index
    %c0_42 = arith.constant 0 : index
    %78 = vector.load %arg6[%c0_40, %c0_41, %c0_42] : memref<2x1x128xf32, #tpu.memory_space<vmem>>, vector<1x1x128xf32>
    %79 = vector.shape_cast %78 : vector<1x1x128xf32> to vector<1x128xf32>
    %c1_i32_43 = arith.constant 1 : i32
    %80 = tpu.dynamic_rotate %71 by %c1_i32_43 dim 0 : vector<32x128xf32>, i32 -> vector<32x128xf32>
    %81 = vector.broadcast %29 : vector<32x1xf32> to vector<32x128xf32>
    %82 = arith.mulf %80, %81 : vector<32x128xf32>
    %c31_i32_44 = arith.constant 31 : i32
    %83 = tpu.dynamic_rotate %71 by %c31_i32_44 dim 0 : vector<32x128xf32>, i32 -> vector<32x128xf32>
    %84 = vector.broadcast %49 : vector<32x1xf32> to vector<32x128xf32>
    %85 = arith.mulf %83, %84 : vector<32x128xf32>
    %cst_45 = arith.constant dense<0.000000e+00> : vector<32x128xf32>
    %86 = tpu.matmul %71, %75, %cst_45 {dimension_numbers = #tpu.dot_dimension_numbers<[1], [0], [0], [1], [0, 0, 1, 1], [], []>} : vector<32x128xf32>, vector<128x128xf32>, vector<32x128xf32> -> vector<32x128xf32>
    %cst_46 = arith.constant dense<0.000000e+00> : vector<32x128xf32>
    %87 = tpu.matmul %82, %73, %cst_46 {dimension_numbers = #tpu.dot_dimension_numbers<[1], [0], [0], [1], [0, 0, 1, 1], [], []>} : vector<32x128xf32>, vector<128x128xf32>, vector<32x128xf32> -> vector<32x128xf32>
    %88 = arith.addf %86, %87 : vector<32x128xf32>
    %cst_47 = arith.constant dense<0.000000e+00> : vector<32x128xf32>
    %89 = tpu.matmul %85, %77, %cst_47 {dimension_numbers = #tpu.dot_dimension_numbers<[1], [0], [0], [1], [0, 0, 1, 1], [], []>} : vector<32x128xf32>, vector<128x128xf32>, vector<32x128xf32> -> vector<32x128xf32>
    %90 = arith.addf %88, %89 : vector<32x128xf32>
    %91 = vector.broadcast %79 : vector<1x128xf32> to vector<32x128xf32>
    %92 = arith.addf %90, %91 : vector<32x128xf32>
    %cst_48 = arith.constant 0.000000e+00 : f32
    %93 = vector.broadcast %cst_48 : f32 to vector<32x128xf32>
    %94 = arith.maximumf %92, %93 : vector<32x128xf32>
    %c0_49 = arith.constant 0 : index
    %c0_50 = arith.constant 0 : index
    %c0_51 = arith.constant 0 : index
    %c0_52 = arith.constant 0 : index
    %95 = vector.load %arg7[%c0_49, %c0_50, %c0_51, %c0_52] : memref<2x3x128x128xf32, #tpu.memory_space<vmem>>, vector<1x1x128x128xf32>
    %96 = vector.shape_cast %95 : vector<1x1x128x128xf32> to vector<128x128xf32>
    %c0_53 = arith.constant 0 : index
    %c1_54 = arith.constant 1 : index
    %c0_55 = arith.constant 0 : index
    %c0_56 = arith.constant 0 : index
    %97 = vector.load %arg7[%c0_53, %c1_54, %c0_55, %c0_56] : memref<2x3x128x128xf32, #tpu.memory_space<vmem>>, vector<1x1x128x128xf32>
    %98 = vector.shape_cast %97 : vector<1x1x128x128xf32> to vector<128x128xf32>
    %c0_57 = arith.constant 0 : index
    %c2_58 = arith.constant 2 : index
    %c0_59 = arith.constant 0 : index
    %c0_60 = arith.constant 0 : index
    %99 = vector.load %arg7[%c0_57, %c2_58, %c0_59, %c0_60] : memref<2x3x128x128xf32, #tpu.memory_space<vmem>>, vector<1x1x128x128xf32>
    %100 = vector.shape_cast %99 : vector<1x1x128x128xf32> to vector<128x128xf32>
    %c0_61 = arith.constant 0 : index
    %c0_62 = arith.constant 0 : index
    %c0_63 = arith.constant 0 : index
    %101 = vector.load %arg8[%c0_61, %c0_62, %c0_63] : memref<2x1x128xf32, #tpu.memory_space<vmem>>, vector<1x1x128xf32>
    %102 = vector.shape_cast %101 : vector<1x1x128xf32> to vector<1x128xf32>
    %c1_i32_64 = arith.constant 1 : i32
    %103 = tpu.dynamic_rotate %94 by %c1_i32_64 dim 0 : vector<32x128xf32>, i32 -> vector<32x128xf32>
    %104 = vector.broadcast %29 : vector<32x1xf32> to vector<32x128xf32>
    %105 = arith.mulf %103, %104 : vector<32x128xf32>
    %c31_i32_65 = arith.constant 31 : i32
    %106 = tpu.dynamic_rotate %94 by %c31_i32_65 dim 0 : vector<32x128xf32>, i32 -> vector<32x128xf32>
    %107 = vector.broadcast %49 : vector<32x1xf32> to vector<32x128xf32>
    %108 = arith.mulf %106, %107 : vector<32x128xf32>
    %cst_66 = arith.constant dense<0.000000e+00> : vector<32x128xf32>
    %109 = tpu.matmul %94, %98, %cst_66 {dimension_numbers = #tpu.dot_dimension_numbers<[1], [0], [0], [1], [0, 0, 1, 1], [], []>} : vector<32x128xf32>, vector<128x128xf32>, vector<32x128xf32> -> vector<32x128xf32>
    %cst_67 = arith.constant dense<0.000000e+00> : vector<32x128xf32>
    %110 = tpu.matmul %105, %96, %cst_67 {dimension_numbers = #tpu.dot_dimension_numbers<[1], [0], [0], [1], [0, 0, 1, 1], [], []>} : vector<32x128xf32>, vector<128x128xf32>, vector<32x128xf32> -> vector<32x128xf32>
    %111 = arith.addf %109, %110 : vector<32x128xf32>
    %cst_68 = arith.constant dense<0.000000e+00> : vector<32x128xf32>
    %112 = tpu.matmul %108, %100, %cst_68 {dimension_numbers = #tpu.dot_dimension_numbers<[1], [0], [0], [1], [0, 0, 1, 1], [], []>} : vector<32x128xf32>, vector<128x128xf32>, vector<32x128xf32> -> vector<32x128xf32>
    %113 = arith.addf %111, %112 : vector<32x128xf32>
    %114 = vector.broadcast %102 : vector<1x128xf32> to vector<32x128xf32>
    %115 = arith.addf %113, %114 : vector<32x128xf32>
    %116 = arith.addf %71, %115 : vector<32x128xf32>
    %cst_69 = arith.constant 0.000000e+00 : f32
    %117 = vector.broadcast %cst_69 : f32 to vector<32x128xf32>
    %118 = arith.maximumf %116, %117 : vector<32x128xf32>
    %c1_70 = arith.constant 1 : index
    %c0_71 = arith.constant 0 : index
    %c0_72 = arith.constant 0 : index
    %c0_73 = arith.constant 0 : index
    %119 = vector.load %arg5[%c1_70, %c0_71, %c0_72, %c0_73] : memref<2x3x128x128xf32, #tpu.memory_space<vmem>>, vector<1x1x128x128xf32>
    %120 = vector.shape_cast %119 : vector<1x1x128x128xf32> to vector<128x128xf32>
    %c1_74 = arith.constant 1 : index
    %c1_75 = arith.constant 1 : index
    %c0_76 = arith.constant 0 : index
    %c0_77 = arith.constant 0 : index
    %121 = vector.load %arg5[%c1_74, %c1_75, %c0_76, %c0_77] : memref<2x3x128x128xf32, #tpu.memory_space<vmem>>, vector<1x1x128x128xf32>
    %122 = vector.shape_cast %121 : vector<1x1x128x128xf32> to vector<128x128xf32>
    %c1_78 = arith.constant 1 : index
    %c2_79 = arith.constant 2 : index
    %c0_80 = arith.constant 0 : index
    %c0_81 = arith.constant 0 : index
    %123 = vector.load %arg5[%c1_78, %c2_79, %c0_80, %c0_81] : memref<2x3x128x128xf32, #tpu.memory_space<vmem>>, vector<1x1x128x128xf32>
    %124 = vector.shape_cast %123 : vector<1x1x128x128xf32> to vector<128x128xf32>
    %c1_82 = arith.constant 1 : index
    %c0_83 = arith.constant 0 : index
    %c0_84 = arith.constant 0 : index
    %125 = vector.load %arg6[%c1_82, %c0_83, %c0_84] : memref<2x1x128xf32, #tpu.memory_space<vmem>>, vector<1x1x128xf32>
    %126 = vector.shape_cast %125 : vector<1x1x128xf32> to vector<1x128xf32>
    %c1_i32_85 = arith.constant 1 : i32
    %127 = tpu.dynamic_rotate %118 by %c1_i32_85 dim 0 : vector<32x128xf32>, i32 -> vector<32x128xf32>
    %128 = vector.broadcast %29 : vector<32x1xf32> to vector<32x128xf32>
    %129 = arith.mulf %127, %128 : vector<32x128xf32>
    %c31_i32_86 = arith.constant 31 : i32
    %130 = tpu.dynamic_rotate %118 by %c31_i32_86 dim 0 : vector<32x128xf32>, i32 -> vector<32x128xf32>
    %131 = vector.broadcast %49 : vector<32x1xf32> to vector<32x128xf32>
    %132 = arith.mulf %130, %131 : vector<32x128xf32>
    %cst_87 = arith.constant dense<0.000000e+00> : vector<32x128xf32>
    %133 = tpu.matmul %118, %122, %cst_87 {dimension_numbers = #tpu.dot_dimension_numbers<[1], [0], [0], [1], [0, 0, 1, 1], [], []>} : vector<32x128xf32>, vector<128x128xf32>, vector<32x128xf32> -> vector<32x128xf32>
    %cst_88 = arith.constant dense<0.000000e+00> : vector<32x128xf32>
    %134 = tpu.matmul %129, %120, %cst_88 {dimension_numbers = #tpu.dot_dimension_numbers<[1], [0], [0], [1], [0, 0, 1, 1], [], []>} : vector<32x128xf32>, vector<128x128xf32>, vector<32x128xf32> -> vector<32x128xf32>
    %135 = arith.addf %133, %134 : vector<32x128xf32>
    %cst_89 = arith.constant dense<0.000000e+00> : vector<32x128xf32>
    %136 = tpu.matmul %132, %124, %cst_89 {dimension_numbers = #tpu.dot_dimension_numbers<[1], [0], [0], [1], [0, 0, 1, 1], [], []>} : vector<32x128xf32>, vector<128x128xf32>, vector<32x128xf32> -> vector<32x128xf32>
    %137 = arith.addf %135, %136 : vector<32x128xf32>
    %138 = vector.broadcast %126 : vector<1x128xf32> to vector<32x128xf32>
    %139 = arith.addf %137, %138 : vector<32x128xf32>
    %cst_90 = arith.constant 0.000000e+00 : f32
    %140 = vector.broadcast %cst_90 : f32 to vector<32x128xf32>
    %141 = arith.maximumf %139, %140 : vector<32x128xf32>
    %c1_91 = arith.constant 1 : index
    %c0_92 = arith.constant 0 : index
    %c0_93 = arith.constant 0 : index
    %c0_94 = arith.constant 0 : index
    %142 = vector.load %arg7[%c1_91, %c0_92, %c0_93, %c0_94] : memref<2x3x128x128xf32, #tpu.memory_space<vmem>>, vector<1x1x128x128xf32>
    %143 = vector.shape_cast %142 : vector<1x1x128x128xf32> to vector<128x128xf32>
    %c1_95 = arith.constant 1 : index
    %c1_96 = arith.constant 1 : index
    %c0_97 = arith.constant 0 : index
    %c0_98 = arith.constant 0 : index
    %144 = vector.load %arg7[%c1_95, %c1_96, %c0_97, %c0_98] : memref<2x3x128x128xf32, #tpu.memory_space<vmem>>, vector<1x1x128x128xf32>
    %145 = vector.shape_cast %144 : vector<1x1x128x128xf32> to vector<128x128xf32>
    %c1_99 = arith.constant 1 : index
    %c2_100 = arith.constant 2 : index
    %c0_101 = arith.constant 0 : index
    %c0_102 = arith.constant 0 : index
    %146 = vector.load %arg7[%c1_99, %c2_100, %c0_101, %c0_102] : memref<2x3x128x128xf32, #tpu.memory_space<vmem>>, vector<1x1x128x128xf32>
    %147 = vector.shape_cast %146 : vector<1x1x128x128xf32> to vector<128x128xf32>
    %c1_103 = arith.constant 1 : index
    %c0_104 = arith.constant 0 : index
    %c0_105 = arith.constant 0 : index
    %148 = vector.load %arg8[%c1_103, %c0_104, %c0_105] : memref<2x1x128xf32, #tpu.memory_space<vmem>>, vector<1x1x128xf32>
    %149 = vector.shape_cast %148 : vector<1x1x128xf32> to vector<1x128xf32>
    %c1_i32_106 = arith.constant 1 : i32
    %150 = tpu.dynamic_rotate %141 by %c1_i32_106 dim 0 : vector<32x128xf32>, i32 -> vector<32x128xf32>
    %151 = vector.broadcast %29 : vector<32x1xf32> to vector<32x128xf32>
    %152 = arith.mulf %150, %151 : vector<32x128xf32>
    %c31_i32_107 = arith.constant 31 : i32
    %153 = tpu.dynamic_rotate %141 by %c31_i32_107 dim 0 : vector<32x128xf32>, i32 -> vector<32x128xf32>
    %154 = vector.broadcast %49 : vector<32x1xf32> to vector<32x128xf32>
    %155 = arith.mulf %153, %154 : vector<32x128xf32>
    %cst_108 = arith.constant dense<0.000000e+00> : vector<32x128xf32>
    %156 = tpu.matmul %141, %145, %cst_108 {dimension_numbers = #tpu.dot_dimension_numbers<[1], [0], [0], [1], [0, 0, 1, 1], [], []>} : vector<32x128xf32>, vector<128x128xf32>, vector<32x128xf32> -> vector<32x128xf32>
    %cst_109 = arith.constant dense<0.000000e+00> : vector<32x128xf32>
    %157 = tpu.matmul %152, %143, %cst_109 {dimension_numbers = #tpu.dot_dimension_numbers<[1], [0], [0], [1], [0, 0, 1, 1], [], []>} : vector<32x128xf32>, vector<128x128xf32>, vector<32x128xf32> -> vector<32x128xf32>
    %158 = arith.addf %156, %157 : vector<32x128xf32>
    %cst_110 = arith.constant dense<0.000000e+00> : vector<32x128xf32>
    %159 = tpu.matmul %155, %147, %cst_110 {dimension_numbers = #tpu.dot_dimension_numbers<[1], [0], [0], [1], [0, 0, 1, 1], [], []>} : vector<32x128xf32>, vector<128x128xf32>, vector<32x128xf32> -> vector<32x128xf32>
    %160 = arith.addf %158, %159 : vector<32x128xf32>
    %161 = vector.broadcast %149 : vector<1x128xf32> to vector<32x128xf32>
    %162 = arith.addf %160, %161 : vector<32x128xf32>
    %163 = arith.addf %118, %162 : vector<32x128xf32>
    %cst_111 = arith.constant 0.000000e+00 : f32
    %164 = vector.broadcast %cst_111 : f32 to vector<32x128xf32>
    %165 = arith.maximumf %163, %164 : vector<32x128xf32>
    %166 = vector.shape_cast %165 : vector<32x128xf32> to vector<2x16x128xf32>
    %cst_112 = arith.constant dense<0.000000e+00> : vector<2x128xf32>
    %167 = vector.multi_reduction <add>, %166, %cst_112 [1] : vector<2x16x128xf32> to vector<2x128xf32>
    %cst_113 = arith.constant 6.250000e-02 : f32
    %168 = vector.broadcast %cst_113 : f32 to vector<2x128xf32>
    %169 = arith.mulf %167, %168 : vector<2x128xf32>
    %c0_114 = arith.constant 0 : index
    %c0_115 = arith.constant 0 : index
    %170 = vector.load %arg9[%c0_114, %c0_115] : memref<128x128xf32, #tpu.memory_space<vmem>>, vector<128x128xf32>
    %cst_116 = arith.constant dense<0.000000e+00> : vector<2x128xf32>
    %171 = tpu.matmul %169, %170, %cst_116 {dimension_numbers = #tpu.dot_dimension_numbers<[1], [0], [0], [1], [0, 0, 1, 1], [], []>} : vector<2x128xf32>, vector<128x128xf32>, vector<2x128xf32> -> vector<2x128xf32>
    %c0_117 = arith.constant 0 : index
    %c0_118 = arith.constant 0 : index
    %172 = vector.load %arg10[%c0_117, %c0_118] : memref<1x128xf32, #tpu.memory_space<vmem>>, vector<1x128xf32>
    %173 = vector.broadcast %172 : vector<1x128xf32> to vector<2x128xf32>
    %174 = arith.addf %171, %173 : vector<2x128xf32>
    %c0_119 = arith.constant 0 : index
    %c0_120 = arith.constant 0 : index
    %c0_121 = arith.constant 0 : index
    %175 = vector.load %arg11[%c0_119, %c0_120, %c0_121] : memref<1x2x128xf32, #tpu.memory_space<vmem>>, vector<1x2x128xf32>
    %176 = vector.shape_cast %175 : vector<1x2x128xf32> to vector<2x128xf32>
    %177 = vector.shape_cast %174 : vector<2x128xf32> to vector<1x2x128xf32>
    tpu.vector_store %arg11[%c0_119, %c0_120, %c0_121], %177 {strides = array<i32>} : memref<1x2x128xf32, #tpu.memory_space<vmem>>, vector<1x2x128xf32>,
    %c0_122 = arith.constant 0 : index
    %c0_123 = arith.constant 0 : index
    %c0_124 = arith.constant 0 : index
    %178 = vector.load %arg12[%c0_122, %c0_123, %c0_124] : memref<1x2x128xf32, #tpu.memory_space<vmem>>, vector<1x2x128xf32>
    %179 = vector.shape_cast %178 : vector<1x2x128xf32> to vector<2x128xf32>
    %180 = vector.shape_cast %169 : vector<2x128xf32> to vector<1x2x128xf32>
    tpu.vector_store %arg12[%c0_122, %c0_123, %c0_124], %180 {strides = array<i32>} : memref<1x2x128xf32, #tpu.memory_space<vmem>>, vector<1x2x128xf32>,
    return
  }
  func.func @transform_0(%arg0: i32) -> (i32, i32, i32) {
    %c0_i32 = arith.constant 0 : i32
    %c0_i32_0 = arith.constant 0 : i32
    %c0_i32_1 = arith.constant 0 : i32
    return %arg0, %c0_i32, %c0_i32_0 : i32, i32, i32
  }
  func.func @transform_1(%arg0: i32) -> (i32, i32) {
    %c0_i32 = arith.constant 0 : i32
    %c0_i32_0 = arith.constant 0 : i32
    %c0_i32_1 = arith.constant 0 : i32
    return %c0_i32, %c0_i32_0 : i32, i32
  }
  func.func @transform_2(%arg0: i32) -> (i32, i32, i32) {
    %c0_i32 = arith.constant 0 : i32
    %c0_i32_0 = arith.constant 0 : i32
    %c0_i32_1 = arith.constant 0 : i32
    %c0_i32_2 = arith.constant 0 : i32
    return %c0_i32, %c0_i32_0, %c0_i32_1 : i32, i32, i32
  }
  func.func @transform_3(%arg0: i32) -> (i32, i32) {
    %c0_i32 = arith.constant 0 : i32
    %c0_i32_0 = arith.constant 0 : i32
    %c0_i32_1 = arith.constant 0 : i32
    return %c0_i32, %c0_i32_0 : i32, i32
  }
  func.func @transform_4(%arg0: i32) -> (i32, i32, i32, i32) {
    %c0_i32 = arith.constant 0 : i32
    %c0_i32_0 = arith.constant 0 : i32
    %c0_i32_1 = arith.constant 0 : i32
    %c0_i32_2 = arith.constant 0 : i32
    %c0_i32_3 = arith.constant 0 : i32
    return %c0_i32, %c0_i32_0, %c0_i32_1, %c0_i32_2 : i32, i32, i32, i32
  }
  func.func @transform_5(%arg0: i32) -> (i32, i32, i32) {
    %c0_i32 = arith.constant 0 : i32
    %c0_i32_0 = arith.constant 0 : i32
    %c0_i32_1 = arith.constant 0 : i32
    %c0_i32_2 = arith.constant 0 : i32
    return %c0_i32, %c0_i32_0, %c0_i32_1 : i32, i32, i32
  }
  func.func @transform_6(%arg0: i32) -> (i32, i32, i32, i32) {
    %c0_i32 = arith.constant 0 : i32
    %c0_i32_0 = arith.constant 0 : i32
    %c0_i32_1 = arith.constant 0 : i32
    %c0_i32_2 = arith.constant 0 : i32
    %c0_i32_3 = arith.constant 0 : i32
    return %c0_i32, %c0_i32_0, %c0_i32_1, %c0_i32_2 : i32, i32, i32, i32
  }
  func.func @transform_7(%arg0: i32) -> (i32, i32, i32) {
    %c0_i32 = arith.constant 0 : i32
    %c0_i32_0 = arith.constant 0 : i32
    %c0_i32_1 = arith.constant 0 : i32
    %c0_i32_2 = arith.constant 0 : i32
    return %c0_i32, %c0_i32_0, %c0_i32_1 : i32, i32, i32
  }
  func.func @transform_8(%arg0: i32) -> (i32, i32) {
    %c0_i32 = arith.constant 0 : i32
    %c0_i32_0 = arith.constant 0 : i32
    %c0_i32_1 = arith.constant 0 : i32
    return %c0_i32, %c0_i32_0 : i32, i32
  }
  func.func @transform_9(%arg0: i32) -> (i32, i32) {
    %c0_i32 = arith.constant 0 : i32
    %c0_i32_0 = arith.constant 0 : i32
    %c0_i32_1 = arith.constant 0 : i32
    return %c0_i32, %c0_i32_0 : i32, i32
  }
  func.func @transform_10(%arg0: i32) -> (i32, i32, i32) {
    %c0_i32 = arith.constant 0 : i32
    %c0_i32_0 = arith.constant 0 : i32
    %c0_i32_1 = arith.constant 0 : i32
    return %arg0, %c0_i32, %c0_i32_0 : i32, i32, i32
  }
  func.func @transform_11(%arg0: i32) -> (i32, i32, i32) {
    %c0_i32 = arith.constant 0 : i32
    %c0_i32_0 = arith.constant 0 : i32
    %c0_i32_1 = arith.constant 0 : i32
    return %arg0, %c0_i32, %c0_i32_0 : i32, i32, i32
  }
}

</mosaic_0001>

<llo_original>
// kernel: tpu_custom_call.1
$region0: #{tpu_custom_call.1}
  #allocation0 [shape = 'u32[]', space=smem, size = 0x4, offset = 0x4, fixed_abs, tag = 'smem constant byte address 0x4 - core index']
  #allocation1 [shape = 'u32[144,128]{1,0:T(1,128)}', space=vmem, size = 0x12000, scoped, tag = 'internal scratch']
  %s0 = inlined_call_operand.vmem [shape: s32[2,32,1], index: 0, kind: input, shape index: {}]
  %s1 = inlined_call_operand.hbm [shape: f32[256,128], index: 1, kind: input, shape index: {}]
  %s2 = inlined_call_operand.hbm [shape: f32[3,128,128], index: 2, kind: input, shape index: {}]
  %s3 = inlined_call_operand.vmem [shape: f32[1,128], index: 3, kind: input, shape index: {}]
  %s4 = inlined_call_operand.hbm [shape: f32[2,3,128,128], index: 4, kind: input, shape index: {}]
  %s5 = inlined_call_operand.vmem [shape: f32[2,1,128], index: 5, kind: input, shape index: {}]
  %s6 = inlined_call_operand.hbm [shape: f32[2,3,128,128], index: 6, kind: input, shape index: {}]
  %s7 = inlined_call_operand.vmem [shape: f32[2,1,128], index: 7, kind: input, shape index: {}]
  %s8 = inlined_call_operand.hbm [shape: f32[128,128], index: 8, kind: input, shape index: {}]
  %s9 = inlined_call_operand.vmem [shape: f32[1,128], index: 9, kind: input, shape index: {}]
  %s10 = inlined_call_operand.hbm [shape: f32[2,2,128], index: 10, kind: output, shape index: {0}]
  %s11 = inlined_call_operand.hbm [shape: f32[2,2,128], index: 11, kind: output, shape index: {1}]
  %12 = xla_tuple %s10, %s11
  %s13 = sld [smem:[#allocation0]]
  $region101: #{tpu_custom_call.1} parent=0
    _
  %s15 = ssub.s32 1, %s13
  %s16 = scalar_select 0, %s15, %s13
  $region1: #{tpu_custom_call.1} parent=0
    #allocation2 [shape = 'u8[131072]{0}', space=vmem, size = 0x20000, scoped, tag = 'input window, operand 1, single buffered']
    #allocation3 [shape = 's32[2]{0}', space=sflag, size = 0x8, scoped, tag = 'scoped memory for tpu_custom_call.1']
    #allocation4 [shape = 's32[2]{0}', space=sflag, size = 0x8, scoped, tag = 'scoped memory for tpu_custom_call.1']
    #allocation5 [shape = 'u8[196608]{0}', space=vmem, size = 0x30000, scoped, tag = 'input window, operand 2, single buffered']
    #allocation6 [shape = 's32[1]{0}', space=sflag, size = 0x4, scoped, tag = 'scoped memory for tpu_custom_call.1']
    #allocation7 [shape = 'u8[393216]{0}', space=vmem, size = 0x60000, scoped, tag = 'input window, operand 4, single buffered']
    #allocation8 [shape = 'u8[393216]{0}', space=vmem, size = 0x60000, scoped, tag = 'input window, operand 6, single buffered']
    #allocation9 [shape = 's32[1]{0}', space=sflag, size = 0x4, scoped, tag = 'scoped memory for tpu_custom_call.1']
    #allocation10 [shape = 'u8[65536]{0}', space=vmem, size = 0x10000, scoped, tag = 'input window, operand 8, single buffered']
    #allocation11 [shape = 'u8[2048]{0}', space=vmem, size = 0x800, scoped, tag = 'output window, operand 0']
    #allocation12 [shape = 'u8[2048]{0}', space=vmem, size = 0x800, scoped, tag = 'output window, operand 1']
    #allocation13 [shape = 's32[2]{0}', space=sflag, size = 0x8, scoped, tag = 'scoped memory for tpu_custom_call.1']
    %17 = vsyncpa [#allocation3], 0
    %18 = vsyncpa [#allocation6], 0
    %19 = vsyncpa [#allocation9], 0
    %20 = vsyncpa [#allocation4], 0
    %s21 = scalar_lea.sflag [#allocation4], 1
    %22 = vsyncpa %s21, 0
    %23 = vsyncpa [#allocation13], 0
    %s24 = scalar_lea.sflag [#allocation13], 1
    %25 = vsyncpa %s24, 0
    loop: start=0, step=1, limit=4
    $region2: #{tpu_custom_call.1} parent=1 // loop_pre_header
      _
    $region3: #{tpu_custom_call.1} parent=1 // loop_header
      %s27 = sphi 0, %s31
      %p28 = scmp.ge.s32.totalorder %s27, 4
      %s37 = sphi 0, %s39
      %s40 = sphi 0, %s37
      %s41 = sphi 0, %s40
      %s57 = sphi 0, %s41
      %s61 = sphi 0, %s61
      %s63 = sphi 0, %s61
      %s64 = sphi 0, %s63
      %s78 = sphi 0, %s64
      %s82 = sphi 0, %s82
      %s84 = sphi 0, %s82
      %s85 = sphi 0, %s84
      %s99 = sphi 0, %s85
      %s103 = sphi 0, %s103
      %s105 = sphi 0, %s103
      %s106 = sphi 0, %s105
      %s120 = sphi 0, %s106
      %s124 = sphi 0, %s124
      %s126 = sphi 0, %s124
      %s127 = sphi 0, %s126
      %s141 = sphi 0, %s127
      %s145 = sphi 0, %s145
      %s147 = sphi 0, %s145
      %s148 = sphi 0, %s147
      %s162 = sphi 0, %s148
      %s166 = sphi 0, %s166
      %s168 = sphi 0, %s166
      %s169 = sphi 0, %s168
      %s183 = sphi 0, %s169
      %s187 = sphi 0, %s187
      %s189 = sphi 0, %s187
      %s190 = sphi 0, %s189
      %s204 = sphi 0, %s190
      %s208 = sphi 0, %s208
      %s210 = sphi 0, %s208
      %s211 = sphi 0, %s210
      %s225 = sphi 0, %s211
      %s229 = sphi 0, %s229
      %s231 = sphi 0, %s229
      %s232 = sphi 0, %s231
      %s246 = sphi 0, %s232
      %s252 = sphi 0, %s254
      %s255 = sphi 0, %s252
      %s256 = sphi 0, %s255
      %s272 = sphi 0, %s256
      %s278 = sphi 0, %s280
      %s281 = sphi 0, %s278
      %s282 = sphi 0, %s281
      %s298 = sphi 0, %s282
    $region4: #{tpu_custom_call.1} parent=1 // loop_header_branch
      %30 = sbr.rel (%p28) target = $region8
    $region5: #{tpu_custom_call.1} parent=1 // loop_body
      %s32 = ssub.s32 %s27, 1
      %s33 = ssub.s32 %s27, 2
      %s34 = sadd.s32 %s27, 1
      %s35 = ssub.s32 %s27, %s34
      %p36 = scmp.eq.s32.totalorder %s35, 0
      %s38 = sadd.s32 %s37, 1
      %s39 = scalar_select %p36, %s37, %s38
      %p42 = pneg %p36
      %p43 = scmp.eq.s32.totalorder %s27, 1
      %p44 = por %p42, %p43
      %p45 = scmp.ne.s32.totalorder %s37, %s40
      %p46 = scmp.eq.s32.totalorder %s27, 0
      %p47 = por %p45, %p46
      %p48 = scmp.ne.s32.totalorder %s37, %s40
      %p49 = scmp.eq.s32.totalorder %s32, 1
      %p50 = por %p48, %p49
      %p51 = scmp.ne.s32.totalorder %s40, %s41
      %p52 = scmp.eq.s32.totalorder %s32, 0
      %p53 = por %p51, %p52
      %p54 = scmp.ne.s32.totalorder %s40, %s41
      %p55 = scmp.eq.s32.totalorder %s33, 1
      %p56 = por %p54, %p55
      %p58 = scmp.ne.s32.totalorder %s41, %s57
      %p59 = scmp.eq.s32.totalorder %s33, 0
      %p60 = por %p58, %p59
      %s62 = sadd.s32 %s61, 1
      %p65 = scmp.eq.s32.totalorder %s27, 1
      %p66 = scmp.ne.s32.totalorder %s61, %s63
      %p67 = scmp.eq.s32.totalorder %s27, 0
      %p68 = por %p66, %p67
      %p69 = scmp.ne.s32.totalorder %s61, %s63
      %p70 = scmp.eq.s32.totalorder %s32, 1
      %p71 = por %p69, %p70
      %p72 = scmp.ne.s32.totalorder %s63, %s64
      %p73 = scmp.eq.s32.totalorder %s32, 0
      %p74 = por %p72, %p73
      %p75 = scmp.ne.s32.totalorder %s63, %s64
      %p76 = scmp.eq.s32.totalorder %s33, 1
      %p77 = por %p75, %p76
      %p79 = scmp.ne.s32.totalorder %s64, %s78
      %p80 = scmp.eq.s32.totalorder %s33, 0
      %p81 = por %p79, %p80
      %s83 = sadd.s32 %s82, 1
      %p86 = scmp.eq.s32.totalorder %s27, 1
      %p87 = scmp.ne.s32.totalorder %s82, %s84
      %p88 = scmp.eq.s32.totalorder %s27, 0
      %p89 = por %p87, %p88
      %p90 = scmp.ne.s32.totalorder %s82, %s84
      %p91 = scmp.eq.s32.totalorder %s32, 1
      %p92 = por %p90, %p91
      %p93 = scmp.ne.s32.totalorder %s84, %s85
      %p94 = scmp.eq.s32.totalorder %s32, 0
      %p95 = por %p93, %p94
      %p96 = scmp.ne.s32.totalorder %s84, %s85
      %p97 = scmp.eq.s32.totalorder %s33, 1
      %p98 = por %p96, %p97
      %p100 = scmp.ne.s32.totalorder %s85, %s99
      %p101 = scmp.eq.s32.totalorder %s33, 0
      %p102 = por %p100, %p101
      %s104 = sadd.s32 %s103, 1
      %p107 = scmp.eq.s32.totalorder %s27, 1
      %p108 = scmp.ne.s32.totalorder %s103, %s105
      %p109 = scmp.eq.s32.totalorder %s27, 0
      %p110 = por %p108, %p109
      %p111 = scmp.ne.s32.totalorder %s103, %s105
      %p112 = scmp.eq.s32.totalorder %s32, 1
      %p113 = por %p111, %p112
      %p114 = scmp.ne.s32.totalorder %s105, %s106
      %p115 = scmp.eq.s32.totalorder %s32, 0
      %p116 = por %p114, %p115
      %p117 = scmp.ne.s32.totalorder %s105, %s106
      %p118 = scmp.eq.s32.totalorder %s33, 1
      %p119 = por %p117, %p118
      %p121 = scmp.ne.s32.totalorder %s106, %s120
      %p122 = scmp.eq.s32.totalorder %s33, 0
      %p123 = por %p121, %p122
      %s125 = sadd.s32 %s124, 1
      %p128 = scmp.eq.s32.totalorder %s27, 1
      %p129 = scmp.ne.s32.totalorder %s124, %s126
      %p130 = scmp.eq.s32.totalorder %s27, 0
      %p131 = por %p129, %p130
      %p132 = scmp.ne.s32.totalorder %s124, %s126
      %p133 = scmp.eq.s32.totalorder %s32, 1
      %p134 = por %p132, %p133
      %p135 = scmp.ne.s32.totalorder %s126, %s127
      %p136 = scmp.eq.s32.totalorder %s32, 0
      %p137 = por %p135, %p136
      %p138 = scmp.ne.s32.totalorder %s126, %s127
      %p139 = scmp.eq.s32.totalorder %s33, 1
      %p140 = por %p138, %p139
      %p142 = scmp.ne.s32.totalorder %s127, %s141
      %p143 = scmp.eq.s32.totalorder %s33, 0
      %p144 = por %p142, %p143
      %s146 = sadd.s32 %s145, 1
      %p149 = scmp.eq.s32.totalorder %s27, 1
      %p150 = scmp.ne.s32.totalorder %s145, %s147
      %p151 = scmp.eq.s32.totalorder %s27, 0
      %p152 = por %p150, %p151
      %p153 = scmp.ne.s32.totalorder %s145, %s147
      %p154 = scmp.eq.s32.totalorder %s32, 1
      %p155 = por %p153, %p154
      %p156 = scmp.ne.s32.totalorder %s147, %s148
      %p157 = scmp.eq.s32.totalorder %s32, 0
      %p158 = por %p156, %p157
      %p159 = scmp.ne.s32.totalorder %s147, %s148
      %p160 = scmp.eq.s32.totalorder %s33, 1
      %p161 = por %p159, %p160
      %p163 = scmp.ne.s32.totalorder %s148, %s162
      %p164 = scmp.eq.s32.totalorder %s33, 0
      %p165 = por %p163, %p164
      %s167 = sadd.s32 %s166, 1
      %p170 = scmp.eq.s32.totalorder %s27, 1
      %p171 = scmp.ne.s32.totalorder %s166, %s168
      %p172 = scmp.eq.s32.totalorder %s27, 0
      %p173 = por %p171, %p172
      %p174 = scmp.ne.s32.totalorder %s166, %s168
      %p175 = scmp.eq.s32.totalorder %s32, 1
      %p176 = por %p174, %p175
      %p177 = scmp.ne.s32.totalorder %s168, %s169
      %p178 = scmp.eq.s32.totalorder %s32, 0
      %p179 = por %p177, %p178
      %p180 = scmp.ne.s32.totalorder %s168, %s169
      %p181 = scmp.eq.s32.totalorder %s33, 1
      %p182 = por %p180, %p181
      %p184 = scmp.ne.s32.totalorder %s169, %s183
      %p185 = scmp.eq.s32.totalorder %s33, 0
      %p186 = por %p184, %p185
      %s188 = sadd.s32 %s187, 1
      %p191 = scmp.eq.s32.totalorder %s27, 1
      %p192 = scmp.ne.s32.totalorder %s187, %s189
      %p193 = scmp.eq.s32.totalorder %s27, 0
      %p194 = por %p192, %p193
      %p195 = scmp.ne.s32.totalorder %s187, %s189
      %p196 = scmp.eq.s32.totalorder %s32, 1
      %p197 = por %p195, %p196
      %p198 = scmp.ne.s32.totalorder %s189, %s190
      %p199 = scmp.eq.s32.totalorder %s32, 0
      %p200 = por %p198, %p199
      %p201 = scmp.ne.s32.totalorder %s189, %s190
      %p202 = scmp.eq.s32.totalorder %s33, 1
      %p203 = por %p201, %p202
      %p205 = scmp.ne.s32.totalorder %s190, %s204
      %p206 = scmp.eq.s32.totalorder %s33, 0
      %p207 = por %p205, %p206
      %s209 = sadd.s32 %s208, 1
      %p212 = scmp.eq.s32.totalorder %s27, 1
      %p213 = scmp.ne.s32.totalorder %s208, %s210
      %p214 = scmp.eq.s32.totalorder %s27, 0
      %p215 = por %p213, %p214
      %p216 = scmp.ne.s32.totalorder %s208, %s210
      %p217 = scmp.eq.s32.totalorder %s32, 1
      %p218 = por %p216, %p217
      %p219 = scmp.ne.s32.totalorder %s210, %s211
      %p220 = scmp.eq.s32.totalorder %s32, 0
      %p221 = por %p219, %p220
      %p222 = scmp.ne.s32.totalorder %s210, %s211
      %p223 = scmp.eq.s32.totalorder %s33, 1
      %p224 = por %p222, %p223
      %p226 = scmp.ne.s32.totalorder %s211, %s225
      %p227 = scmp.eq.s32.totalorder %s33, 0
      %p228 = por %p226, %p227
      %s230 = sadd.s32 %s229, 1
      %p233 = scmp.eq.s32.totalorder %s27, 1
      %p234 = scmp.ne.s32.totalorder %s229, %s231
      %p235 = scmp.eq.s32.totalorder %s27, 0
      %p236 = por %p234, %p235
      %p237 = scmp.ne.s32.totalorder %s229, %s231
      %p238 = scmp.eq.s32.totalorder %s32, 1
      %p239 = por %p237, %p238
      %p240 = scmp.ne.s32.totalorder %s231, %s232
      %p241 = scmp.eq.s32.totalorder %s32, 0
      %p242 = por %p240, %p241
      %p243 = scmp.ne.s32.totalorder %s231, %s232
      %p244 = scmp.eq.s32.totalorder %s33, 1
      %p245 = por %p243, %p244
      %p247 = scmp.ne.s32.totalorder %s232, %s246
      %p248 = scmp.eq.s32.totalorder %s33, 0
      %p249 = por %p247, %p248
      %s250 = ssub.s32 %s27, %s34
      %p251 = scmp.eq.s32.totalorder %s250, 0
      %s253 = sadd.s32 %s252, 1
      %s254 = scalar_select %p251, %s252, %s253
      %p257 = pneg %p251
      %p258 = scmp.eq.s32.totalorder %s27, 1
      %p259 = por %p257, %p258
      %p260 = scmp.ne.s32.totalorder %s252, %s255
      %p261 = scmp.eq.s32.totalorder %s27, 0
      %p262 = por %p260, %p261
      %p263 = scmp.ne.s32.totalorder %s252, %s255
      %p264 = scmp.eq.s32.totalorder %s32, 1
      %p265 = por %p263, %p264
      %p266 = scmp.ne.s32.totalorder %s255, %s256
      %p267 = scmp.eq.s32.totalorder %s32, 0
      %p268 = por %p266, %p267
      %p269 = scmp.ne.s32.totalorder %s255, %s256
      %p270 = scmp.eq.s32.totalorder %s33, 1
      %p271 = por %p269, %p270
      %p273 = scmp.ne.s32.totalorder %s256, %s272
      %p274 = scmp.eq.s32.totalorder %s33, 0
      %p275 = por %p273, %p274
      %s276 = ssub.s32 %s27, %s34
      %p277 = scmp.eq.s32.totalorder %s276, 0
      %s279 = sadd.s32 %s278, 1
      %s280 = scalar_select %p277, %s278, %s279
      %p283 = pneg %p277
      %p284 = scmp.eq.s32.totalorder %s27, 1
      %p285 = por %p283, %p284
      %p286 = scmp.ne.s32.totalorder %s278, %s281
      %p287 = scmp.eq.s32.totalorder %s27, 0
      %p288 = por %p286, %p287
      %p289 = scmp.ne.s32.totalorder %s278, %s281
      %p290 = scmp.eq.s32.totalorder %s32, 1
      %p291 = por %p289, %p290
      %p292 = scmp.ne.s32.totalorder %s281, %s282
      %p293 = scmp.eq.s32.totalorder %s32, 0
      %p294 = por %p292, %p293
      %p295 = scmp.ne.s32.totalorder %s281, %s282
      %p296 = scmp.eq.s32.totalorder %s33, 1
      %p297 = por %p295, %p296
      %p299 = scmp.ne.s32.totalorder %s282, %s298
      %p300 = scmp.eq.s32.totalorder %s33, 0
      %p301 = por %p299, %p300
      %p302 = scmp.le.s32.totalorder 1, %s27
      %p303 = scmp.lt.s32.totalorder %s27, 3
      %p304 = pnand %p302, %p303
      %p305 = pneg %p304
      // Predicated region
      $region9: #{tpu_custom_call.1} parent=5 // pred_check
        _
      $region10: #{tpu_custom_call.1} parent=5 // pred_check_branch
        %307 = sbr.rel (%p304) target = $region12
      $region11: #{tpu_custom_call.1} parent=5 // pred_region
        %s308 = ssub.s32 %s27, 1
        // Predicated region
        $region13: #{tpu_custom_call.1} parent=11 // pred_check
          %p309 = pneg %p74
        $region14: #{tpu_custom_call.1} parent=11 // pred_check_branch
          %311 = sbr.rel (%p309) target = $region16
        $region15: #{tpu_custom_call.1} parent=11 // pred_region
          %s313 = ssub.s32 4096, 4096
          %314 = vsyncadd [#allocation3], %s313
          %s315 = sshll.u32 [#allocation2], 4
          %s316 = int_to_ptr.vmem [resolvable:$true] %s315
          %321 = dma.hbm_to_vmem [thread:$0]  %s1, 4096, %s316, [#allocation3], 128, 128, 8
        $region16: #{tpu_custom_call.1} parent=11 // pred_fallthru
          _
        // Predicated region
        $region17: #{tpu_custom_call.1} parent=11 // pred_check
          %p322 = pneg %p95
        $region18: #{tpu_custom_call.1} parent=11 // pred_check_branch
          %324 = sbr.rel (%p322) target = $region20
        $region19: #{tpu_custom_call.1} parent=11 // pred_region
          %s326 = ssub.s32 6144, 6144
          %327 = vsyncadd [#allocation6], %s326
          %s328 = sshll.u32 [#allocation5], 4
          %s329 = int_to_ptr.vmem [resolvable:$true] %s328
          %334 = dma.hbm_to_vmem [thread:$0]  %s2, 6144, %s329, [#allocation6], 128, 128, 8
        $region20: #{tpu_custom_call.1} parent=11 // pred_fallthru
          _
        // Predicated region
        $region21: #{tpu_custom_call.1} parent=11 // pred_check
          %p335 = pneg %p116
        $region22: #{tpu_custom_call.1} parent=11 // pred_check_branch
          %337 = sbr.rel (%p335) target = $region24
        $region23: #{tpu_custom_call.1} parent=11 // pred_region
          _
        $region24: #{tpu_custom_call.1} parent=11 // pred_fallthru
          _
        // Predicated region
        $region25: #{tpu_custom_call.1} parent=11 // pred_check
          %p338 = pneg %p137
        $region26: #{tpu_custom_call.1} parent=11 // pred_check_branch
          %340 = sbr.rel (%p338) target = $region28
        $region27: #{tpu_custom_call.1} parent=11 // pred_region
          %s342 = ssub.s32 12288, 12288
          %343 = vsyncadd [#allocation6], %s342
          %s344 = sshll.u32 [#allocation7], 4
          %s345 = int_to_ptr.vmem [resolvable:$true] %s344
          %350 = dma.hbm_to_vmem [thread:$0]  %s4, 12288, %s345, [#allocation6], 128, 128, 8
        $region28: #{tpu_custom_call.1} parent=11 // pred_fallthru
          _
        // Predicated region
        $region29: #{tpu_custom_call.1} parent=11 // pred_check
          %p351 = pneg %p158
        $region30: #{tpu_custom_call.1} parent=11 // pred_check_branch
          %353 = sbr.rel (%p351) target = $region32
        $region31: #{tpu_custom_call.1} parent=11 // pred_region
          _
        $region32: #{tpu_custom_call.1} parent=11 // pred_fallthru
          _
        // Predicated region
        $region33: #{tpu_custom_call.1} parent=11 // pred_check
          %p354 = pneg %p179
        $region34: #{tpu_custom_call.1} parent=11 // pred_check_branch
          %356 = sbr.rel (%p354) target = $region36
        $region35: #{tpu_custom_call.1} parent=11 // pred_region
          %s358 = ssub.s32 12288, 12288
          %359 = vsyncadd [#allocation9], %s358
          %s360 = sshll.u32 [#allocation8], 4
          %s361 = int_to_ptr.vmem [resolvable:$true] %s360
          %366 = dma.hbm_to_vmem [thread:$0]  %s6, 12288, %s361, [#allocation9], 128, 128, 8
        $region36: #{tpu_custom_call.1} parent=11 // pred_fallthru
          _
        // Predicated region
        $region37: #{tpu_custom_call.1} parent=11 // pred_check
          %p367 = pneg %p200
        $region38: #{tpu_custom_call.1} parent=11 // pred_check_branch
          %369 = sbr.rel (%p367) target = $region40
        $region39: #{tpu_custom_call.1} parent=11 // pred_region
          _
        $region40: #{tpu_custom_call.1} parent=11 // pred_fallthru
          _
        // Predicated region
        $region41: #{tpu_custom_call.1} parent=11 // pred_check
          %p370 = pneg %p221
        $region42: #{tpu_custom_call.1} parent=11 // pred_check_branch
          %372 = sbr.rel (%p370) target = $region44
        $region43: #{tpu_custom_call.1} parent=11 // pred_region
          %s374 = ssub.s32 2048, 2048
          %375 = vsyncadd [#allocation9], %s374
          %s376 = sshll.u32 [#allocation10], 4
          %s377 = int_to_ptr.vmem [resolvable:$true] %s376
          %382 = dma.hbm_to_vmem [thread:$0]  %s8, 2048, %s377, [#allocation9], 128, 128, 8
        $region44: #{tpu_custom_call.1} parent=11 // pred_fallthru
          _
        // Predicated region
        $region45: #{tpu_custom_call.1} parent=11 // pred_check
          %p383 = pneg %p242
        $region46: #{tpu_custom_call.1} parent=11 // pred_check_branch
          %385 = sbr.rel (%p383) target = $region48
        $region47: #{tpu_custom_call.1} parent=11 // pred_region
          _
        $region48: #{tpu_custom_call.1} parent=11 // pred_fallthru
          _
      $region12: #{tpu_custom_call.1} parent=5 // pred_fallthru
        _
      %p386 = scmp.lt.s32.totalorder %s27, 2
      // Predicated region
      $region49: #{tpu_custom_call.1} parent=5 // pred_check
        %p387 = pneg %p386
      $region50: #{tpu_custom_call.1} parent=5 // pred_check_branch
        %389 = sbr.rel (%p387) target = $region52
      $region51: #{tpu_custom_call.1} parent=5 // pred_region
        // Predicated region
        $region53: #{tpu_custom_call.1} parent=51 // pred_check
          %p390 = pneg %p47
        $region54: #{tpu_custom_call.1} parent=51 // pred_check_branch
          %392 = sbr.rel (%p390) target = $region56
        $region55: #{tpu_custom_call.1} parent=51 // pred_region
          %p393 = scmp.lt.s32.totalorder %s27, 1
          %s394 = scalar_select %p393, %s27, 1
          %s395 = smul.addr %s394, 4
          %s396 = smul.addr %s395, 8
          %s397 = scalar_lea.vmem %s0, %s396
        $region56: #{tpu_custom_call.1} parent=51 // pred_fallthru
          _
      $region52: #{tpu_custom_call.1} parent=5 // pred_fallthru
        _
      %p398 = scmp.le.s32.totalorder 1, %s27
      %p399 = scmp.lt.s32.totalorder %s27, 3
      %p400 = pnand %p398, %p399
      %p401 = pneg %p400
      // Predicated region
      $region57: #{tpu_custom_call.1} parent=5 // pred_check
        _
      $region58: #{tpu_custom_call.1} parent=5 // pred_check_branch
        %403 = sbr.rel (%p400) target = $region60
      $region59: #{tpu_custom_call.1} parent=5 // pred_region
        %s404 = ssub.s32 %s27, 1
        // Predicated region
        $region61: #{tpu_custom_call.1} parent=59 // pred_check
          %p405 = pneg %p74
        $region62: #{tpu_custom_call.1} parent=59 // pred_check_branch
          %407 = sbr.rel (%p405) target = $region64
        $region63: #{tpu_custom_call.1} parent=59 // pred_region
          %408 = dma.done [#allocation3], 4096
        $region64: #{tpu_custom_call.1} parent=59 // pred_fallthru
          _
        // Predicated region
        $region65: #{tpu_custom_call.1} parent=59 // pred_check
          %p409 = pneg %p95
        $region66: #{tpu_custom_call.1} parent=59 // pred_check_branch
          %411 = sbr.rel (%p409) target = $region68
        $region67: #{tpu_custom_call.1} parent=59 // pred_region
          %412 = dma.done [#allocation6], 6144
        $region68: #{tpu_custom_call.1} parent=59 // pred_fallthru
          _
        // Predicated region
        $region69: #{tpu_custom_call.1} parent=59 // pred_check
          %p413 = pneg %p137
        $region70: #{tpu_custom_call.1} parent=59 // pred_check_branch
          %415 = sbr.rel (%p413) target = $region72
        $region71: #{tpu_custom_call.1} parent=59 // pred_region
          %416 = dma.done [#allocation6], 12288
        $region72: #{tpu_custom_call.1} parent=59 // pred_fallthru
          _
        // Predicated region
        $region73: #{tpu_custom_call.1} parent=59 // pred_check
          %p417 = pneg %p179
        $region74: #{tpu_custom_call.1} parent=59 // pred_check_branch
          %419 = sbr.rel (%p417) target = $region76
        $region75: #{tpu_custom_call.1} parent=59 // pred_region
          %420 = dma.done [#allocation9], 12288
        $region76: #{tpu_custom_call.1} parent=59 // pred_fallthru
          _
        // Predicated region
        $region77: #{tpu_custom_call.1} parent=59 // pred_check
          %p421 = pneg %p221
        $region78: #{tpu_custom_call.1} parent=59 // pred_check_branch
          %423 = sbr.rel (%p421) target = $region80
        $region79: #{tpu_custom_call.1} parent=59 // pred_region
          %424 = dma.done [#allocation9], 2048
        $region80: #{tpu_custom_call.1} parent=59 // pred_fallthru
          _
        %p425 = scmp.lt.s32.totalorder %s32, 1
        %s426 = scalar_select %p425, %s32, 1
        %s427 = smul.addr %s426, 4
        %s428 = smul.addr %s427, 8
        %s429 = scalar_lea.vmem %s0, %s428
        %p430 = pneg %p53
        %p431 = pneg %p50
        %p432 = pneg %p74
        %p433 = pneg %p71
        %p434 = pneg %p95
        %p435 = pneg %p92
        %p436 = pneg %p116
        %p437 = pneg %p113
        %p438 = pneg %p137
        %p439 = pneg %p134
        %p440 = pneg %p158
        %p441 = pneg %p155
        %p442 = pneg %p179
        %p443 = pneg %p176
        %p444 = pneg %p200
        %p445 = pneg %p197
        %p446 = pneg %p221
        %p447 = pneg %p218
        %p448 = pneg %p242
        %p449 = pneg %p239
        %p450 = pneg %p268
        %p451 = pneg %p265
        %s452 = sand.u32 %s255, 1
        %s453 = scalar_lea.sflag [#allocation4], %s452
        %s454 = sand.u32 %s255, 1
        %s455 = smul.addr %s454, 2
        %s456 = scalar_lea.vmem [#allocation11], %s455
        %p457 = pneg %p294
        %p458 = pneg %p291
        %s459 = sand.u32 %s281, 1
        %s460 = scalar_lea.sflag [#allocation13], %s459
        %s461 = sand.u32 %s281, 1
        %s462 = smul.addr %s461, 2
        %s463 = scalar_lea.vmem [#allocation12], %s462
        %p464 = scmp.lt.s32.totalorder %s32, 1
        %s465 = scalar_select %p464, %s32, 1
        %s466 = smul.addr %s465, 4
        %s467 = smul.addr %s466, 8
        %s468 = scalar_lea.vmem %s0, %s467
        %v469 = vld [vmem:[%s468] sm:$0xff]
        %v470 = vld [vmem:[%s468 + $0x8] sm:$0xff]
        %v471 = vld [vmem:[%s468 + $0x10] sm:$0xff]
        %v472 = vld [vmem:[%s468 + $0x18] sm:$0xff]
        %v473 = vlaneseq
        %v474 = vand.u32 %v473, 127
        %v475 = vadd.s32 %v474, 128
        %476 = vset.pattern.permute.xlu0 0
        %477 = vperm.xlu0 %476, %v469
        %v478 = vpop.permute.xlu0 %477
        %479 = vset.pattern.permute.xlu0 0
        %480 = vperm.xlu0 %479, %v470
        %v481 = vpop.permute.xlu0 %480
        %482 = vset.pattern.permute.xlu0 0
        %483 = vperm.xlu0 %482, %v471
        %v484 = vpop.permute.xlu0 %483
        %485 = vset.pattern.permute.xlu0 0
        %486 = vperm.xlu0 %485, %v472
        %v487 = vpop.permute.xlu0 %486
        %vm488 = vcmp.eq.s32.totalorder %v478, %v474
        %vm489 = vcmp.eq.s32.totalorder %v478, %v475
        %vm490 = vcmp.eq.s32.totalorder %v481, %v474
        %vm491 = vcmp.eq.s32.totalorder %v481, %v475
        %vm492 = vcmp.eq.s32.totalorder %v484, %v474
        %vm493 = vcmp.eq.s32.totalorder %v484, %v475
        %vm494 = vcmp.eq.s32.totalorder %v487, %v474
        %vm495 = vcmp.eq.s32.totalorder %v487, %v475
        %v496 = vsel %vm488, 1, 0
        %v497 = vsel %vm489, 1, 0
        %v498 = vsel %vm490, 1, 0
        %v499 = vsel %vm491, 1, 0
        %v500 = vsel %vm492, 1, 0
        %v501 = vsel %vm493, 1, 0
        %v502 = vsel %vm494, 1, 0
        %v503 = vsel %vm495, 1, 0
        %v504 = vcvt.s32.f32 %v496
        %v505 = vcvt.s32.f32 %v497
        %v506 = vcvt.s32.f32 %v498
        %v507 = vcvt.s32.f32 %v499
        %v508 = vcvt.s32.f32 %v500
        %v509 = vcvt.s32.f32 %v501
        %v510 = vcvt.s32.f32 %v502
        %v511 = vcvt.s32.f32 %v503
        %v512 = vld [vmem:[#allocation2] sm:$0xff]
        %v513 = vld [vmem:[#allocation2 + $0x8] sm:$0xff]
        %v514 = vld [vmem:[#allocation2 + $0x10] sm:$0xff]
        %v515 = vld [vmem:[#allocation2 + $0x18] sm:$0xff]
        %v516 = vld [vmem:[#allocation2 + $0x20] sm:$0xff]
        %v517 = vld [vmem:[#allocation2 + $0x28] sm:$0xff]
        %v518 = vld [vmem:[#allocation2 + $0x30] sm:$0xff]
        %v519 = vld [vmem:[#allocation2 + $0x38] sm:$0xff]
        %v520 = vld [vmem:[#allocation2 + $0x40] sm:$0xff]
        %v521 = vld [vmem:[#allocation2 + $0x48] sm:$0xff]
        %v522 = vld [vmem:[#allocation2 + $0x50] sm:$0xff]
        %v523 = vld [vmem:[#allocation2 + $0x58] sm:$0xff]
        %v524 = vld [vmem:[#allocation2 + $0x60] sm:$0xff]
        %v525 = vld [vmem:[#allocation2 + $0x68] sm:$0xff]
        %v526 = vld [vmem:[#allocation2 + $0x70] sm:$0xff]
        %v527 = vld [vmem:[#allocation2 + $0x78] sm:$0xff]
        %v528 = vld [vmem:[#allocation2 + $0x80] sm:$0xff]
        %v529 = vld [vmem:[#allocation2 + $0x88] sm:$0xff]
        %v530 = vld [vmem:[#allocation2 + $0x90] sm:$0xff]
        %v531 = vld [vmem:[#allocation2 + $0x98] sm:$0xff]
        %v532 = vld [vmem:[#allocation2 + $0xa0] sm:$0xff]
        %v533 = vld [vmem:[#allocation2 + $0xa8] sm:$0xff]
        %v534 = vld [vmem:[#allocation2 + $0xb0] sm:$0xff]
        %v535 = vld [vmem:[#allocation2 + $0xb8] sm:$0xff]
        %v536 = vld [vmem:[#allocation2 + $0xc0] sm:$0xff]
        %v537 = vld [vmem:[#allocation2 + $0xc8] sm:$0xff]
        %v538 = vld [vmem:[#allocation2 + $0xd0] sm:$0xff]
        %v539 = vld [vmem:[#allocation2 + $0xd8] sm:$0xff]
        %v540 = vld [vmem:[#allocation2 + $0xe0] sm:$0xff]
        %v541 = vld [vmem:[#allocation2 + $0xe8] sm:$0xff]
        %v542 = vld [vmem:[#allocation2 + $0xf0] sm:$0xff]
        %v543 = vld [vmem:[#allocation2 + $0xf8] sm:$0xff]
        %544 = vmatprep.subr.mxu0 0.0
        %545 = vmatpush1.msra.mxu0 %v527
        %546 = vmatprep.subr.mxu0 0.0
        %547 = vmatpush1.msra.mxu0 %v526
        %548 = vmatprep.subr.mxu0 0.0
        %549 = vmatpush1.msra.mxu0 %v525
        %550 = vmatprep.subr.mxu0 0.0
        %551 = vmatpush1.msra.mxu0 %v524
        %552 = vmatprep.subr.mxu0 0.0
        %553 = vmatpush1.msra.mxu0 %v523
        %554 = vmatprep.subr.mxu0 0.0
        %555 = vmatpush1.msra.mxu0 %v522
        %556 = vmatprep.subr.mxu0 0.0
        %557 = vmatpush1.msra.mxu0 %v521
        %558 = vmatprep.subr.mxu0 0.0
        %559 = vmatpush1.msra.mxu0 %v520
        %560 = vmatprep.subr.mxu0 0.0
        %561 = vmatpush1.msra.mxu0 %v519
        %562 = vmatprep.subr.mxu0 0.0
        %563 = vmatpush1.msra.mxu0 %v518
        %564 = vmatprep.subr.mxu0 0.0
        %565 = vmatpush1.msra.mxu0 %v517
        %566 = vmatprep.subr.mxu0 0.0
        %567 = vmatpush1.msra.mxu0 %v516
        %568 = vmatprep.subr.mxu0 0.0
        %569 = vmatpush1.msra.mxu0 %v515
        %570 = vmatprep.subr.mxu0 0.0
        %571 = vmatpush1.msra.mxu0 %v514
        %572 = vmatprep.subr.mxu0 0.0
        %573 = vmatpush1.msra.mxu0 %v513
        %574 = vmatprep.subr.mxu0 0.0
        %575 = vmatpush1.msra.mxu0 %v512
        %576 = vmatprep.subr.mxu0 0.0
        %577 = vmatpush2.msra.mxu0 %v543
        %578 = vmatprep.subr.mxu0 0.0
        %579 = vmatpush2.msra.mxu0 %v542
        %580 = vmatprep.subr.mxu0 0.0
        %581 = vmatpush2.msra.mxu0 %v541
        %582 = vmatprep.subr.mxu0 0.0
        %583 = vmatpush2.msra.mxu0 %v540
        %584 = vmatprep.subr.mxu0 0.0
        %585 = vmatpush2.msra.mxu0 %v539
        %586 = vmatprep.subr.mxu0 0.0
        %587 = vmatpush2.msra.mxu0 %v538
        %588 = vmatprep.subr.mxu0 0.0
        %589 = vmatpush2.msra.mxu0 %v537
        %590 = vmatprep.subr.mxu0 0.0
        %591 = vmatpush2.msra.mxu0 %v536
        %592 = vmatprep.subr.mxu0 0.0
        %593 = vmatpush2.msra.mxu0 %v535
        %594 = vmatprep.subr.mxu0 0.0
        %595 = vmatpush2.msra.mxu0 %v534
        %596 = vmatprep.subr.mxu0 0.0
        %597 = vmatpush2.msra.mxu0 %v533
        %598 = vmatprep.subr.mxu0 0.0
        %599 = vmatpush2.msra.mxu0 %v532
        %600 = vmatprep.subr.mxu0 0.0
        %601 = vmatpush2.msra.mxu0 %v531
        %602 = vmatprep.subr.mxu0 0.0
        %603 = vmatpush2.msra.mxu0 %v530
        %604 = vmatprep.subr.mxu0 0.0
        %605 = vmatpush2.msra.mxu0 %v529
        %606 = vmatprep.subr.mxu0 0.0
        %607 = vmatpush2.msra.mxu0 %v528
        %608 = vmatprep.mubr.f32.mxu0 %v505
        %609 = vmatmul.mubr.f32.gmra.mxu0 %v504
        %v610 = vpop.f32.mrf.mxu0
        %v611 = vadd.f32 0.0, %v610
        %v612 = vpop.f32.mrf.mxu0
        %613 = vmatprep.mubr.f32.mxu0 %v507
        %614 = vmatmul.mubr.f32.gmra.mxu0 %v506
        %v615 = vpop.f32.mrf.mxu0
        %v616 = vadd.f32 0.0, %v615
        %v617 = vpop.f32.mrf.mxu0
        %618 = vmatprep.mubr.f32.mxu0 %v509
        %619 = vmatmul.mubr.f32.gmra.mxu0 %v508
        %v620 = vpop.f32.mrf.mxu0
        %v621 = vadd.f32 0.0, %v620
        %v622 = vpop.f32.mrf.mxu0
        %623 = vmatprep.mubr.f32.mxu0 %v511
        %624 = vmatmul.mubr.f32.gmra.mxu0 %v510
        %v625 = vpop.f32.mrf.mxu0
        %v626 = vadd.f32 0.0, %v625
        %v627 = vpop.f32.mrf.mxu0
        %628 = vdwg.mxu0
        %v629 = vlaneseq
        %v630 = vshrl.u32 %v629, 7
        %v631 = vadd.s32 %v630, 8
        %v632 = vadd.s32 %v630, 16
        %v633 = vadd.s32 %v630, 24
        %vm634 = vcmp.lt.s32.totalorder %v630, 0
        %v635 = vsub.s32 0, %v630
        %v636 = vsel %vm634, %v635, %v630
        %v637 = vshrl.u32 %v636, 4
        %v638 = vand.u32 %v636, 15
        %v639 = vsub.s32 0, %v638
        %v640 = vsel %vm634, %v639, %v638
        %vm641 = vcmp.lt.s32.totalorder %v631, 0
        %v642 = vsub.s32 0, %v631
        %v643 = vsel %vm641, %v642, %v631
        %v644 = vshrl.u32 %v643, 4
        %v645 = vand.u32 %v643, 15
        %v646 = vsub.s32 0, %v645
        %v647 = vsel %vm641, %v646, %v645
        %vm648 = vcmp.lt.s32.totalorder %v632, 0
        %v649 = vsub.s32 0, %v632
        %v650 = vsel %vm648, %v649, %v632
        %v651 = vshrl.u32 %v650, 4
        %v652 = vand.u32 %v650, 15
        %v653 = vsub.s32 0, %v652
        %v654 = vsel %vm648, %v653, %v652
        %vm655 = vcmp.lt.s32.totalorder %v633, 0
        %v656 = vsub.s32 0, %v633
        %v657 = vsel %vm655, %v656, %v633
        %v658 = vshrl.u32 %v657, 4
        %v659 = vand.u32 %v657, 15
        %v660 = vsub.s32 0, %v659
        %v661 = vsel %vm655, %v660, %v659
        %vm662 = vcmp.ne.s32.totalorder %v640, 0
        %vm663 = vcmp.ne.s32.totalorder %v647, 0
        %vm664 = vcmp.ne.s32.totalorder %v654, 0
        %vm665 = vcmp.ne.s32.totalorder %v661, 0
        %vm666 = vcmp.lt.s32.totalorder %v640, 0
        %vm667 = vcmp.lt.s32.totalorder %v647, 0
        %vm668 = vcmp.lt.s32.totalorder %v654, 0
        %vm669 = vcmp.lt.s32.totalorder %v661, 0
        %vm670 = vmand %vm666, %vm662
        %vm671 = vmand %vm667, %vm663
        %vm672 = vmand %vm668, %vm664
        %vm673 = vmand %vm669, %vm665
        %v674 = vadd.s32 %v640, 16
        %v675 = vadd.s32 %v647, 16
        %v676 = vadd.s32 %v654, 16
        %v677 = vadd.s32 %v661, 16
        %v678 = vsel %vm670, %v674, %v640
        %v679 = vsel %vm671, %v675, %v647
        %v680 = vsel %vm672, %v676, %v654
        %v681 = vsel %vm673, %v677, %v661
        %vm682 = vcmp.ne.s32.totalorder %v678, 0
        %vm683 = vcmp.ne.s32.totalorder %v679, 0
        %vm684 = vcmp.ne.s32.totalorder %v680, 0
        %vm685 = vcmp.ne.s32.totalorder %v681, 0
        %v686 = vsel %vm682, 1, 0
        %v687 = vsel %vm683, 1, 0
        %v688 = vsel %vm684, 1, 0
        %v689 = vsel %vm685, 1, 0
        %v690 = vcvt.s32.f32 %v686
        %v691 = vcvt.s32.f32 %v687
        %v692 = vcvt.s32.f32 %v688
        %v693 = vcvt.s32.f32 %v689
        %vm694 = vcmp.ne.s32.totalorder %v678, 15
        %vm695 = vcmp.ne.s32.totalorder %v679, 15
        %vm696 = vcmp.ne.s32.totalorder %v680, 15
        %vm697 = vcmp.ne.s32.totalorder %v681, 15
        %v698 = vsel %vm694, 1, 0
        %v699 = vsel %vm695, 1, 0
        %v700 = vsel %vm696, 1, 0
        %v701 = vsel %vm697, 1, 0
        %v702 = vcvt.s32.f32 %v698
        %v703 = vcvt.s32.f32 %v699
        %v704 = vcvt.s32.f32 %v700
        %v705 = vcvt.s32.f32 %v701
        %v706 = vld [vmem:[#allocation5] sm:$0xff]
        %v707 = vld [vmem:[#allocation5 + $0x8] sm:$0xff]
        %v708 = vld [vmem:[#allocation5 + $0x10] sm:$0xff]
        %v709 = vld [vmem:[#allocation5 + $0x18] sm:$0xff]
        %v710 = vld [vmem:[#allocation5 + $0x20] sm:$0xff]
        %v711 = vld [vmem:[#allocation5 + $0x28] sm:$0xff]
        %v712 = vld [vmem:[#allocation5 + $0x30] sm:$0xff]
        %v713 = vld [vmem:[#allocation5 + $0x38] sm:$0xff]
        %v714 = vld [vmem:[#allocation5 + $0x40] sm:$0xff]
        %v715 = vld [vmem:[#allocation5 + $0x48] sm:$0xff]
        %v716 = vld [vmem:[#allocation5 + $0x50] sm:$0xff]
        %v717 = vld [vmem:[#allocation5 + $0x58] sm:$0xff]
        %v718 = vld [vmem:[#allocation5 + $0x60] sm:$0xff]
        %v719 = vld [vmem:[#allocation5 + $0x68] sm:$0xff]
        %v720 = vld [vmem:[#allocation5 + $0x70] sm:$0xff]
        %v721 = vld [vmem:[#allocation5 + $0x78] sm:$0xff]
        %s722 = scalar_lea.vmem [#allocation5], 128
        %v723 = vld [vmem:[%s722] sm:$0xff]
        %v724 = vld [vmem:[%s722 + $0x8] sm:$0xff]
        %v725 = vld [vmem:[%s722 + $0x10] sm:$0xff]
        %v726 = vld [vmem:[%s722 + $0x18] sm:$0xff]
        %v727 = vld [vmem:[%s722 + $0x20] sm:$0xff]
        %v728 = vld [vmem:[%s722 + $0x28] sm:$0xff]
        %v729 = vld [vmem:[%s722 + $0x30] sm:$0xff]
        %v730 = vld [vmem:[%s722 + $0x38] sm:$0xff]
        %v731 = vld [vmem:[%s722 + $0x40] sm:$0xff]
        %v732 = vld [vmem:[%s722 + $0x48] sm:$0xff]
        %v733 = vld [vmem:[%s722 + $0x50] sm:$0xff]
        %v734 = vld [vmem:[%s722 + $0x58] sm:$0xff]
        %v735 = vld [vmem:[%s722 + $0x60] sm:$0xff]
        %v736 = vld [vmem:[%s722 + $0x68] sm:$0xff]
        %v737 = vld [vmem:[%s722 + $0x70] sm:$0xff]
        %v738 = vld [vmem:[%s722 + $0x78] sm:$0xff]
        %s739 = scalar_lea.vmem [#allocation5], 256
        %v740 = vld [vmem:[%s739] sm:$0xff]
        %v741 = vld [vmem:[%s739 + $0x8] sm:$0xff]
        %v742 = vld [vmem:[%s739 + $0x10] sm:$0xff]
        %v743 = vld [vmem:[%s739 + $0x18] sm:$0xff]
        %v744 = vld [vmem:[%s739 + $0x20] sm:$0xff]
        %v745 = vld [vmem:[%s739 + $0x28] sm:$0xff]
        %v746 = vld [vmem:[%s739 + $0x30] sm:$0xff]
        %v747 = vld [vmem:[%s739 + $0x38] sm:$0xff]
        %v748 = vld [vmem:[%s739 + $0x40] sm:$0xff]
        %v749 = vld [vmem:[%s739 + $0x48] sm:$0xff]
        %v750 = vld [vmem:[%s739 + $0x50] sm:$0xff]
        %v751 = vld [vmem:[%s739 + $0x58] sm:$0xff]
        %v752 = vld [vmem:[%s739 + $0x60] sm:$0xff]
        %v753 = vld [vmem:[%s739 + $0x68] sm:$0xff]
        %v754 = vld [vmem:[%s739 + $0x70] sm:$0xff]
        %v755 = vld [vmem:[%s739 + $0x78] sm:$0xff]
        %v756 = vld [vmem:[%s3] sm:$0x1]
        %v757 = vrot.slane %v611, 7
        %v758 = vrot.slane %v616, 7
        %v759 = vrot.slane %v621, 7
        %v760 = vrot.slane %v626, 7
        %vm761 = vcmp.lt.s32.totalorder %v630, 1
        %v762 = vsel %vm761, %v759, %v760
        %v763 = vsel %vm761, %v758, %v759
        %v764 = vsel %vm761, %v757, %v758
        %v765 = vsel %vm761, %v760, %v757
        %v766 = vmul.f32 %v765, %v690
        %v767 = vmul.f32 %v764, %v691
        %v768 = vmul.f32 %v763, %v692
        %v769 = vmul.f32 %v762, %v693
        %v770 = vrot.slane %v611, 1
        %v771 = vrot.slane %v616, 1
        %v772 = vrot.slane %v621, 1
        %v773 = vrot.slane %v626, 1
        %vm774 = vcmp.lt.s32.totalorder %v630, 7
        %v775 = vsel %vm774, %v772, %v773
        %v776 = vsel %vm774, %v771, %v772
        %v777 = vsel %vm774, %v770, %v771
        %v778 = vsel %vm774, %v773, %v770
        %v779 = vmul.f32 %v777, %v702
        %v780 = vmul.f32 %v776, %v703
        %v781 = vmul.f32 %v775, %v704
        %v782 = vmul.f32 %v778, %v705
        %783 = vmatprep.subr.mxu0 0.0
        %784 = vmatpush1.msra.mxu0 %v721
        %785 = vmatprep.subr.mxu0 0.0
        %786 = vmatpush1.msra.mxu0 %v720
        %787 = vmatprep.subr.mxu0 0.0
        %788 = vmatpush1.msra.mxu0 %v719
        %789 = vmatprep.subr.mxu0 0.0
        %790 = vmatpush1.msra.mxu0 %v718
        %791 = vmatprep.subr.mxu0 0.0
        %792 = vmatpush1.msra.mxu0 %v717
        %793 = vmatprep.subr.mxu0 0.0
        %794 = vmatpush1.msra.mxu0 %v716
        %795 = vmatprep.subr.mxu0 0.0
        %796 = vmatpush1.msra.mxu0 %v715
        %797 = vmatprep.subr.mxu0 0.0
        %798 = vmatpush1.msra.mxu0 %v714
        %799 = vmatprep.subr.mxu0 0.0
        %800 = vmatpush1.msra.mxu0 %v713
        %801 = vmatprep.subr.mxu0 0.0
        %802 = vmatpush1.msra.mxu0 %v712
        %803 = vmatprep.subr.mxu0 0.0
        %804 = vmatpush1.msra.mxu0 %v711
        %805 = vmatprep.subr.mxu0 0.0
        %806 = vmatpush1.msra.mxu0 %v710
        %807 = vmatprep.subr.mxu0 0.0
        %808 = vmatpush1.msra.mxu0 %v709
        %809 = vmatprep.subr.mxu0 0.0
        %810 = vmatpush1.msra.mxu0 %v708
        %811 = vmatprep.subr.mxu0 0.0
        %812 = vmatpush1.msra.mxu0 %v707
        %813 = vmatprep.subr.mxu0 0.0
        %814 = vmatpush1.msra.mxu0 %v706
        %815 = vmatprep.subr.mxu0 0.0
        %816 = vmatpush2.msra.mxu0 0.0
        %817 = vmatprep.subr.mxu0 0.0
        %818 = vmatpush2.msra.mxu0 0.0
        %819 = vmatprep.subr.mxu0 0.0
        %820 = vmatpush2.msra.mxu0 0.0
        %821 = vmatprep.subr.mxu0 0.0
        %822 = vmatpush2.msra.mxu0 0.0
        %823 = vmatprep.subr.mxu0 0.0
        %824 = vmatpush2.msra.mxu0 0.0
        %825 = vmatprep.subr.mxu0 0.0
        %826 = vmatpush2.msra.mxu0 0.0
        %827 = vmatprep.subr.mxu0 0.0
        %828 = vmatpush2.msra.mxu0 0.0
        %829 = vmatprep.subr.mxu0 0.0
        %830 = vmatpush2.msra.mxu0 0.0
        %831 = vmatprep.subr.mxu0 0.0
        %832 = vmatpush2.msra.mxu0 0.0
        %833 = vmatprep.subr.mxu0 0.0
        %834 = vmatpush2.msra.mxu0 0.0
        %835 = vmatprep.subr.mxu0 0.0
        %836 = vmatpush2.msra.mxu0 0.0
        %837 = vmatprep.subr.mxu0 0.0
        %838 = vmatpush2.msra.mxu0 0.0
        %839 = vmatprep.subr.mxu0 0.0
        %840 = vmatpush2.msra.mxu0 0.0
        %841 = vmatprep.subr.mxu0 0.0
        %842 = vmatpush2.msra.mxu0 0.0
        %843 = vmatprep.subr.mxu0 0.0
        %844 = vmatpush2.msra.mxu0 0.0
        %845 = vmatprep.subr.mxu0 0.0
        %846 = vmatpush2.msra.mxu0 0.0
        %847 = vmatprep.mubr.f32.mxu0 0.0
        %848 = vmatmul.mubr.f32.gmra.mxu0 %v766
        %v849 = vpop.f32.mrf.mxu0
        %v850 = vadd.f32 0.0, %v849
        %v851 = vpop.f32.mrf.mxu0
        %852 = vmatprep.mubr.f32.mxu0 0.0
        %853 = vmatmul.mubr.f32.gmra.mxu0 %v767
        %v854 = vpop.f32.mrf.mxu0
        %v855 = vadd.f32 0.0, %v854
        %v856 = vpop.f32.mrf.mxu0
        %857 = vmatprep.mubr.f32.mxu0 0.0
        %858 = vmatmul.mubr.f32.gmra.mxu0 %v768
        %v859 = vpop.f32.mrf.mxu0
        %v860 = vadd.f32 0.0, %v859
        %v861 = vpop.f32.mrf.mxu0
        %862 = vmatprep.mubr.f32.mxu0 0.0
        %863 = vmatmul.mubr.f32.gmra.mxu0 %v769
        %v864 = vpop.f32.mrf.mxu0
        %v865 = vadd.f32 0.0, %v864
        %v866 = vpop.f32.mrf.mxu0
        %867 = vdwg.mxu0
        %868 = vmatprep.subr.mxu0 0.0
        %869 = vmatpush1.msra.mxu0 %v738
        %870 = vmatprep.subr.mxu0 0.0
        %871 = vmatpush1.msra.mxu0 %v737
        %872 = vmatprep.subr.mxu0 0.0
        %873 = vmatpush1.msra.mxu0 %v736
        %874 = vmatprep.subr.mxu0 0.0
        %875 = vmatpush1.msra.mxu0 %v735
        %876 = vmatprep.subr.mxu0 0.0
        %877 = vmatpush1.msra.mxu0 %v734
        %878 = vmatprep.subr.mxu0 0.0
        %879 = vmatpush1.msra.mxu0 %v733
        %880 = vmatprep.subr.mxu0 0.0
        %881 = vmatpush1.msra.mxu0 %v732
        %882 = vmatprep.subr.mxu0 0.0
        %883 = vmatpush1.msra.mxu0 %v731
        %884 = vmatprep.subr.mxu0 0.0
        %885 = vmatpush1.msra.mxu0 %v730
        %886 = vmatprep.subr.mxu0 0.0
        %887 = vmatpush1.msra.mxu0 %v729
        %888 = vmatprep.subr.mxu0 0.0
        %889 = vmatpush1.msra.mxu0 %v728
        %890 = vmatprep.subr.mxu0 0.0
        %891 = vmatpush1.msra.mxu0 %v727
        %892 = vmatprep.subr.mxu0 0.0
        %893 = vmatpush1.msra.mxu0 %v726
        %894 = vmatprep.subr.mxu0 0.0
        %895 = vmatpush1.msra.mxu0 %v725
        %896 = vmatprep.subr.mxu0 0.0
        %897 = vmatpush1.msra.mxu0 %v724
        %898 = vmatprep.subr.mxu0 0.0
        %899 = vmatpush1.msra.mxu0 %v723
        %900 = vmatprep.subr.mxu0 0.0
        %901 = vmatpush2.msra.mxu0 0.0
        %902 = vmatprep.subr.mxu0 0.0
        %903 = vmatpush2.msra.mxu0 0.0
        %904 = vmatprep.subr.mxu0 0.0
        %905 = vmatpush2.msra.mxu0 0.0
        %906 = vmatprep.subr.mxu0 0.0
        %907 = vmatpush2.msra.mxu0 0.0
        %908 = vmatprep.subr.mxu0 0.0
        %909 = vmatpush2.msra.mxu0 0.0
        %910 = vmatprep.subr.mxu0 0.0
        %911 = vmatpush2.msra.mxu0 0.0
        %912 = vmatprep.subr.mxu0 0.0
        %913 = vmatpush2.msra.mxu0 0.0
        %914 = vmatprep.subr.mxu0 0.0
        %915 = vmatpush2.msra.mxu0 0.0
        %916 = vmatprep.subr.mxu0 0.0
        %917 = vmatpush2.msra.mxu0 0.0
        %918 = vmatprep.subr.mxu0 0.0
        %919 = vmatpush2.msra.mxu0 0.0
        %920 = vmatprep.subr.mxu0 0.0
        %921 = vmatpush2.msra.mxu0 0.0
        %922 = vmatprep.subr.mxu0 0.0
        %923 = vmatpush2.msra.mxu0 0.0
        %924 = vmatprep.subr.mxu0 0.0
        %925 = vmatpush2.msra.mxu0 0.0
        %926 = vmatprep.subr.mxu0 0.0
        %927 = vmatpush2.msra.mxu0 0.0
        %928 = vmatprep.subr.mxu0 0.0
        %929 = vmatpush2.msra.mxu0 0.0
        %930 = vmatprep.subr.mxu0 0.0
        %931 = vmatpush2.msra.mxu0 0.0
        %932 = vmatprep.mubr.f32.mxu0 0.0
        %933 = vmatmul.mubr.f32.gmra.mxu0 %v611
        %v934 = vpop.f32.mrf.mxu0
        %v935 = vadd.f32 %v850, %v934
        %v936 = vpop.f32.mrf.mxu0
        %937 = vmatprep.mubr.f32.mxu0 0.0
        %938 = vmatmul.mubr.f32.gmra.mxu0 %v616
        %v939 = vpop.f32.mrf.mxu0
        %v940 = vadd.f32 %v855, %v939
        %v941 = vpop.f32.mrf.mxu0
        %942 = vmatprep.mubr.f32.mxu0 0.0
        %943 = vmatmul.mubr.f32.gmra.mxu0 %v621
        %v944 = vpop.f32.mrf.mxu0
        %v945 = vadd.f32 %v860, %v944
        %v946 = vpop.f32.mrf.mxu0
        %947 = vmatprep.mubr.f32.mxu0 0.0
        %948 = vmatmul.mubr.f32.gmra.mxu0 %v626
        %v949 = vpop.f32.mrf.mxu0
        %v950 = vadd.f32 %v865, %v949
        %v951 = vpop.f32.mrf.mxu0
        %952 = vdwg.mxu0
        %953 = vmatprep.subr.mxu0 0.0
        %954 = vmatpush1.msra.mxu0 %v755
        %955 = vmatprep.subr.mxu0 0.0
        %956 = vmatpush1.msra.mxu0 %v754
        %957 = vmatprep.subr.mxu0 0.0
        %958 = vmatpush1.msra.mxu0 %v753
        %959 = vmatprep.subr.mxu0 0.0
        %960 = vmatpush1.msra.mxu0 %v752
        %961 = vmatprep.subr.mxu0 0.0
        %962 = vmatpush1.msra.mxu0 %v751
        %963 = vmatprep.subr.mxu0 0.0
        %964 = vmatpush1.msra.mxu0 %v750
        %965 = vmatprep.subr.mxu0 0.0
        %966 = vmatpush1.msra.mxu0 %v749
        %967 = vmatprep.subr.mxu0 0.0
        %968 = vmatpush1.msra.mxu0 %v748
        %969 = vmatprep.subr.mxu0 0.0
        %970 = vmatpush1.msra.mxu0 %v747
        %971 = vmatprep.subr.mxu0 0.0
        %972 = vmatpush1.msra.mxu0 %v746
        %973 = vmatprep.subr.mxu0 0.0
        %974 = vmatpush1.msra.mxu0 %v745
        %975 = vmatprep.subr.mxu0 0.0
        %976 = vmatpush1.msra.mxu0 %v744
        %977 = vmatprep.subr.mxu0 0.0
        %978 = vmatpush1.msra.mxu0 %v743
        %979 = vmatprep.subr.mxu0 0.0
        %980 = vmatpush1.msra.mxu0 %v742
        %981 = vmatprep.subr.mxu0 0.0
        %982 = vmatpush1.msra.mxu0 %v741
        %983 = vmatprep.subr.mxu0 0.0
        %984 = vmatpush1.msra.mxu0 %v740
        %985 = vmatprep.subr.mxu0 0.0
        %986 = vmatpush2.msra.mxu0 0.0
        %987 = vmatprep.subr.mxu0 0.0
        %988 = vmatpush2.msra.mxu0 0.0
        %989 = vmatprep.subr.mxu0 0.0
        %990 = vmatpush2.msra.mxu0 0.0
        %991 = vmatprep.subr.mxu0 0.0
        %992 = vmatpush2.msra.mxu0 0.0
        %993 = vmatprep.subr.mxu0 0.0
        %994 = vmatpush2.msra.mxu0 0.0
        %995 = vmatprep.subr.mxu0 0.0
        %996 = vmatpush2.msra.mxu0 0.0
        %997 = vmatprep.subr.mxu0 0.0
        %998 = vmatpush2.msra.mxu0 0.0
        %999 = vmatprep.subr.mxu0 0.0
        %1000 = vmatpush2.msra.mxu0 0.0
        %1001 = vmatprep.subr.mxu0 0.0
        %1002 = vmatpush2.msra.mxu0 0.0
        %1003 = vmatprep.subr.mxu0 0.0
        %1004 = vmatpush2.msra.mxu0 0.0
        %1005 = vmatprep.subr.mxu0 0.0
        %1006 = vmatpush2.msra.mxu0 0.0
        %1007 = vmatprep.subr.mxu0 0.0
        %1008 = vmatpush2.msra.mxu0 0.0
        %1009 = vmatprep.subr.mxu0 0.0
        %1010 = vmatpush2.msra.mxu0 0.0
        %1011 = vmatprep.subr.mxu0 0.0
        %1012 = vmatpush2.msra.mxu0 0.0
        %1013 = vmatprep.subr.mxu0 0.0
        %1014 = vmatpush2.msra.mxu0 0.0
        %1015 = vmatprep.subr.mxu0 0.0
        %1016 = vmatpush2.msra.mxu0 0.0
        %1017 = vmatprep.mubr.f32.mxu0 0.0
        %1018 = vmatmul.mubr.f32.gmra.mxu0 %v779
        %v1019 = vpop.f32.mrf.mxu0
        %v1020 = vadd.f32 0.0, %v1019
        %v1021 = vpop.f32.mrf.mxu0
        %1022 = vmatprep.mubr.f32.mxu0 0.0
        %1023 = vmatmul.mubr.f32.gmra.mxu0 %v780
        %v1024 = vpop.f32.mrf.mxu0
        %v1025 = vadd.f32 0.0, %v1024
        %v1026 = vpop.f32.mrf.mxu0
        %1027 = vmatprep.mubr.f32.mxu0 0.0
        %1028 = vmatmul.mubr.f32.gmra.mxu0 %v781
        %v1029 = vpop.f32.mrf.mxu0
        %v1030 = vadd.f32 0.0, %v1029
        %v1031 = vpop.f32.mrf.mxu0
        %1032 = vmatprep.mubr.f32.mxu0 0.0
        %1033 = vmatmul.mubr.f32.gmra.mxu0 %v782
        %v1034 = vpop.f32.mrf.mxu0
        %v1035 = vadd.f32 0.0, %v1034
        %v1036 = vpop.f32.mrf.mxu0
        %1037 = vdwg.mxu0
        %v1038 = vadd.f32 %v935, %v1020
        %v1039 = vadd.f32 %v940, %v1025
        %v1040 = vadd.f32 %v945, %v1030
        %v1041 = vadd.f32 %v950, %v1035
        %v1043 = vlaneseq
        %v1044 = vshrl.u32 %v1043, 7
        %v1045 = vsub.s32 0, %v1044
        %v1046 = vrot.slane %v756, %v1045
        %v1048 = vadd.f32 %v1038, %v1046
        %v1049 = vadd.f32 %v1039, %v1046
        %v1050 = vadd.f32 %v1040, %v1046
        %v1051 = vadd.f32 %v1041, %v1046
        %v1052 = vmax.f32 %v1048, 0.0
        %v1053 = vmax.f32 %v1049, 0.0
        %v1054 = vmax.f32 %v1050, 0.0
        %v1055 = vmax.f32 %v1051, 0.0
        %v1056 = vld [vmem:[#allocation7] sm:$0xff]
        %v1057 = vld [vmem:[#allocation7 + $0x8] sm:$0xff]
        %v1058 = vld [vmem:[#allocation7 + $0x10] sm:$0xff]
        %v1059 = vld [vmem:[#allocation7 + $0x18] sm:$0xff]
        %v1060 = vld [vmem:[#allocation7 + $0x20] sm:$0xff]
        %v1061 = vld [vmem:[#allocation7 + $0x28] sm:$0xff]
        %v1062 = vld [vmem:[#allocation7 + $0x30] sm:$0xff]
        %v1063 = vld [vmem:[#allocation7 + $0x38] sm:$0xff]
        %v1064 = vld [vmem:[#allocation7 + $0x40] sm:$0xff]
        %v1065 = vld [vmem:[#allocation7 + $0x48] sm:$0xff]
        %v1066 = vld [vmem:[#allocation7 + $0x50] sm:$0xff]
        %v1067 = vld [vmem:[#allocation7 + $0x58] sm:$0xff]
        %v1068 = vld [vmem:[#allocation7 + $0x60] sm:$0xff]
        %v1069 = vld [vmem:[#allocation7 + $0x68] sm:$0xff]
        %v1070 = vld [vmem:[#allocation7 + $0x70] sm:$0xff]
        %v1071 = vld [vmem:[#allocation7 + $0x78] sm:$0xff]
        %s1072 = scalar_lea.vmem [#allocation7], 128
        %v1073 = vld [vmem:[%s1072] sm:$0xff]
        %v1074 = vld [vmem:[%s1072 + $0x8] sm:$0xff]
        %v1075 = vld [vmem:[%s1072 + $0x10] sm:$0xff]
        %v1076 = vld [vmem:[%s1072 + $0x18] sm:$0xff]
        %v1077 = vld [vmem:[%s1072 + $0x20] sm:$0xff]
        %v1078 = vld [vmem:[%s1072 + $0x28] sm:$0xff]
        %v1079 = vld [vmem:[%s1072 + $0x30] sm:$0xff]
        %v1080 = vld [vmem:[%s1072 + $0x38] sm:$0xff]
        %v1081 = vld [vmem:[%s1072 + $0x40] sm:$0xff]
        %v1082 = vld [vmem:[%s1072 + $0x48] sm:$0xff]
        %v1083 = vld [vmem:[%s1072 + $0x50] sm:$0xff]
        %v1084 = vld [vmem:[%s1072 + $0x58] sm:$0xff]
        %v1085 = vld [vmem:[%s1072 + $0x60] sm:$0xff]
        %v1086 = vld [vmem:[%s1072 + $0x68] sm:$0xff]
        %v1087 = vld [vmem:[%s1072 + $0x70] sm:$0xff]
        %v1088 = vld [vmem:[%s1072 + $0x78] sm:$0xff]
        %s1089 = scalar_lea.vmem [#allocation7], 256
        %v1090 = vld [vmem:[%s1089] sm:$0xff]
        %v1091 = vld [vmem:[%s1089 + $0x8] sm:$0xff]
        %v1092 = vld [vmem:[%s1089 + $0x10] sm:$0xff]
        %v1093 = vld [vmem:[%s1089 + $0x18] sm:$0xff]
        %v1094 = vld [vmem:[%s1089 + $0x20] sm:$0xff]
        %v1095 = vld [vmem:[%s1089 + $0x28] sm:$0xff]
        %v1096 = vld [vmem:[%s1089 + $0x30] sm:$0xff]
        %v1097 = vld [vmem:[%s1089 + $0x38] sm:$0xff]
        %v1098 = vld [vmem:[%s1089 + $0x40] sm:$0xff]
        %v1099 = vld [vmem:[%s1089 + $0x48] sm:$0xff]
        %v1100 = vld [vmem:[%s1089 + $0x50] sm:$0xff]
        %v1101 = vld [vmem:[%s1089 + $0x58] sm:$0xff]
        %v1102 = vld [vmem:[%s1089 + $0x60] sm:$0xff]
        %v1103 = vld [vmem:[%s1089 + $0x68] sm:$0xff]
        %v1104 = vld [vmem:[%s1089 + $0x70] sm:$0xff]
        %v1105 = vld [vmem:[%s1089 + $0x78] sm:$0xff]
        %v1106 = vld [vmem:[%s5] sm:$0x1]
        %v1107 = vrot.slane %v1052, 7
        %v1108 = vrot.slane %v1053, 7
        %v1109 = vrot.slane %v1054, 7
        %v1110 = vrot.slane %v1055, 7
        %v1111 = vsel %vm761, %v1109, %v1110
        %v1112 = vsel %vm761, %v1108, %v1109
        %v1113 = vsel %vm761, %v1107, %v1108
        %v1114 = vsel %vm761, %v1110, %v1107
        %v1115 = vmul.f32 %v1114, %v690
        %v1116 = vmul.f32 %v1113, %v691
        %v1117 = vmul.f32 %v1112, %v692
        %v1118 = vmul.f32 %v1111, %v693
        %v1119 = vrot.slane %v1052, 1
        %v1120 = vrot.slane %v1053, 1
        %v1121 = vrot.slane %v1054, 1
        %v1122 = vrot.slane %v1055, 1
        %v1123 = vsel %vm774, %v1121, %v1122
        %v1124 = vsel %vm774, %v1120, %v1121
        %v1125 = vsel %vm774, %v1119, %v1120
        %v1126 = vsel %vm774, %v1122, %v1119
        %v1127 = vmul.f32 %v1125, %v702
        %v1128 = vmul.f32 %v1124, %v703
        %v1129 = vmul.f32 %v1123, %v704
        %v1130 = vmul.f32 %v1126, %v705
        %1131 = vmatprep.subr.mxu0 0.0
        %1132 = vmatpush1.msra.mxu0 %v1071
        %1133 = vmatprep.subr.mxu0 0.0
        %1134 = vmatpush1.msra.mxu0 %v1070
        %1135 = vmatprep.subr.mxu0 0.0
        %1136 = vmatpush1.msra.mxu0 %v1069
        %1137 = vmatprep.subr.mxu0 0.0
        %1138 = vmatpush1.msra.mxu0 %v1068
        %1139 = vmatprep.subr.mxu0 0.0
        %1140 = vmatpush1.msra.mxu0 %v1067
        %1141 = vmatprep.subr.mxu0 0.0
        %1142 = vmatpush1.msra.mxu0 %v1066
        %1143 = vmatprep.subr.mxu0 0.0
        %1144 = vmatpush1.msra.mxu0 %v1065
        %1145 = vmatprep.subr.mxu0 0.0
        %1146 = vmatpush1.msra.mxu0 %v1064
        %1147 = vmatprep.subr.mxu0 0.0
        %1148 = vmatpush1.msra.mxu0 %v1063
        %1149 = vmatprep.subr.mxu0 0.0
        %1150 = vmatpush1.msra.mxu0 %v1062
        %1151 = vmatprep.subr.mxu0 0.0
        %1152 = vmatpush1.msra.mxu0 %v1061
        %1153 = vmatprep.subr.mxu0 0.0
        %1154 = vmatpush1.msra.mxu0 %v1060
        %1155 = vmatprep.subr.mxu0 0.0
        %1156 = vmatpush1.msra.mxu0 %v1059
        %1157 = vmatprep.subr.mxu0 0.0
        %1158 = vmatpush1.msra.mxu0 %v1058
        %1159 = vmatprep.subr.mxu0 0.0
        %1160 = vmatpush1.msra.mxu0 %v1057
        %1161 = vmatprep.subr.mxu0 0.0
        %1162 = vmatpush1.msra.mxu0 %v1056
        %1163 = vmatprep.subr.mxu0 0.0
        %1164 = vmatpush2.msra.mxu0 0.0
        %1165 = vmatprep.subr.mxu0 0.0
        %1166 = vmatpush2.msra.mxu0 0.0
        %1167 = vmatprep.subr.mxu0 0.0
        %1168 = vmatpush2.msra.mxu0 0.0
        %1169 = vmatprep.subr.mxu0 0.0
        %1170 = vmatpush2.msra.mxu0 0.0
        %1171 = vmatprep.subr.mxu0 0.0
        %1172 = vmatpush2.msra.mxu0 0.0
        %1173 = vmatprep.subr.mxu0 0.0
        %1174 = vmatpush2.msra.mxu0 0.0
        %1175 = vmatprep.subr.mxu0 0.0
        %1176 = vmatpush2.msra.mxu0 0.0
        %1177 = vmatprep.subr.mxu0 0.0
        %1178 = vmatpush2.msra.mxu0 0.0
        %1179 = vmatprep.subr.mxu0 0.0
        %1180 = vmatpush2.msra.mxu0 0.0
        %1181 = vmatprep.subr.mxu0 0.0
        %1182 = vmatpush2.msra.mxu0 0.0
        %1183 = vmatprep.subr.mxu0 0.0
        %1184 = vmatpush2.msra.mxu0 0.0
        %1185 = vmatprep.subr.mxu0 0.0
        %1186 = vmatpush2.msra.mxu0 0.0
        %1187 = vmatprep.subr.mxu0 0.0
        %1188 = vmatpush2.msra.mxu0 0.0
        %1189 = vmatprep.subr.mxu0 0.0
        %1190 = vmatpush2.msra.mxu0 0.0
        %1191 = vmatprep.subr.mxu0 0.0
        %1192 = vmatpush2.msra.mxu0 0.0
        %1193 = vmatprep.subr.mxu0 0.0
        %1194 = vmatpush2.msra.mxu0 0.0
        %1195 = vmatprep.mubr.f32.mxu0 0.0
        %1196 = vmatmul.mubr.f32.gmra.mxu0 %v1115
        %v1197 = vpop.f32.mrf.mxu0
        %v1198 = vadd.f32 0.0, %v1197
        %v1199 = vpop.f32.mrf.mxu0
        %1200 = vmatprep.mubr.f32.mxu0 0.0
        %1201 = vmatmul.mubr.f32.gmra.mxu0 %v1116
        %v1202 = vpop.f32.mrf.mxu0
        %v1203 = vadd.f32 0.0, %v1202
        %v1204 = vpop.f32.mrf.mxu0
        %1205 = vmatprep.mubr.f32.mxu0 0.0
        %1206 = vmatmul.mubr.f32.gmra.mxu0 %v1117
        %v1207 = vpop.f32.mrf.mxu0
        %v1208 = vadd.f32 0.0, %v1207
        %v1209 = vpop.f32.mrf.mxu0
        %1210 = vmatprep.mubr.f32.mxu0 0.0
        %1211 = vmatmul.mubr.f32.gmra.mxu0 %v1118
        %v1212 = vpop.f32.mrf.mxu0
        %v1213 = vadd.f32 0.0, %v1212
        %v1214 = vpop.f32.mrf.mxu0
        %1215 = vdwg.mxu0
        %1216 = vmatprep.subr.mxu0 0.0
        %1217 = vmatpush1.msra.mxu0 %v1088
        %1218 = vmatprep.subr.mxu0 0.0
        %1219 = vmatpush1.msra.mxu0 %v1087
        %1220 = vmatprep.subr.mxu0 0.0
        %1221 = vmatpush1.msra.mxu0 %v1086
        %1222 = vmatprep.subr.mxu0 0.0
        %1223 = vmatpush1.msra.mxu0 %v1085
        %1224 = vmatprep.subr.mxu0 0.0
        %1225 = vmatpush1.msra.mxu0 %v1084
        %1226 = vmatprep.subr.mxu0 0.0
        %1227 = vmatpush1.msra.mxu0 %v1083
        %1228 = vmatprep.subr.mxu0 0.0
        %1229 = vmatpush1.msra.mxu0 %v1082
        %1230 = vmatprep.subr.mxu0 0.0
        %1231 = vmatpush1.msra.mxu0 %v1081
        %1232 = vmatprep.subr.mxu0 0.0
        %1233 = vmatpush1.msra.mxu0 %v1080
        %1234 = vmatprep.subr.mxu0 0.0
        %1235 = vmatpush1.msra.mxu0 %v1079
        %1236 = vmatprep.subr.mxu0 0.0
        %1237 = vmatpush1.msra.mxu0 %v1078
        %1238 = vmatprep.subr.mxu0 0.0
        %1239 = vmatpush1.msra.mxu0 %v1077
        %1240 = vmatprep.subr.mxu0 0.0
        %1241 = vmatpush1.msra.mxu0 %v1076
        %1242 = vmatprep.subr.mxu0 0.0
        %1243 = vmatpush1.msra.mxu0 %v1075
        %1244 = vmatprep.subr.mxu0 0.0
        %1245 = vmatpush1.msra.mxu0 %v1074
        %1246 = vmatprep.subr.mxu0 0.0
        %1247 = vmatpush1.msra.mxu0 %v1073
        %1248 = vmatprep.subr.mxu0 0.0
        %1249 = vmatpush2.msra.mxu0 0.0
        %1250 = vmatprep.subr.mxu0 0.0
        %1251 = vmatpush2.msra.mxu0 0.0
        %1252 = vmatprep.subr.mxu0 0.0
        %1253 = vmatpush2.msra.mxu0 0.0
        %1254 = vmatprep.subr.mxu0 0.0
        %1255 = vmatpush2.msra.mxu0 0.0
        %1256 = vmatprep.subr.mxu0 0.0
        %1257 = vmatpush2.msra.mxu0 0.0
        %1258 = vmatprep.subr.mxu0 0.0
        %1259 = vmatpush2.msra.mxu0 0.0
        %1260 = vmatprep.subr.mxu0 0.0
        %1261 = vmatpush2.msra.mxu0 0.0
        %1262 = vmatprep.subr.mxu0 0.0
        %1263 = vmatpush2.msra.mxu0 0.0
        %1264 = vmatprep.subr.mxu0 0.0
        %1265 = vmatpush2.msra.mxu0 0.0
        %1266 = vmatprep.subr.mxu0 0.0
        %1267 = vmatpush2.msra.mxu0 0.0
        %1268 = vmatprep.subr.mxu0 0.0
        %1269 = vmatpush2.msra.mxu0 0.0
        %1270 = vmatprep.subr.mxu0 0.0
        %1271 = vmatpush2.msra.mxu0 0.0
        %1272 = vmatprep.subr.mxu0 0.0
        %1273 = vmatpush2.msra.mxu0 0.0
        %1274 = vmatprep.subr.mxu0 0.0
        %1275 = vmatpush2.msra.mxu0 0.0
        %1276 = vmatprep.subr.mxu0 0.0
        %1277 = vmatpush2.msra.mxu0 0.0
        %1278 = vmatprep.subr.mxu0 0.0
        %1279 = vmatpush2.msra.mxu0 0.0
        %1280 = vmatprep.mubr.f32.mxu0 0.0
        %1281 = vmatmul.mubr.f32.gmra.mxu0 %v1052
        %v1282 = vpop.f32.mrf.mxu0
        %v1283 = vadd.f32 %v1198, %v1282
        %v1284 = vpop.f32.mrf.mxu0
        %1285 = vmatprep.mubr.f32.mxu0 0.0
        %1286 = vmatmul.mubr.f32.gmra.mxu0 %v1053
        %v1287 = vpop.f32.mrf.mxu0
        %v1288 = vadd.f32 %v1203, %v1287
        %v1289 = vpop.f32.mrf.mxu0
        %1290 = vmatprep.mubr.f32.mxu0 0.0
        %1291 = vmatmul.mubr.f32.gmra.mxu0 %v1054
        %v1292 = vpop.f32.mrf.mxu0
        %v1293 = vadd.f32 %v1208, %v1292
        %v1294 = vpop.f32.mrf.mxu0
        %1295 = vmatprep.mubr.f32.mxu0 0.0
        %1296 = vmatmul.mubr.f32.gmra.mxu0 %v1055
        %v1297 = vpop.f32.mrf.mxu0
        %v1298 = vadd.f32 %v1213, %v1297
        %v1299 = vpop.f32.mrf.mxu0
        %1300 = vdwg.mxu0
        %1301 = vmatprep.subr.mxu0 0.0
        %1302 = vmatpush1.msra.mxu0 %v1105
        %1303 = vmatprep.subr.mxu0 0.0
        %1304 = vmatpush1.msra.mxu0 %v1104
        %1305 = vmatprep.subr.mxu0 0.0
        %1306 = vmatpush1.msra.mxu0 %v1103
        %1307 = vmatprep.subr.mxu0 0.0
        %1308 = vmatpush1.msra.mxu0 %v1102
        %1309 = vmatprep.subr.mxu0 0.0
        %1310 = vmatpush1.msra.mxu0 %v1101
        %1311 = vmatprep.subr.mxu0 0.0
        %1312 = vmatpush1.msra.mxu0 %v1100
        %1313 = vmatprep.subr.mxu0 0.0
        %1314 = vmatpush1.msra.mxu0 %v1099
        %1315 = vmatprep.subr.mxu0 0.0
        %1316 = vmatpush1.msra.mxu0 %v1098
        %1317 = vmatprep.subr.mxu0 0.0
        %1318 = vmatpush1.msra.mxu0 %v1097
        %1319 = vmatprep.subr.mxu0 0.0
        %1320 = vmatpush1.msra.mxu0 %v1096
        %1321 = vmatprep.subr.mxu0 0.0
        %1322 = vmatpush1.msra.mxu0 %v1095
        %1323 = vmatprep.subr.mxu0 0.0
        %1324 = vmatpush1.msra.mxu0 %v1094
        %1325 = vmatprep.subr.mxu0 0.0
        %1326 = vmatpush1.msra.mxu0 %v1093
        %1327 = vmatprep.subr.mxu0 0.0
        %1328 = vmatpush1.msra.mxu0 %v1092
        %1329 = vmatprep.subr.mxu0 0.0
        %1330 = vmatpush1.msra.mxu0 %v1091
        %1331 = vmatprep.subr.mxu0 0.0
        %1332 = vmatpush1.msra.mxu0 %v1090
        %1333 = vmatprep.subr.mxu0 0.0
        %1334 = vmatpush2.msra.mxu0 0.0
        %1335 = vmatprep.subr.mxu0 0.0
        %1336 = vmatpush2.msra.mxu0 0.0
        %1337 = vmatprep.subr.mxu0 0.0
        %1338 = vmatpush2.msra.mxu0 0.0
        %1339 = vmatprep.subr.mxu0 0.0
        %1340 = vmatpush2.msra.mxu0 0.0
        %1341 = vmatprep.subr.mxu0 0.0
        %1342 = vmatpush2.msra.mxu0 0.0
        %1343 = vmatprep.subr.mxu0 0.0
        %1344 = vmatpush2.msra.mxu0 0.0
        %1345 = vmatprep.subr.mxu0 0.0
        %1346 = vmatpush2.msra.mxu0 0.0
        %1347 = vmatprep.subr.mxu0 0.0
        %1348 = vmatpush2.msra.mxu0 0.0
        %1349 = vmatprep.subr.mxu0 0.0
        %1350 = vmatpush2.msra.mxu0 0.0
        %1351 = vmatprep.subr.mxu0 0.0
        %1352 = vmatpush2.msra.mxu0 0.0
        %1353 = vmatprep.subr.mxu0 0.0
        %1354 = vmatpush2.msra.mxu0 0.0
        %1355 = vmatprep.subr.mxu0 0.0
        %1356 = vmatpush2.msra.mxu0 0.0
        %1357 = vmatprep.subr.mxu0 0.0
        %1358 = vmatpush2.msra.mxu0 0.0
        %1359 = vmatprep.subr.mxu0 0.0
        %1360 = vmatpush2.msra.mxu0 0.0
        %1361 = vmatprep.subr.mxu0 0.0
        %1362 = vmatpush2.msra.mxu0 0.0
        %1363 = vmatprep.subr.mxu0 0.0
        %1364 = vmatpush2.msra.mxu0 0.0
        %1365 = vmatprep.mubr.f32.mxu0 0.0
        %1366 = vmatmul.mubr.f32.gmra.mxu0 %v1127
        %v1367 = vpop.f32.mrf.mxu0
        %v1368 = vadd.f32 0.0, %v1367
        %v1369 = vpop.f32.mrf.mxu0
        %1370 = vmatprep.mubr.f32.mxu0 0.0
        %1371 = vmatmul.mubr.f32.gmra.mxu0 %v1128
        %v1372 = vpop.f32.mrf.mxu0
        %v1373 = vadd.f32 0.0, %v1372
        %v1374 = vpop.f32.mrf.mxu0
        %1375 = vmatprep.mubr.f32.mxu0 0.0
        %1376 = vmatmul.mubr.f32.gmra.mxu0 %v1129
        %v1377 = vpop.f32.mrf.mxu0
        %v1378 = vadd.f32 0.0, %v1377
        %v1379 = vpop.f32.mrf.mxu0
        %1380 = vmatprep.mubr.f32.mxu0 0.0
        %1381 = vmatmul.mubr.f32.gmra.mxu0 %v1130
        %v1382 = vpop.f32.mrf.mxu0
        %v1383 = vadd.f32 0.0, %v1382
        %v1384 = vpop.f32.mrf.mxu0
        %1385 = vdwg.mxu0
        %v1386 = vadd.f32 %v1283, %v1368
        %v1387 = vadd.f32 %v1288, %v1373
        %v1388 = vadd.f32 %v1293, %v1378
        %v1389 = vadd.f32 %v1298, %v1383
        %v1391 = vlaneseq
        %v1392 = vshrl.u32 %v1391, 7
        %v1393 = vsub.s32 0, %v1392
        %v1394 = vrot.slane %v1106, %v1393
        %v1396 = vadd.f32 %v1386, %v1394
        %v1397 = vadd.f32 %v1387, %v1394
        %v1398 = vadd.f32 %v1388, %v1394
        %v1399 = vadd.f32 %v1389, %v1394
        %v1400 = vmax.f32 %v1396, 0.0
        %v1401 = vmax.f32 %v1397, 0.0
        %v1402 = vmax.f32 %v1398, 0.0
        %v1403 = vmax.f32 %v1399, 0.0
        %v1404 = vld [vmem:[#allocation8] sm:$0xff]
        %v1405 = vld [vmem:[#allocation8 + $0x8] sm:$0xff]
        %v1406 = vld [vmem:[#allocation8 + $0x10] sm:$0xff]
        %v1407 = vld [vmem:[#allocation8 + $0x18] sm:$0xff]
        %v1408 = vld [vmem:[#allocation8 + $0x20] sm:$0xff]
        %v1409 = vld [vmem:[#allocation8 + $0x28] sm:$0xff]
        %v1410 = vld [vmem:[#allocation8 + $0x30] sm:$0xff]
        %v1411 = vld [vmem:[#allocation8 + $0x38] sm:$0xff]
        %v1412 = vld [vmem:[#allocation8 + $0x40] sm:$0xff]
        %v1413 = vld [vmem:[#allocation8 + $0x48] sm:$0xff]
        %v1414 = vld [vmem:[#allocation8 + $0x50] sm:$0xff]
        %v1415 = vld [vmem:[#allocation8 + $0x58] sm:$0xff]
        %v1416 = vld [vmem:[#allocation8 + $0x60] sm:$0xff]
        %v1417 = vld [vmem:[#allocation8 + $0x68] sm:$0xff]
        %v1418 = vld [vmem:[#allocation8 + $0x70] sm:$0xff]
        %v1419 = vld [vmem:[#allocation8 + $0x78] sm:$0xff]
        %s1420 = scalar_lea.vmem [#allocation8], 128
        %v1421 = vld [vmem:[%s1420] sm:$0xff]
        %v1422 = vld [vmem:[%s1420 + $0x8] sm:$0xff]
        %v1423 = vld [vmem:[%s1420 + $0x10] sm:$0xff]
        %v1424 = vld [vmem:[%s1420 + $0x18] sm:$0xff]
        %v1425 = vld [vmem:[%s1420 + $0x20] sm:$0xff]
        %v1426 = vld [vmem:[%s1420 + $0x28] sm:$0xff]
        %v1427 = vld [vmem:[%s1420 + $0x30] sm:$0xff]
        %v1428 = vld [vmem:[%s1420 + $0x38] sm:$0xff]
        %v1429 = vld [vmem:[%s1420 + $0x40] sm:$0xff]
        %v1430 = vld [vmem:[%s1420 + $0x48] sm:$0xff]
        %v1431 = vld [vmem:[%s1420 + $0x50] sm:$0xff]
        %v1432 = vld [vmem:[%s1420 + $0x58] sm:$0xff]
        %v1433 = vld [vmem:[%s1420 + $0x60] sm:$0xff]
        %v1434 = vld [vmem:[%s1420 + $0x68] sm:$0xff]
        %v1435 = vld [vmem:[%s1420 + $0x70] sm:$0xff]
        %v1436 = vld [vmem:[%s1420 + $0x78] sm:$0xff]
        %s1437 = scalar_lea.vmem [#allocation8], 256
        %v1438 = vld [vmem:[%s1437] sm:$0xff]
        %v1439 = vld [vmem:[%s1437 + $0x8] sm:$0xff]
        %v1440 = vld [vmem:[%s1437 + $0x10] sm:$0xff]
        %v1441 = vld [vmem:[%s1437 + $0x18] sm:$0xff]
        %v1442 = vld [vmem:[%s1437 + $0x20] sm:$0xff]
        %v1443 = vld [vmem:[%s1437 + $0x28] sm:$0xff]
        %v1444 = vld [vmem:[%s1437 + $0x30] sm:$0xff]
        %v1445 = vld [vmem:[%s1437 + $0x38] sm:$0xff]
        %v1446 = vld [vmem:[%s1437 + $0x40] sm:$0xff]
        %v1447 = vld [vmem:[%s1437 + $0x48] sm:$0xff]
        %v1448 = vld [vmem:[%s1437 + $0x50] sm:$0xff]
        %v1449 = vld [vmem:[%s1437 + $0x58] sm:$0xff]
        %v1450 = vld [vmem:[%s1437 + $0x60] sm:$0xff]
        %v1451 = vld [vmem:[%s1437 + $0x68] sm:$0xff]
        %v1452 = vld [vmem:[%s1437 + $0x70] sm:$0xff]
        %v1453 = vld [vmem:[%s1437 + $0x78] sm:$0xff]
        %v1454 = vld [vmem:[%s7] sm:$0x1]
        %v1455 = vrot.slane %v1400, 7
        %v1456 = vrot.slane %v1401, 7
        %v1457 = vrot.slane %v1402, 7
        %v1458 = vrot.slane %v1403, 7
        %v1459 = vsel %vm761, %v1457, %v1458
        %v1460 = vsel %vm761, %v1456, %v1457
        %v1461 = vsel %vm761, %v1455, %v1456
        %v1462 = vsel %vm761, %v1458, %v1455
        %v1463 = vmul.f32 %v1462, %v690
        %v1464 = vmul.f32 %v1461, %v691
        %v1465 = vmul.f32 %v1460, %v692
        %v1466 = vmul.f32 %v1459, %v693
        %v1467 = vrot.slane %v1400, 1
        %v1468 = vrot.slane %v1401, 1
        %v1469 = vrot.slane %v1402, 1
        %v1470 = vrot.slane %v1403, 1
        %v1471 = vsel %vm774, %v1469, %v1470
        %v1472 = vsel %vm774, %v1468, %v1469
        %v1473 = vsel %vm774, %v1467, %v1468
        %v1474 = vsel %vm774, %v1470, %v1467
        %v1475 = vmul.f32 %v1473, %v702
        %v1476 = vmul.f32 %v1472, %v703
        %v1477 = vmul.f32 %v1471, %v704
        %v1478 = vmul.f32 %v1474, %v705
        %1479 = vmatprep.subr.mxu0 0.0
        %1480 = vmatpush1.msra.mxu0 %v1419
        %1481 = vmatprep.subr.mxu0 0.0
        %1482 = vmatpush1.msra.mxu0 %v1418
        %1483 = vmatprep.subr.mxu0 0.0
        %1484 = vmatpush1.msra.mxu0 %v1417
        %1485 = vmatprep.subr.mxu0 0.0
        %1486 = vmatpush1.msra.mxu0 %v1416
        %1487 = vmatprep.subr.mxu0 0.0
        %1488 = vmatpush1.msra.mxu0 %v1415
        %1489 = vmatprep.subr.mxu0 0.0
        %1490 = vmatpush1.msra.mxu0 %v1414
        %1491 = vmatprep.subr.mxu0 0.0
        %1492 = vmatpush1.msra.mxu0 %v1413
        %1493 = vmatprep.subr.mxu0 0.0
        %1494 = vmatpush1.msra.mxu0 %v1412
        %1495 = vmatprep.subr.mxu0 0.0
        %1496 = vmatpush1.msra.mxu0 %v1411
        %1497 = vmatprep.subr.mxu0 0.0
        %1498 = vmatpush1.msra.mxu0 %v1410
        %1499 = vmatprep.subr.mxu0 0.0
        %1500 = vmatpush1.msra.mxu0 %v1409
        %1501 = vmatprep.subr.mxu0 0.0
        %1502 = vmatpush1.msra.mxu0 %v1408
        %1503 = vmatprep.subr.mxu0 0.0
        %1504 = vmatpush1.msra.mxu0 %v1407
        %1505 = vmatprep.subr.mxu0 0.0
        %1506 = vmatpush1.msra.mxu0 %v1406
        %1507 = vmatprep.subr.mxu0 0.0
        %1508 = vmatpush1.msra.mxu0 %v1405
        %1509 = vmatprep.subr.mxu0 0.0
        %1510 = vmatpush1.msra.mxu0 %v1404
        %1511 = vmatprep.subr.mxu0 0.0
        %1512 = vmatpush2.msra.mxu0 0.0
        %1513 = vmatprep.subr.mxu0 0.0
        %1514 = vmatpush2.msra.mxu0 0.0
        %1515 = vmatprep.subr.mxu0 0.0
        %1516 = vmatpush2.msra.mxu0 0.0
        %1517 = vmatprep.subr.mxu0 0.0
        %1518 = vmatpush2.msra.mxu0 0.0
        %1519 = vmatprep.subr.mxu0 0.0
        %1520 = vmatpush2.msra.mxu0 0.0
        %1521 = vmatprep.subr.mxu0 0.0
        %1522 = vmatpush2.msra.mxu0 0.0
        %1523 = vmatprep.subr.mxu0 0.0
        %1524 = vmatpush2.msra.mxu0 0.0
        %1525 = vmatprep.subr.mxu0 0.0
        %1526 = vmatpush2.msra.mxu0 0.0
        %1527 = vmatprep.subr.mxu0 0.0
        %1528 = vmatpush2.msra.mxu0 0.0
        %1529 = vmatprep.subr.mxu0 0.0
        %1530 = vmatpush2.msra.mxu0 0.0
        %1531 = vmatprep.subr.mxu0 0.0
        %1532 = vmatpush2.msra.mxu0 0.0
        %1533 = vmatprep.subr.mxu0 0.0
        %1534 = vmatpush2.msra.mxu0 0.0
        %1535 = vmatprep.subr.mxu0 0.0
        %1536 = vmatpush2.msra.mxu0 0.0
        %1537 = vmatprep.subr.mxu0 0.0
        %1538 = vmatpush2.msra.mxu0 0.0
        %1539 = vmatprep.subr.mxu0 0.0
        %1540 = vmatpush2.msra.mxu0 0.0
        %1541 = vmatprep.subr.mxu0 0.0
        %1542 = vmatpush2.msra.mxu0 0.0
        %1543 = vmatprep.mubr.f32.mxu0 0.0
        %1544 = vmatmul.mubr.f32.gmra.mxu0 %v1463
        %v1545 = vpop.f32.mrf.mxu0
        %v1546 = vadd.f32 0.0, %v1545
        %v1547 = vpop.f32.mrf.mxu0
        %1548 = vmatprep.mubr.f32.mxu0 0.0
        %1549 = vmatmul.mubr.f32.gmra.mxu0 %v1464
        %v1550 = vpop.f32.mrf.mxu0
        %v1551 = vadd.f32 0.0, %v1550
        %v1552 = vpop.f32.mrf.mxu0
        %1553 = vmatprep.mubr.f32.mxu0 0.0
        %1554 = vmatmul.mubr.f32.gmra.mxu0 %v1465
        %v1555 = vpop.f32.mrf.mxu0
        %v1556 = vadd.f32 0.0, %v1555
        %v1557 = vpop.f32.mrf.mxu0
        %1558 = vmatprep.mubr.f32.mxu0 0.0
        %1559 = vmatmul.mubr.f32.gmra.mxu0 %v1466
        %v1560 = vpop.f32.mrf.mxu0
        %v1561 = vadd.f32 0.0, %v1560
        %v1562 = vpop.f32.mrf.mxu0
        %1563 = vdwg.mxu0
        %1564 = vmatprep.subr.mxu0 0.0
        %1565 = vmatpush1.msra.mxu0 %v1436
        %1566 = vmatprep.subr.mxu0 0.0
        %1567 = vmatpush1.msra.mxu0 %v1435
        %1568 = vmatprep.subr.mxu0 0.0
        %1569 = vmatpush1.msra.mxu0 %v1434
        %1570 = vmatprep.subr.mxu0 0.0
        %1571 = vmatpush1.msra.mxu0 %v1433
        %1572 = vmatprep.subr.mxu0 0.0
        %1573 = vmatpush1.msra.mxu0 %v1432
        %1574 = vmatprep.subr.mxu0 0.0
        %1575 = vmatpush1.msra.mxu0 %v1431
        %1576 = vmatprep.subr.mxu0 0.0
        %1577 = vmatpush1.msra.mxu0 %v1430
        %1578 = vmatprep.subr.mxu0 0.0
        %1579 = vmatpush1.msra.mxu0 %v1429
        %1580 = vmatprep.subr.mxu0 0.0
        %1581 = vmatpush1.msra.mxu0 %v1428
        %1582 = vmatprep.subr.mxu0 0.0
        %1583 = vmatpush1.msra.mxu0 %v1427
        %1584 = vmatprep.subr.mxu0 0.0
        %1585 = vmatpush1.msra.mxu0 %v1426
        %1586 = vmatprep.subr.mxu0 0.0
        %1587 = vmatpush1.msra.mxu0 %v1425
        %1588 = vmatprep.subr.mxu0 0.0
        %1589 = vmatpush1.msra.mxu0 %v1424
        %1590 = vmatprep.subr.mxu0 0.0
        %1591 = vmatpush1.msra.mxu0 %v1423
        %1592 = vmatprep.subr.mxu0 0.0
        %1593 = vmatpush1.msra.mxu0 %v1422
        %1594 = vmatprep.subr.mxu0 0.0
        %1595 = vmatpush1.msra.mxu0 %v1421
        %1596 = vmatprep.subr.mxu0 0.0
        %1597 = vmatpush2.msra.mxu0 0.0
        %1598 = vmatprep.subr.mxu0 0.0
        %1599 = vmatpush2.msra.mxu0 0.0
        %1600 = vmatprep.subr.mxu0 0.0
        %1601 = vmatpush2.msra.mxu0 0.0
        %1602 = vmatprep.subr.mxu0 0.0
        %1603 = vmatpush2.msra.mxu0 0.0
        %1604 = vmatprep.subr.mxu0 0.0
        %1605 = vmatpush2.msra.mxu0 0.0
        %1606 = vmatprep.subr.mxu0 0.0
        %1607 = vmatpush2.msra.mxu0 0.0
        %1608 = vmatprep.subr.mxu0 0.0
        %1609 = vmatpush2.msra.mxu0 0.0
        %1610 = vmatprep.subr.mxu0 0.0
        %1611 = vmatpush2.msra.mxu0 0.0
        %1612 = vmatprep.subr.mxu0 0.0
        %1613 = vmatpush2.msra.mxu0 0.0
        %1614 = vmatprep.subr.mxu0 0.0
        %1615 = vmatpush2.msra.mxu0 0.0
        %1616 = vmatprep.subr.mxu0 0.0
        %1617 = vmatpush2.msra.mxu0 0.0
        %1618 = vmatprep.subr.mxu0 0.0
        %1619 = vmatpush2.msra.mxu0 0.0
        %1620 = vmatprep.subr.mxu0 0.0
        %1621 = vmatpush2.msra.mxu0 0.0
        %1622 = vmatprep.subr.mxu0 0.0
        %1623 = vmatpush2.msra.mxu0 0.0
        %1624 = vmatprep.subr.mxu0 0.0
        %1625 = vmatpush2.msra.mxu0 0.0
        %1626 = vmatprep.subr.mxu0 0.0
        %1627 = vmatpush2.msra.mxu0 0.0
        %1628 = vmatprep.mubr.f32.mxu0 0.0
        %1629 = vmatmul.mubr.f32.gmra.mxu0 %v1400
        %v1630 = vpop.f32.mrf.mxu0
        %v1631 = vadd.f32 %v1546, %v1630
        %v1632 = vpop.f32.mrf.mxu0
        %1633 = vmatprep.mubr.f32.mxu0 0.0
        %1634 = vmatmul.mubr.f32.gmra.mxu0 %v1401
        %v1635 = vpop.f32.mrf.mxu0
        %v1636 = vadd.f32 %v1551, %v1635
        %v1637 = vpop.f32.mrf.mxu0
        %1638 = vmatprep.mubr.f32.mxu0 0.0
        %1639 = vmatmul.mubr.f32.gmra.mxu0 %v1402
        %v1640 = vpop.f32.mrf.mxu0
        %v1641 = vadd.f32 %v1556, %v1640
        %v1642 = vpop.f32.mrf.mxu0
        %1643 = vmatprep.mubr.f32.mxu0 0.0
        %1644 = vmatmul.mubr.f32.gmra.mxu0 %v1403
        %v1645 = vpop.f32.mrf.mxu0
        %v1646 = vadd.f32 %v1561, %v1645
        %v1647 = vpop.f32.mrf.mxu0
        %1648 = vdwg.mxu0
        %1649 = vmatprep.subr.mxu0 0.0
        %1650 = vmatpush1.msra.mxu0 %v1453
        %1651 = vmatprep.subr.mxu0 0.0
        %1652 = vmatpush1.msra.mxu0 %v1452
        %1653 = vmatprep.subr.mxu0 0.0
        %1654 = vmatpush1.msra.mxu0 %v1451
        %1655 = vmatprep.subr.mxu0 0.0
        %1656 = vmatpush1.msra.mxu0 %v1450
        %1657 = vmatprep.subr.mxu0 0.0
        %1658 = vmatpush1.msra.mxu0 %v1449
        %1659 = vmatprep.subr.mxu0 0.0
        %1660 = vmatpush1.msra.mxu0 %v1448
        %1661 = vmatprep.subr.mxu0 0.0
        %1662 = vmatpush1.msra.mxu0 %v1447
        %1663 = vmatprep.subr.mxu0 0.0
        %1664 = vmatpush1.msra.mxu0 %v1446
        %1665 = vmatprep.subr.mxu0 0.0
        %1666 = vmatpush1.msra.mxu0 %v1445
        %1667 = vmatprep.subr.mxu0 0.0
        %1668 = vmatpush1.msra.mxu0 %v1444
        %1669 = vmatprep.subr.mxu0 0.0
        %1670 = vmatpush1.msra.mxu0 %v1443
        %1671 = vmatprep.subr.mxu0 0.0
        %1672 = vmatpush1.msra.mxu0 %v1442
        %1673 = vmatprep.subr.mxu0 0.0
        %1674 = vmatpush1.msra.mxu0 %v1441
        %1675 = vmatprep.subr.mxu0 0.0
        %1676 = vmatpush1.msra.mxu0 %v1440
        %1677 = vmatprep.subr.mxu0 0.0
        %1678 = vmatpush1.msra.mxu0 %v1439
        %1679 = vmatprep.subr.mxu0 0.0
        %1680 = vmatpush1.msra.mxu0 %v1438
        %1681 = vmatprep.subr.mxu0 0.0
        %1682 = vmatpush2.msra.mxu0 0.0
        %1683 = vmatprep.subr.mxu0 0.0
        %1684 = vmatpush2.msra.mxu0 0.0
        %1685 = vmatprep.subr.mxu0 0.0
        %1686 = vmatpush2.msra.mxu0 0.0
        %1687 = vmatprep.subr.mxu0 0.0
        %1688 = vmatpush2.msra.mxu0 0.0
        %1689 = vmatprep.subr.mxu0 0.0
        %1690 = vmatpush2.msra.mxu0 0.0
        %1691 = vmatprep.subr.mxu0 0.0
        %1692 = vmatpush2.msra.mxu0 0.0
        %1693 = vmatprep.subr.mxu0 0.0
        %1694 = vmatpush2.msra.mxu0 0.0
        %1695 = vmatprep.subr.mxu0 0.0
        %1696 = vmatpush2.msra.mxu0 0.0
        %1697 = vmatprep.subr.mxu0 0.0
        %1698 = vmatpush2.msra.mxu0 0.0
        %1699 = vmatprep.subr.mxu0 0.0
        %1700 = vmatpush2.msra.mxu0 0.0
        %1701 = vmatprep.subr.mxu0 0.0
        %1702 = vmatpush2.msra.mxu0 0.0
        %1703 = vmatprep.subr.mxu0 0.0
        %1704 = vmatpush2.msra.mxu0 0.0
        %1705 = vmatprep.subr.mxu0 0.0
        %1706 = vmatpush2.msra.mxu0 0.0
        %1707 = vmatprep.subr.mxu0 0.0
        %1708 = vmatpush2.msra.mxu0 0.0
        %1709 = vmatprep.subr.mxu0 0.0
        %1710 = vmatpush2.msra.mxu0 0.0
        %1711 = vmatprep.subr.mxu0 0.0
        %1712 = vmatpush2.msra.mxu0 0.0
        %1713 = vmatprep.mubr.f32.mxu0 0.0
        %1714 = vmatmul.mubr.f32.gmra.mxu0 %v1475
        %v1715 = vpop.f32.mrf.mxu0
        %v1716 = vadd.f32 0.0, %v1715
        %v1717 = vpop.f32.mrf.mxu0
        %1718 = vmatprep.mubr.f32.mxu0 0.0
        %1719 = vmatmul.mubr.f32.gmra.mxu0 %v1476
        %v1720 = vpop.f32.mrf.mxu0
        %v1721 = vadd.f32 0.0, %v1720
        %v1722 = vpop.f32.mrf.mxu0
        %1723 = vmatprep.mubr.f32.mxu0 0.0
        %1724 = vmatmul.mubr.f32.gmra.mxu0 %v1477
        %v1725 = vpop.f32.mrf.mxu0
        %v1726 = vadd.f32 0.0, %v1725
        %v1727 = vpop.f32.mrf.mxu0
        %1728 = vmatprep.mubr.f32.mxu0 0.0
        %1729 = vmatmul.mubr.f32.gmra.mxu0 %v1478
        %v1730 = vpop.f32.mrf.mxu0
        %v1731 = vadd.f32 0.0, %v1730
        %v1732 = vpop.f32.mrf.mxu0
        %1733 = vdwg.mxu0
        %v1734 = vadd.f32 %v1631, %v1716
        %v1735 = vadd.f32 %v1636, %v1721
        %v1736 = vadd.f32 %v1641, %v1726
        %v1737 = vadd.f32 %v1646, %v1731
        %v1739 = vlaneseq
        %v1740 = vshrl.u32 %v1739, 7
        %v1741 = vsub.s32 0, %v1740
        %v1742 = vrot.slane %v1454, %v1741
        %v1744 = vadd.f32 %v1734, %v1742
        %v1745 = vadd.f32 %v1735, %v1742
        %v1746 = vadd.f32 %v1736, %v1742
        %v1747 = vadd.f32 %v1737, %v1742
        %v1748 = vadd.f32 %v1052, %v1744
        %v1749 = vadd.f32 %v1053, %v1745
        %v1750 = vadd.f32 %v1054, %v1746
        %v1751 = vadd.f32 %v1055, %v1747
        %v1752 = vmax.f32 %v1748, 0.0
        %v1753 = vmax.f32 %v1749, 0.0
        %v1754 = vmax.f32 %v1750, 0.0
        %v1755 = vmax.f32 %v1751, 0.0
        %s1756 = scalar_lea.vmem [#allocation7], 384
        %v1757 = vld [vmem:[%s1756] sm:$0xff]
        %v1758 = vld [vmem:[%s1756 + $0x8] sm:$0xff]
        %v1759 = vld [vmem:[%s1756 + $0x10] sm:$0xff]
        %v1760 = vld [vmem:[%s1756 + $0x18] sm:$0xff]
        %v1761 = vld [vmem:[%s1756 + $0x20] sm:$0xff]
        %v1762 = vld [vmem:[%s1756 + $0x28] sm:$0xff]
        %v1763 = vld [vmem:[%s1756 + $0x30] sm:$0xff]
        %v1764 = vld [vmem:[%s1756 + $0x38] sm:$0xff]
        %v1765 = vld [vmem:[%s1756 + $0x40] sm:$0xff]
        %v1766 = vld [vmem:[%s1756 + $0x48] sm:$0xff]
        %v1767 = vld [vmem:[%s1756 + $0x50] sm:$0xff]
        %v1768 = vld [vmem:[%s1756 + $0x58] sm:$0xff]
        %v1769 = vld [vmem:[%s1756 + $0x60] sm:$0xff]
        %v1770 = vld [vmem:[%s1756 + $0x68] sm:$0xff]
        %v1771 = vld [vmem:[%s1756 + $0x70] sm:$0xff]
        %v1772 = vld [vmem:[%s1756 + $0x78] sm:$0xff]
        %s1773 = scalar_lea.vmem [#allocation7], 512
        %v1774 = vld [vmem:[%s1773] sm:$0xff]
        %v1775 = vld [vmem:[%s1773 + $0x8] sm:$0xff]
        %v1776 = vld [vmem:[%s1773 + $0x10] sm:$0xff]
        %v1777 = vld [vmem:[%s1773 + $0x18] sm:$0xff]
        %v1778 = vld [vmem:[%s1773 + $0x20] sm:$0xff]
        %v1779 = vld [vmem:[%s1773 + $0x28] sm:$0xff]
        %v1780 = vld [vmem:[%s1773 + $0x30] sm:$0xff]
        %v1781 = vld [vmem:[%s1773 + $0x38] sm:$0xff]
        %v1782 = vld [vmem:[%s1773 + $0x40] sm:$0xff]
        %v1783 = vld [vmem:[%s1773 + $0x48] sm:$0xff]
        %v1784 = vld [vmem:[%s1773 + $0x50] sm:$0xff]
        %v1785 = vld [vmem:[%s1773 + $0x58] sm:$0xff]
        %v1786 = vld [vmem:[%s1773 + $0x60] sm:$0xff]
        %v1787 = vld [vmem:[%s1773 + $0x68] sm:$0xff]
        %v1788 = vld [vmem:[%s1773 + $0x70] sm:$0xff]
        %v1789 = vld [vmem:[%s1773 + $0x78] sm:$0xff]
        %s1790 = scalar_lea.vmem [#allocation7], 640
        %v1791 = vld [vmem:[%s1790] sm:$0xff]
        %v1792 = vld [vmem:[%s1790 + $0x8] sm:$0xff]
        %v1793 = vld [vmem:[%s1790 + $0x10] sm:$0xff]
        %v1794 = vld [vmem:[%s1790 + $0x18] sm:$0xff]
        %v1795 = vld [vmem:[%s1790 + $0x20] sm:$0xff]
        %v1796 = vld [vmem:[%s1790 + $0x28] sm:$0xff]
        %v1797 = vld [vmem:[%s1790 + $0x30] sm:$0xff]
        %v1798 = vld [vmem:[%s1790 + $0x38] sm:$0xff]
        %v1799 = vld [vmem:[%s1790 + $0x40] sm:$0xff]
        %v1800 = vld [vmem:[%s1790 + $0x48] sm:$0xff]
        %v1801 = vld [vmem:[%s1790 + $0x50] sm:$0xff]
        %v1802 = vld [vmem:[%s1790 + $0x58] sm:$0xff]
        %v1803 = vld [vmem:[%s1790 + $0x60] sm:$0xff]
        %v1804 = vld [vmem:[%s1790 + $0x68] sm:$0xff]
        %v1805 = vld [vmem:[%s1790 + $0x70] sm:$0xff]
        %v1806 = vld [vmem:[%s1790 + $0x78] sm:$0xff]
        %s1807 = scalar_lea.vmem %s5, 1
        %v1808 = vld [vmem:[%s1807] sm:$0x1]
        %v1809 = vrot.slane %v1752, 7
        %v1810 = vrot.slane %v1753, 7
        %v1811 = vrot.slane %v1754, 7
        %v1812 = vrot.slane %v1755, 7
        %v1813 = vsel %vm761, %v1811, %v1812
        %v1814 = vsel %vm761, %v1810, %v1811
        %v1815 = vsel %vm761, %v1809, %v1810
        %v1816 = vsel %vm761, %v1812, %v1809
        %v1817 = vmul.f32 %v1816, %v690
        %v1818 = vmul.f32 %v1815, %v691
        %v1819 = vmul.f32 %v1814, %v692
        %v1820 = vmul.f32 %v1813, %v693
        %v1821 = vrot.slane %v1752, 1
        %v1822 = vrot.slane %v1753, 1
        %v1823 = vrot.slane %v1754, 1
        %v1824 = vrot.slane %v1755, 1
        %v1825 = vsel %vm774, %v1823, %v1824
        %v1826 = vsel %vm774, %v1822, %v1823
        %v1827 = vsel %vm774, %v1821, %v1822
        %v1828 = vsel %vm774, %v1824, %v1821
        %v1829 = vmul.f32 %v1827, %v702
        %v1830 = vmul.f32 %v1826, %v703
        %v1831 = vmul.f32 %v1825, %v704
        %v1832 = vmul.f32 %v1828, %v705
        %1833 = vmatprep.subr.mxu0 0.0
        %1834 = vmatpush1.msra.mxu0 %v1772
        %1835 = vmatprep.subr.mxu0 0.0
        %1836 = vmatpush1.msra.mxu0 %v1771
        %1837 = vmatprep.subr.mxu0 0.0
        %1838 = vmatpush1.msra.mxu0 %v1770
        %1839 = vmatprep.subr.mxu0 0.0
        %1840 = vmatpush1.msra.mxu0 %v1769
        %1841 = vmatprep.subr.mxu0 0.0
        %1842 = vmatpush1.msra.mxu0 %v1768
        %1843 = vmatprep.subr.mxu0 0.0
        %1844 = vmatpush1.msra.mxu0 %v1767
        %1845 = vmatprep.subr.mxu0 0.0
        %1846 = vmatpush1.msra.mxu0 %v1766
        %1847 = vmatprep.subr.mxu0 0.0
        %1848 = vmatpush1.msra.mxu0 %v1765
        %1849 = vmatprep.subr.mxu0 0.0
        %1850 = vmatpush1.msra.mxu0 %v1764
        %1851 = vmatprep.subr.mxu0 0.0
        %1852 = vmatpush1.msra.mxu0 %v1763
        %1853 = vmatprep.subr.mxu0 0.0
        %1854 = vmatpush1.msra.mxu0 %v1762
        %1855 = vmatprep.subr.mxu0 0.0
        %1856 = vmatpush1.msra.mxu0 %v1761
        %1857 = vmatprep.subr.mxu0 0.0
        %1858 = vmatpush1.msra.mxu0 %v1760
        %1859 = vmatprep.subr.mxu0 0.0
        %1860 = vmatpush1.msra.mxu0 %v1759
        %1861 = vmatprep.subr.mxu0 0.0
        %1862 = vmatpush1.msra.mxu0 %v1758
        %1863 = vmatprep.subr.mxu0 0.0
        %1864 = vmatpush1.msra.mxu0 %v1757
        %1865 = vmatprep.subr.mxu0 0.0
        %1866 = vmatpush2.msra.mxu0 0.0
        %1867 = vmatprep.subr.mxu0 0.0
        %1868 = vmatpush2.msra.mxu0 0.0
        %1869 = vmatprep.subr.mxu0 0.0
        %1870 = vmatpush2.msra.mxu0 0.0
        %1871 = vmatprep.subr.mxu0 0.0
        %1872 = vmatpush2.msra.mxu0 0.0
        %1873 = vmatprep.subr.mxu0 0.0
        %1874 = vmatpush2.msra.mxu0 0.0
        %1875 = vmatprep.subr.mxu0 0.0
        %1876 = vmatpush2.msra.mxu0 0.0
        %1877 = vmatprep.subr.mxu0 0.0
        %1878 = vmatpush2.msra.mxu0 0.0
        %1879 = vmatprep.subr.mxu0 0.0
        %1880 = vmatpush2.msra.mxu0 0.0
        %1881 = vmatprep.subr.mxu0 0.0
        %1882 = vmatpush2.msra.mxu0 0.0
        %1883 = vmatprep.subr.mxu0 0.0
        %1884 = vmatpush2.msra.mxu0 0.0
        %1885 = vmatprep.subr.mxu0 0.0
        %1886 = vmatpush2.msra.mxu0 0.0
        %1887 = vmatprep.subr.mxu0 0.0
        %1888 = vmatpush2.msra.mxu0 0.0
        %1889 = vmatprep.subr.mxu0 0.0
        %1890 = vmatpush2.msra.mxu0 0.0
        %1891 = vmatprep.subr.mxu0 0.0
        %1892 = vmatpush2.msra.mxu0 0.0
        %1893 = vmatprep.subr.mxu0 0.0
        %1894 = vmatpush2.msra.mxu0 0.0
        %1895 = vmatprep.subr.mxu0 0.0
        %1896 = vmatpush2.msra.mxu0 0.0
        %1897 = vmatprep.mubr.f32.mxu0 0.0
        %1898 = vmatmul.mubr.f32.gmra.mxu0 %v1817
        %v1899 = vpop.f32.mrf.mxu0
        %v1900 = vadd.f32 0.0, %v1899
        %v1901 = vpop.f32.mrf.mxu0
        %1902 = vmatprep.mubr.f32.mxu0 0.0
        %1903 = vmatmul.mubr.f32.gmra.mxu0 %v1818
        %v1904 = vpop.f32.mrf.mxu0
        %v1905 = vadd.f32 0.0, %v1904
        %v1906 = vpop.f32.mrf.mxu0
        %1907 = vmatprep.mubr.f32.mxu0 0.0
        %1908 = vmatmul.mubr.f32.gmra.mxu0 %v1819
        %v1909 = vpop.f32.mrf.mxu0
        %v1910 = vadd.f32 0.0, %v1909
        %v1911 = vpop.f32.mrf.mxu0
        %1912 = vmatprep.mubr.f32.mxu0 0.0
        %1913 = vmatmul.mubr.f32.gmra.mxu0 %v1820
        %v1914 = vpop.f32.mrf.mxu0
        %v1915 = vadd.f32 0.0, %v1914
        %v1916 = vpop.f32.mrf.mxu0
        %1917 = vdwg.mxu0
        %1918 = vmatprep.subr.mxu0 0.0
        %1919 = vmatpush1.msra.mxu0 %v1789
        %1920 = vmatprep.subr.mxu0 0.0
        %1921 = vmatpush1.msra.mxu0 %v1788
        %1922 = vmatprep.subr.mxu0 0.0
        %1923 = vmatpush1.msra.mxu0 %v1787
        %1924 = vmatprep.subr.mxu0 0.0
        %1925 = vmatpush1.msra.mxu0 %v1786
        %1926 = vmatprep.subr.mxu0 0.0
        %1927 = vmatpush1.msra.mxu0 %v1785
        %1928 = vmatprep.subr.mxu0 0.0
        %1929 = vmatpush1.msra.mxu0 %v1784
        %1930 = vmatprep.subr.mxu0 0.0
        %1931 = vmatpush1.msra.mxu0 %v1783
        %1932 = vmatprep.subr.mxu0 0.0
        %1933 = vmatpush1.msra.mxu0 %v1782
        %1934 = vmatprep.subr.mxu0 0.0
        %1935 = vmatpush1.msra.mxu0 %v1781
        %1936 = vmatprep.subr.mxu0 0.0
        %1937 = vmatpush1.msra.mxu0 %v1780
        %1938 = vmatprep.subr.mxu0 0.0
        %1939 = vmatpush1.msra.mxu0 %v1779
        %1940 = vmatprep.subr.mxu0 0.0
        %1941 = vmatpush1.msra.mxu0 %v1778
        %1942 = vmatprep.subr.mxu0 0.0
        %1943 = vmatpush1.msra.mxu0 %v1777
        %1944 = vmatprep.subr.mxu0 0.0
        %1945 = vmatpush1.msra.mxu0 %v1776
        %1946 = vmatprep.subr.mxu0 0.0
        %1947 = vmatpush1.msra.mxu0 %v1775
        %1948 = vmatprep.subr.mxu0 0.0
        %1949 = vmatpush1.msra.mxu0 %v1774
        %1950 = vmatprep.subr.mxu0 0.0
        %1951 = vmatpush2.msra.mxu0 0.0
        %1952 = vmatprep.subr.mxu0 0.0
        %1953 = vmatpush2.msra.mxu0 0.0
        %1954 = vmatprep.subr.mxu0 0.0
        %1955 = vmatpush2.msra.mxu0 0.0
        %1956 = vmatprep.subr.mxu0 0.0
        %1957 = vmatpush2.msra.mxu0 0.0
        %1958 = vmatprep.subr.mxu0 0.0
        %1959 = vmatpush2.msra.mxu0 0.0
        %1960 = vmatprep.subr.mxu0 0.0
        %1961 = vmatpush2.msra.mxu0 0.0
        %1962 = vmatprep.subr.mxu0 0.0
        %1963 = vmatpush2.msra.mxu0 0.0
        %1964 = vmatprep.subr.mxu0 0.0
        %1965 = vmatpush2.msra.mxu0 0.0
        %1966 = vmatprep.subr.mxu0 0.0
        %1967 = vmatpush2.msra.mxu0 0.0
        %1968 = vmatprep.subr.mxu0 0.0
        %1969 = vmatpush2.msra.mxu0 0.0
        %1970 = vmatprep.subr.mxu0 0.0
        %1971 = vmatpush2.msra.mxu0 0.0
        %1972 = vmatprep.subr.mxu0 0.0
        %1973 = vmatpush2.msra.mxu0 0.0
        %1974 = vmatprep.subr.mxu0 0.0
        %1975 = vmatpush2.msra.mxu0 0.0
        %1976 = vmatprep.subr.mxu0 0.0
        %1977 = vmatpush2.msra.mxu0 0.0
        %1978 = vmatprep.subr.mxu0 0.0
        %1979 = vmatpush2.msra.mxu0 0.0
        %1980 = vmatprep.subr.mxu0 0.0
        %1981 = vmatpush2.msra.mxu0 0.0
        %1982 = vmatprep.mubr.f32.mxu0 0.0
        %1983 = vmatmul.mubr.f32.gmra.mxu0 %v1752
        %v1984 = vpop.f32.mrf.mxu0
        %v1985 = vadd.f32 %v1900, %v1984
        %v1986 = vpop.f32.mrf.mxu0
        %1987 = vmatprep.mubr.f32.mxu0 0.0
        %1988 = vmatmul.mubr.f32.gmra.mxu0 %v1753
        %v1989 = vpop.f32.mrf.mxu0
        %v1990 = vadd.f32 %v1905, %v1989
        %v1991 = vpop.f32.mrf.mxu0
        %1992 = vmatprep.mubr.f32.mxu0 0.0
        %1993 = vmatmul.mubr.f32.gmra.mxu0 %v1754
        %v1994 = vpop.f32.mrf.mxu0
        %v1995 = vadd.f32 %v1910, %v1994
        %v1996 = vpop.f32.mrf.mxu0
        %1997 = vmatprep.mubr.f32.mxu0 0.0
        %1998 = vmatmul.mubr.f32.gmra.mxu0 %v1755
        %v1999 = vpop.f32.mrf.mxu0
        %v2000 = vadd.f32 %v1915, %v1999
        %v2001 = vpop.f32.mrf.mxu0
        %2002 = vdwg.mxu0
        %2003 = vmatprep.subr.mxu0 0.0
        %2004 = vmatpush1.msra.mxu0 %v1806
        %2005 = vmatprep.subr.mxu0 0.0
        %2006 = vmatpush1.msra.mxu0 %v1805
        %2007 = vmatprep.subr.mxu0 0.0
        %2008 = vmatpush1.msra.mxu0 %v1804
        %2009 = vmatprep.subr.mxu0 0.0
        %2010 = vmatpush1.msra.mxu0 %v1803
        %2011 = vmatprep.subr.mxu0 0.0
        %2012 = vmatpush1.msra.mxu0 %v1802
        %2013 = vmatprep.subr.mxu0 0.0
        %2014 = vmatpush1.msra.mxu0 %v1801
        %2015 = vmatprep.subr.mxu0 0.0
        %2016 = vmatpush1.msra.mxu0 %v1800
        %2017 = vmatprep.subr.mxu0 0.0
        %2018 = vmatpush1.msra.mxu0 %v1799
        %2019 = vmatprep.subr.mxu0 0.0
        %2020 = vmatpush1.msra.mxu0 %v1798
        %2021 = vmatprep.subr.mxu0 0.0
        %2022 = vmatpush1.msra.mxu0 %v1797
        %2023 = vmatprep.subr.mxu0 0.0
        %2024 = vmatpush1.msra.mxu0 %v1796
        %2025 = vmatprep.subr.mxu0 0.0
        %2026 = vmatpush1.msra.mxu0 %v1795
        %2027 = vmatprep.subr.mxu0 0.0
        %2028 = vmatpush1.msra.mxu0 %v1794
        %2029 = vmatprep.subr.mxu0 0.0
        %2030 = vmatpush1.msra.mxu0 %v1793
        %2031 = vmatprep.subr.mxu0 0.0
        %2032 = vmatpush1.msra.mxu0 %v1792
        %2033 = vmatprep.subr.mxu0 0.0
        %2034 = vmatpush1.msra.mxu0 %v1791
        %2035 = vmatprep.subr.mxu0 0.0
        %2036 = vmatpush2.msra.mxu0 0.0
        %2037 = vmatprep.subr.mxu0 0.0
        %2038 = vmatpush2.msra.mxu0 0.0
        %2039 = vmatprep.subr.mxu0 0.0
        %2040 = vmatpush2.msra.mxu0 0.0
        %2041 = vmatprep.subr.mxu0 0.0
        %2042 = vmatpush2.msra.mxu0 0.0
        %2043 = vmatprep.subr.mxu0 0.0
        %2044 = vmatpush2.msra.mxu0 0.0
        %2045 = vmatprep.subr.mxu0 0.0
        %2046 = vmatpush2.msra.mxu0 0.0
        %2047 = vmatprep.subr.mxu0 0.0
        %2048 = vmatpush2.msra.mxu0 0.0
        %2049 = vmatprep.subr.mxu0 0.0
        %2050 = vmatpush2.msra.mxu0 0.0
        %2051 = vmatprep.subr.mxu0 0.0
        %2052 = vmatpush2.msra.mxu0 0.0
        %2053 = vmatprep.subr.mxu0 0.0
        %2054 = vmatpush2.msra.mxu0 0.0
        %2055 = vmatprep.subr.mxu0 0.0
        %2056 = vmatpush2.msra.mxu0 0.0
        %2057 = vmatprep.subr.mxu0 0.0
        %2058 = vmatpush2.msra.mxu0 0.0
        %2059 = vmatprep.subr.mxu0 0.0
        %2060 = vmatpush2.msra.mxu0 0.0
        %2061 = vmatprep.subr.mxu0 0.0
        %2062 = vmatpush2.msra.mxu0 0.0
        %2063 = vmatprep.subr.mxu0 0.0
        %2064 = vmatpush2.msra.mxu0 0.0
        %2065 = vmatprep.subr.mxu0 0.0
        %2066 = vmatpush2.msra.mxu0 0.0
        %2067 = vmatprep.mubr.f32.mxu0 0.0
        %2068 = vmatmul.mubr.f32.gmra.mxu0 %v1829
        %v2069 = vpop.f32.mrf.mxu0
        %v2070 = vadd.f32 0.0, %v2069
        %v2071 = vpop.f32.mrf.mxu0
        %2072 = vmatprep.mubr.f32.mxu0 0.0
        %2073 = vmatmul.mubr.f32.gmra.mxu0 %v1830
        %v2074 = vpop.f32.mrf.mxu0
        %v2075 = vadd.f32 0.0, %v2074
        %v2076 = vpop.f32.mrf.mxu0
        %2077 = vmatprep.mubr.f32.mxu0 0.0
        %2078 = vmatmul.mubr.f32.gmra.mxu0 %v1831
        %v2079 = vpop.f32.mrf.mxu0
        %v2080 = vadd.f32 0.0, %v2079
        %v2081 = vpop.f32.mrf.mxu0
        %2082 = vmatprep.mubr.f32.mxu0 0.0
        %2083 = vmatmul.mubr.f32.gmra.mxu0 %v1832
        %v2084 = vpop.f32.mrf.mxu0
        %v2085 = vadd.f32 0.0, %v2084
        %v2086 = vpop.f32.mrf.mxu0
        %2087 = vdwg.mxu0
        %v2088 = vadd.f32 %v1985, %v2070
        %v2089 = vadd.f32 %v1990, %v2075
        %v2090 = vadd.f32 %v1995, %v2080
        %v2091 = vadd.f32 %v2000, %v2085
        %v2093 = vlaneseq
        %v2094 = vshrl.u32 %v2093, 7
        %v2095 = vsub.s32 0, %v2094
        %v2096 = vrot.slane %v1808, %v2095
        %v2098 = vadd.f32 %v2088, %v2096
        %v2099 = vadd.f32 %v2089, %v2096
        %v2100 = vadd.f32 %v2090, %v2096
        %v2101 = vadd.f32 %v2091, %v2096
        %v2102 = vmax.f32 %v2098, 0.0
        %v2103 = vmax.f32 %v2099, 0.0
        %v2104 = vmax.f32 %v2100, 0.0
        %v2105 = vmax.f32 %v2101, 0.0
        %s2106 = scalar_lea.vmem [#allocation8], 384
        %v2107 = vld [vmem:[%s2106] sm:$0xff]
        %v2108 = vld [vmem:[%s2106 + $0x8] sm:$0xff]
        %v2109 = vld [vmem:[%s2106 + $0x10] sm:$0xff]
        %v2110 = vld [vmem:[%s2106 + $0x18] sm:$0xff]
        %v2111 = vld [vmem:[%s2106 + $0x20] sm:$0xff]
        %v2112 = vld [vmem:[%s2106 + $0x28] sm:$0xff]
        %v2113 = vld [vmem:[%s2106 + $0x30] sm:$0xff]
        %v2114 = vld [vmem:[%s2106 + $0x38] sm:$0xff]
        %v2115 = vld [vmem:[%s2106 + $0x40] sm:$0xff]
        %v2116 = vld [vmem:[%s2106 + $0x48] sm:$0xff]
        %v2117 = vld [vmem:[%s2106 + $0x50] sm:$0xff]
        %v2118 = vld [vmem:[%s2106 + $0x58] sm:$0xff]
        %v2119 = vld [vmem:[%s2106 + $0x60] sm:$0xff]
        %v2120 = vld [vmem:[%s2106 + $0x68] sm:$0xff]
        %v2121 = vld [vmem:[%s2106 + $0x70] sm:$0xff]
        %v2122 = vld [vmem:[%s2106 + $0x78] sm:$0xff]
        %s2123 = scalar_lea.vmem [#allocation8], 512
        %v2124 = vld [vmem:[%s2123] sm:$0xff]
        %v2125 = vld [vmem:[%s2123 + $0x8] sm:$0xff]
        %v2126 = vld [vmem:[%s2123 + $0x10] sm:$0xff]
        %v2127 = vld [vmem:[%s2123 + $0x18] sm:$0xff]
        %v2128 = vld [vmem:[%s2123 + $0x20] sm:$0xff]
        %v2129 = vld [vmem:[%s2123 + $0x28] sm:$0xff]
        %v2130 = vld [vmem:[%s2123 + $0x30] sm:$0xff]
        %v2131 = vld [vmem:[%s2123 + $0x38] sm:$0xff]
        %v2132 = vld [vmem:[%s2123 + $0x40] sm:$0xff]
        %v2133 = vld [vmem:[%s2123 + $0x48] sm:$0xff]
        %v2134 = vld [vmem:[%s2123 + $0x50] sm:$0xff]
        %v2135 = vld [vmem:[%s2123 + $0x58] sm:$0xff]
        %v2136 = vld [vmem:[%s2123 + $0x60] sm:$0xff]
        %v2137 = vld [vmem:[%s2123 + $0x68] sm:$0xff]
        %v2138 = vld [vmem:[%s2123 + $0x70] sm:$0xff]
        %v2139 = vld [vmem:[%s2123 + $0x78] sm:$0xff]
        %s2140 = scalar_lea.vmem [#allocation8], 640
        %v2141 = vld [vmem:[%s2140] sm:$0xff]
        %v2142 = vld [vmem:[%s2140 + $0x8] sm:$0xff]
        %v2143 = vld [vmem:[%s2140 + $0x10] sm:$0xff]
        %v2144 = vld [vmem:[%s2140 + $0x18] sm:$0xff]
        %v2145 = vld [vmem:[%s2140 + $0x20] sm:$0xff]
        %v2146 = vld [vmem:[%s2140 + $0x28] sm:$0xff]
        %v2147 = vld [vmem:[%s2140 + $0x30] sm:$0xff]
        %v2148 = vld [vmem:[%s2140 + $0x38] sm:$0xff]
        %v2149 = vld [vmem:[%s2140 + $0x40] sm:$0xff]
        %v2150 = vld [vmem:[%s2140 + $0x48] sm:$0xff]
        %v2151 = vld [vmem:[%s2140 + $0x50] sm:$0xff]
        %v2152 = vld [vmem:[%s2140 + $0x58] sm:$0xff]
        %v2153 = vld [vmem:[%s2140 + $0x60] sm:$0xff]
        %v2154 = vld [vmem:[%s2140 + $0x68] sm:$0xff]
        %v2155 = vld [vmem:[%s2140 + $0x70] sm:$0xff]
        %v2156 = vld [vmem:[%s2140 + $0x78] sm:$0xff]
        %s2157 = scalar_lea.vmem %s7, 1
        %v2158 = vld [vmem:[%s2157] sm:$0x1]
        %v2159 = vrot.slane %v2102, 7
        %v2160 = vrot.slane %v2103, 7
        %v2161 = vrot.slane %v2104, 7
        %v2162 = vrot.slane %v2105, 7
        %v2163 = vsel %vm761, %v2161, %v2162
        %v2164 = vsel %vm761, %v2160, %v2161
        %v2165 = vsel %vm761, %v2159, %v2160
        %v2166 = vsel %vm761, %v2162, %v2159
        %v2167 = vmul.f32 %v2166, %v690
        %v2168 = vmul.f32 %v2165, %v691
        %v2169 = vmul.f32 %v2164, %v692
        %v2170 = vmul.f32 %v2163, %v693
        %v2171 = vrot.slane %v2102, 1
        %v2172 = vrot.slane %v2103, 1
        %v2173 = vrot.slane %v2104, 1
        %v2174 = vrot.slane %v2105, 1
        %v2175 = vsel %vm774, %v2173, %v2174
        %v2176 = vsel %vm774, %v2172, %v2173
        %v2177 = vsel %vm774, %v2171, %v2172
        %v2178 = vsel %vm774, %v2174, %v2171
        %v2179 = vmul.f32 %v2177, %v702
        %v2180 = vmul.f32 %v2176, %v703
        %v2181 = vmul.f32 %v2175, %v704
        %v2182 = vmul.f32 %v2178, %v705
        %2183 = vmatprep.subr.mxu0 0.0
        %2184 = vmatpush1.msra.mxu0 %v2122
        %2185 = vmatprep.subr.mxu0 0.0
        %2186 = vmatpush1.msra.mxu0 %v2121
        %2187 = vmatprep.subr.mxu0 0.0
        %2188 = vmatpush1.msra.mxu0 %v2120
        %2189 = vmatprep.subr.mxu0 0.0
        %2190 = vmatpush1.msra.mxu0 %v2119
        %2191 = vmatprep.subr.mxu0 0.0
        %2192 = vmatpush1.msra.mxu0 %v2118
        %2193 = vmatprep.subr.mxu0 0.0
        %2194 = vmatpush1.msra.mxu0 %v2117
        %2195 = vmatprep.subr.mxu0 0.0
        %2196 = vmatpush1.msra.mxu0 %v2116
        %2197 = vmatprep.subr.mxu0 0.0
        %2198 = vmatpush1.msra.mxu0 %v2115
        %2199 = vmatprep.subr.mxu0 0.0
        %2200 = vmatpush1.msra.mxu0 %v2114
        %2201 = vmatprep.subr.mxu0 0.0
        %2202 = vmatpush1.msra.mxu0 %v2113
        %2203 = vmatprep.subr.mxu0 0.0
        %2204 = vmatpush1.msra.mxu0 %v2112
        %2205 = vmatprep.subr.mxu0 0.0
        %2206 = vmatpush1.msra.mxu0 %v2111
        %2207 = vmatprep.subr.mxu0 0.0
        %2208 = vmatpush1.msra.mxu0 %v2110
        %2209 = vmatprep.subr.mxu0 0.0
        %2210 = vmatpush1.msra.mxu0 %v2109
        %2211 = vmatprep.subr.mxu0 0.0
        %2212 = vmatpush1.msra.mxu0 %v2108
        %2213 = vmatprep.subr.mxu0 0.0
        %2214 = vmatpush1.msra.mxu0 %v2107
        %2215 = vmatprep.subr.mxu0 0.0
        %2216 = vmatpush2.msra.mxu0 0.0
        %2217 = vmatprep.subr.mxu0 0.0
        %2218 = vmatpush2.msra.mxu0 0.0
        %2219 = vmatprep.subr.mxu0 0.0
        %2220 = vmatpush2.msra.mxu0 0.0
        %2221 = vmatprep.subr.mxu0 0.0
        %2222 = vmatpush2.msra.mxu0 0.0
        %2223 = vmatprep.subr.mxu0 0.0
        %2224 = vmatpush2.msra.mxu0 0.0
        %2225 = vmatprep.subr.mxu0 0.0
        %2226 = vmatpush2.msra.mxu0 0.0
        %2227 = vmatprep.subr.mxu0 0.0
        %2228 = vmatpush2.msra.mxu0 0.0
        %2229 = vmatprep.subr.mxu0 0.0
        %2230 = vmatpush2.msra.mxu0 0.0
        %2231 = vmatprep.subr.mxu0 0.0
        %2232 = vmatpush2.msra.mxu0 0.0
        %2233 = vmatprep.subr.mxu0 0.0
        %2234 = vmatpush2.msra.mxu0 0.0
        %2235 = vmatprep.subr.mxu0 0.0
        %2236 = vmatpush2.msra.mxu0 0.0
        %2237 = vmatprep.subr.mxu0 0.0
        %2238 = vmatpush2.msra.mxu0 0.0
        %2239 = vmatprep.subr.mxu0 0.0
        %2240 = vmatpush2.msra.mxu0 0.0
        %2241 = vmatprep.subr.mxu0 0.0
        %2242 = vmatpush2.msra.mxu0 0.0
        %2243 = vmatprep.subr.mxu0 0.0
        %2244 = vmatpush2.msra.mxu0 0.0
        %2245 = vmatprep.subr.mxu0 0.0
        %2246 = vmatpush2.msra.mxu0 0.0
        %2247 = vmatprep.mubr.f32.mxu0 0.0
        %2248 = vmatmul.mubr.f32.gmra.mxu0 %v2167
        %v2249 = vpop.f32.mrf.mxu0
        %v2250 = vadd.f32 0.0, %v2249
        %v2251 = vpop.f32.mrf.mxu0
        %2252 = vmatprep.mubr.f32.mxu0 0.0
        %2253 = vmatmul.mubr.f32.gmra.mxu0 %v2168
        %v2254 = vpop.f32.mrf.mxu0
        %v2255 = vadd.f32 0.0, %v2254
        %v2256 = vpop.f32.mrf.mxu0
        %2257 = vmatprep.mubr.f32.mxu0 0.0
        %2258 = vmatmul.mubr.f32.gmra.mxu0 %v2169
        %v2259 = vpop.f32.mrf.mxu0
        %v2260 = vadd.f32 0.0, %v2259
        %v2261 = vpop.f32.mrf.mxu0
        %2262 = vmatprep.mubr.f32.mxu0 0.0
        %2263 = vmatmul.mubr.f32.gmra.mxu0 %v2170
        %v2264 = vpop.f32.mrf.mxu0
        %v2265 = vadd.f32 0.0, %v2264
        %v2266 = vpop.f32.mrf.mxu0
        %2267 = vdwg.mxu0
        %2268 = vmatprep.subr.mxu0 0.0
        %2269 = vmatpush1.msra.mxu0 %v2139
        %2270 = vmatprep.subr.mxu0 0.0
        %2271 = vmatpush1.msra.mxu0 %v2138
        %2272 = vmatprep.subr.mxu0 0.0
        %2273 = vmatpush1.msra.mxu0 %v2137
        %2274 = vmatprep.subr.mxu0 0.0
        %2275 = vmatpush1.msra.mxu0 %v2136
        %2276 = vmatprep.subr.mxu0 0.0
        %2277 = vmatpush1.msra.mxu0 %v2135
        %2278 = vmatprep.subr.mxu0 0.0
        %2279 = vmatpush1.msra.mxu0 %v2134
        %2280 = vmatprep.subr.mxu0 0.0
        %2281 = vmatpush1.msra.mxu0 %v2133
        %2282 = vmatprep.subr.mxu0 0.0
        %2283 = vmatpush1.msra.mxu0 %v2132
        %2284 = vmatprep.subr.mxu0 0.0
        %2285 = vmatpush1.msra.mxu0 %v2131
        %2286 = vmatprep.subr.mxu0 0.0
        %2287 = vmatpush1.msra.mxu0 %v2130
        %2288 = vmatprep.subr.mxu0 0.0
        %2289 = vmatpush1.msra.mxu0 %v2129
        %2290 = vmatprep.subr.mxu0 0.0
        %2291 = vmatpush1.msra.mxu0 %v2128
        %2292 = vmatprep.subr.mxu0 0.0
        %2293 = vmatpush1.msra.mxu0 %v2127
        %2294 = vmatprep.subr.mxu0 0.0
        %2295 = vmatpush1.msra.mxu0 %v2126
        %2296 = vmatprep.subr.mxu0 0.0
        %2297 = vmatpush1.msra.mxu0 %v2125
        %2298 = vmatprep.subr.mxu0 0.0
        %2299 = vmatpush1.msra.mxu0 %v2124
        %2300 = vmatprep.subr.mxu0 0.0
        %2301 = vmatpush2.msra.mxu0 0.0
        %2302 = vmatprep.subr.mxu0 0.0
        %2303 = vmatpush2.msra.mxu0 0.0
        %2304 = vmatprep.subr.mxu0 0.0
        %2305 = vmatpush2.msra.mxu0 0.0
        %2306 = vmatprep.subr.mxu0 0.0
        %2307 = vmatpush2.msra.mxu0 0.0
        %2308 = vmatprep.subr.mxu0 0.0
        %2309 = vmatpush2.msra.mxu0 0.0
        %2310 = vmatprep.subr.mxu0 0.0
        %2311 = vmatpush2.msra.mxu0 0.0
        %2312 = vmatprep.subr.mxu0 0.0
        %2313 = vmatpush2.msra.mxu0 0.0
        %2314 = vmatprep.subr.mxu0 0.0
        %2315 = vmatpush2.msra.mxu0 0.0
        %2316 = vmatprep.subr.mxu0 0.0
        %2317 = vmatpush2.msra.mxu0 0.0
        %2318 = vmatprep.subr.mxu0 0.0
        %2319 = vmatpush2.msra.mxu0 0.0
        %2320 = vmatprep.subr.mxu0 0.0
        %2321 = vmatpush2.msra.mxu0 0.0
        %2322 = vmatprep.subr.mxu0 0.0
        %2323 = vmatpush2.msra.mxu0 0.0
        %2324 = vmatprep.subr.mxu0 0.0
        %2325 = vmatpush2.msra.mxu0 0.0
        %2326 = vmatprep.subr.mxu0 0.0
        %2327 = vmatpush2.msra.mxu0 0.0
        %2328 = vmatprep.subr.mxu0 0.0
        %2329 = vmatpush2.msra.mxu0 0.0
        %2330 = vmatprep.subr.mxu0 0.0
        %2331 = vmatpush2.msra.mxu0 0.0
        %2332 = vmatprep.mubr.f32.mxu0 0.0
        %2333 = vmatmul.mubr.f32.gmra.mxu0 %v2102
        %v2334 = vpop.f32.mrf.mxu0
        %v2335 = vadd.f32 %v2250, %v2334
        %v2336 = vpop.f32.mrf.mxu0
        %2337 = vmatprep.mubr.f32.mxu0 0.0
        %2338 = vmatmul.mubr.f32.gmra.mxu0 %v2103
        %v2339 = vpop.f32.mrf.mxu0
        %v2340 = vadd.f32 %v2255, %v2339
        %v2341 = vpop.f32.mrf.mxu0
        %2342 = vmatprep.mubr.f32.mxu0 0.0
        %2343 = vmatmul.mubr.f32.gmra.mxu0 %v2104
        %v2344 = vpop.f32.mrf.mxu0
        %v2345 = vadd.f32 %v2260, %v2344
        %v2346 = vpop.f32.mrf.mxu0
        %2347 = vmatprep.mubr.f32.mxu0 0.0
        %2348 = vmatmul.mubr.f32.gmra.mxu0 %v2105
        %v2349 = vpop.f32.mrf.mxu0
        %v2350 = vadd.f32 %v2265, %v2349
        %v2351 = vpop.f32.mrf.mxu0
        %2352 = vdwg.mxu0
        %2353 = vmatprep.subr.mxu0 0.0
        %2354 = vmatpush1.msra.mxu0 %v2156
        %2355 = vmatprep.subr.mxu0 0.0
        %2356 = vmatpush1.msra.mxu0 %v2155
        %2357 = vmatprep.subr.mxu0 0.0
        %2358 = vmatpush1.msra.mxu0 %v2154
        %2359 = vmatprep.subr.mxu0 0.0
        %2360 = vmatpush1.msra.mxu0 %v2153
        %2361 = vmatprep.subr.mxu0 0.0
        %2362 = vmatpush1.msra.mxu0 %v2152
        %2363 = vmatprep.subr.mxu0 0.0
        %2364 = vmatpush1.msra.mxu0 %v2151
        %2365 = vmatprep.subr.mxu0 0.0
        %2366 = vmatpush1.msra.mxu0 %v2150
        %2367 = vmatprep.subr.mxu0 0.0
        %2368 = vmatpush1.msra.mxu0 %v2149
        %2369 = vmatprep.subr.mxu0 0.0
        %2370 = vmatpush1.msra.mxu0 %v2148
        %2371 = vmatprep.subr.mxu0 0.0
        %2372 = vmatpush1.msra.mxu0 %v2147
        %2373 = vmatprep.subr.mxu0 0.0
        %2374 = vmatpush1.msra.mxu0 %v2146
        %2375 = vmatprep.subr.mxu0 0.0
        %2376 = vmatpush1.msra.mxu0 %v2145
        %2377 = vmatprep.subr.mxu0 0.0
        %2378 = vmatpush1.msra.mxu0 %v2144
        %2379 = vmatprep.subr.mxu0 0.0
        %2380 = vmatpush1.msra.mxu0 %v2143
        %2381 = vmatprep.subr.mxu0 0.0
        %2382 = vmatpush1.msra.mxu0 %v2142
        %2383 = vmatprep.subr.mxu0 0.0
        %2384 = vmatpush1.msra.mxu0 %v2141
        %2385 = vmatprep.subr.mxu0 0.0
        %2386 = vmatpush2.msra.mxu0 0.0
        %2387 = vmatprep.subr.mxu0 0.0
        %2388 = vmatpush2.msra.mxu0 0.0
        %2389 = vmatprep.subr.mxu0 0.0
        %2390 = vmatpush2.msra.mxu0 0.0
        %2391 = vmatprep.subr.mxu0 0.0
        %2392 = vmatpush2.msra.mxu0 0.0
        %2393 = vmatprep.subr.mxu0 0.0
        %2394 = vmatpush2.msra.mxu0 0.0
        %2395 = vmatprep.subr.mxu0 0.0
        %2396 = vmatpush2.msra.mxu0 0.0
        %2397 = vmatprep.subr.mxu0 0.0
        %2398 = vmatpush2.msra.mxu0 0.0
        %2399 = vmatprep.subr.mxu0 0.0
        %2400 = vmatpush2.msra.mxu0 0.0
        %2401 = vmatprep.subr.mxu0 0.0
        %2402 = vmatpush2.msra.mxu0 0.0
        %2403 = vmatprep.subr.mxu0 0.0
        %2404 = vmatpush2.msra.mxu0 0.0
        %2405 = vmatprep.subr.mxu0 0.0
        %2406 = vmatpush2.msra.mxu0 0.0
        %2407 = vmatprep.subr.mxu0 0.0
        %2408 = vmatpush2.msra.mxu0 0.0
        %2409 = vmatprep.subr.mxu0 0.0
        %2410 = vmatpush2.msra.mxu0 0.0
        %2411 = vmatprep.subr.mxu0 0.0
        %2412 = vmatpush2.msra.mxu0 0.0
        %2413 = vmatprep.subr.mxu0 0.0
        %2414 = vmatpush2.msra.mxu0 0.0
        %2415 = vmatprep.subr.mxu0 0.0
        %2416 = vmatpush2.msra.mxu0 0.0
        %2417 = vmatprep.mubr.f32.mxu0 0.0
        %2418 = vmatmul.mubr.f32.gmra.mxu0 %v2179
        %v2419 = vpop.f32.mrf.mxu0
        %v2420 = vadd.f32 0.0, %v2419
        %v2421 = vpop.f32.mrf.mxu0
        %2422 = vmatprep.mubr.f32.mxu0 0.0
        %2423 = vmatmul.mubr.f32.gmra.mxu0 %v2180
        %v2424 = vpop.f32.mrf.mxu0
        %v2425 = vadd.f32 0.0, %v2424
        %v2426 = vpop.f32.mrf.mxu0
        %2427 = vmatprep.mubr.f32.mxu0 0.0
        %2428 = vmatmul.mubr.f32.gmra.mxu0 %v2181
        %v2429 = vpop.f32.mrf.mxu0
        %v2430 = vadd.f32 0.0, %v2429
        %v2431 = vpop.f32.mrf.mxu0
        %2432 = vmatprep.mubr.f32.mxu0 0.0
        %2433 = vmatmul.mubr.f32.gmra.mxu0 %v2182
        %v2434 = vpop.f32.mrf.mxu0
        %v2435 = vadd.f32 0.0, %v2434
        %v2436 = vpop.f32.mrf.mxu0
        %2437 = vdwg.mxu0
        %v2438 = vadd.f32 %v2335, %v2420
        %v2439 = vadd.f32 %v2340, %v2425
        %v2440 = vadd.f32 %v2345, %v2430
        %v2441 = vadd.f32 %v2350, %v2435
        %v2443 = vlaneseq
        %v2444 = vshrl.u32 %v2443, 7
        %v2445 = vsub.s32 0, %v2444
        %v2446 = vrot.slane %v2158, %v2445
        %v2448 = vadd.f32 %v2438, %v2446
        %v2449 = vadd.f32 %v2439, %v2446
        %v2450 = vadd.f32 %v2440, %v2446
        %v2451 = vadd.f32 %v2441, %v2446
        %v2452 = vadd.f32 %v1752, %v2448
        %v2453 = vadd.f32 %v1753, %v2449
        %v2454 = vadd.f32 %v1754, %v2450
        %v2455 = vadd.f32 %v1755, %v2451
        %v2456 = vmax.f32 %v2452, 0.0
        %v2457 = vmax.f32 %v2453, 0.0
        %v2458 = vmax.f32 %v2454, 0.0
        %v2459 = vmax.f32 %v2455, 0.0
        %v2460 = vadd.f32 %v2456, %v2457
        %v2461 = vrot.slane %v2460, 4
        %v2462 = vadd.f32 %v2460, %v2461
        %v2463 = vrot.slane %v2462, 2
        %v2464 = vadd.f32 %v2462, %v2463
        %v2465 = vrot.slane %v2464, 1
        %v2466 = vadd.f32 %v2464, %v2465
        %v2467 = vadd.f32 %v2458, %v2459
        %v2468 = vrot.slane %v2467, 4
        %v2469 = vadd.f32 %v2467, %v2468
        %v2470 = vrot.slane %v2469, 2
        %v2471 = vadd.f32 %v2469, %v2470
        %v2472 = vrot.slane %v2471, 1
        %v2473 = vadd.f32 %v2471, %v2472
        %v2474 = vmul.f32 %v2466, 0.0625
        %v2475 = vmul.f32 %v2473, 0.0625
        %v2476 = vld [vmem:[#allocation10] sm:$0xff]
        %v2477 = vld [vmem:[#allocation10 + $0x8] sm:$0xff]
        %v2478 = vld [vmem:[#allocation10 + $0x10] sm:$0xff]
        %v2479 = vld [vmem:[#allocation10 + $0x18] sm:$0xff]
        %v2480 = vld [vmem:[#allocation10 + $0x20] sm:$0xff]
        %v2481 = vld [vmem:[#allocation10 + $0x28] sm:$0xff]
        %v2482 = vld [vmem:[#allocation10 + $0x30] sm:$0xff]
        %v2483 = vld [vmem:[#allocation10 + $0x38] sm:$0xff]
        %v2484 = vld [vmem:[#allocation10 + $0x40] sm:$0xff]
        %v2485 = vld [vmem:[#allocation10 + $0x48] sm:$0xff]
        %v2486 = vld [vmem:[#allocation10 + $0x50] sm:$0xff]
        %v2487 = vld [vmem:[#allocation10 + $0x58] sm:$0xff]
        %v2488 = vld [vmem:[#allocation10 + $0x60] sm:$0xff]
        %v2489 = vld [vmem:[#allocation10 + $0x68] sm:$0xff]
        %v2490 = vld [vmem:[#allocation10 + $0x70] sm:$0xff]
        %v2491 = vld [vmem:[#allocation10 + $0x78] sm:$0xff]
        %v2492 = vld [vmem:[%s9] sm:$0x1]
        %v2494 = vlaneseq
        %v2495 = vshrl.u32 %v2494, 7
        %v2496 = vsub.s32 0, %v2495
        %v2497 = vrot.slane %v2492, %v2496
        %vm2501 = vcmask 1041409
        %v2502 = vsel %vm2501, %v2475, %v2474
        %2504 = vmatprep.subr.mxu0 0.0
        %2505 = vmatpush1.msra.mxu0 %v2491
        %2506 = vmatprep.subr.mxu0 0.0
        %2507 = vmatpush1.msra.mxu0 %v2490
        %2508 = vmatprep.subr.mxu0 0.0
        %2509 = vmatpush1.msra.mxu0 %v2489
        %2510 = vmatprep.subr.mxu0 0.0
        %2511 = vmatpush1.msra.mxu0 %v2488
        %2512 = vmatprep.subr.mxu0 0.0
        %2513 = vmatpush1.msra.mxu0 %v2487
        %2514 = vmatprep.subr.mxu0 0.0
        %2515 = vmatpush1.msra.mxu0 %v2486
        %2516 = vmatprep.subr.mxu0 0.0
        %2517 = vmatpush1.msra.mxu0 %v2485
        %2518 = vmatprep.subr.mxu0 0.0
        %2519 = vmatpush1.msra.mxu0 %v2484
        %2520 = vmatprep.subr.mxu0 0.0
        %2521 = vmatpush1.msra.mxu0 %v2483
        %2522 = vmatprep.subr.mxu0 0.0
        %2523 = vmatpush1.msra.mxu0 %v2482
        %2524 = vmatprep.subr.mxu0 0.0
        %2525 = vmatpush1.msra.mxu0 %v2481
        %2526 = vmatprep.subr.mxu0 0.0
        %2527 = vmatpush1.msra.mxu0 %v2480
        %2528 = vmatprep.subr.mxu0 0.0
        %2529 = vmatpush1.msra.mxu0 %v2479
        %2530 = vmatprep.subr.mxu0 0.0
        %2531 = vmatpush1.msra.mxu0 %v2478
        %2532 = vmatprep.subr.mxu0 0.0
        %2533 = vmatpush1.msra.mxu0 %v2477
        %2534 = vmatprep.subr.mxu0 0.0
        %2535 = vmatpush1.msra.mxu0 %v2476
        %2536 = vmatprep.subr.mxu0 0.0
        %2537 = vmatpush2.msra.mxu0 0.0
        %2538 = vmatprep.subr.mxu0 0.0
        %2539 = vmatpush2.msra.mxu0 0.0
        %2540 = vmatprep.subr.mxu0 0.0
        %2541 = vmatpush2.msra.mxu0 0.0
        %2542 = vmatprep.subr.mxu0 0.0
        %2543 = vmatpush2.msra.mxu0 0.0
        %2544 = vmatprep.subr.mxu0 0.0
        %2545 = vmatpush2.msra.mxu0 0.0
        %2546 = vmatprep.subr.mxu0 0.0
        %2547 = vmatpush2.msra.mxu0 0.0
        %2548 = vmatprep.subr.mxu0 0.0
        %2549 = vmatpush2.msra.mxu0 0.0
        %2550 = vmatprep.subr.mxu0 0.0
        %2551 = vmatpush2.msra.mxu0 0.0
        %2552 = vmatprep.subr.mxu0 0.0
        %2553 = vmatpush2.msra.mxu0 0.0
        %2554 = vmatprep.subr.mxu0 0.0
        %2555 = vmatpush2.msra.mxu0 0.0
        %2556 = vmatprep.subr.mxu0 0.0
        %2557 = vmatpush2.msra.mxu0 0.0
        %2558 = vmatprep.subr.mxu0 0.0
        %2559 = vmatpush2.msra.mxu0 0.0
        %2560 = vmatprep.subr.mxu0 0.0
        %2561 = vmatpush2.msra.mxu0 0.0
        %2562 = vmatprep.subr.mxu0 0.0
        %2563 = vmatpush2.msra.mxu0 0.0
        %2564 = vmatprep.subr.mxu0 0.0
        %2565 = vmatpush2.msra.mxu0 0.0
        %2566 = vmatprep.subr.mxu0 0.0
        %2567 = vmatpush2.msra.mxu0 0.0
        %2568 = vmatprep.mubr.f32.mxu0 0.0
        %2569 = vmatmul.mubr.f32.gmra.mxu0 %v2502
        %v2570 = vpop.f32.mrf.mxu0
        %v2571 = vadd.f32 %v2497, %v2570
        %v2572 = vpop.f32.mrf.mxu0
        %2573 = vdwg.mxu0
        %2574 = vst [vmem:[%s456] sm:$0x3] %v2571
        %2575 = vst [vmem:[%s463] sm:$0x3] %v2502
        %s2576 = sand.u32 %s255, 1
        %s2577 = scalar_lea.sflag [#allocation4], %s2576
        %s2578 = sand.u32 %s255, 1
        %s2579 = smul.addr %s2578, 2
        %s2580 = scalar_lea.vmem [#allocation11], %s2579
        %s2581 = sand.u32 %s281, 1
        %s2582 = scalar_lea.sflag [#allocation13], %s2581
        %s2583 = sand.u32 %s281, 1
        %s2584 = smul.addr %s2583, 2
        %s2585 = scalar_lea.vmem [#allocation12], %s2584
        // Predicated region
        $region81: #{tpu_custom_call.1} parent=59 // pred_check
          %p2586 = pneg %p265
        $region82: #{tpu_custom_call.1} parent=59 // pred_check_branch
          %2588 = sbr.rel (%p2586) target = $region84
        $region83: #{tpu_custom_call.1} parent=59 // pred_region
          %s2590 = ssub.s32 32, 32
          %2591 = vsyncadd %s2577, %s2590
          %s2592 = smul.addr %s32, 32
          %s2593 = scalar_lea.hbm %s10, %s2592
          %s2595 = sshll.u32 %s2580, 4
          %s2596 = int_to_ptr.vmem [resolvable:$true] %s2595
          %2598 = dma.vmem_to_hbm [thread:$0]  %s2596, 32, %s2593, %s2577
        $region84: #{tpu_custom_call.1} parent=59 // pred_fallthru
          _
        // Predicated region
        $region85: #{tpu_custom_call.1} parent=59 // pred_check
          %p2599 = pneg %p291
        $region86: #{tpu_custom_call.1} parent=59 // pred_check_branch
          %2601 = sbr.rel (%p2599) target = $region88
        $region87: #{tpu_custom_call.1} parent=59 // pred_region
          %s2603 = ssub.s32 32, 32
          %2604 = vsyncadd %s2582, %s2603
          %s2605 = smul.addr %s32, 32
          %s2606 = scalar_lea.hbm %s11, %s2605
          %s2608 = sshll.u32 %s2585, 4
          %s2609 = int_to_ptr.vmem [resolvable:$true] %s2608
          %2611 = dma.vmem_to_hbm [thread:$0]  %s2609, 32, %s2606, %s2582
        $region88: #{tpu_custom_call.1} parent=59 // pred_fallthru
          _
      $region60: #{tpu_custom_call.1} parent=5 // pred_fallthru
        _
      %p2612 = scmp.le.s32.totalorder 2, %s27
      // Predicated region
      $region89: #{tpu_custom_call.1} parent=5 // pred_check
        %p2613 = pneg %p2612
      $region90: #{tpu_custom_call.1} parent=5 // pred_check_branch
        %2615 = sbr.rel (%p2613) target = $region92
      $region91: #{tpu_custom_call.1} parent=5 // pred_region
        %s2616 = ssub.s32 %s27, 2
        // Predicated region
        $region93: #{tpu_custom_call.1} parent=91 // pred_check
          %p2617 = pneg %p271
        $region94: #{tpu_custom_call.1} parent=91 // pred_check_branch
          %2619 = sbr.rel (%p2617) target = $region96
        $region95: #{tpu_custom_call.1} parent=91 // pred_region
          %s2620 = sand.u32 %s256, 1
          %s2621 = scalar_lea.sflag [#allocation4], %s2620
          %s2622 = sand.u32 %s256, 1
          %s2623 = smul.addr %s2622, 2
          %s2624 = scalar_lea.vmem [#allocation11], %s2623
          %2625 = dma.done %s2621, 32
        $region96: #{tpu_custom_call.1} parent=91 // pred_fallthru
          _
        // Predicated region
        $region97: #{tpu_custom_call.1} parent=91 // pred_check
          %p2626 = pneg %p297
        $region98: #{tpu_custom_call.1} parent=91 // pred_check_branch
          %2628 = sbr.rel (%p2626) target = $region100
        $region99: #{tpu_custom_call.1} parent=91 // pred_region
          %s2629 = sand.u32 %s282, 1
          %s2630 = scalar_lea.sflag [#allocation13], %s2629
          %s2631 = sand.u32 %s282, 1
          %s2632 = smul.addr %s2631, 2
          %s2633 = scalar_lea.vmem [#allocation12], %s2632
          %2634 = dma.done %s2630, 32
        $region100: #{tpu_custom_call.1} parent=91 // pred_fallthru
          _
      $region92: #{tpu_custom_call.1} parent=5 // pred_fallthru
        _
    $region6: #{tpu_custom_call.1} parent=1 // loop_footer
      %s31 = sadd.s32 1, %s27
    $region7: #{tpu_custom_call.1} parent=1 // loop_footer_branch
      %26 = sbr.rel target = $region3
    $region8: #{tpu_custom_call.1} parent=1 // loop_exit
      _
    %2635 = vsyncpa [#allocation3], 1
    %s2636 = scalar_lea.sflag [#allocation3], 1
    %2637 = vsyncpa %s2636, 1
    %2638 = vsyncpa [#allocation6], 1
    %2639 = vsyncpa [#allocation9], 1
    %2640 = vsyncpa [#allocation4], 1
    %s2641 = scalar_lea.sflag [#allocation4], 1
    %2642 = vsyncpa %s2641, 1
    %2643 = vsyncpa [#allocation13], 1
    %s2644 = scalar_lea.sflag [#allocation13], 1
    %2645 = vsyncpa %s2644, 1

// kernel: tpu_custom_call.1
$region0: #{tpu_custom_call.1}
  #allocation0 [shape = 'u32[]', space=smem, size = 0x4, offset = 0x4, fixed_abs, tag = 'smem constant byte address 0x4 - core index']
  #allocation1 [shape = 'u32[144,128]{1,0:T(1,128)}', space=vmem, size = 0x12000, scoped, tag = 'internal scratch']
  %s0 = inlined_call_operand.vmem [shape: s32[2,32,1], index: 0, kind: input, shape index: {}]
  %s1 = inlined_call_operand.hbm [shape: f32[256,128], index: 1, kind: input, shape index: {}]
  %s2 = inlined_call_operand.hbm [shape: f32[3,128,128], index: 2, kind: input, shape index: {}]
  %s3 = inlined_call_operand.vmem [shape: f32[1,128], index: 3, kind: input, shape index: {}]
  %s4 = inlined_call_operand.hbm [shape: f32[2,3,128,128], index: 4, kind: input, shape index: {}]
  %s5 = inlined_call_operand.vmem [shape: f32[2,1,128], index: 5, kind: input, shape index: {}]
  %s6 = inlined_call_operand.hbm [shape: f32[2,3,128,128], index: 6, kind: input, shape index: {}]
  %s7 = inlined_call_operand.vmem [shape: f32[2,1,128], index: 7, kind: input, shape index: {}]
  %s8 = inlined_call_operand.hbm [shape: f32[128,128], index: 8, kind: input, shape index: {}]
  %s9 = inlined_call_operand.vmem [shape: f32[1,128], index: 9, kind: input, shape index: {}]
  %s10 = inlined_call_operand.hbm [shape: f32[2,2,128], index: 10, kind: output, shape index: {0}]
  %s11 = inlined_call_operand.hbm [shape: f32[2,2,128], index: 11, kind: output, shape index: {1}]
  %12 = xla_tuple %s10, %s11
  %s13 = sld [smem:[#allocation0]]
  $region101: #{tpu_custom_call.1} parent=0
    _
  %s15 = ssub.s32 1, %s13
  %s16 = scalar_select 0, %s15, %s13
  $region1: #{tpu_custom_call.1} parent=0
    #allocation2 [shape = 'u8[131072]{0}', space=vmem, size = 0x20000, scoped, tag = 'input window, operand 1, single buffered']
    #allocation3 [shape = 's32[2]{0}', space=sflag, size = 0x8, scoped, tag = 'scoped memory for tpu_custom_call.1']
    #allocation4 [shape = 's32[2]{0}', space=sflag, size = 0x8, scoped, tag = 'scoped memory for tpu_custom_call.1']
    #allocation5 [shape = 'u8[196608]{0}', space=vmem, size = 0x30000, scoped, tag = 'input window, operand 2, single buffered']
    #allocation6 [shape = 's32[1]{0}', space=sflag, size = 0x4, scoped, tag = 'scoped memory for tpu_custom_call.1']
    #allocation7 [shape = 'u8[393216]{0}', space=vmem, size = 0x60000, scoped, tag = 'input window, operand 4, single buffered']
    #allocation8 [shape = 'u8[393216]{0}', space=vmem, size = 0x60000, scoped, tag = 'input window, operand 6, single buffered']
    #allocation9 [shape = 's32[1]{0}', space=sflag, size = 0x4, scoped, tag = 'scoped memory for tpu_custom_call.1']
    #allocation10 [shape = 'u8[65536]{0}', space=vmem, size = 0x10000, scoped, tag = 'input window, operand 8, single buffered']
    #allocation11 [shape = 'u8[2048]{0}', space=vmem, size = 0x800, scoped, tag = 'output window, operand 0']
    #allocation12 [shape = 'u8[2048]{0}', space=vmem, size = 0x800, scoped, tag = 'output window, operand 1']
    #allocation13 [shape = 's32[2]{0}', space=sflag, size = 0x8, scoped, tag = 'scoped memory for tpu_custom_call.1']
    %17 = vsyncpa [#allocation3], 0
    %18 = vsyncpa [#allocation6], 0
    %19 = vsyncpa [#allocation9], 0
    %20 = vsyncpa [#allocation4], 0
    %s21 = scalar_lea.sflag [#allocation4], 1
    %22 = vsyncpa %s21, 0
    %23 = vsyncpa [#allocation13], 0
    %s24 = scalar_lea.sflag [#allocation13], 1
    %25 = vsyncpa %s24, 0
    loop: start=0, step=1, limit=4
    $region2: #{tpu_custom_call.1} parent=1 // loop_pre_header
      _
    $region3: #{tpu_custom_call.1} parent=1 // loop_header
      %s27 = sphi 0, %s31
      %p28 = scmp.ge.s32.totalorder %s27, 4
      %s37 = sphi 0, %s39
      %s40 = sphi 0, %s37
      %s41 = sphi 0, %s40
      %s57 = sphi 0, %s41
      %s61 = sphi 0, %s61
      %s63 = sphi 0, %s61
      %s64 = sphi 0, %s63
      %s78 = sphi 0, %s64
      %s82 = sphi 0, %s82
      %s84 = sphi 0, %s82
      %s85 = sphi 0, %s84
      %s99 = sphi 0, %s85
      %s103 = sphi 0, %s103
      %s105 = sphi 0, %s103
      %s106 = sphi 0, %s105
      %s120 = sphi 0, %s106
      %s124 = sphi 0, %s124
      %s126 = sphi 0, %s124
      %s127 = sphi 0, %s126
      %s141 = sphi 0, %s127
      %s145 = sphi 0, %s145
      %s147 = sphi 0, %s145
      %s148 = sphi 0, %s147
      %s162 = sphi 0, %s148
      %s166 = sphi 0, %s166
      %s168 = sphi 0, %s166
      %s169 = sphi 0, %s168
      %s183 = sphi 0, %s169
      %s187 = sphi 0, %s187
      %s189 = sphi 0, %s187
      %s190 = sphi 0, %s189
      %s204 = sphi 0, %s190
      %s208 = sphi 0, %s208
      %s210 = sphi 0, %s208
      %s211 = sphi 0, %s210
      %s225 = sphi 0, %s211
      %s229 = sphi 0, %s229
      %s231 = sphi 0, %s229
      %s232 = sphi 0, %s231
      %s246 = sphi 0, %s232
      %s252 = sphi 0, %s254
      %s255 = sphi 0, %s252
      %s256 = sphi 0, %s255
      %s272 = sphi 0, %s256
      %s278 = sphi 0, %s280
      %s281 = sphi 0, %s278
      %s282 = sphi 0, %s281
      %s298 = sphi 0, %s282
    $region4: #{tpu_custom_call.1} parent=1 // loop_header_branch
      %30 = sbr.rel (%p28) target = $region8
    $region5: #{tpu_custom_call.1} parent=1 // loop_body
      %s32 = ssub.s32 %s27, 1
      %s33 = ssub.s32 %s27, 2
      %s34 = sadd.s32 %s27, 1
      %s35 = ssub.s32 %s27, %s34
      %p36 = scmp.eq.s32.totalorder %s35, 0
      %s38 = sadd.s32 %s37, 1
      %s39 = scalar_select %p36, %s37, %s38
      %p42 = pneg %p36
      %p43 = scmp.eq.s32.totalorder %s27, 1
      %p44 = por %p42, %p43
      %p45 = scmp.ne.s32.totalorder %s37, %s40
      %p46 = scmp.eq.s32.totalorder %s27, 0
      %p47 = por %p45, %p46
      %p48 = scmp.ne.s32.totalorder %s37, %s40
      %p49 = scmp.eq.s32.totalorder %s32, 1
      %p50 = por %p48, %p49
      %p51 = scmp.ne.s32.totalorder %s40, %s41
      %p52 = scmp.eq.s32.totalorder %s32, 0
      %p53 = por %p51, %p52
      %p54 = scmp.ne.s32.totalorder %s40, %s41
      %p55 = scmp.eq.s32.totalorder %s33, 1
      %p56 = por %p54, %p55
      %p58 = scmp.ne.s32.totalorder %s41, %s57
      %p59 = scmp.eq.s32.totalorder %s33, 0
      %p60 = por %p58, %p59
      %s62 = sadd.s32 %s61, 1
      %p65 = scmp.eq.s32.totalorder %s27, 1
      %p66 = scmp.ne.s32.totalorder %s61, %s63
      %p67 = scmp.eq.s32.totalorder %s27, 0
      %p68 = por %p66, %p67
      %p69 = scmp.ne.s32.totalorder %s61, %s63
      %p70 = scmp.eq.s32.totalorder %s32, 1
      %p71 = por %p69, %p70
      %p72 = scmp.ne.s32.totalorder %s63, %s64
      %p73 = scmp.eq.s32.totalorder %s32, 0
      %p74 = por %p72, %p73
      %p75 = scmp.ne.s32.totalorder %s63, %s64
      %p76 = scmp.eq.s32.totalorder %s33, 1
      %p77 = por %p75, %p76
      %p79 = scmp.ne.s32.totalorder %s64, %s78
      %p80 = scmp.eq.s32.totalorder %s33, 0
      %p81 = por %p79, %p80
      %s83 = sadd.s32 %s82, 1
      %p86 = scmp.eq.s32.totalorder %s27, 1
      %p87 = scmp.ne.s32.totalorder %s82, %s84
      %p88 = scmp.eq.s32.totalorder %s27, 0
      %p89 = por %p87, %p88
      %p90 = scmp.ne.s32.totalorder %s82, %s84
      %p91 = scmp.eq.s32.totalorder %s32, 1
      %p92 = por %p90, %p91
      %p93 = scmp.ne.s32.totalorder %s84, %s85
      %p94 = scmp.eq.s32.totalorder %s32, 0
      %p95 = por %p93, %p94
      %p96 = scmp.ne.s32.totalorder %s84, %s85
      %p97 = scmp.eq.s32.totalorder %s33, 1
      %p98 = por %p96, %p97
      %p100 = scmp.ne.s32.totalorder %s85, %s99
      %p101 = scmp.eq.s32.totalorder %s33, 0
      %p102 = por %p100, %p101
      %s104 = sadd.s32 %s103, 1
      %p107 = scmp.eq.s32.totalorder %s27, 1
      %p108 = scmp.ne.s32.totalorder %s103, %s105
      %p109 = scmp.eq.s32.totalorder %s27, 0
      %p110 = por %p108, %p109
      %p111 = scmp.ne.s32.totalorder %s103, %s105
      %p112 = scmp.eq.s32.totalorder %s32, 1
      %p113 = por %p111, %p112
      %p114 = scmp.ne.s32.totalorder %s105, %s106
      %p115 = scmp.eq.s32.totalorder %s32, 0
      %p116 = por %p114, %p115
      %p117 = scmp.ne.s32.totalorder %s105, %s106
      %p118 = scmp.eq.s32.totalorder %s33, 1
      %p119 = por %p117, %p118
      %p121 = scmp.ne.s32.totalorder %s106, %s120
      %p122 = scmp.eq.s32.totalorder %s33, 0
      %p123 = por %p121, %p122
      %s125 = sadd.s32 %s124, 1
      %p128 = scmp.eq.s32.totalorder %s27, 1
      %p129 = scmp.ne.s32.totalorder %s124, %s126
      %p130 = scmp.eq.s32.totalorder %s27, 0
      %p131 = por %p129, %p130
      %p132 = scmp.ne.s32.totalorder %s124, %s126
      %p133 = scmp.eq.s32.totalorder %s32, 1
      %p134 = por %p132, %p133
      %p135 = scmp.ne.s32.totalorder %s126, %s127
      %p136 = scmp.eq.s32.totalorder %s32, 0
      %p137 = por %p135, %p136
      %p138 = scmp.ne.s32.totalorder %s126, %s127
      %p139 = scmp.eq.s32.totalorder %s33, 1
      %p140 = por %p138, %p139
      %p142 = scmp.ne.s32.totalorder %s127, %s141
      %p143 = scmp.eq.s32.totalorder %s33, 0
      %p144 = por %p142, %p143
      %s146 = sadd.s32 %s145, 1
      %p149 = scmp.eq.s32.totalorder %s27, 1
      %p150 = scmp.ne.s32.totalorder %s145, %s147
      %p151 = scmp.eq.s32.totalorder %s27, 0
      %p152 = por %p150, %p151
      %p153 = scmp.ne.s32.totalorder %s145, %s147
      %p154 = scmp.eq.s32.totalorder %s32, 1
      %p155 = por %p153, %p154
      %p156 = scmp.ne.s32.totalorder %s147, %s148
      %p157 = scmp.eq.s32.totalorder %s32, 0
      %p158 = por %p156, %p157
      %p159 = scmp.ne.s32.totalorder %s147, %s148
      %p160 = scmp.eq.s32.totalorder %s33, 1
      %p161 = por %p159, %p160
      %p163 = scmp.ne.s32.totalorder %s148, %s162
      %p164 = scmp.eq.s32.totalorder %s33, 0
      %p165 = por %p163, %p164
      %s167 = sadd.s32 %s166, 1
      %p170 = scmp.eq.s32.totalorder %s27, 1
      %p171 = scmp.ne.s32.totalorder %s166, %s168
      %p172 = scmp.eq.s32.totalorder %s27, 0
      %p173 = por %p171, %p172
      %p174 = scmp.ne.s32.totalorder %s166, %s168
      %p175 = scmp.eq.s32.totalorder %s32, 1
      %p176 = por %p174, %p175
      %p177 = scmp.ne.s32.totalorder %s168, %s169
      %p178 = scmp.eq.s32.totalorder %s32, 0
      %p179 = por %p177, %p178
      %p180 = scmp.ne.s32.totalorder %s168, %s169
      %p181 = scmp.eq.s32.totalorder %s33, 1
      %p182 = por %p180, %p181
      %p184 = scmp.ne.s32.totalorder %s169, %s183
      %p185 = scmp.eq.s32.totalorder %s33, 0
      %p186 = por %p184, %p185
      %s188 = sadd.s32 %s187, 1
      %p191 = scmp.eq.s32.totalorder %s27, 1
      %p192 = scmp.ne.s32.totalorder %s187, %s189
      %p193 = scmp.eq.s32.totalorder %s27, 0
      %p194 = por %p192, %p193
      %p195 = scmp.ne.s32.totalorder %s187, %s189
      %p196 = scmp.eq.s32.totalorder %s32, 1
      %p197 = por %p195, %p196
      %p198 = scmp.ne.s32.totalorder %s189, %s190
      %p199 = scmp.eq.s32.totalorder %s32, 0
      %p200 = por %p198, %p199
      %p201 = scmp.ne.s32.totalorder %s189, %s190
      %p202 = scmp.eq.s32.totalorder %s33, 1
      %p203 = por %p201, %p202
      %p205 = scmp.ne.s32.totalorder %s190, %s204
      %p206 = scmp.eq.s32.totalorder %s33, 0
      %p207 = por %p205, %p206
      %s209 = sadd.s32 %s208, 1
      %p212 = scmp.eq.s32.totalorder %s27, 1
      %p213 = scmp.ne.s32.totalorder %s208, %s210
      %p214 = scmp.eq.s32.totalorder %s27, 0
      %p215 = por %p213, %p214
      %p216 = scmp.ne.s32.totalorder %s208, %s210
      %p217 = scmp.eq.s32.totalorder %s32, 1
      %p218 = por %p216, %p217
      %p219 = scmp.ne.s32.totalorder %s210, %s211
      %p220 = scmp.eq.s32.totalorder %s32, 0
      %p221 = por %p219, %p220
      %p222 = scmp.ne.s32.totalorder %s210, %s211
      %p223 = scmp.eq.s32.totalorder %s33, 1
      %p224 = por %p222, %p223
      %p226 = scmp.ne.s32.totalorder %s211, %s225
      %p227 = scmp.eq.s32.totalorder %s33, 0
      %p228 = por %p226, %p227
      %s230 = sadd.s32 %s229, 1
      %p233 = scmp.eq.s32.totalorder %s27, 1
      %p234 = scmp.ne.s32.totalorder %s229, %s231
      %p235 = scmp.eq.s32.totalorder %s27, 0
      %p236 = por %p234, %p235
      %p237 = scmp.ne.s32.totalorder %s229, %s231
      %p238 = scmp.eq.s32.totalorder %s32, 1
      %p239 = por %p237, %p238
      %p240 = scmp.ne.s32.totalorder %s231, %s232
      %p241 = scmp.eq.s32.totalorder %s32, 0
      %p242 = por %p240, %p241
      %p243 = scmp.ne.s32.totalorder %s231, %s232
      %p244 = scmp.eq.s32.totalorder %s33, 1
      %p245 = por %p243, %p244
      %p247 = scmp.ne.s32.totalorder %s232, %s246
      %p248 = scmp.eq.s32.totalorder %s33, 0
      %p249 = por %p247, %p248
      %s250 = ssub.s32 %s27, %s34
      %p251 = scmp.eq.s32.totalorder %s250, 0
      %s253 = sadd.s32 %s252, 1
      %s254 = scalar_select %p251, %s252, %s253
      %p257 = pneg %p251
      %p258 = scmp.eq.s32.totalorder %s27, 1
      %p259 = por %p257, %p258
      %p260 = scmp.ne.s32.totalorder %s252, %s255
      %p261 = scmp.eq.s32.totalorder %s27, 0
      %p262 = por %p260, %p261
      %p263 = scmp.ne.s32.totalorder %s252, %s255
      %p264 = scmp.eq.s32.totalorder %s32, 1
      %p265 = por %p263, %p264
      %p266 = scmp.ne.s32.totalorder %s255, %s256
      %p267 = scmp.eq.s32.totalorder %s32, 0
      %p268 = por %p266, %p267
      %p269 = scmp.ne.s32.totalorder %s255, %s256
      %p270 = scmp.eq.s32.totalorder %s33, 1
      %p271 = por %p269, %p270
      %p273 = scmp.ne.s32.totalorder %s256, %s272
      %p274 = scmp.eq.s32.totalorder %s33, 0
      %p275 = por %p273, %p274
      %s276 = ssub.s32 %s27, %s34
      %p277 = scmp.eq.s32.totalorder %s276, 0
      %s279 = sadd.s32 %s278, 1
      %s280 = scalar_select %p277, %s278, %s279
      %p283 = pneg %p277
      %p284 = scmp.eq.s32.totalorder %s27, 1
      %p285 = por %p283, %p284
      %p286 = scmp.ne.s32.totalorder %s278, %s281
      %p287 = scmp.eq.s32.totalorder %s27, 0
      %p288 = por %p286, %p287
      %p289 = scmp.ne.s32.totalorder %s278, %s281
      %p290 = scmp.eq.s32.totalorder %s32, 1
      %p291 = por %p289, %p290
      %p292 = scmp.ne.s32.totalorder %s281, %s282
      %p293 = scmp.eq.s32.totalorder %s32, 0
      %p294 = por %p292, %p293
      %p295 = scmp.ne.s32.totalorder %s281, %s282
      %p296 = scmp.eq.s32.totalorder %s33, 1
      %p297 = por %p295, %p296
      %p299 = scmp.ne.s32.totalorder %s282, %s298
      %p300 = scmp.eq.s32.totalorder %s33, 0
      %p301 = por %p299, %p300
      %p302 = scmp.le.s32.totalorder 1, %s27
      %p303 = scmp.lt.s32.totalorder %s27, 3
      %p304 = pnand %p302, %p303
      %p305 = pneg %p304
      // Predicated region
      $region9: #{tpu_custom_call.1} parent=5 // pred_check
        _
      $region10: #{tpu_custom_call.1} parent=5 // pred_check_branch
        %307 = sbr.rel (%p304) target = $region12
      $region11: #{tpu_custom_call.1} parent=5 // pred_region
        %s308 = ssub.s32 %s27, 1
        // Predicated region
        $region13: #{tpu_custom_call.1} parent=11 // pred_check
          %p309 = pneg %p74
        $region14: #{tpu_custom_call.1} parent=11 // pred_check_branch
          %311 = sbr.rel (%p309) target = $region16
        $region15: #{tpu_custom_call.1} parent=11 // pred_region
          %s313 = ssub.s32 4096, 4096
          %314 = vsyncadd [#allocation3], %s313
          %s315 = sshll.u32 [#allocation2], 4
          %s316 = int_to_ptr.vmem [resolvable:$true] %s315
          %321 = dma.hbm_to_vmem [thread:$0]  %s1, 4096, %s316, [#allocation3], 128, 128, 8
        $region16: #{tpu_custom_call.1} parent=11 // pred_fallthru
          _
        // Predicated region
        $region17: #{tpu_custom_call.1} parent=11 // pred_check
          %p322 = pneg %p95
        $region18: #{tpu_custom_call.1} parent=11 // pred_check_branch
          %324 = sbr.rel (%p322) target = $region20
        $region19: #{tpu_custom_call.1} parent=11 // pred_region
          %s326 = ssub.s32 6144, 6144
          %327 = vsyncadd [#allocation6], %s326
          %s328 = sshll.u32 [#allocation5], 4
          %s329 = int_to_ptr.vmem [resolvable:$true] %s328
          %334 = dma.hbm_to_vmem [thread:$0]  %s2, 6144, %s329, [#allocation6], 128, 128, 8
        $region20: #{tpu_custom_call.1} parent=11 // pred_fallthru
          _
        // Predicated region
        $region21: #{tpu_custom_call.1} parent=11 // pred_check
          %p335 = pneg %p116
        $region22: #{tpu_custom_call.1} parent=11 // pred_check_branch
          %337 = sbr.rel (%p335) target = $region24
        $region23: #{tpu_custom_call.1} parent=11 // pred_region
          _
        $region24: #{tpu_custom_call.1} parent=11 // pred_fallthru
          _
        // Predicated region
        $region25: #{tpu_custom_call.1} parent=11 // pred_check
          %p338 = pneg %p137
        $region26: #{tpu_custom_call.1} parent=11 // pred_check_branch
          %340 = sbr.rel (%p338) target = $region28
        $region27: #{tpu_custom_call.1} parent=11 // pred_region
          %s342 = ssub.s32 12288, 12288
          %343 = vsyncadd [#allocation6], %s342
          %s344 = sshll.u32 [#allocation7], 4
          %s345 = int_to_ptr.vmem [resolvable:$true] %s344
          %350 = dma.hbm_to_vmem [thread:$0]  %s4, 12288, %s345, [#allocation6], 128, 128, 8
        $region28: #{tpu_custom_call.1} parent=11 // pred_fallthru
          _
        // Predicated region
        $region29: #{tpu_custom_call.1} parent=11 // pred_check
          %p351 = pneg %p158
        $region30: #{tpu_custom_call.1} parent=11 // pred_check_branch
          %353 = sbr.rel (%p351) target = $region32
        $region31: #{tpu_custom_call.1} parent=11 // pred_region
          _
        $region32: #{tpu_custom_call.1} parent=11 // pred_fallthru
          _
        // Predicated region
        $region33: #{tpu_custom_call.1} parent=11 // pred_check
          %p354 = pneg %p179
        $region34: #{tpu_custom_call.1} parent=11 // pred_check_branch
          %356 = sbr.rel (%p354) target = $region36
        $region35: #{tpu_custom_call.1} parent=11 // pred_region
          %s358 = ssub.s32 12288, 12288
          %359 = vsyncadd [#allocation9], %s358
          %s360 = sshll.u32 [#allocation8], 4
          %s361 = int_to_ptr.vmem [resolvable:$true] %s360
          %366 = dma.hbm_to_vmem [thread:$0]  %s6, 12288, %s361, [#allocation9], 128, 128, 8
        $region36: #{tpu_custom_call.1} parent=11 // pred_fallthru
          _
        // Predicated region
        $region37: #{tpu_custom_call.1} parent=11 // pred_check
          %p367 = pneg %p200
        $region38: #{tpu_custom_call.1} parent=11 // pred_check_branch
          %369 = sbr.rel (%p367) target = $region40
        $region39: #{tpu_custom_call.1} parent=11 // pred_region
          _
        $region40: #{tpu_custom_call.1} parent=11 // pred_fallthru
          _
        // Predicated region
        $region41: #{tpu_custom_call.1} parent=11 // pred_check
          %p370 = pneg %p221
        $region42: #{tpu_custom_call.1} parent=11 // pred_check_branch
          %372 = sbr.rel (%p370) target = $region44
        $region43: #{tpu_custom_call.1} parent=11 // pred_region
          %s374 = ssub.s32 2048, 2048
          %375 = vsyncadd [#allocation9], %s374
          %s376 = sshll.u32 [#allocation10], 4
          %s377 = int_to_ptr.vmem [resolvable:$true] %s376
          %382 = dma.hbm_to_vmem [thread:$0]  %s8, 2048, %s377, [#allocation9], 128, 128, 8
        $region44: #{tpu_custom_call.1} parent=11 // pred_fallthru
          _
        // Predicated region
        $region45: #{tpu_custom_call.1} parent=11 // pred_check
          %p383 = pneg %p242
        $region46: #{tpu_custom_call.1} parent=11 // pred_check_branch
          %385 = sbr.rel (%p383) target = $region48
        $region47: #{tpu_custom_call.1} parent=11 // pred_region
          _
        $region48: #{tpu_custom_call.1} parent=11 // pred_fallthru
          _
      $region12: #{tpu_custom_call.1} parent=5 // pred_fallthru
        _
      %p386 = scmp.lt.s32.totalorder %s27, 2
      // Predicated region
      $region49: #{tpu_custom_call.1} parent=5 // pred_check
        %p387 = pneg %p386
      $region50: #{tpu_custom_call.1} parent=5 // pred_check_branch
        %389 = sbr.rel (%p387) target = $region52
      $region51: #{tpu_custom_call.1} parent=5 // pred_region
        // Predicated region
        $region53: #{tpu_custom_call.1} parent=51 // pred_check
          %p390 = pneg %p47
        $region54: #{tpu_custom_call.1} parent=51 // pred_check_branch
          %392 = sbr.rel (%p390) target = $region56
        $region55: #{tpu_custom_call.1} parent=51 // pred_region
          %p393 = scmp.lt.s32.totalorder %s27, 1
          %s394 = scalar_select %p393, %s27, 1
          %s395 = smul.addr %s394, 4
          %s396 = smul.addr %s395, 8
          %s397 = scalar_lea.vmem %s0, %s396
        $region56: #{tpu_custom_call.1} parent=51 // pred_fallthru
          _
      $region52: #{tpu_custom_call.1} parent=5 // pred_fallthru
        _
      %p398 = scmp.le.s32.totalorder 1, %s27
      %p399 = scmp.lt.s32.totalorder %s27, 3
      %p400 = pnand %p398, %p399
      %p401 = pneg %p400
      // Predicated region
      $region57: #{tpu_custom_call.1} parent=5 // pred_check
        _
      $region58: #{tpu_custom_call.1} parent=5 // pred_check_branch
        %403 = sbr.rel (%p400) target = $region60
      $region59: #{tpu_custom_call.1} parent=5 // pred_region
        %s404 = ssub.s32 %s27, 1
        // Predicated region
        $region61: #{tpu_custom_call.1} parent=59 // pred_check
          %p405 = pneg %p74
        $region62: #{tpu_custom_call.1} parent=59 // pred_check_branch
          %407 = sbr.rel (%p405) target = $region64
        $region63: #{tpu_custom_call.1} parent=59 // pred_region
          %408 = dma.done [#allocation3], 4096
        $region64: #{tpu_custom_call.1} parent=59 // pred_fallthru
          _
        // Predicated region
        $region65: #{tpu_custom_call.1} parent=59 // pred_check
          %p409 = pneg %p95
        $region66: #{tpu_custom_call.1} parent=59 // pred_check_branch
          %411 = sbr.rel (%p409) target = $region68
        $region67: #{tpu_custom_call.1} parent=59 // pred_region
          %412 = dma.done [#allocation6], 6144
        $region68: #{tpu_custom_call.1} parent=59 // pred_fallthru
          _
        // Predicated region
        $region69: #{tpu_custom_call.1} parent=59 // pred_check
          %p413 = pneg %p137
        $region70: #{tpu_custom_call.1} parent=59 // pred_check_branch
          %415 = sbr.rel (%p413) target = $region72
        $region71: #{tpu_custom_call.1} parent=59 // pred_region
          %416 = dma.done [#allocation6], 12288
        $region72: #{tpu_custom_call.1} parent=59 // pred_fallthru
          _
        // Predicated region
        $region73: #{tpu_custom_call.1} parent=59 // pred_check
          %p417 = pneg %p179
        $region74: #{tpu_custom_call.1} parent=59 // pred_check_branch
          %419 = sbr.rel (%p417) target = $region76
        $region75: #{tpu_custom_call.1} parent=59 // pred_region
          %420 = dma.done [#allocation9], 12288
        $region76: #{tpu_custom_call.1} parent=59 // pred_fallthru
          _
        // Predicated region
        $region77: #{tpu_custom_call.1} parent=59 // pred_check
          %p421 = pneg %p221
        $region78: #{tpu_custom_call.1} parent=59 // pred_check_branch
          %423 = sbr.rel (%p421) target = $region80
        $region79: #{tpu_custom_call.1} parent=59 // pred_region
          %424 = dma.done [#allocation9], 2048
        $region80: #{tpu_custom_call.1} parent=59 // pred_fallthru
          _
        %p425 = scmp.lt.s32.totalorder %s32, 1
        %s426 = scalar_select %p425, %s32, 1
        %s427 = smul.addr %s426, 4
        %s428 = smul.addr %s427, 8
        %s429 = scalar_lea.vmem %s0, %s428
        %p430 = pneg %p53
        %p431 = pneg %p50
        %p432 = pneg %p74
        %p433 = pneg %p71
        %p434 = pneg %p95
        %p435 = pneg %p92
        %p436 = pneg %p116
        %p437 = pneg %p113
        %p438 = pneg %p137
        %p439 = pneg %p134
        %p440 = pneg %p158
        %p441 = pneg %p155
        %p442 = pneg %p179
        %p443 = pneg %p176
        %p444 = pneg %p200
        %p445 = pneg %p197
        %p446 = pneg %p221
        %p447 = pneg %p218
        %p448 = pneg %p242
        %p449 = pneg %p239
        %p450 = pneg %p268
        %p451 = pneg %p265
        %s452 = sand.u32 %s255, 1
        %s453 = scalar_lea.sflag [#allocation4], %s452
        %s454 = sand.u32 %s255, 1
        %s455 = smul.addr %s454, 2
        %s456 = scalar_lea.vmem [#allocation11], %s455
        %p457 = pneg %p294
        %p458 = pneg %p291
        %s459 = sand.u32 %s281, 1
        %s460 = scalar_lea.sflag [#allocation13], %s459
        %s461 = sand.u32 %s281, 1
        %s462 = smul.addr %s461, 2
        %s463 = scalar_lea.vmem [#allocation12], %s462
        %p464 = scmp.lt.s32.totalorder %s32, 1
        %s465 = scalar_select %p464, %s32, 1
        %s466 = smul.addr %s465, 4
        %s467 = smul.addr %s466, 8
        %s468 = scalar_lea.vmem %s0, %s467
        %v469 = vld [vmem:[%s468] sm:$0xff]
        %v470 = vld [vmem:[%s468 + $0x8] sm:$0xff]
        %v471 = vld [vmem:[%s468 + $0x10] sm:$0xff]
        %v472 = vld [vmem:[%s468 + $0x18] sm:$0xff]
        %v473 = vlaneseq
        %v474 = vand.u32 %v473, 127
        %v475 = vadd.s32 %v474, 128
        %476 = vset.pattern.permute.xlu0 0
        %477 = vperm.xlu0 %476, %v469
        %v478 = vpop.permute.xlu0 %477
        %479 = vset.pattern.permute.xlu0 0
        %480 = vperm.xlu0 %479, %v470
        %v481 = vpop.permute.xlu0 %480
        %482 = vset.pattern.permute.xlu0 0
        %483 = vperm.xlu0 %482, %v471
        %v484 = vpop.permute.xlu0 %483
        %485 = vset.pattern.permute.xlu0 0
        %486 = vperm.xlu0 %485, %v472
        %v487 = vpop.permute.xlu0 %486
        %vm488 = vcmp.eq.s32.totalorder %v478, %v474
        %vm489 = vcmp.eq.s32.totalorder %v478, %v475
        %vm490 = vcmp.eq.s32.totalorder %v481, %v474
        %vm491 = vcmp.eq.s32.totalorder %v481, %v475
        %vm492 = vcmp.eq.s32.totalorder %v484, %v474
        %vm493 = vcmp.eq.s32.totalorder %v484, %v475
        %vm494 = vcmp.eq.s32.totalorder %v487, %v474
        %vm495 = vcmp.eq.s32.totalorder %v487, %v475
        %v496 = vsel %vm488, 1, 0
        %v497 = vsel %vm489, 1, 0
        %v498 = vsel %vm490, 1, 0
        %v499 = vsel %vm491, 1, 0
        %v500 = vsel %vm492, 1, 0
        %v501 = vsel %vm493, 1, 0
        %v502 = vsel %vm494, 1, 0
        %v503 = vsel %vm495, 1, 0
        %v504 = vcvt.s32.f32 %v496
        %v505 = vcvt.s32.f32 %v497
        %v506 = vcvt.s32.f32 %v498
        %v507 = vcvt.s32.f32 %v499
        %v508 = vcvt.s32.f32 %v500
        %v509 = vcvt.s32.f32 %v501
        %v510 = vcvt.s32.f32 %v502
        %v511 = vcvt.s32.f32 %v503
        %v512 = vld [vmem:[#allocation2] sm:$0xff]
        %v513 = vld [vmem:[#allocation2 + $0x8] sm:$0xff]
        %v514 = vld [vmem:[#allocation2 + $0x10] sm:$0xff]
        %v515 = vld [vmem:[#allocation2 + $0x18] sm:$0xff]
        %v516 = vld [vmem:[#allocation2 + $0x20] sm:$0xff]
        %v517 = vld [vmem:[#allocation2 + $0x28] sm:$0xff]
        %v518 = vld [vmem:[#allocation2 + $0x30] sm:$0xff]
        %v519 = vld [vmem:[#allocation2 + $0x38] sm:$0xff]
        %v520 = vld [vmem:[#allocation2 + $0x40] sm:$0xff]
        %v521 = vld [vmem:[#allocation2 + $0x48] sm:$0xff]
        %v522 = vld [vmem:[#allocation2 + $0x50] sm:$0xff]
        %v523 = vld [vmem:[#allocation2 + $0x58] sm:$0xff]
        %v524 = vld [vmem:[#allocation2 + $0x60] sm:$0xff]
        %v525 = vld [vmem:[#allocation2 + $0x68] sm:$0xff]
        %v526 = vld [vmem:[#allocation2 + $0x70] sm:$0xff]
        %v527 = vld [vmem:[#allocation2 + $0x78] sm:$0xff]
        %v528 = vld [vmem:[#allocation2 + $0x80] sm:$0xff]
        %v529 = vld [vmem:[#allocation2 + $0x88] sm:$0xff]
        %v530 = vld [vmem:[#allocation2 + $0x90] sm:$0xff]
        %v531 = vld [vmem:[#allocation2 + $0x98] sm:$0xff]
        %v532 = vld [vmem:[#allocation2 + $0xa0] sm:$0xff]
        %v533 = vld [vmem:[#allocation2 + $0xa8] sm:$0xff]
        %v534 = vld [vmem:[#allocation2 + $0xb0] sm:$0xff]
        %v535 = vld [vmem:[#allocation2 + $0xb8] sm:$0xff]
        %v536 = vld [vmem:[#allocation2 + $0xc0] sm:$0xff]
        %v537 = vld [vmem:[#allocation2 + $0xc8] sm:$0xff]
        %v538 = vld [vmem:[#allocation2 + $0xd0] sm:$0xff]
        %v539 = vld [vmem:[#allocation2 + $0xd8] sm:$0xff]
        %v540 = vld [vmem:[#allocation2 + $0xe0] sm:$0xff]
        %v541 = vld [vmem:[#allocation2 + $0xe8] sm:$0xff]
        %v542 = vld [vmem:[#allocation2 + $0xf0] sm:$0xff]
        %v543 = vld [vmem:[#allocation2 + $0xf8] sm:$0xff]
        %544 = vmatprep.subr.mxu0 0.0
        %545 = vmatpush1.msra.mxu0 %v527
        %546 = vmatprep.subr.mxu0 0.0
        %547 = vmatpush1.msra.mxu0 %v526
        %548 = vmatprep.subr.mxu0 0.0
        %549 = vmatpush1.msra.mxu0 %v525
        %550 = vmatprep.subr.mxu0 0.0
        %551 = vmatpush1.msra.mxu0 %v524
        %552 = vmatprep.subr.mxu0 0.0
        %553 = vmatpush1.msra.mxu0 %v523
        %554 = vmatprep.subr.mxu0 0.0
        %555 = vmatpush1.msra.mxu0 %v522
        %556 = vmatprep.subr.mxu0 0.0
        %557 = vmatpush1.msra.mxu0 %v521
        %558 = vmatprep.subr.mxu0 0.0
        %559 = vmatpush1.msra.mxu0 %v520
        %560 = vmatprep.subr.mxu0 0.0
        %561 = vmatpush1.msra.mxu0 %v519
        %562 = vmatprep.subr.mxu0 0.0
        %563 = vmatpush1.msra.mxu0 %v518
        %564 = vmatprep.subr.mxu0 0.0
        %565 = vmatpush1.msra.mxu0 %v517
        %566 = vmatprep.subr.mxu0 0.0
        %567 = vmatpush1.msra.mxu0 %v516
        %568 = vmatprep.subr.mxu0 0.0
        %569 = vmatpush1.msra.mxu0 %v515
        %570 = vmatprep.subr.mxu0 0.0
        %571 = vmatpush1.msra.mxu0 %v514
        %572 = vmatprep.subr.mxu0 0.0
        %573 = vmatpush1.msra.mxu0 %v513
        %574 = vmatprep.subr.mxu0 0.0
        %575 = vmatpush1.msra.mxu0 %v512
        %576 = vmatprep.subr.mxu0 0.0
        %577 = vmatpush2.msra.mxu0 %v543
        %578 = vmatprep.subr.mxu0 0.0
        %579 = vmatpush2.msra.mxu0 %v542
        %580 = vmatprep.subr.mxu0 0.0
        %581 = vmatpush2.msra.mxu0 %v541
        %582 = vmatprep.subr.mxu0 0.0
        %583 = vmatpush2.msra.mxu0 %v540
        %584 = vmatprep.subr.mxu0 0.0
        %585 = vmatpush2.msra.mxu0 %v539
        %586 = vmatprep.subr.mxu0 0.0
        %587 = vmatpush2.msra.mxu0 %v538
        %588 = vmatprep.subr.mxu0 0.0
        %589 = vmatpush2.msra.mxu0 %v537
        %590 = vmatprep.subr.mxu0 0.0
        %591 = vmatpush2.msra.mxu0 %v536
        %592 = vmatprep.subr.mxu0 0.0
        %593 = vmatpush2.msra.mxu0 %v535
        %594 = vmatprep.subr.mxu0 0.0
        %595 = vmatpush2.msra.mxu0 %v534
        %596 = vmatprep.subr.mxu0 0.0
        %597 = vmatpush2.msra.mxu0 %v533
        %598 = vmatprep.subr.mxu0 0.0
        %599 = vmatpush2.msra.mxu0 %v532
        %600 = vmatprep.subr.mxu0 0.0
        %601 = vmatpush2.msra.mxu0 %v531
        %602 = vmatprep.subr.mxu0 0.0
        %603 = vmatpush2.msra.mxu0 %v530
        %604 = vmatprep.subr.mxu0 0.0
        %605 = vmatpush2.msra.mxu0 %v529
        %606 = vmatprep.subr.mxu0 0.0
        %607 = vmatpush2.msra.mxu0 %v528
        %608 = vmatprep.mubr.f32.mxu0 %v505
        %609 = vmatmul.mubr.f32.gmra.mxu0 %v504
        %v610 = vpop.f32.mrf.mxu0
        %v611 = vadd.f32 0.0, %v610
        %v612 = vpop.f32.mrf.mxu0
        %613 = vmatprep.mubr.f32.mxu0 %v507
        %614 = vmatmul.mubr.f32.gmra.mxu0 %v506
        %v615 = vpop.f32.mrf.mxu0
        %v616 = vadd.f32 0.0, %v615
        %v617 = vpop.f32.mrf.mxu0
        %618 = vmatprep.mubr.f32.mxu0 %v509
        %619 = vmatmul.mubr.f32.gmra.mxu0 %v508
        %v620 = vpop.f32.mrf.mxu0
        %v621 = vadd.f32 0.0, %v620
        %v622 = vpop.f32.mrf.mxu0
        %623 = vmatprep.mubr.f32.mxu0 %v511
        %624 = vmatmul.mubr.f32.gmra.mxu0 %v510
        %v625 = vpop.f32.mrf.mxu0
        %v626 = vadd.f32 0.0, %v625
        %v627 = vpop.f32.mrf.mxu0
        %628 = vdwg.mxu0
        %v629 = vlaneseq
        %v630 = vshrl.u32 %v629, 7
        %v631 = vadd.s32 %v630, 8
        %v632 = vadd.s32 %v630, 16
        %v633 = vadd.s32 %v630, 24
        %vm634 = vcmp.lt.s32.totalorder %v630, 0
        %v635 = vsub.s32 0, %v630
        %v636 = vsel %vm634, %v635, %v630
        %v637 = vshrl.u32 %v636, 4
        %v638 = vand.u32 %v636, 15
        %v639 = vsub.s32 0, %v638
        %v640 = vsel %vm634, %v639, %v638
        %vm641 = vcmp.lt.s32.totalorder %v631, 0
        %v642 = vsub.s32 0, %v631
        %v643 = vsel %vm641, %v642, %v631
        %v644 = vshrl.u32 %v643, 4
        %v645 = vand.u32 %v643, 15
        %v646 = vsub.s32 0, %v645
        %v647 = vsel %vm641, %v646, %v645
        %vm648 = vcmp.lt.s32.totalorder %v632, 0
        %v649 = vsub.s32 0, %v632
        %v650 = vsel %vm648, %v649, %v632
        %v651 = vshrl.u32 %v650, 4
        %v652 = vand.u32 %v650, 15
        %v653 = vsub.s32 0, %v652
        %v654 = vsel %vm648, %v653, %v652
        %vm655 = vcmp.lt.s32.totalorder %v633, 0
        %v656 = vsub.s32 0, %v633
        %v657 = vsel %vm655, %v656, %v633
        %v658 = vshrl.u32 %v657, 4
        %v659 = vand.u32 %v657, 15
        %v660 = vsub.s32 0, %v659
        %v661 = vsel %vm655, %v660, %v659
        %vm662 = vcmp.ne.s32.totalorder %v640, 0
        %vm663 = vcmp.ne.s32.totalorder %v647, 0
        %vm664 = vcmp.ne.s32.totalorder %v654, 0
        %vm665 = vcmp.ne.s32.totalorder %v661, 0
        %vm666 = vcmp.lt.s32.totalorder %v640, 0
        %vm667 = vcmp.lt.s32.totalorder %v647, 0
        %vm668 = vcmp.lt.s32.totalorder %v654, 0
        %vm669 = vcmp.lt.s32.totalorder %v661, 0
        %vm670 = vmand %vm666, %vm662
        %vm671 = vmand %vm667, %vm663
        %vm672 = vmand %vm668, %vm664
        %vm673 = vmand %vm669, %vm665
        %v674 = vadd.s32 %v640, 16
        %v675 = vadd.s32 %v647, 16
        %v676 = vadd.s32 %v654, 16
        %v677 = vadd.s32 %v661, 16
        %v678 = vsel %vm670, %v674, %v640
        %v679 = vsel %vm671, %v675, %v647
        %v680 = vsel %vm672, %v676, %v654
        %v681 = vsel %vm673, %v677, %v661
        %vm682 = vcmp.ne.s32.totalorder %v678, 0
        %vm683 = vcmp.ne.s32.totalorder %v679, 0
        %vm684 = vcmp.ne.s32.totalorder %v680, 0
        %vm685 = vcmp.ne.s32.totalorder %v681, 0
        %v686 = vsel %vm682, 1, 0
        %v687 = vsel %vm683, 1, 0
        %v688 = vsel %vm684, 1, 0
        %v689 = vsel %vm685, 1, 0
        %v690 = vcvt.s32.f32 %v686
        %v691 = vcvt.s32.f32 %v687
        %v692 = vcvt.s32.f32 %v688
        %v693 = vcvt.s32.f32 %v689
        %vm694 = vcmp.ne.s32.totalorder %v678, 15
        %vm695 = vcmp.ne.s32.totalorder %v679, 15
        %vm696 = vcmp.ne.s32.totalorder %v680, 15
        %vm697 = vcmp.ne.s32.totalorder %v681, 15
        %v698 = vsel %vm694, 1, 0
        %v699 = vsel %vm695, 1, 0
        %v700 = vsel %vm696, 1, 0
        %v701 = vsel %vm697, 1, 0
        %v702 = vcvt.s32.f32 %v698
        %v703 = vcvt.s32.f32 %v699
        %v704 = vcvt.s32.f32 %v700
        %v705 = vcvt.s32.f32 %v701
        %v706 = vld [vmem:[#allocation5] sm:$0xff]
        %v707 = vld [vmem:[#allocation5 + $0x8] sm:$0xff]
        %v708 = vld [vmem:[#allocation5 + $0x10] sm:$0xff]
        %v709 = vld [vmem:[#allocation5 + $0x18] sm:$0xff]
        %v710 = vld [vmem:[#allocation5 + $0x20] sm:$0xff]
        %v711 = vld [vmem:[#allocation5 + $0x28] sm:$0xff]
        %v712 = vld [vmem:[#allocation5 + $0x30] sm:$0xff]
        %v713 = vld [vmem:[#allocation5 + $0x38] sm:$0xff]
        %v714 = vld [vmem:[#allocation5 + $0x40] sm:$0xff]
        %v715 = vld [vmem:[#allocation5 + $0x48] sm:$0xff]
        %v716 = vld [vmem:[#allocation5 + $0x50] sm:$0xff]
        %v717 = vld [vmem:[#allocation5 + $0x58] sm:$0xff]
        %v718 = vld [vmem:[#allocation5 + $0x60] sm:$0xff]
        %v719 = vld [vmem:[#allocation5 + $0x68] sm:$0xff]
        %v720 = vld [vmem:[#allocation5 + $0x70] sm:$0xff]
        %v721 = vld [vmem:[#allocation5 + $0x78] sm:$0xff]
        %s722 = scalar_lea.vmem [#allocation5], 128
        %v723 = vld [vmem:[%s722] sm:$0xff]
        %v724 = vld [vmem:[%s722 + $0x8] sm:$0xff]
        %v725 = vld [vmem:[%s722 + $0x10] sm:$0xff]
        %v726 = vld [vmem:[%s722 + $0x18] sm:$0xff]
        %v727 = vld [vmem:[%s722 + $0x20] sm:$0xff]
        %v728 = vld [vmem:[%s722 + $0x28] sm:$0xff]
        %v729 = vld [vmem:[%s722 + $0x30] sm:$0xff]
        %v730 = vld [vmem:[%s722 + $0x38] sm:$0xff]
        %v731 = vld [vmem:[%s722 + $0x40] sm:$0xff]
        %v732 = vld [vmem:[%s722 + $0x48] sm:$0xff]
        %v733 = vld [vmem:[%s722 + $0x50] sm:$0xff]
        %v734 = vld [vmem:[%s722 + $0x58] sm:$0xff]
        %v735 = vld [vmem:[%s722 + $0x60] sm:$0xff]
        %v736 = vld [vmem:[%s722 + $0x68] sm:$0xff]
        %v737 = vld [vmem:[%s722 + $0x70] sm:$0xff]
        %v738 = vld [vmem:[%s722 + $0x78] sm:$0xff]
        %s739 = scalar_lea.vmem [#allocation5], 256
        %v740 = vld [vmem:[%s739] sm:$0xff]
        %v741 = vld [vmem:[%s739 + $0x8] sm:$0xff]
        %v742 = vld [vmem:[%s739 + $0x10] sm:$0xff]
        %v743 = vld [vmem:[%s739 + $0x18] sm:$0xff]
        %v744 = vld [vmem:[%s739 + $0x20] sm:$0xff]
        %v745 = vld [vmem:[%s739 + $0x28] sm:$0xff]
        %v746 = vld [vmem:[%s739 + $0x30] sm:$0xff]
        %v747 = vld [vmem:[%s739 + $0x38] sm:$0xff]
        %v748 = vld [vmem:[%s739 + $0x40] sm:$0xff]
        %v749 = vld [vmem:[%s739 + $0x48] sm:$0xff]
        %v750 = vld [vmem:[%s739 + $0x50] sm:$0xff]
        %v751 = vld [vmem:[%s739 + $0x58] sm:$0xff]
        %v752 = vld [vmem:[%s739 + $0x60] sm:$0xff]
        %v753 = vld [vmem:[%s739 + $0x68] sm:$0xff]
        %v754 = vld [vmem:[%s739 + $0x70] sm:$0xff]
        %v755 = vld [vmem:[%s739 + $0x78] sm:$0xff]
        %v756 = vld [vmem:[%s3] sm:$0x1]
        %v757 = vrot.slane %v611, 7
        %v758 = vrot.slane %v616, 7
        %v759 = vrot.slane %v621, 7
        %v760 = vrot.slane %v626, 7
        %vm761 = vcmp.lt.s32.totalorder %v630, 1
        %v762 = vsel %vm761, %v759, %v760
        %v763 = vsel %vm761, %v758, %v759
        %v764 = vsel %vm761, %v757, %v758
        %v765 = vsel %vm761, %v760, %v757
        %v766 = vmul.f32 %v765, %v690
        %v767 = vmul.f32 %v764, %v691
        %v768 = vmul.f32 %v763, %v692
        %v769 = vmul.f32 %v762, %v693
        %v770 = vrot.slane %v611, 1
        %v771 = vrot.slane %v616, 1
        %v772 = vrot.slane %v621, 1
        %v773 = vrot.slane %v626, 1
        %vm774 = vcmp.lt.s32.totalorder %v630, 7
        %v775 = vsel %vm774, %v772, %v773
        %v776 = vsel %vm774, %v771, %v772
        %v777 = vsel %vm774, %v770, %v771
        %v778 = vsel %vm774, %v773, %v770
        %v779 = vmul.f32 %v777, %v702
        %v780 = vmul.f32 %v776, %v703
        %v781 = vmul.f32 %v775, %v704
        %v782 = vmul.f32 %v778, %v705
        %783 = vmatprep.subr.mxu0 0.0
        %784 = vmatpush1.msra.mxu0 %v721
        %785 = vmatprep.subr.mxu0 0.0
        %786 = vmatpush1.msra.mxu0 %v720
        %787 = vmatprep.subr.mxu0 0.0
        %788 = vmatpush1.msra.mxu0 %v719
        %789 = vmatprep.subr.mxu0 0.0
        %790 = vmatpush1.msra.mxu0 %v718
        %791 = vmatprep.subr.mxu0 0.0
        %792 = vmatpush1.msra.mxu0 %v717
        %793 = vmatprep.subr.mxu0 0.0
        %794 = vmatpush1.msra.mxu0 %v716
        %795 = vmatprep.subr.mxu0 0.0
        %796 = vmatpush1.msra.mxu0 %v715
        %797 = vmatprep.subr.mxu0 0.0
        %798 = vmatpush1.msra.mxu0 %v714
        %799 = vmatprep.subr.mxu0 0.0
        %800 = vmatpush1.msra.mxu0 %v713
        %801 = vmatprep.subr.mxu0 0.0
        %802 = vmatpush1.msra.mxu0 %v712
        %803 = vmatprep.subr.mxu0 0.0
        %804 = vmatpush1.msra.mxu0 %v711
        %805 = vmatprep.subr.mxu0 0.0
        %806 = vmatpush1.msra.mxu0 %v710
        %807 = vmatprep.subr.mxu0 0.0
        %808 = vmatpush1.msra.mxu0 %v709
        %809 = vmatprep.subr.mxu0 0.0
        %810 = vmatpush1.msra.mxu0 %v708
        %811 = vmatprep.subr.mxu0 0.0
        %812 = vmatpush1.msra.mxu0 %v707
        %813 = vmatprep.subr.mxu0 0.0
        %814 = vmatpush1.msra.mxu0 %v706
        %815 = vmatprep.subr.mxu0 0.0
        %816 = vmatpush2.msra.mxu0 0.0
        %817 = vmatprep.subr.mxu0 0.0
        %818 = vmatpush2.msra.mxu0 0.0
        %819 = vmatprep.subr.mxu0 0.0
        %820 = vmatpush2.msra.mxu0 0.0
        %821 = vmatprep.subr.mxu0 0.0
        %822 = vmatpush2.msra.mxu0 0.0
        %823 = vmatprep.subr.mxu0 0.0
        %824 = vmatpush2.msra.mxu0 0.0
        %825 = vmatprep.subr.mxu0 0.0
        %826 = vmatpush2.msra.mxu0 0.0
        %827 = vmatprep.subr.mxu0 0.0
        %828 = vmatpush2.msra.mxu0 0.0
        %829 = vmatprep.subr.mxu0 0.0
        %830 = vmatpush2.msra.mxu0 0.0
        %831 = vmatprep.subr.mxu0 0.0
        %832 = vmatpush2.msra.mxu0 0.0
        %833 = vmatprep.subr.mxu0 0.0
        %834 = vmatpush2.msra.mxu0 0.0
        %835 = vmatprep.subr.mxu0 0.0
        %836 = vmatpush2.msra.mxu0 0.0
        %837 = vmatprep.subr.mxu0 0.0
        %838 = vmatpush2.msra.mxu0 0.0
        %839 = vmatprep.subr.mxu0 0.0
        %840 = vmatpush2.msra.mxu0 0.0
        %841 = vmatprep.subr.mxu0 0.0
        %842 = vmatpush2.msra.mxu0 0.0
        %843 = vmatprep.subr.mxu0 0.0
        %844 = vmatpush2.msra.mxu0 0.0
        %845 = vmatprep.subr.mxu0 0.0
        %846 = vmatpush2.msra.mxu0 0.0
        %847 = vmatprep.mubr.f32.mxu0 0.0
        %848 = vmatmul.mubr.f32.gmra.mxu0 %v766
        %v849 = vpop.f32.mrf.mxu0
        %v850 = vadd.f32 0.0, %v849
        %v851 = vpop.f32.mrf.mxu0
        %852 = vmatprep.mubr.f32.mxu0 0.0
        %853 = vmatmul.mubr.f32.gmra.mxu0 %v767
        %v854 = vpop.f32.mrf.mxu0
        %v855 = vadd.f32 0.0, %v854
        %v856 = vpop.f32.mrf.mxu0
        %857 = vmatprep.mubr.f32.mxu0 0.0
        %858 = vmatmul.mubr.f32.gmra.mxu0 %v768
        %v859 = vpop.f32.mrf.mxu0
        %v860 = vadd.f32 0.0, %v859
        %v861 = vpop.f32.mrf.mxu0
        %862 = vmatprep.mubr.f32.mxu0 0.0
        %863 = vmatmul.mubr.f32.gmra.mxu0 %v769
        %v864 = vpop.f32.mrf.mxu0
        %v865 = vadd.f32 0.0, %v864
        %v866 = vpop.f32.mrf.mxu0
        %867 = vdwg.mxu0
        %868 = vmatprep.subr.mxu0 0.0
        %869 = vmatpush1.msra.mxu0 %v738
        %870 = vmatprep.subr.mxu0 0.0
        %871 = vmatpush1.msra.mxu0 %v737
        %872 = vmatprep.subr.mxu0 0.0
        %873 = vmatpush1.msra.mxu0 %v736
        %874 = vmatprep.subr.mxu0 0.0
        %875 = vmatpush1.msra.mxu0 %v735
        %876 = vmatprep.subr.mxu0 0.0
        %877 = vmatpush1.msra.mxu0 %v734
        %878 = vmatprep.subr.mxu0 0.0
        %879 = vmatpush1.msra.mxu0 %v733
        %880 = vmatprep.subr.mxu0 0.0
        %881 = vmatpush1.msra.mxu0 %v732
        %882 = vmatprep.subr.mxu0 0.0
        %883 = vmatpush1.msra.mxu0 %v731
        %884 = vmatprep.subr.mxu0 0.0
        %885 = vmatpush1.msra.mxu0 %v730
        %886 = vmatprep.subr.mxu0 0.0
        %887 = vmatpush1.msra.mxu0 %v729
        %888 = vmatprep.subr.mxu0 0.0
        %889 = vmatpush1.msra.mxu0 %v728
        %890 = vmatprep.subr.mxu0 0.0
        %891 = vmatpush1.msra.mxu0 %v727
        %892 = vmatprep.subr.mxu0 0.0
        %893 = vmatpush1.msra.mxu0 %v726
        %894 = vmatprep.subr.mxu0 0.0
        %895 = vmatpush1.msra.mxu0 %v725
        %896 = vmatprep.subr.mxu0 0.0
        %897 = vmatpush1.msra.mxu0 %v724
        %898 = vmatprep.subr.mxu0 0.0
        %899 = vmatpush1.msra.mxu0 %v723
        %900 = vmatprep.subr.mxu0 0.0
        %901 = vmatpush2.msra.mxu0 0.0
        %902 = vmatprep.subr.mxu0 0.0
        %903 = vmatpush2.msra.mxu0 0.0
        %904 = vmatprep.subr.mxu0 0.0
        %905 = vmatpush2.msra.mxu0 0.0
        %906 = vmatprep.subr.mxu0 0.0
        %907 = vmatpush2.msra.mxu0 0.0
        %908 = vmatprep.subr.mxu0 0.0
        %909 = vmatpush2.msra.mxu0 0.0
        %910 = vmatprep.subr.mxu0 0.0
        %911 = vmatpush2.msra.mxu0 0.0
        %912 = vmatprep.subr.mxu0 0.0
        %913 = vmatpush2.msra.mxu0 0.0
        %914 = vmatprep.subr.mxu0 0.0
        %915 = vmatpush2.msra.mxu0 0.0
        %916 = vmatprep.subr.mxu0 0.0
        %917 = vmatpush2.msra.mxu0 0.0
        %918 = vmatprep.subr.mxu0 0.0
        %919 = vmatpush2.msra.mxu0 0.0
        %920 = vmatprep.subr.mxu0 0.0
        %921 = vmatpush2.msra.mxu0 0.0
        %922 = vmatprep.subr.mxu0 0.0
        %923 = vmatpush2.msra.mxu0 0.0
        %924 = vmatprep.subr.mxu0 0.0
        %925 = vmatpush2.msra.mxu0 0.0
        %926 = vmatprep.subr.mxu0 0.0
        %927 = vmatpush2.msra.mxu0 0.0
        %928 = vmatprep.subr.mxu0 0.0
        %929 = vmatpush2.msra.mxu0 0.0
        %930 = vmatprep.subr.mxu0 0.0
        %931 = vmatpush2.msra.mxu0 0.0
        %932 = vmatprep.mubr.f32.mxu0 0.0
        %933 = vmatmul.mubr.f32.gmra.mxu0 %v611
        %v934 = vpop.f32.mrf.mxu0
        %v935 = vadd.f32 %v850, %v934
        %v936 = vpop.f32.mrf.mxu0
        %937 = vmatprep.mubr.f32.mxu0 0.0
        %938 = vmatmul.mubr.f32.gmra.mxu0 %v616
        %v939 = vpop.f32.mrf.mxu0
        %v940 = vadd.f32 %v855, %v939
        %v941 = vpop.f32.mrf.mxu0
        %942 = vmatprep.mubr.f32.mxu0 0.0
        %943 = vmatmul.mubr.f32.gmra.mxu0 %v621
        %v944 = vpop.f32.mrf.mxu0
        %v945 = vadd.f32 %v860, %v944
        %v946 = vpop.f32.mrf.mxu0
        %947 = vmatprep.mubr.f32.mxu0 0.0
        %948 = vmatmul.mubr.f32.gmra.mxu0 %v626
        %v949 = vpop.f32.mrf.mxu0
        %v950 = vadd.f32 %v865, %v949
        %v951 = vpop.f32.mrf.mxu0
        %952 = vdwg.mxu0
        %953 = vmatprep.subr.mxu0 0.0
        %954 = vmatpush1.msra.mxu0 %v755
        %955 = vmatprep.subr.mxu0 0.0
        %956 = vmatpush1.msra.mxu0 %v754
        %957 = vmatprep.subr.mxu0 0.0
        %958 = vmatpush1.msra.mxu0 %v753
        %959 = vmatprep.subr.mxu0 0.0
        %960 = vmatpush1.msra.mxu0 %v752
        %961 = vmatprep.subr.mxu0 0.0
        %962 = vmatpush1.msra.mxu0 %v751
        %963 = vmatprep.subr.mxu0 0.0
        %964 = vmatpush1.msra.mxu0 %v750
        %965 = vmatprep.subr.mxu0 0.0
        %966 = vmatpush1.msra.mxu0 %v749
        %967 = vmatprep.subr.mxu0 0.0
        %968 = vmatpush1.msra.mxu0 %v748
        %969 = vmatprep.subr.mxu0 0.0
        %970 = vmatpush1.msra.mxu0 %v747
        %971 = vmatprep.subr.mxu0 0.0
        %972 = vmatpush1.msra.mxu0 %v746
        %973 = vmatprep.subr.mxu0 0.0
        %974 = vmatpush1.msra.mxu0 %v745
        %975 = vmatprep.subr.mxu0 0.0
        %976 = vmatpush1.msra.mxu0 %v744
        %977 = vmatprep.subr.mxu0 0.0
        %978 = vmatpush1.msra.mxu0 %v743
        %979 = vmatprep.subr.mxu0 0.0
        %980 = vmatpush1.msra.mxu0 %v742
        %981 = vmatprep.subr.mxu0 0.0
        %982 = vmatpush1.msra.mxu0 %v741
        %983 = vmatprep.subr.mxu0 0.0
        %984 = vmatpush1.msra.mxu0 %v740
        %985 = vmatprep.subr.mxu0 0.0
        %986 = vmatpush2.msra.mxu0 0.0
        %987 = vmatprep.subr.mxu0 0.0
        %988 = vmatpush2.msra.mxu0 0.0
        %989 = vmatprep.subr.mxu0 0.0
        %990 = vmatpush2.msra.mxu0 0.0
        %991 = vmatprep.subr.mxu0 0.0
        %992 = vmatpush2.msra.mxu0 0.0
        %993 = vmatprep.subr.mxu0 0.0
        %994 = vmatpush2.msra.mxu0 0.0
        %995 = vmatprep.subr.mxu0 0.0
        %996 = vmatpush2.msra.mxu0 0.0
        %997 = vmatprep.subr.mxu0 0.0
        %998 = vmatpush2.msra.mxu0 0.0
        %999 = vmatprep.subr.mxu0 0.0
        %1000 = vmatpush2.msra.mxu0 0.0
        %1001 = vmatprep.subr.mxu0 0.0
        %1002 = vmatpush2.msra.mxu0 0.0
        %1003 = vmatprep.subr.mxu0 0.0
        %1004 = vmatpush2.msra.mxu0 0.0
        %1005 = vmatprep.subr.mxu0 0.0
        %1006 = vmatpush2.msra.mxu0 0.0
        %1007 = vmatprep.subr.mxu0 0.0
        %1008 = vmatpush2.msra.mxu0 0.0
        %1009 = vmatprep.subr.mxu0 0.0
        %1010 = vmatpush2.msra.mxu0 0.0
        %1011 = vmatprep.subr.mxu0 0.0
        %1012 = vmatpush2.msra.mxu0 0.0
        %1013 = vmatprep.subr.mxu0 0.0
        %1014 = vmatpush2.msra.mxu0 0.0
        %1015 = vmatprep.subr.mxu0 0.0
        %1016 = vmatpush2.msra.mxu0 0.0
        %1017 = vmatprep.mubr.f32.mxu0 0.0
        %1018 = vmatmul.mubr.f32.gmra.mxu0 %v779
        %v1019 = vpop.f32.mrf.mxu0
        %v1020 = vadd.f32 0.0, %v1019
        %v1021 = vpop.f32.mrf.mxu0
        %1022 = vmatprep.mubr.f32.mxu0 0.0
        %1023 = vmatmul.mubr.f32.gmra.mxu0 %v780
        %v1024 = vpop.f32.mrf.mxu0
        %v1025 = vadd.f32 0.0, %v1024
        %v1026 = vpop.f32.mrf.mxu0
        %1027 = vmatprep.mubr.f32.mxu0 0.0
        %1028 = vmatmul.mubr.f32.gmra.mxu0 %v781
        %v1029 = vpop.f32.mrf.mxu0
        %v1030 = vadd.f32 0.0, %v1029
        %v1031 = vpop.f32.mrf.mxu0
        %1032 = vmatprep.mubr.f32.mxu0 0.0
        %1033 = vmatmul.mubr.f32.gmra.mxu0 %v782
        %v1034 = vpop.f32.mrf.mxu0
        %v1035 = vadd.f32 0.0, %v1034
        %v1036 = vpop.f32.mrf.mxu0
        %1037 = vdwg.mxu0
        %v1038 = vadd.f32 %v935, %v1020
        %v1039 = vadd.f32 %v940, %v1025
        %v1040 = vadd.f32 %v945, %v1030
        %v1041 = vadd.f32 %v950, %v1035
        %v1043 = vlaneseq
        %v1044 = vshrl.u32 %v1043, 7
        %v1045 = vsub.s32 0, %v1044
        %v1046 = vrot.slane %v756, %v1045
        %v1048 = vadd.f32 %v1038, %v1046
        %v1049 = vadd.f32 %v1039, %v1046
        %v1050 = vadd.f32 %v1040, %v1046
        %v1051 = vadd.f32 %v1041, %v1046
        %v1052 = vmax.f32 %v1048, 0.0
        %v1053 = vmax.f32 %v1049, 0.0
        %v1054 = vmax.f32 %v1050, 0.0
        %v1055 = vmax.f32 %v1051, 0.0
        %v1056 = vld [vmem:[#allocation7] sm:$0xff]
        %v1057 = vld [vmem:[#allocation7 + $0x8] sm:$0xff]
        %v1058 = vld [vmem:[#allocation7 + $0x10] sm:$0xff]
        %v1059 = vld [vmem:[#allocation7 + $0x18] sm:$0xff]
        %v1060 = vld [vmem:[#allocation7 + $0x20] sm:$0xff]
        %v1061 = vld [vmem:[#allocation7 + $0x28] sm:$0xff]
        %v1062 = vld [vmem:[#allocation7 + $0x30] sm:$0xff]
        %v1063 = vld [vmem:[#allocation7 + $0x38] sm:$0xff]
        %v1064 = vld [vmem:[#allocation7 + $0x40] sm:$0xff]
        %v1065 = vld [vmem:[#allocation7 + $0x48] sm:$0xff]
        %v1066 = vld [vmem:[#allocation7 + $0x50] sm:$0xff]
        %v1067 = vld [vmem:[#allocation7 + $0x58] sm:$0xff]
        %v1068 = vld [vmem:[#allocation7 + $0x60] sm:$0xff]
        %v1069 = vld [vmem:[#allocation7 + $0x68] sm:$0xff]
        %v1070 = vld [vmem:[#allocation7 + $0x70] sm:$0xff]
        %v1071 = vld [vmem:[#allocation7 + $0x78] sm:$0xff]
        %s1072 = scalar_lea.vmem [#allocation7], 128
        %v1073 = vld [vmem:[%s1072] sm:$0xff]
        %v1074 = vld [vmem:[%s1072 + $0x8] sm:$0xff]
        %v1075 = vld [vmem:[%s1072 + $0x10] sm:$0xff]
        %v1076 = vld [vmem:[%s1072 + $0x18] sm:$0xff]
        %v1077 = vld [vmem:[%s1072 + $0x20] sm:$0xff]
        %v1078 = vld [vmem:[%s1072 + $0x28] sm:$0xff]
        %v1079 = vld [vmem:[%s1072 + $0x30] sm:$0xff]
        %v1080 = vld [vmem:[%s1072 + $0x38] sm:$0xff]
        %v1081 = vld [vmem:[%s1072 + $0x40] sm:$0xff]
        %v1082 = vld [vmem:[%s1072 + $0x48] sm:$0xff]
        %v1083 = vld [vmem:[%s1072 + $0x50] sm:$0xff]
        %v1084 = vld [vmem:[%s1072 + $0x58] sm:$0xff]
        %v1085 = vld [vmem:[%s1072 + $0x60] sm:$0xff]
        %v1086 = vld [vmem:[%s1072 + $0x68] sm:$0xff]
        %v1087 = vld [vmem:[%s1072 + $0x70] sm:$0xff]
        %v1088 = vld [vmem:[%s1072 + $0x78] sm:$0xff]
        %s1089 = scalar_lea.vmem [#allocation7], 256
        %v1090 = vld [vmem:[%s1089] sm:$0xff]
        %v1091 = vld [vmem:[%s1089 + $0x8] sm:$0xff]
        %v1092 = vld [vmem:[%s1089 + $0x10] sm:$0xff]
        %v1093 = vld [vmem:[%s1089 + $0x18] sm:$0xff]
        %v1094 = vld [vmem:[%s1089 + $0x20] sm:$0xff]
        %v1095 = vld [vmem:[%s1089 + $0x28] sm:$0xff]
        %v1096 = vld [vmem:[%s1089 + $0x30] sm:$0xff]
        %v1097 = vld [vmem:[%s1089 + $0x38] sm:$0xff]
        %v1098 = vld [vmem:[%s1089 + $0x40] sm:$0xff]
        %v1099 = vld [vmem:[%s1089 + $0x48] sm:$0xff]
        %v1100 = vld [vmem:[%s1089 + $0x50] sm:$0xff]
        %v1101 = vld [vmem:[%s1089 + $0x58] sm:$0xff]
        %v1102 = vld [vmem:[%s1089 + $0x60] sm:$0xff]
        %v1103 = vld [vmem:[%s1089 + $0x68] sm:$0xff]
        %v1104 = vld [vmem:[%s1089 + $0x70] sm:$0xff]
        %v1105 = vld [vmem:[%s1089 + $0x78] sm:$0xff]
        %v1106 = vld [vmem:[%s5] sm:$0x1]
        %v1107 = vrot.slane %v1052, 7
        %v1108 = vrot.slane %v1053, 7
        %v1109 = vrot.slane %v1054, 7
        %v1110 = vrot.slane %v1055, 7
        %v1111 = vsel %vm761, %v1109, %v1110
        %v1112 = vsel %vm761, %v1108, %v1109
        %v1113 = vsel %vm761, %v1107, %v1108
        %v1114 = vsel %vm761, %v1110, %v1107
        %v1115 = vmul.f32 %v1114, %v690
        %v1116 = vmul.f32 %v1113, %v691
        %v1117 = vmul.f32 %v1112, %v692
        %v1118 = vmul.f32 %v1111, %v693
        %v1119 = vrot.slane %v1052, 1
        %v1120 = vrot.slane %v1053, 1
        %v1121 = vrot.slane %v1054, 1
        %v1122 = vrot.slane %v1055, 1
        %v1123 = vsel %vm774, %v1121, %v1122
        %v1124 = vsel %vm774, %v1120, %v1121
        %v1125 = vsel %vm774, %v1119, %v1120
        %v1126 = vsel %vm774, %v1122, %v1119
        %v1127 = vmul.f32 %v1125, %v702
        %v1128 = vmul.f32 %v1124, %v703
        %v1129 = vmul.f32 %v1123, %v704
        %v1130 = vmul.f32 %v1126, %v705
        %1131 = vmatprep.subr.mxu0 0.0
        %1132 = vmatpush1.msra.mxu0 %v1071
        %1133 = vmatprep.subr.mxu0 0.0
        %1134 = vmatpush1.msra.mxu0 %v1070
        %1135 = vmatprep.subr.mxu0 0.0
        %1136 = vmatpush1.msra.mxu0 %v1069
        %1137 = vmatprep.subr.mxu0 0.0
        %1138 = vmatpush1.msra.mxu0 %v1068
        %1139 = vmatprep.subr.mxu0 0.0
        %1140 = vmatpush1.msra.mxu0 %v1067
        %1141 = vmatprep.subr.mxu0 0.0
        %1142 = vmatpush1.msra.mxu0 %v1066
        %1143 = vmatprep.subr.mxu0 0.0
        %1144 = vmatpush1.msra.mxu0 %v1065
        %1145 = vmatprep.subr.mxu0 0.0
        %1146 = vmatpush1.msra.mxu0 %v1064
        %1147 = vmatprep.subr.mxu0 0.0
        %1148 = vmatpush1.msra.mxu0 %v1063
        %1149 = vmatprep.subr.mxu0 0.0
        %1150 = vmatpush1.msra.mxu0 %v1062
        %1151 = vmatprep.subr.mxu0 0.0
        %1152 = vmatpush1.msra.mxu0 %v1061
        %1153 = vmatprep.subr.mxu0 0.0
        %1154 = vmatpush1.msra.mxu0 %v1060
        %1155 = vmatprep.subr.mxu0 0.0
        %1156 = vmatpush1.msra.mxu0 %v1059
        %1157 = vmatprep.subr.mxu0 0.0
        %1158 = vmatpush1.msra.mxu0 %v1058
        %1159 = vmatprep.subr.mxu0 0.0
        %1160 = vmatpush1.msra.mxu0 %v1057
        %1161 = vmatprep.subr.mxu0 0.0
        %1162 = vmatpush1.msra.mxu0 %v1056
        %1163 = vmatprep.subr.mxu0 0.0
        %1164 = vmatpush2.msra.mxu0 0.0
        %1165 = vmatprep.subr.mxu0 0.0
        %1166 = vmatpush2.msra.mxu0 0.0
        %1167 = vmatprep.subr.mxu0 0.0
        %1168 = vmatpush2.msra.mxu0 0.0
        %1169 = vmatprep.subr.mxu0 0.0
        %1170 = vmatpush2.msra.mxu0 0.0
        %1171 = vmatprep.subr.mxu0 0.0
        %1172 = vmatpush2.msra.mxu0 0.0
        %1173 = vmatprep.subr.mxu0 0.0
        %1174 = vmatpush2.msra.mxu0 0.0
        %1175 = vmatprep.subr.mxu0 0.0
        %1176 = vmatpush2.msra.mxu0 0.0
        %1177 = vmatprep.subr.mxu0 0.0
        %1178 = vmatpush2.msra.mxu0 0.0
        %1179 = vmatprep.subr.mxu0 0.0
        %1180 = vmatpush2.msra.mxu0 0.0
        %1181 = vmatprep.subr.mxu0 0.0
        %1182 = vmatpush2.msra.mxu0 0.0
        %1183 = vmatprep.subr.mxu0 0.0
        %1184 = vmatpush2.msra.mxu0 0.0
        %1185 = vmatprep.subr.mxu0 0.0
        %1186 = vmatpush2.msra.mxu0 0.0
        %1187 = vmatprep.subr.mxu0 0.0
        %1188 = vmatpush2.msra.mxu0 0.0
        %1189 = vmatprep.subr.mxu0 0.0
        %1190 = vmatpush2.msra.mxu0 0.0
        %1191 = vmatprep.subr.mxu0 0.0
        %1192 = vmatpush2.msra.mxu0 0.0
        %1193 = vmatprep.subr.mxu0 0.0
        %1194 = vmatpush2.msra.mxu0 0.0
        %1195 = vmatprep.mubr.f32.mxu0 0.0
        %1196 = vmatmul.mubr.f32.gmra.mxu0 %v1115
        %v1197 = vpop.f32.mrf.mxu0
        %v1198 = vadd.f32 0.0, %v1197
        %v1199 = vpop.f32.mrf.mxu0
        %1200 = vmatprep.mubr.f32.mxu0 0.0
        %1201 = vmatmul.mubr.f32.gmra.mxu0 %v1116
        %v1202 = vpop.f32.mrf.mxu0
        %v1203 = vadd.f32 0.0, %v1202
        %v1204 = vpop.f32.mrf.mxu0
        %1205 = vmatprep.mubr.f32.mxu0 0.0
        %1206 = vmatmul.mubr.f32.gmra.mxu0 %v1117
        %v1207 = vpop.f32.mrf.mxu0
        %v1208 = vadd.f32 0.0, %v1207
        %v1209 = vpop.f32.mrf.mxu0
        %1210 = vmatprep.mubr.f32.mxu0 0.0
        %1211 = vmatmul.mubr.f32.gmra.mxu0 %v1118
        %v1212 = vpop.f32.mrf.mxu0
        %v1213 = vadd.f32 0.0, %v1212
        %v1214 = vpop.f32.mrf.mxu0
        %1215 = vdwg.mxu0
        %1216 = vmatprep.subr.mxu0 0.0
        %1217 = vmatpush1.msra.mxu0 %v1088
        %1218 = vmatprep.subr.mxu0 0.0
        %1219 = vmatpush1.msra.mxu0 %v1087
        %1220 = vmatprep.subr.mxu0 0.0
        %1221 = vmatpush1.msra.mxu0 %v1086
        %1222 = vmatprep.subr.mxu0 0.0
        %1223 = vmatpush1.msra.mxu0 %v1085
        %1224 = vmatprep.subr.mxu0 0.0
        %1225 = vmatpush1.msra.mxu0 %v1084
        %1226 = vmatprep.subr.mxu0 0.0
        %1227 = vmatpush1.msra.mxu0 %v1083
        %1228 = vmatprep.subr.mxu0 0.0
        %1229 = vmatpush1.msra.mxu0 %v1082
        %1230 = vmatprep.subr.mxu0 0.0
        %1231 = vmatpush1.msra.mxu0 %v1081
        %1232 = vmatprep.subr.mxu0 0.0
        %1233 = vmatpush1.msra.mxu0 %v1080
        %1234 = vmatprep.subr.mxu0 0.0
        %1235 = vmatpush1.msra.mxu0 %v1079
        %1236 = vmatprep.subr.mxu0 0.0
        %1237 = vmatpush1.msra.mxu0 %v1078
        %1238 = vmatprep.subr.mxu0 0.0
        %1239 = vmatpush1.msra.mxu0 %v1077
        %1240 = vmatprep.subr.mxu0 0.0
        %1241 = vmatpush1.msra.mxu0 %v1076
        %1242 = vmatprep.subr.mxu0 0.0
        %1243 = vmatpush1.msra.mxu0 %v1075
        %1244 = vmatprep.subr.mxu0 0.0
        %1245 = vmatpush1.msra.mxu0 %v1074
        %1246 = vmatprep.subr.mxu0 0.0
        %1247 = vmatpush1.msra.mxu0 %v1073
        %1248 = vmatprep.subr.mxu0 0.0
        %1249 = vmatpush2.msra.mxu0 0.0
        %1250 = vmatprep.subr.mxu0 0.0
        %1251 = vmatpush2.msra.mxu0 0.0
        %1252 = vmatprep.subr.mxu0 0.0
        %1253 = vmatpush2.msra.mxu0 0.0
        %1254 = vmatprep.subr.mxu0 0.0
        %1255 = vmatpush2.msra.mxu0 0.0
        %1256 = vmatprep.subr.mxu0 0.0
        %1257 = vmatpush2.msra.mxu0 0.0
        %1258 = vmatprep.subr.mxu0 0.0
        %1259 = vmatpush2.msra.mxu0 0.0
        %1260 = vmatprep.subr.mxu0 0.0
        %1261 = vmatpush2.msra.mxu0 0.0
        %1262 = vmatprep.subr.mxu0 0.0
        %1263 = vmatpush2.msra.mxu0 0.0
        %1264 = vmatprep.subr.mxu0 0.0
        %1265 = vmatpush2.msra.mxu0 0.0
        %1266 = vmatprep.subr.mxu0 0.0
        %1267 = vmatpush2.msra.mxu0 0.0
        %1268 = vmatprep.subr.mxu0 0.0
        %1269 = vmatpush2.msra.mxu0 0.0
        %1270 = vmatprep.subr.mxu0 0.0
        %1271 = vmatpush2.msra.mxu0 0.0
        %1272 = vmatprep.subr.mxu0 0.0
        %1273 = vmatpush2.msra.mxu0 0.0
        %1274 = vmatprep.subr.mxu0 0.0
        %1275 = vmatpush2.msra.mxu0 0.0
        %1276 = vmatprep.subr.mxu0 0.0
        %1277 = vmatpush2.msra.mxu0 0.0
        %1278 = vmatprep.subr.mxu0 0.0
        %1279 = vmatpush2.msra.mxu0 0.0
        %1280 = vmatprep.mubr.f32.mxu0 0.0
        %1281 = vmatmul.mubr.f32.gmra.mxu0 %v1052
        %v1282 = vpop.f32.mrf.mxu0
        %v1283 = vadd.f32 %v1198, %v1282
        %v1284 = vpop.f32.mrf.mxu0
        %1285 = vmatprep.mubr.f32.mxu0 0.0
        %1286 = vmatmul.mubr.f32.gmra.mxu0 %v1053
        %v1287 = vpop.f32.mrf.mxu0
        %v1288 = vadd.f32 %v1203, %v1287
        %v1289 = vpop.f32.mrf.mxu0
        %1290 = vmatprep.mubr.f32.mxu0 0.0
        %1291 = vmatmul.mubr.f32.gmra.mxu0 %v1054
        %v1292 = vpop.f32.mrf.mxu0
        %v1293 = vadd.f32 %v1208, %v1292
        %v1294 = vpop.f32.mrf.mxu0
        %1295 = vmatprep.mubr.f32.mxu0 0.0
        %1296 = vmatmul.mubr.f32.gmra.mxu0 %v1055
        %v1297 = vpop.f32.mrf.mxu0
        %v1298 = vadd.f32 %v1213, %v1297
        %v1299 = vpop.f32.mrf.mxu0
        %1300 = vdwg.mxu0
        %1301 = vmatprep.subr.mxu0 0.0
        %1302 = vmatpush1.msra.mxu0 %v1105
        %1303 = vmatprep.subr.mxu0 0.0
        %1304 = vmatpush1.msra.mxu0 %v1104
        %1305 = vmatprep.subr.mxu0 0.0
        %1306 = vmatpush1.msra.mxu0 %v1103
        %1307 = vmatprep.subr.mxu0 0.0
        %1308 = vmatpush1.msra.mxu0 %v1102
        %1309 = vmatprep.subr.mxu0 0.0
        %1310 = vmatpush1.msra.mxu0 %v1101
        %1311 = vmatprep.subr.mxu0 0.0
        %1312 = vmatpush1.msra.mxu0 %v1100
        %1313 = vmatprep.subr.mxu0 0.0
        %1314 = vmatpush1.msra.mxu0 %v1099
        %1315 = vmatprep.subr.mxu0 0.0
        %1316 = vmatpush1.msra.mxu0 %v1098
        %1317 = vmatprep.subr.mxu0 0.0
        %1318 = vmatpush1.msra.mxu0 %v1097
        %1319 = vmatprep.subr.mxu0 0.0
        %1320 = vmatpush1.msra.mxu0 %v1096
        %1321 = vmatprep.subr.mxu0 0.0
        %1322 = vmatpush1.msra.mxu0 %v1095
        %1323 = vmatprep.subr.mxu0 0.0
        %1324 = vmatpush1.msra.mxu0 %v1094
        %1325 = vmatprep.subr.mxu0 0.0
        %1326 = vmatpush1.msra.mxu0 %v1093
        %1327 = vmatprep.subr.mxu0 0.0
        %1328 = vmatpush1.msra.mxu0 %v1092
        %1329 = vmatprep.subr.mxu0 0.0
        %1330 = vmatpush1.msra.mxu0 %v1091
        %1331 = vmatprep.subr.mxu0 0.0
        %1332 = vmatpush1.msra.mxu0 %v1090
        %1333 = vmatprep.subr.mxu0 0.0
        %1334 = vmatpush2.msra.mxu0 0.0
        %1335 = vmatprep.subr.mxu0 0.0
        %1336 = vmatpush2.msra.mxu0 0.0
        %1337 = vmatprep.subr.mxu0 0.0
        %1338 = vmatpush2.msra.mxu0 0.0
        %1339 = vmatprep.subr.mxu0 0.0
        %1340 = vmatpush2.msra.mxu0 0.0
        %1341 = vmatprep.subr.mxu0 0.0
        %1342 = vmatpush2.msra.mxu0 0.0
        %1343 = vmatprep.subr.mxu0 0.0
        %1344 = vmatpush2.msra.mxu0 0.0
        %1345 = vmatprep.subr.mxu0 0.0
        %1346 = vmatpush2.msra.mxu0 0.0
        %1347 = vmatprep.subr.mxu0 0.0
        %1348 = vmatpush2.msra.mxu0 0.0
        %1349 = vmatprep.subr.mxu0 0.0
        %1350 = vmatpush2.msra.mxu0 0.0
        %1351 = vmatprep.subr.mxu0 0.0
        %1352 = vmatpush2.msra.mxu0 0.0
        %1353 = vmatprep.subr.mxu0 0.0
        %1354 = vmatpush2.msra.mxu0 0.0
        %1355 = vmatprep.subr.mxu0 0.0
        %1356 = vmatpush2.msra.mxu0 0.0
        %1357 = vmatprep.subr.mxu0 0.0
        %1358 = vmatpush2.msra.mxu0 0.0
        %1359 = vmatprep.subr.mxu0 0.0
        %1360 = vmatpush2.msra.mxu0 0.0
        %1361 = vmatprep.subr.mxu0 0.0
        %1362 = vmatpush2.msra.mxu0 0.0
        %1363 = vmatprep.subr.mxu0 0.0
        %1364 = vmatpush2.msra.mxu0 0.0
        %1365 = vmatprep.mubr.f32.mxu0 0.0
        %1366 = vmatmul.mubr.f32.gmra.mxu0 %v1127
        %v1367 = vpop.f32.mrf.mxu0
        %v1368 = vadd.f32 0.0, %v1367
        %v1369 = vpop.f32.mrf.mxu0
        %1370 = vmatprep.mubr.f32.mxu0 0.0
        %1371 = vmatmul.mubr.f32.gmra.mxu0 %v1128
        %v1372 = vpop.f32.mrf.mxu0
        %v1373 = vadd.f32 0.0, %v1372
        %v1374 = vpop.f32.mrf.mxu0
        %1375 = vmatprep.mubr.f32.mxu0 0.0
        %1376 = vmatmul.mubr.f32.gmra.mxu0 %v1129
        %v1377 = vpop.f32.mrf.mxu0
        %v1378 = vadd.f32 0.0, %v1377
        %v1379 = vpop.f32.mrf.mxu0
        %1380 = vmatprep.mubr.f32.mxu0 0.0
        %1381 = vmatmul.mubr.f32.gmra.mxu0 %v1130
        %v1382 = vpop.f32.mrf.mxu0
        %v1383 = vadd.f32 0.0, %v1382
        %v1384 = vpop.f32.mrf.mxu0
        %1385 = vdwg.mxu0
        %v1386 = vadd.f32 %v1283, %v1368
        %v1387 = vadd.f32 %v1288, %v1373
        %v1388 = vadd.f32 %v1293, %v1378
        %v1389 = vadd.f32 %v1298, %v1383
        %v1391 = vlaneseq
        %v1392 = vshrl.u32 %v1391, 7
        %v1393 = vsub.s32 0, %v1392
        %v1394 = vrot.slane %v1106, %v1393
        %v1396 = vadd.f32 %v1386, %v1394
        %v1397 = vadd.f32 %v1387, %v1394
        %v1398 = vadd.f32 %v1388, %v1394
        %v1399 = vadd.f32 %v1389, %v1394
        %v1400 = vmax.f32 %v1396, 0.0
        %v1401 = vmax.f32 %v1397, 0.0
        %v1402 = vmax.f32 %v1398, 0.0
        %v1403 = vmax.f32 %v1399, 0.0
        %v1404 = vld [vmem:[#allocation8] sm:$0xff]
        %v1405 = vld [vmem:[#allocation8 + $0x8] sm:$0xff]
        %v1406 = vld [vmem:[#allocation8 + $0x10] sm:$0xff]
        %v1407 = vld [vmem:[#allocation8 + $0x18] sm:$0xff]
        %v1408 = vld [vmem:[#allocation8 + $0x20] sm:$0xff]
        %v1409 = vld [vmem:[#allocation8 + $0x28] sm:$0xff]
        %v1410 = vld [vmem:[#allocation8 + $0x30] sm:$0xff]
        %v1411 = vld [vmem:[#allocation8 + $0x38] sm:$0xff]
        %v1412 = vld [vmem:[#allocation8 + $0x40] sm:$0xff]
        %v1413 = vld [vmem:[#allocation8 + $0x48] sm:$0xff]
        %v1414 = vld [vmem:[#allocation8 + $0x50] sm:$0xff]
        %v1415 = vld [vmem:[#allocation8 + $0x58] sm:$0xff]
        %v1416 = vld [vmem:[#allocation8 + $0x60] sm:$0xff]
        %v1417 = vld [vmem:[#allocation8 + $0x68] sm:$0xff]
        %v1418 = vld [vmem:[#allocation8 + $0x70] sm:$0xff]
        %v1419 = vld [vmem:[#allocation8 + $0x78] sm:$0xff]
        %s1420 = scalar_lea.vmem [#allocation8], 128
        %v1421 = vld [vmem:[%s1420] sm:$0xff]
        %v1422 = vld [vmem:[%s1420 + $0x8] sm:$0xff]
        %v1423 = vld [vmem:[%s1420 + $0x10] sm:$0xff]
        %v1424 = vld [vmem:[%s1420 + $0x18] sm:$0xff]
        %v1425 = vld [vmem:[%s1420 + $0x20] sm:$0xff]
        %v1426 = vld [vmem:[%s1420 + $0x28] sm:$0xff]
        %v1427 = vld [vmem:[%s1420 + $0x30] sm:$0xff]
        %v1428 = vld [vmem:[%s1420 + $0x38] sm:$0xff]
        %v1429 = vld [vmem:[%s1420 + $0x40] sm:$0xff]
        %v1430 = vld [vmem:[%s1420 + $0x48] sm:$0xff]
        %v1431 = vld [vmem:[%s1420 + $0x50] sm:$0xff]
        %v1432 = vld [vmem:[%s1420 + $0x58] sm:$0xff]
        %v1433 = vld [vmem:[%s1420 + $0x60] sm:$0xff]
        %v1434 = vld [vmem:[%s1420 + $0x68] sm:$0xff]
        %v1435 = vld [vmem:[%s1420 + $0x70] sm:$0xff]
        %v1436 = vld [vmem:[%s1420 + $0x78] sm:$0xff]
        %s1437 = scalar_lea.vmem [#allocation8], 256
        %v1438 = vld [vmem:[%s1437] sm:$0xff]
        %v1439 = vld [vmem:[%s1437 + $0x8] sm:$0xff]
        %v1440 = vld [vmem:[%s1437 + $0x10] sm:$0xff]
        %v1441 = vld [vmem:[%s1437 + $0x18] sm:$0xff]
        %v1442 = vld [vmem:[%s1437 + $0x20] sm:$0xff]
        %v1443 = vld [vmem:[%s1437 + $0x28] sm:$0xff]
        %v1444 = vld [vmem:[%s1437 + $0x30] sm:$0xff]
        %v1445 = vld [vmem:[%s1437 + $0x38] sm:$0xff]
        %v1446 = vld [vmem:[%s1437 + $0x40] sm:$0xff]
        %v1447 = vld [vmem:[%s1437 + $0x48] sm:$0xff]
        %v1448 = vld [vmem:[%s1437 + $0x50] sm:$0xff]
        %v1449 = vld [vmem:[%s1437 + $0x58] sm:$0xff]
        %v1450 = vld [vmem:[%s1437 + $0x60] sm:$0xff]
        %v1451 = vld [vmem:[%s1437 + $0x68] sm:$0xff]
        %v1452 = vld [vmem:[%s1437 + $0x70] sm:$0xff]
        %v1453 = vld [vmem:[%s1437 + $0x78] sm:$0xff]
        %v1454 = vld [vmem:[%s7] sm:$0x1]
        %v1455 = vrot.slane %v1400, 7
        %v1456 = vrot.slane %v1401, 7
        %v1457 = vrot.slane %v1402, 7
        %v1458 = vrot.slane %v1403, 7
        %v1459 = vsel %vm761, %v1457, %v1458
        %v1460 = vsel %vm761, %v1456, %v1457
        %v1461 = vsel %vm761, %v1455, %v1456
        %v1462 = vsel %vm761, %v1458, %v1455
        %v1463 = vmul.f32 %v1462, %v690
        %v1464 = vmul.f32 %v1461, %v691
        %v1465 = vmul.f32 %v1460, %v692
        %v1466 = vmul.f32 %v1459, %v693
        %v1467 = vrot.slane %v1400, 1
        %v1468 = vrot.slane %v1401, 1
        %v1469 = vrot.slane %v1402, 1
        %v1470 = vrot.slane %v1403, 1
        %v1471 = vsel %vm774, %v1469, %v1470
        %v1472 = vsel %vm774, %v1468, %v1469
        %v1473 = vsel %vm774, %v1467, %v1468
        %v1474 = vsel %vm774, %v1470, %v1467
        %v1475 = vmul.f32 %v1473, %v702
        %v1476 = vmul.f32 %v1472, %v703
        %v1477 = vmul.f32 %v1471, %v704
        %v1478 = vmul.f32 %v1474, %v705
        %1479 = vmatprep.subr.mxu0 0.0
        %1480 = vmatpush1.msra.mxu0 %v1419
        %1481 = vmatprep.subr.mxu0 0.0
        %1482 = vmatpush1.msra.mxu0 %v1418
        %1483 = vmatprep.subr.mxu0 0.0
        %1484 = vmatpush1.msra.mxu0 %v1417
        %1485 = vmatprep.subr.mxu0 0.0
        %1486 = vmatpush1.msra.mxu0 %v1416
        %1487 = vmatprep.subr.mxu0 0.0
        %1488 = vmatpush1.msra.mxu0 %v1415
        %1489 = vmatprep.subr.mxu0 0.0
        %1490 = vmatpush1.msra.mxu0 %v1414
        %1491 = vmatprep.subr.mxu0 0.0
        %1492 = vmatpush1.msra.mxu0 %v1413
        %1493 = vmatprep.subr.mxu0 0.0
        %1494 = vmatpush1.msra.mxu0 %v1412
        %1495 = vmatprep.subr.mxu0 0.0
        %1496 = vmatpush1.msra.mxu0 %v1411
        %1497 = vmatprep.subr.mxu0 0.0
        %1498 = vmatpush1.msra.mxu0 %v1410
        %1499 = vmatprep.subr.mxu0 0.0
        %1500 = vmatpush1.msra.mxu0 %v1409
        %1501 = vmatprep.subr.mxu0 0.0
        %1502 = vmatpush1.msra.mxu0 %v1408
        %1503 = vmatprep.subr.mxu0 0.0
        %1504 = vmatpush1.msra.mxu0 %v1407
        %1505 = vmatprep.subr.mxu0 0.0
        %1506 = vmatpush1.msra.mxu0 %v1406
        %1507 = vmatprep.subr.mxu0 0.0
        %1508 = vmatpush1.msra.mxu0 %v1405
        %1509 = vmatprep.subr.mxu0 0.0
        %1510 = vmatpush1.msra.mxu0 %v1404
        %1511 = vmatprep.subr.mxu0 0.0
        %1512 = vmatpush2.msra.mxu0 0.0
        %1513 = vmatprep.subr.mxu0 0.0
        %1514 = vmatpush2.msra.mxu0 0.0
        %1515 = vmatprep.subr.mxu0 0.0
        %1516 = vmatpush2.msra.mxu0 0.0
        %1517 = vmatprep.subr.mxu0 0.0
        %1518 = vmatpush2.msra.mxu0 0.0
        %1519 = vmatprep.subr.mxu0 0.0
        %1520 = vmatpush2.msra.mxu0 0.0
        %1521 = vmatprep.subr.mxu0 0.0
        %1522 = vmatpush2.msra.mxu0 0.0
        %1523 = vmatprep.subr.mxu0 0.0
        %1524 = vmatpush2.msra.mxu0 0.0
        %1525 = vmatprep.subr.mxu0 0.0
        %1526 = vmatpush2.msra.mxu0 0.0
        %1527 = vmatprep.subr.mxu0 0.0
        %1528 = vmatpush2.msra.mxu0 0.0
        %1529 = vmatprep.subr.mxu0 0.0
        %1530 = vmatpush2.msra.mxu0 0.0
        %1531 = vmatprep.subr.mxu0 0.0
        %1532 = vmatpush2.msra.mxu0 0.0
        %1533 = vmatprep.subr.mxu0 0.0
        %1534 = vmatpush2.msra.mxu0 0.0
        %1535 = vmatprep.subr.mxu0 0.0
        %1536 = vmatpush2.msra.mxu0 0.0
        %1537 = vmatprep.subr.mxu0 0.0
        %1538 = vmatpush2.msra.mxu0 0.0
        %1539 = vmatprep.subr.mxu0 0.0
        %1540 = vmatpush2.msra.mxu0 0.0
        %1541 = vmatprep.subr.mxu0 0.0
        %1542 = vmatpush2.msra.mxu0 0.0
        %1543 = vmatprep.mubr.f32.mxu0 0.0
        %1544 = vmatmul.mubr.f32.gmra.mxu0 %v1463
        %v1545 = vpop.f32.mrf.mxu0
        %v1546 = vadd.f32 0.0, %v1545
        %v1547 = vpop.f32.mrf.mxu0
        %1548 = vmatprep.mubr.f32.mxu0 0.0
        %1549 = vmatmul.mubr.f32.gmra.mxu0 %v1464
        %v1550 = vpop.f32.mrf.mxu0
        %v1551 = vadd.f32 0.0, %v1550
        %v1552 = vpop.f32.mrf.mxu0
        %1553 = vmatprep.mubr.f32.mxu0 0.0
        %1554 = vmatmul.mubr.f32.gmra.mxu0 %v1465
        %v1555 = vpop.f32.mrf.mxu0
        %v1556 = vadd.f32 0.0, %v1555
        %v1557 = vpop.f32.mrf.mxu0
        %1558 = vmatprep.mubr.f32.mxu0 0.0
        %1559 = vmatmul.mubr.f32.gmra.mxu0 %v1466
        %v1560 = vpop.f32.mrf.mxu0
        %v1561 = vadd.f32 0.0, %v1560
        %v1562 = vpop.f32.mrf.mxu0
        %1563 = vdwg.mxu0
        %1564 = vmatprep.subr.mxu0 0.0
        %1565 = vmatpush1.msra.mxu0 %v1436
        %1566 = vmatprep.subr.mxu0 0.0
        %1567 = vmatpush1.msra.mxu0 %v1435
        %1568 = vmatprep.subr.mxu0 0.0
        %1569 = vmatpush1.msra.mxu0 %v1434
        %1570 = vmatprep.subr.mxu0 0.0
        %1571 = vmatpush1.msra.mxu0 %v1433
        %1572 = vmatprep.subr.mxu0 0.0
        %1573 = vmatpush1.msra.mxu0 %v1432
        %1574 = vmatprep.subr.mxu0 0.0
        %1575 = vmatpush1.msra.mxu0 %v1431
        %1576 = vmatprep.subr.mxu0 0.0
        %1577 = vmatpush1.msra.mxu0 %v1430
        %1578 = vmatprep.subr.mxu0 0.0
        %1579 = vmatpush1.msra.mxu0 %v1429
        %1580 = vmatprep.subr.mxu0 0.0
        %1581 = vmatpush1.msra.mxu0 %v1428
        %1582 = vmatprep.subr.mxu0 0.0
        %1583 = vmatpush1.msra.mxu0 %v1427
        %1584 = vmatprep.subr.mxu0 0.0
        %1585 = vmatpush1.msra.mxu0 %v1426
        %1586 = vmatprep.subr.mxu0 0.0
        %1587 = vmatpush1.msra.mxu0 %v1425
        %1588 = vmatprep.subr.mxu0 0.0
        %1589 = vmatpush1.msra.mxu0 %v1424
        %1590 = vmatprep.subr.mxu0 0.0
        %1591 = vmatpush1.msra.mxu0 %v1423
        %1592 = vmatprep.subr.mxu0 0.0
        %1593 = vmatpush1.msra.mxu0 %v1422
        %1594 = vmatprep.subr.mxu0 0.0
        %1595 = vmatpush1.msra.mxu0 %v1421
        %1596 = vmatprep.subr.mxu0 0.0
        %1597 = vmatpush2.msra.mxu0 0.0
        %1598 = vmatprep.subr.mxu0 0.0
        %1599 = vmatpush2.msra.mxu0 0.0
        %1600 = vmatprep.subr.mxu0 0.0
        %1601 = vmatpush2.msra.mxu0 0.0
        %1602 = vmatprep.subr.mxu0 0.0
        %1603 = vmatpush2.msra.mxu0 0.0
        %1604 = vmatprep.subr.mxu0 0.0
        %1605 = vmatpush2.msra.mxu0 0.0
        %1606 = vmatprep.subr.mxu0 0.0
        %1607 = vmatpush2.msra.mxu0 0.0
        %1608 = vmatprep.subr.mxu0 0.0
        %1609 = vmatpush2.msra.mxu0 0.0
        %1610 = vmatprep.subr.mxu0 0.0
        %1611 = vmatpush2.msra.mxu0 0.0
        %1612 = vmatprep.subr.mxu0 0.0
        %1613 = vmatpush2.msra.mxu0 0.0
        %1614 = vmatprep.subr.mxu0 0.0
        %1615 = vmatpush2.msra.mxu0 0.0
        %1616 = vmatprep.subr.mxu0 0.0
        %1617 = vmatpush2.msra.mxu0 0.0
        %1618 = vmatprep.subr.mxu0 0.0
        %1619 = vmatpush2.msra.mxu0 0.0
        %1620 = vmatprep.subr.mxu0 0.0
        %1621 = vmatpush2.msra.mxu0 0.0
        %1622 = vmatprep.subr.mxu0 0.0
        %1623 = vmatpush2.msra.mxu0 0.0
        %1624 = vmatprep.subr.mxu0 0.0
        %1625 = vmatpush2.msra.mxu0 0.0
        %1626 = vmatprep.subr.mxu0 0.0
        %1627 = vmatpush2.msra.mxu0 0.0
        %1628 = vmatprep.mubr.f32.mxu0 0.0
        %1629 = vmatmul.mubr.f32.gmra.mxu0 %v1400
        %v1630 = vpop.f32.mrf.mxu0
        %v1631 = vadd.f32 %v1546, %v1630
        %v1632 = vpop.f32.mrf.mxu0
        %1633 = vmatprep.mubr.f32.mxu0 0.0
        %1634 = vmatmul.mubr.f32.gmra.mxu0 %v1401
        %v1635 = vpop.f32.mrf.mxu0
        %v1636 = vadd.f32 %v1551, %v1635
        %v1637 = vpop.f32.mrf.mxu0
        %1638 = vmatprep.mubr.f32.mxu0 0.0
        %1639 = vmatmul.mubr.f32.gmra.mxu0 %v1402
        %v1640 = vpop.f32.mrf.mxu0
        %v1641 = vadd.f32 %v1556, %v1640
        %v1642 = vpop.f32.mrf.mxu0
        %1643 = vmatprep.mubr.f32.mxu0 0.0
        %1644 = vmatmul.mubr.f32.gmra.mxu0 %v1403
        %v1645 = vpop.f32.mrf.mxu0
        %v1646 = vadd.f32 %v1561, %v1645
        %v1647 = vpop.f32.mrf.mxu0
        %1648 = vdwg.mxu0
        %1649 = vmatprep.subr.mxu0 0.0
        %1650 = vmatpush1.msra.mxu0 %v1453
        %1651 = vmatprep.subr.mxu0 0.0
        %1652 = vmatpush1.msra.mxu0 %v1452
        %1653 = vmatprep.subr.mxu0 0.0
        %1654 = vmatpush1.msra.mxu0 %v1451
        %1655 = vmatprep.subr.mxu0 0.0
        %1656 = vmatpush1.msra.mxu0 %v1450
        %1657 = vmatprep.subr.mxu0 0.0
        %1658 = vmatpush1.msra.mxu0 %v1449
        %1659 = vmatprep.subr.mxu0 0.0
        %1660 = vmatpush1.msra.mxu0 %v1448
        %1661 = vmatprep.subr.mxu0 0.0
        %1662 = vmatpush1.msra.mxu0 %v1447
        %1663 = vmatprep.subr.mxu0 0.0
        %1664 = vmatpush1.msra.mxu0 %v1446
        %1665 = vmatprep.subr.mxu0 0.0
        %1666 = vmatpush1.msra.mxu0 %v1445
        %1667 = vmatprep.subr.mxu0 0.0
        %1668 = vmatpush1.msra.mxu0 %v1444
        %1669 = vmatprep.subr.mxu0 0.0
        %1670 = vmatpush1.msra.mxu0 %v1443
        %1671 = vmatprep.subr.mxu0 0.0
        %1672 = vmatpush1.msra.mxu0 %v1442
        %1673 = vmatprep.subr.mxu0 0.0
        %1674 = vmatpush1.msra.mxu0 %v1441
        %1675 = vmatprep.subr.mxu0 0.0
        %1676 = vmatpush1.msra.mxu0 %v1440
        %1677 = vmatprep.subr.mxu0 0.0
        %1678 = vmatpush1.msra.mxu0 %v1439
        %1679 = vmatprep.subr.mxu0 0.0
        %1680 = vmatpush1.msra.mxu0 %v1438
        %1681 = vmatprep.subr.mxu0 0.0
        %1682 = vmatpush2.msra.mxu0 0.0
        %1683 = vmatprep.subr.mxu0 0.0
        %1684 = vmatpush2.msra.mxu0 0.0
        %1685 = vmatprep.subr.mxu0 0.0
        %1686 = vmatpush2.msra.mxu0 0.0
        %1687 = vmatprep.subr.mxu0 0.0
        %1688 = vmatpush2.msra.mxu0 0.0
        %1689 = vmatprep.subr.mxu0 0.0
        %1690 = vmatpush2.msra.mxu0 0.0
        %1691 = vmatprep.subr.mxu0 0.0
        %1692 = vmatpush2.msra.mxu0 0.0
        %1693 = vmatprep.subr.mxu0 0.0
        %1694 = vmatpush2.msra.mxu0 0.0
        %1695 = vmatprep.subr.mxu0 0.0
        %1696 = vmatpush2.msra.mxu0 0.0
        %1697 = vmatprep.subr.mxu0 0.0
        %1698 = vmatpush2.msra.mxu0 0.0
        %1699 = vmatprep.subr.mxu0 0.0
        %1700 = vmatpush2.msra.mxu0 0.0
        %1701 = vmatprep.subr.mxu0 0.0
        %1702 = vmatpush2.msra.mxu0 0.0
        %1703 = vmatprep.subr.mxu0 0.0
        %1704 = vmatpush2.msra.mxu0 0.0
        %1705 = vmatprep.subr.mxu0 0.0
        %1706 = vmatpush2.msra.mxu0 0.0
        %1707 = vmatprep.subr.mxu0 0.0
        %1708 = vmatpush2.msra.mxu0 0.0
        %1709 = vmatprep.subr.mxu0 0.0
        %1710 = vmatpush2.msra.mxu0 0.0
        %1711 = vmatprep.subr.mxu0 0.0
        %1712 = vmatpush2.msra.mxu0 0.0
        %1713 = vmatprep.mubr.f32.mxu0 0.0
        %1714 = vmatmul.mubr.f32.gmra.mxu0 %v1475
        %v1715 = vpop.f32.mrf.mxu0
        %v1716 = vadd.f32 0.0, %v1715
        %v1717 = vpop.f32.mrf.mxu0
        %1718 = vmatprep.mubr.f32.mxu0 0.0
        %1719 = vmatmul.mubr.f32.gmra.mxu0 %v1476
        %v1720 = vpop.f32.mrf.mxu0
        %v1721 = vadd.f32 0.0, %v1720
        %v1722 = vpop.f32.mrf.mxu0
        %1723 = vmatprep.mubr.f32.mxu0 0.0
        %1724 = vmatmul.mubr.f32.gmra.mxu0 %v1477
        %v1725 = vpop.f32.mrf.mxu0
        %v1726 = vadd.f32 0.0, %v1725
        %v1727 = vpop.f32.mrf.mxu0
        %1728 = vmatprep.mubr.f32.mxu0 0.0
        %1729 = vmatmul.mubr.f32.gmra.mxu0 %v1478
        %v1730 = vpop.f32.mrf.mxu0
        %v1731 = vadd.f32 0.0, %v1730
        %v1732 = vpop.f32.mrf.mxu0
        %1733 = vdwg.mxu0
        %v1734 = vadd.f32 %v1631, %v1716
        %v1735 = vadd.f32 %v1636, %v1721
        %v1736 = vadd.f32 %v1641, %v1726
        %v1737 = vadd.f32 %v1646, %v1731
        %v1739 = vlaneseq
        %v1740 = vshrl.u32 %v1739, 7
        %v1741 = vsub.s32 0, %v1740
        %v1742 = vrot.slane %v1454, %v1741
        %v1744 = vadd.f32 %v1734, %v1742
        %v1745 = vadd.f32 %v1735, %v1742
        %v1746 = vadd.f32 %v1736, %v1742
        %v1747 = vadd.f32 %v1737, %v1742
        %v1748 = vadd.f32 %v1052, %v1744
        %v1749 = vadd.f32 %v1053, %v1745
        %v1750 = vadd.f32 %v1054, %v1746
        %v1751 = vadd.f32 %v1055, %v1747
        %v1752 = vmax.f32 %v1748, 0.0
        %v1753 = vmax.f32 %v1749, 0.0
        %v1754 = vmax.f32 %v1750, 0.0
        %v1755 = vmax.f32 %v1751, 0.0
        %s1756 = scalar_lea.vmem [#allocation7], 384
        %v1757 = vld [vmem:[%s1756] sm:$0xff]
        %v1758 = vld [vmem:[%s1756 + $0x8] sm:$0xff]
        %v1759 = vld [vmem:[%s1756 + $0x10] sm:$0xff]
        %v1760 = vld [vmem:[%s1756 + $0x18] sm:$0xff]
        %v1761 = vld [vmem:[%s1756 + $0x20] sm:$0xff]
        %v1762 = vld [vmem:[%s1756 + $0x28] sm:$0xff]
        %v1763 = vld [vmem:[%s1756 + $0x30] sm:$0xff]
        %v1764 = vld [vmem:[%s1756 + $0x38] sm:$0xff]
        %v1765 = vld [vmem:[%s1756 + $0x40] sm:$0xff]
        %v1766 = vld [vmem:[%s1756 + $0x48] sm:$0xff]
        %v1767 = vld [vmem:[%s1756 + $0x50] sm:$0xff]
        %v1768 = vld [vmem:[%s1756 + $0x58] sm:$0xff]
        %v1769 = vld [vmem:[%s1756 + $0x60] sm:$0xff]
        %v1770 = vld [vmem:[%s1756 + $0x68] sm:$0xff]
        %v1771 = vld [vmem:[%s1756 + $0x70] sm:$0xff]
        %v1772 = vld [vmem:[%s1756 + $0x78] sm:$0xff]
        %s1773 = scalar_lea.vmem [#allocation7], 512
        %v1774 = vld [vmem:[%s1773] sm:$0xff]
        %v1775 = vld [vmem:[%s1773 + $0x8] sm:$0xff]
        %v1776 = vld [vmem:[%s1773 + $0x10] sm:$0xff]
        %v1777 = vld [vmem:[%s1773 + $0x18] sm:$0xff]
        %v1778 = vld [vmem:[%s1773 + $0x20] sm:$0xff]
        %v1779 = vld [vmem:[%s1773 + $0x28] sm:$0xff]
        %v1780 = vld [vmem:[%s1773 + $0x30] sm:$0xff]
        %v1781 = vld [vmem:[%s1773 + $0x38] sm:$0xff]
        %v1782 = vld [vmem:[%s1773 + $0x40] sm:$0xff]
        %v1783 = vld [vmem:[%s1773 + $0x48] sm:$0xff]
        %v1784 = vld [vmem:[%s1773 + $0x50] sm:$0xff]
        %v1785 = vld [vmem:[%s1773 + $0x58] sm:$0xff]
        %v1786 = vld [vmem:[%s1773 + $0x60] sm:$0xff]
        %v1787 = vld [vmem:[%s1773 + $0x68] sm:$0xff]
        %v1788 = vld [vmem:[%s1773 + $0x70] sm:$0xff]
        %v1789 = vld [vmem:[%s1773 + $0x78] sm:$0xff]
        %s1790 = scalar_lea.vmem [#allocation7], 640
        %v1791 = vld [vmem:[%s1790] sm:$0xff]
        %v1792 = vld [vmem:[%s1790 + $0x8] sm:$0xff]
        %v1793 = vld [vmem:[%s1790 + $0x10] sm:$0xff]
        %v1794 = vld [vmem:[%s1790 + $0x18] sm:$0xff]
        %v1795 = vld [vmem:[%s1790 + $0x20] sm:$0xff]
        %v1796 = vld [vmem:[%s1790 + $0x28] sm:$0xff]
        %v1797 = vld [vmem:[%s1790 + $0x30] sm:$0xff]
        %v1798 = vld [vmem:[%s1790 + $0x38] sm:$0xff]
        %v1799 = vld [vmem:[%s1790 + $0x40] sm:$0xff]
        %v1800 = vld [vmem:[%s1790 + $0x48] sm:$0xff]
        %v1801 = vld [vmem:[%s1790 + $0x50] sm:$0xff]
        %v1802 = vld [vmem:[%s1790 + $0x58] sm:$0xff]
        %v1803 = vld [vmem:[%s1790 + $0x60] sm:$0xff]
        %v1804 = vld [vmem:[%s1790 + $0x68] sm:$0xff]
        %v1805 = vld [vmem:[%s1790 + $0x70] sm:$0xff]
        %v1806 = vld [vmem:[%s1790 + $0x78] sm:$0xff]
        %s1807 = scalar_lea.vmem %s5, 1
        %v1808 = vld [vmem:[%s1807] sm:$0x1]
        %v1809 = vrot.slane %v1752, 7
        %v1810 = vrot.slane %v1753, 7
        %v1811 = vrot.slane %v1754, 7
        %v1812 = vrot.slane %v1755, 7
        %v1813 = vsel %vm761, %v1811, %v1812
        %v1814 = vsel %vm761, %v1810, %v1811
        %v1815 = vsel %vm761, %v1809, %v1810
        %v1816 = vsel %vm761, %v1812, %v1809
        %v1817 = vmul.f32 %v1816, %v690
        %v1818 = vmul.f32 %v1815, %v691
        %v1819 = vmul.f32 %v1814, %v692
        %v1820 = vmul.f32 %v1813, %v693
        %v1821 = vrot.slane %v1752, 1
        %v1822 = vrot.slane %v1753, 1
        %v1823 = vrot.slane %v1754, 1
        %v1824 = vrot.slane %v1755, 1
        %v1825 = vsel %vm774, %v1823, %v1824
        %v1826 = vsel %vm774, %v1822, %v1823
        %v1827 = vsel %vm774, %v1821, %v1822
        %v1828 = vsel %vm774, %v1824, %v1821
        %v1829 = vmul.f32 %v1827, %v702
        %v1830 = vmul.f32 %v1826, %v703
        %v1831 = vmul.f32 %v1825, %v704
        %v1832 = vmul.f32 %v1828, %v705
        %1833 = vmatprep.subr.mxu0 0.0
        %1834 = vmatpush1.msra.mxu0 %v1772
        %1835 = vmatprep.subr.mxu0 0.0
        %1836 = vmatpush1.msra.mxu0 %v1771
        %1837 = vmatprep.subr.mxu0 0.0
        %1838 = vmatpush1.msra.mxu0 %v1770
        %1839 = vmatprep.subr.mxu0 0.0
        %1840 = vmatpush1.msra.mxu0 %v1769
        %1841 = vmatprep.subr.mxu0 0.0
        %1842 = vmatpush1.msra.mxu0 %v1768
        %1843 = vmatprep.subr.mxu0 0.0
        %1844 = vmatpush1.msra.mxu0 %v1767
        %1845 = vmatprep.subr.mxu0 0.0
        %1846 = vmatpush1.msra.mxu0 %v1766
        %1847 = vmatprep.subr.mxu0 0.0
        %1848 = vmatpush1.msra.mxu0 %v1765
        %1849 = vmatprep.subr.mxu0 0.0
        %1850 = vmatpush1.msra.mxu0 %v1764
        %1851 = vmatprep.subr.mxu0 0.0
        %1852 = vmatpush1.msra.mxu0 %v1763
        %1853 = vmatprep.subr.mxu0 0.0
        %1854 = vmatpush1.msra.mxu0 %v1762
        %1855 = vmatprep.subr.mxu0 0.0
        %1856 = vmatpush1.msra.mxu0 %v1761
        %1857 = vmatprep.subr.mxu0 0.0
        %1858 = vmatpush1.msra.mxu0 %v1760
        %1859 = vmatprep.subr.mxu0 0.0
        %1860 = vmatpush1.msra.mxu0 %v1759
        %1861 = vmatprep.subr.mxu0 0.0
        %1862 = vmatpush1.msra.mxu0 %v1758
        %1863 = vmatprep.subr.mxu0 0.0
        %1864 = vmatpush1.msra.mxu0 %v1757
        %1865 = vmatprep.subr.mxu0 0.0
        %1866 = vmatpush2.msra.mxu0 0.0
        %1867 = vmatprep.subr.mxu0 0.0
        %1868 = vmatpush2.msra.mxu0 0.0
        %1869 = vmatprep.subr.mxu0 0.0
        %1870 = vmatpush2.msra.mxu0 0.0
        %1871 = vmatprep.subr.mxu0 0.0
        %1872 = vmatpush2.msra.mxu0 0.0
        %1873 = vmatprep.subr.mxu0 0.0
        %1874 = vmatpush2.msra.mxu0 0.0
        %1875 = vmatprep.subr.mxu0 0.0
        %1876 = vmatpush2.msra.mxu0 0.0
        %1877 = vmatprep.subr.mxu0 0.0
        %1878 = vmatpush2.msra.mxu0 0.0
        %1879 = vmatprep.subr.mxu0 0.0
        %1880 = vmatpush2.msra.mxu0 0.0
        %1881 = vmatprep.subr.mxu0 0.0
        %1882 = vmatpush2.msra.mxu0 0.0
        %1883 = vmatprep.subr.mxu0 0.0
        %1884 = vmatpush2.msra.mxu0 0.0
        %1885 = vmatprep.subr.mxu0 0.0
        %1886 = vmatpush2.msra.mxu0 0.0
        %1887 = vmatprep.subr.mxu0 0.0
        %1888 = vmatpush2.msra.mxu0 0.0
        %1889 = vmatprep.subr.mxu0 0.0
        %1890 = vmatpush2.msra.mxu0 0.0
        %1891 = vmatprep.subr.mxu0 0.0
        %1892 = vmatpush2.msra.mxu0 0.0
        %1893 = vmatprep.subr.mxu0 0.0
        %1894 = vmatpush2.msra.mxu0 0.0
        %1895 = vmatprep.subr.mxu0 0.0
        %1896 = vmatpush2.msra.mxu0 0.0
        %1897 = vmatprep.mubr.f32.mxu0 0.0
        %1898 = vmatmul.mubr.f32.gmra.mxu0 %v1817
        %v1899 = vpop.f32.mrf.mxu0
        %v1900 = vadd.f32 0.0, %v1899
        %v1901 = vpop.f32.mrf.mxu0
        %1902 = vmatprep.mubr.f32.mxu0 0.0
        %1903 = vmatmul.mubr.f32.gmra.mxu0 %v1818
        %v1904 = vpop.f32.mrf.mxu0
        %v1905 = vadd.f32 0.0, %v1904
        %v1906 = vpop.f32.mrf.mxu0
        %1907 = vmatprep.mubr.f32.mxu0 0.0
        %1908 = vmatmul.mubr.f32.gmra.mxu0 %v1819
        %v1909 = vpop.f32.mrf.mxu0
        %v1910 = vadd.f32 0.0, %v1909
        %v1911 = vpop.f32.mrf.mxu0
        %1912 = vmatprep.mubr.f32.mxu0 0.0
        %1913 = vmatmul.mubr.f32.gmra.mxu0 %v1820
        %v1914 = vpop.f32.mrf.mxu0
        %v1915 = vadd.f32 0.0, %v1914
        %v1916 = vpop.f32.mrf.mxu0
        %1917 = vdwg.mxu0
        %1918 = vmatprep.subr.mxu0 0.0
        %1919 = vmatpush1.msra.mxu0 %v1789
        %1920 = vmatprep.subr.mxu0 0.0
        %1921 = vmatpush1.msra.mxu0 %v1788
        %1922 = vmatprep.subr.mxu0 0.0
        %1923 = vmatpush1.msra.mxu0 %v1787
        %1924 = vmatprep.subr.mxu0 0.0
        %1925 = vmatpush1.msra.mxu0 %v1786
        %1926 = vmatprep.subr.mxu0 0.0
        %1927 = vmatpush1.msra.mxu0 %v1785
        %1928 = vmatprep.subr.mxu0 0.0
        %1929 = vmatpush1.msra.mxu0 %v1784
        %1930 = vmatprep.subr.mxu0 0.0
        %1931 = vmatpush1.msra.mxu0 %v1783
        %1932 = vmatprep.subr.mxu0 0.0
        %1933 = vmatpush1.msra.mxu0 %v1782
        %1934 = vmatprep.subr.mxu0 0.0
        %1935 = vmatpush1.msra.mxu0 %v1781
        %1936 = vmatprep.subr.mxu0 0.0
        %1937 = vmatpush1.msra.mxu0 %v1780
        %1938 = vmatprep.subr.mxu0 0.0
        %1939 = vmatpush1.msra.mxu0 %v1779
        %1940 = vmatprep.subr.mxu0 0.0
        %1941 = vmatpush1.msra.mxu0 %v1778
        %1942 = vmatprep.subr.mxu0 0.0
        %1943 = vmatpush1.msra.mxu0 %v1777
        %1944 = vmatprep.subr.mxu0 0.0
        %1945 = vmatpush1.msra.mxu0 %v1776
        %1946 = vmatprep.subr.mxu0 0.0
        %1947 = vmatpush1.msra.mxu0 %v1775
        %1948 = vmatprep.subr.mxu0 0.0
        %1949 = vmatpush1.msra.mxu0 %v1774
        %1950 = vmatprep.subr.mxu0 0.0
        %1951 = vmatpush2.msra.mxu0 0.0
        %1952 = vmatprep.subr.mxu0 0.0
        %1953 = vmatpush2.msra.mxu0 0.0
        %1954 = vmatprep.subr.mxu0 0.0
        %1955 = vmatpush2.msra.mxu0 0.0
        %1956 = vmatprep.subr.mxu0 0.0
        %1957 = vmatpush2.msra.mxu0 0.0
        %1958 = vmatprep.subr.mxu0 0.0
        %1959 = vmatpush2.msra.mxu0 0.0
        %1960 = vmatprep.subr.mxu0 0.0
        %1961 = vmatpush2.msra.mxu0 0.0
        %1962 = vmatprep.subr.mxu0 0.0
        %1963 = vmatpush2.msra.mxu0 0.0
        %1964 = vmatprep.subr.mxu0 0.0
        %1965 = vmatpush2.msra.mxu0 0.0
        %1966 = vmatprep.subr.mxu0 0.0
        %1967 = vmatpush2.msra.mxu0 0.0
        %1968 = vmatprep.subr.mxu0 0.0
        %1969 = vmatpush2.msra.mxu0 0.0
        %1970 = vmatprep.subr.mxu0 0.0
        %1971 = vmatpush2.msra.mxu0 0.0
        %1972 = vmatprep.subr.mxu0 0.0
        %1973 = vmatpush2.msra.mxu0 0.0
        %1974 = vmatprep.subr.mxu0 0.0
        %1975 = vmatpush2.msra.mxu0 0.0
        %1976 = vmatprep.subr.mxu0 0.0
        %1977 = vmatpush2.msra.mxu0 0.0
        %1978 = vmatprep.subr.mxu0 0.0
        %1979 = vmatpush2.msra.mxu0 0.0
        %1980 = vmatprep.subr.mxu0 0.0
        %1981 = vmatpush2.msra.mxu0 0.0
        %1982 = vmatprep.mubr.f32.mxu0 0.0
        %1983 = vmatmul.mubr.f32.gmra.mxu0 %v1752
        %v1984 = vpop.f32.mrf.mxu0
        %v1985 = vadd.f32 %v1900, %v1984
        %v1986 = vpop.f32.mrf.mxu0
        %1987 = vmatprep.mubr.f32.mxu0 0.0
        %1988 = vmatmul.mubr.f32.gmra.mxu0 %v1753
        %v1989 = vpop.f32.mrf.mxu0
        %v1990 = vadd.f32 %v1905, %v1989
        %v1991 = vpop.f32.mrf.mxu0
        %1992 = vmatprep.mubr.f32.mxu0 0.0
        %1993 = vmatmul.mubr.f32.gmra.mxu0 %v1754
        %v1994 = vpop.f32.mrf.mxu0
        %v1995 = vadd.f32 %v1910, %v1994
        %v1996 = vpop.f32.mrf.mxu0
        %1997 = vmatprep.mubr.f32.mxu0 0.0
        %1998 = vmatmul.mubr.f32.gmra.mxu0 %v1755
        %v1999 = vpop.f32.mrf.mxu0
        %v2000 = vadd.f32 %v1915, %v1999
        %v2001 = vpop.f32.mrf.mxu0
        %2002 = vdwg.mxu0
        %2003 = vmatprep.subr.mxu0 0.0
        %2004 = vmatpush1.msra.mxu0 %v1806
        %2005 = vmatprep.subr.mxu0 0.0
        %2006 = vmatpush1.msra.mxu0 %v1805
        %2007 = vmatprep.subr.mxu0 0.0
        %2008 = vmatpush1.msra.mxu0 %v1804
        %2009 = vmatprep.subr.mxu0 0.0
        %2010 = vmatpush1.msra.mxu0 %v1803
        %2011 = vmatprep.subr.mxu0 0.0
        %2012 = vmatpush1.msra.mxu0 %v1802
        %2013 = vmatprep.subr.mxu0 0.0
        %2014 = vmatpush1.msra.mxu0 %v1801
        %2015 = vmatprep.subr.mxu0 0.0
        %2016 = vmatpush1.msra.mxu0 %v1800
        %2017 = vmatprep.subr.mxu0 0.0
        %2018 = vmatpush1.msra.mxu0 %v1799
        %2019 = vmatprep.subr.mxu0 0.0
        %2020 = vmatpush1.msra.mxu0 %v1798
        %2021 = vmatprep.subr.mxu0 0.0
        %2022 = vmatpush1.msra.mxu0 %v1797
        %2023 = vmatprep.subr.mxu0 0.0
        %2024 = vmatpush1.msra.mxu0 %v1796
        %2025 = vmatprep.subr.mxu0 0.0
        %2026 = vmatpush1.msra.mxu0 %v1795
        %2027 = vmatprep.subr.mxu0 0.0
        %2028 = vmatpush1.msra.mxu0 %v1794
        %2029 = vmatprep.subr.mxu0 0.0
        %2030 = vmatpush1.msra.mxu0 %v1793
        %2031 = vmatprep.subr.mxu0 0.0
        %2032 = vmatpush1.msra.mxu0 %v1792
        %2033 = vmatprep.subr.mxu0 0.0
        %2034 = vmatpush1.msra.mxu0 %v1791
        %2035 = vmatprep.subr.mxu0 0.0
        %2036 = vmatpush2.msra.mxu0 0.0
        %2037 = vmatprep.subr.mxu0 0.0
        %2038 = vmatpush2.msra.mxu0 0.0
        %2039 = vmatprep.subr.mxu0 0.0
        %2040 = vmatpush2.msra.mxu0 0.0
        %2041 = vmatprep.subr.mxu0 0.0
        %2042 = vmatpush2.msra.mxu0 0.0
        %2043 = vmatprep.subr.mxu0 0.0
        %2044 = vmatpush2.msra.mxu0 0.0
        %2045 = vmatprep.subr.mxu0 0.0
        %2046 = vmatpush2.msra.mxu0 0.0
        %2047 = vmatprep.subr.mxu0 0.0
        %2048 = vmatpush2.msra.mxu0 0.0
        %2049 = vmatprep.subr.mxu0 0.0
        %2050 = vmatpush2.msra.mxu0 0.0
        %2051 = vmatprep.subr.mxu0 0.0
        %2052 = vmatpush2.msra.mxu0 0.0
        %2053 = vmatprep.subr.mxu0 0.0
        %2054 = vmatpush2.msra.mxu0 0.0
        %2055 = vmatprep.subr.mxu0 0.0
        %2056 = vmatpush2.msra.mxu0 0.0
        %2057 = vmatprep.subr.mxu0 0.0
        %2058 = vmatpush2.msra.mxu0 0.0
        %2059 = vmatprep.subr.mxu0 0.0
        %2060 = vmatpush2.msra.mxu0 0.0
        %2061 = vmatprep.subr.mxu0 0.0
        %2062 = vmatpush2.msra.mxu0 0.0
        %2063 = vmatprep.subr.mxu0 0.0
        %2064 = vmatpush2.msra.mxu0 0.0
        %2065 = vmatprep.subr.mxu0 0.0
        %2066 = vmatpush2.msra.mxu0 0.0
        %2067 = vmatprep.mubr.f32.mxu0 0.0
        %2068 = vmatmul.mubr.f32.gmra.mxu0 %v1829
        %v2069 = vpop.f32.mrf.mxu0
        %v2070 = vadd.f32 0.0, %v2069
        %v2071 = vpop.f32.mrf.mxu0
        %2072 = vmatprep.mubr.f32.mxu0 0.0
        %2073 = vmatmul.mubr.f32.gmra.mxu0 %v1830
        %v2074 = vpop.f32.mrf.mxu0
        %v2075 = vadd.f32 0.0, %v2074
        %v2076 = vpop.f32.mrf.mxu0
        %2077 = vmatprep.mubr.f32.mxu0 0.0
        %2078 = vmatmul.mubr.f32.gmra.mxu0 %v1831
        %v2079 = vpop.f32.mrf.mxu0
        %v2080 = vadd.f32 0.0, %v2079
        %v2081 = vpop.f32.mrf.mxu0
        %2082 = vmatprep.mubr.f32.mxu0 0.0
        %2083 = vmatmul.mubr.f32.gmra.mxu0 %v1832
        %v2084 = vpop.f32.mrf.mxu0
        %v2085 = vadd.f32 0.0, %v2084
        %v2086 = vpop.f32.mrf.mxu0
        %2087 = vdwg.mxu0
        %v2088 = vadd.f32 %v1985, %v2070
        %v2089 = vadd.f32 %v1990, %v2075
        %v2090 = vadd.f32 %v1995, %v2080
        %v2091 = vadd.f32 %v2000, %v2085
        %v2093 = vlaneseq
        %v2094 = vshrl.u32 %v2093, 7
        %v2095 = vsub.s32 0, %v2094
        %v2096 = vrot.slane %v1808, %v2095
        %v2098 = vadd.f32 %v2088, %v2096
        %v2099 = vadd.f32 %v2089, %v2096
        %v2100 = vadd.f32 %v2090, %v2096
        %v2101 = vadd.f32 %v2091, %v2096
        %v2102 = vmax.f32 %v2098, 0.0
        %v2103 = vmax.f32 %v2099, 0.0
        %v2104 = vmax.f32 %v2100, 0.0
        %v2105 = vmax.f32 %v2101, 0.0
        %s2106 = scalar_lea.vmem [#allocation8], 384
        %v2107 = vld [vmem:[%s2106] sm:$0xff]
        %v2108 = vld [vmem:[%s2106 + $0x8] sm:$0xff]
        %v2109 = vld [vmem:[%s2106 + $0x10] sm:$0xff]
        %v2110 = vld [vmem:[%s2106 + $0x18] sm:$0xff]
        %v2111 = vld [vmem:[%s2106 + $0x20] sm:$0xff]
        %v2112 = vld [vmem:[%s2106 + $0x28] sm:$0xff]
        %v2113 = vld [vmem:[%s2106 + $0x30] sm:$0xff]
        %v2114 = vld [vmem:[%s2106 + $0x38] sm:$0xff]
        %v2115 = vld [vmem:[%s2106 + $0x40] sm:$0xff]
        %v2116 = vld [vmem:[%s2106 + $0x48] sm:$0xff]
        %v2117 = vld [vmem:[%s2106 + $0x50] sm:$0xff]
        %v2118 = vld [vmem:[%s2106 + $0x58] sm:$0xff]
        %v2119 = vld [vmem:[%s2106 + $0x60] sm:$0xff]
        %v2120 = vld [vmem:[%s2106 + $0x68] sm:$0xff]
        %v2121 = vld [vmem:[%s2106 + $0x70] sm:$0xff]
        %v2122 = vld [vmem:[%s2106 + $0x78] sm:$0xff]
        %s2123 = scalar_lea.vmem [#allocation8], 512
        %v2124 = vld [vmem:[%s2123] sm:$0xff]
        %v2125 = vld [vmem:[%s2123 + $0x8] sm:$0xff]
        %v2126 = vld [vmem:[%s2123 + $0x10] sm:$0xff]
        %v2127 = vld [vmem:[%s2123 + $0x18] sm:$0xff]
        %v2128 = vld [vmem:[%s2123 + $0x20] sm:$0xff]
        %v2129 = vld [vmem:[%s2123 + $0x28] sm:$0xff]
        %v2130 = vld [vmem:[%s2123 + $0x30] sm:$0xff]
        %v2131 = vld [vmem:[%s2123 + $0x38] sm:$0xff]
        %v2132 = vld [vmem:[%s2123 + $0x40] sm:$0xff]
        %v2133 = vld [vmem:[%s2123 + $0x48] sm:$0xff]
        %v2134 = vld [vmem:[%s2123 + $0x50] sm:$0xff]
        %v2135 = vld [vmem:[%s2123 + $0x58] sm:$0xff]
        %v2136 = vld [vmem:[%s2123 + $0x60] sm:$0xff]
        %v2137 = vld [vmem:[%s2123 + $0x68] sm:$0xff]
        %v2138 = vld [vmem:[%s2123 + $0x70] sm:$0xff]
        %v2139 = vld [vmem:[%s2123 + $0x78] sm:$0xff]
        %s2140 = scalar_lea.vmem [#allocation8], 640
        %v2141 = vld [vmem:[%s2140] sm:$0xff]
        %v2142 = vld [vmem:[%s2140 + $0x8] sm:$0xff]
        %v2143 = vld [vmem:[%s2140 + $0x10] sm:$0xff]
        %v2144 = vld [vmem:[%s2140 + $0x18] sm:$0xff]
        %v2145 = vld [vmem:[%s2140 + $0x20] sm:$0xff]
        %v2146 = vld [vmem:[%s2140 + $0x28] sm:$0xff]
        %v2147 = vld [vmem:[%s2140 + $0x30] sm:$0xff]
        %v2148 = vld [vmem:[%s2140 + $0x38] sm:$0xff]
        %v2149 = vld [vmem:[%s2140 + $0x40] sm:$0xff]
        %v2150 = vld [vmem:[%s2140 + $0x48] sm:$0xff]
        %v2151 = vld [vmem:[%s2140 + $0x50] sm:$0xff]
        %v2152 = vld [vmem:[%s2140 + $0x58] sm:$0xff]
        %v2153 = vld [vmem:[%s2140 + $0x60] sm:$0xff]
        %v2154 = vld [vmem:[%s2140 + $0x68] sm:$0xff]
        %v2155 = vld [vmem:[%s2140 + $0x70] sm:$0xff]
        %v2156 = vld [vmem:[%s2140 + $0x78] sm:$0xff]
        %s2157 = scalar_lea.vmem %s7, 1
        %v2158 = vld [vmem:[%s2157] sm:$0x1]
        %v2159 = vrot.slane %v2102, 7
        %v2160 = vrot.slane %v2103, 7
        %v2161 = vrot.slane %v2104, 7
        %v2162 = vrot.slane %v2105, 7
        %v2163 = vsel %vm761, %v2161, %v2162
        %v2164 = vsel %vm761, %v2160, %v2161
        %v2165 = vsel %vm761, %v2159, %v2160
        %v2166 = vsel %vm761, %v2162, %v2159
        %v2167 = vmul.f32 %v2166, %v690
        %v2168 = vmul.f32 %v2165, %v691
        %v2169 = vmul.f32 %v2164, %v692
        %v2170 = vmul.f32 %v2163, %v693
        %v2171 = vrot.slane %v2102, 1
        %v2172 = vrot.slane %v2103, 1
        %v2173 = vrot.slane %v2104, 1
        %v2174 = vrot.slane %v2105, 1
        %v2175 = vsel %vm774, %v2173, %v2174
        %v2176 = vsel %vm774, %v2172, %v2173
        %v2177 = vsel %vm774, %v2171, %v2172
        %v2178 = vsel %vm774, %v2174, %v2171
        %v2179 = vmul.f32 %v2177, %v702
        %v2180 = vmul.f32 %v2176, %v703
        %v2181 = vmul.f32 %v2175, %v704
        %v2182 = vmul.f32 %v2178, %v705
        %2183 = vmatprep.subr.mxu0 0.0
        %2184 = vmatpush1.msra.mxu0 %v2122
        %2185 = vmatprep.subr.mxu0 0.0
        %2186 = vmatpush1.msra.mxu0 %v2121
        %2187 = vmatprep.subr.mxu0 0.0
        %2188 = vmatpush1.msra.mxu0 %v2120
        %2189 = vmatprep.subr.mxu0 0.0
        %2190 = vmatpush1.msra.mxu0 %v2119
        %2191 = vmatprep.subr.mxu0 0.0
        %2192 = vmatpush1.msra.mxu0 %v2118
        %2193 = vmatprep.subr.mxu0 0.0
        %2194 = vmatpush1.msra.mxu0 %v2117
        %2195 = vmatprep.subr.mxu0 0.0
        %2196 = vmatpush1.msra.mxu0 %v2116
        %2197 = vmatprep.subr.mxu0 0.0
        %2198 = vmatpush1.msra.mxu0 %v2115
        %2199 = vmatprep.subr.mxu0 0.0
        %2200 = vmatpush1.msra.mxu0 %v2114
        %2201 = vmatprep.subr.mxu0 0.0
        %2202 = vmatpush1.msra.mxu0 %v2113
        %2203 = vmatprep.subr.mxu0 0.0
        %2204 = vmatpush1.msra.mxu0 %v2112
        %2205 = vmatprep.subr.mxu0 0.0
        %2206 = vmatpush1.msra.mxu0 %v2111
        %2207 = vmatprep.subr.mxu0 0.0
        %2208 = vmatpush1.msra.mxu0 %v2110
        %2209 = vmatprep.subr.mxu0 0.0
        %2210 = vmatpush1.msra.mxu0 %v2109
        %2211 = vmatprep.subr.mxu0 0.0
        %2212 = vmatpush1.msra.mxu0 %v2108
        %2213 = vmatprep.subr.mxu0 0.0
        %2214 = vmatpush1.msra.mxu0 %v2107
        %2215 = vmatprep.subr.mxu0 0.0
        %2216 = vmatpush2.msra.mxu0 0.0
        %2217 = vmatprep.subr.mxu0 0.0
        %2218 = vmatpush2.msra.mxu0 0.0
        %2219 = vmatprep.subr.mxu0 0.0
        %2220 = vmatpush2.msra.mxu0 0.0
        %2221 = vmatprep.subr.mxu0 0.0
        %2222 = vmatpush2.msra.mxu0 0.0
        %2223 = vmatprep.subr.mxu0 0.0
        %2224 = vmatpush2.msra.mxu0 0.0
        %2225 = vmatprep.subr.mxu0 0.0
        %2226 = vmatpush2.msra.mxu0 0.0
        %2227 = vmatprep.subr.mxu0 0.0
        %2228 = vmatpush2.msra.mxu0 0.0
        %2229 = vmatprep.subr.mxu0 0.0
        %2230 = vmatpush2.msra.mxu0 0.0
        %2231 = vmatprep.subr.mxu0 0.0
        %2232 = vmatpush2.msra.mxu0 0.0
        %2233 = vmatprep.subr.mxu0 0.0
        %2234 = vmatpush2.msra.mxu0 0.0
        %2235 = vmatprep.subr.mxu0 0.0
        %2236 = vmatpush2.msra.mxu0 0.0
        %2237 = vmatprep.subr.mxu0 0.0
        %2238 = vmatpush2.msra.mxu0 0.0
        %2239 = vmatprep.subr.mxu0 0.0
        %2240 = vmatpush2.msra.mxu0 0.0
        %2241 = vmatprep.subr.mxu0 0.0
        %2242 = vmatpush2.msra.mxu0 0.0
        %2243 = vmatprep.subr.mxu0 0.0
        %2244 = vmatpush2.msra.mxu0 0.0
        %2245 = vmatprep.subr.mxu0 0.0
        %2246 = vmatpush2.msra.mxu0 0.0
        %2247 = vmatprep.mubr.f32.mxu0 0.0
        %2248 = vmatmul.mubr.f32.gmra.mxu0 %v2167
        %v2249 = vpop.f32.mrf.mxu0
        %v2250 = vadd.f32 0.0, %v2249
        %v2251 = vpop.f32.mrf.mxu0
        %2252 = vmatprep.mubr.f32.mxu0 0.0
        %2253 = vmatmul.mubr.f32.gmra.mxu0 %v2168
        %v2254 = vpop.f32.mrf.mxu0
        %v2255 = vadd.f32 0.0, %v2254
        %v2256 = vpop.f32.mrf.mxu0
        %2257 = vmatprep.mubr.f32.mxu0 0.0
        %2258 = vmatmul.mubr.f32.gmra.mxu0 %v2169
        %v2259 = vpop.f32.mrf.mxu0
        %v2260 = vadd.f32 0.0, %v2259
        %v2261 = vpop.f32.mrf.mxu0
        %2262 = vmatprep.mubr.f32.mxu0 0.0
        %2263 = vmatmul.mubr.f32.gmra.mxu0 %v2170
        %v2264 = vpop.f32.mrf.mxu0
        %v2265 = vadd.f32 0.0, %v2264
        %v2266 = vpop.f32.mrf.mxu0
        %2267 = vdwg.mxu0
        %2268 = vmatprep.subr.mxu0 0.0
        %2269 = vmatpush1.msra.mxu0 %v2139
        %2270 = vmatprep.subr.mxu0 0.0
        %2271 = vmatpush1.msra.mxu0 %v2138
        %2272 = vmatprep.subr.mxu0 0.0
        %2273 = vmatpush1.msra.mxu0 %v2137
        %2274 = vmatprep.subr.mxu0 0.0
        %2275 = vmatpush1.msra.mxu0 %v2136
        %2276 = vmatprep.subr.mxu0 0.0
        %2277 = vmatpush1.msra.mxu0 %v2135
        %2278 = vmatprep.subr.mxu0 0.0
        %2279 = vmatpush1.msra.mxu0 %v2134
        %2280 = vmatprep.subr.mxu0 0.0
        %2281 = vmatpush1.msra.mxu0 %v2133
        %2282 = vmatprep.subr.mxu0 0.0
        %2283 = vmatpush1.msra.mxu0 %v2132
        %2284 = vmatprep.subr.mxu0 0.0
        %2285 = vmatpush1.msra.mxu0 %v2131
        %2286 = vmatprep.subr.mxu0 0.0
        %2287 = vmatpush1.msra.mxu0 %v2130
        %2288 = vmatprep.subr.mxu0 0.0
        %2289 = vmatpush1.msra.mxu0 %v2129
        %2290 = vmatprep.subr.mxu0 0.0
        %2291 = vmatpush1.msra.mxu0 %v2128
        %2292 = vmatprep.subr.mxu0 0.0
        %2293 = vmatpush1.msra.mxu0 %v2127
        %2294 = vmatprep.subr.mxu0 0.0
        %2295 = vmatpush1.msra.mxu0 %v2126
        %2296 = vmatprep.subr.mxu0 0.0
        %2297 = vmatpush1.msra.mxu0 %v2125
        %2298 = vmatprep.subr.mxu0 0.0
        %2299 = vmatpush1.msra.mxu0 %v2124
        %2300 = vmatprep.subr.mxu0 0.0
        %2301 = vmatpush2.msra.mxu0 0.0
        %2302 = vmatprep.subr.mxu0 0.0
        %2303 = vmatpush2.msra.mxu0 0.0
        %2304 = vmatprep.subr.mxu0 0.0
        %2305 = vmatpush2.msra.mxu0 0.0
        %2306 = vmatprep.subr.mxu0 0.0
        %2307 = vmatpush2.msra.mxu0 0.0
        %2308 = vmatprep.subr.mxu0 0.0
        %2309 = vmatpush2.msra.mxu0 0.0
        %2310 = vmatprep.subr.mxu0 0.0
        %2311 = vmatpush2.msra.mxu0 0.0
        %2312 = vmatprep.subr.mxu0 0.0
        %2313 = vmatpush2.msra.mxu0 0.0
        %2314 = vmatprep.subr.mxu0 0.0
        %2315 = vmatpush2.msra.mxu0 0.0
        %2316 = vmatprep.subr.mxu0 0.0
        %2317 = vmatpush2.msra.mxu0 0.0
        %2318 = vmatprep.subr.mxu0 0.0
        %2319 = vmatpush2.msra.mxu0 0.0
        %2320 = vmatprep.subr.mxu0 0.0
        %2321 = vmatpush2.msra.mxu0 0.0
        %2322 = vmatprep.subr.mxu0 0.0
        %2323 = vmatpush2.msra.mxu0 0.0
        %2324 = vmatprep.subr.mxu0 0.0
        %2325 = vmatpush2.msra.mxu0 0.0
        %2326 = vmatprep.subr.mxu0 0.0
        %2327 = vmatpush2.msra.mxu0 0.0
        %2328 = vmatprep.subr.mxu0 0.0
        %2329 = vmatpush2.msra.mxu0 0.0
        %2330 = vmatprep.subr.mxu0 0.0
        %2331 = vmatpush2.msra.mxu0 0.0
        %2332 = vmatprep.mubr.f32.mxu0 0.0
        %2333 = vmatmul.mubr.f32.gmra.mxu0 %v2102
        %v2334 = vpop.f32.mrf.mxu0
        %v2335 = vadd.f32 %v2250, %v2334
        %v2336 = vpop.f32.mrf.mxu0
        %2337 = vmatprep.mubr.f32.mxu0 0.0
        %2338 = vmatmul.mubr.f32.gmra.mxu0 %v2103
        %v2339 = vpop.f32.mrf.mxu0
        %v2340 = vadd.f32 %v2255, %v2339
        %v2341 = vpop.f32.mrf.mxu0
        %2342 = vmatprep.mubr.f32.mxu0 0.0
        %2343 = vmatmul.mubr.f32.gmra.mxu0 %v2104
        %v2344 = vpop.f32.mrf.mxu0
        %v2345 = vadd.f32 %v2260, %v2344
        %v2346 = vpop.f32.mrf.mxu0
        %2347 = vmatprep.mubr.f32.mxu0 0.0
        %2348 = vmatmul.mubr.f32.gmra.mxu0 %v2105
        %v2349 = vpop.f32.mrf.mxu0
        %v2350 = vadd.f32 %v2265, %v2349
        %v2351 = vpop.f32.mrf.mxu0
        %2352 = vdwg.mxu0
        %2353 = vmatprep.subr.mxu0 0.0
        %2354 = vmatpush1.msra.mxu0 %v2156
        %2355 = vmatprep.subr.mxu0 0.0
        %2356 = vmatpush1.msra.mxu0 %v2155
        %2357 = vmatprep.subr.mxu0 0.0
        %2358 = vmatpush1.msra.mxu0 %v2154
        %2359 = vmatprep.subr.mxu0 0.0
        %2360 = vmatpush1.msra.mxu0 %v2153
        %2361 = vmatprep.subr.mxu0 0.0
        %2362 = vmatpush1.msra.mxu0 %v2152
        %2363 = vmatprep.subr.mxu0 0.0
        %2364 = vmatpush1.msra.mxu0 %v2151
        %2365 = vmatprep.subr.mxu0 0.0
        %2366 = vmatpush1.msra.mxu0 %v2150
        %2367 = vmatprep.subr.mxu0 0.0
        %2368 = vmatpush1.msra.mxu0 %v2149
        %2369 = vmatprep.subr.mxu0 0.0
        %2370 = vmatpush1.msra.mxu0 %v2148
        %2371 = vmatprep.subr.mxu0 0.0
        %2372 = vmatpush1.msra.mxu0 %v2147
        %2373 = vmatprep.subr.mxu0 0.0
        %2374 = vmatpush1.msra.mxu0 %v2146
        %2375 = vmatprep.subr.mxu0 0.0
        %2376 = vmatpush1.msra.mxu0 %v2145
        %2377 = vmatprep.subr.mxu0 0.0
        %2378 = vmatpush1.msra.mxu0 %v2144
        %2379 = vmatprep.subr.mxu0 0.0
        %2380 = vmatpush1.msra.mxu0 %v2143
        %2381 = vmatprep.subr.mxu0 0.0
        %2382 = vmatpush1.msra.mxu0 %v2142
        %2383 = vmatprep.subr.mxu0 0.0
        %2384 = vmatpush1.msra.mxu0 %v2141
        %2385 = vmatprep.subr.mxu0 0.0
        %2386 = vmatpush2.msra.mxu0 0.0
        %2387 = vmatprep.subr.mxu0 0.0
        %2388 = vmatpush2.msra.mxu0 0.0
        %2389 = vmatprep.subr.mxu0 0.0
        %2390 = vmatpush2.msra.mxu0 0.0
        %2391 = vmatprep.subr.mxu0 0.0
        %2392 = vmatpush2.msra.mxu0 0.0
        %2393 = vmatprep.subr.mxu0 0.0
        %2394 = vmatpush2.msra.mxu0 0.0
        %2395 = vmatprep.subr.mxu0 0.0
        %2396 = vmatpush2.msra.mxu0 0.0
        %2397 = vmatprep.subr.mxu0 0.0
        %2398 = vmatpush2.msra.mxu0 0.0
        %2399 = vmatprep.subr.mxu0 0.0
        %2400 = vmatpush2.msra.mxu0 0.0
        %2401 = vmatprep.subr.mxu0 0.0
        %2402 = vmatpush2.msra.mxu0 0.0
        %2403 = vmatprep.subr.mxu0 0.0
        %2404 = vmatpush2.msra.mxu0 0.0
        %2405 = vmatprep.subr.mxu0 0.0
        %2406 = vmatpush2.msra.mxu0 0.0
        %2407 = vmatprep.subr.mxu0 0.0
        %2408 = vmatpush2.msra.mxu0 0.0
        %2409 = vmatprep.subr.mxu0 0.0
        %2410 = vmatpush2.msra.mxu0 0.0
        %2411 = vmatprep.subr.mxu0 0.0
        %2412 = vmatpush2.msra.mxu0 0.0
        %2413 = vmatprep.subr.mxu0 0.0
        %2414 = vmatpush2.msra.mxu0 0.0
        %2415 = vmatprep.subr.mxu0 0.0
        %2416 = vmatpush2.msra.mxu0 0.0
        %2417 = vmatprep.mubr.f32.mxu0 0.0
        %2418 = vmatmul.mubr.f32.gmra.mxu0 %v2179
        %v2419 = vpop.f32.mrf.mxu0
        %v2420 = vadd.f32 0.0, %v2419
        %v2421 = vpop.f32.mrf.mxu0
        %2422 = vmatprep.mubr.f32.mxu0 0.0
        %2423 = vmatmul.mubr.f32.gmra.mxu0 %v2180
        %v2424 = vpop.f32.mrf.mxu0
        %v2425 = vadd.f32 0.0, %v2424
        %v2426 = vpop.f32.mrf.mxu0
        %2427 = vmatprep.mubr.f32.mxu0 0.0
        %2428 = vmatmul.mubr.f32.gmra.mxu0 %v2181
        %v2429 = vpop.f32.mrf.mxu0
        %v2430 = vadd.f32 0.0, %v2429
        %v2431 = vpop.f32.mrf.mxu0
        %2432 = vmatprep.mubr.f32.mxu0 0.0
        %2433 = vmatmul.mubr.f32.gmra.mxu0 %v2182
        %v2434 = vpop.f32.mrf.mxu0
        %v2435 = vadd.f32 0.0, %v2434
        %v2436 = vpop.f32.mrf.mxu0
        %2437 = vdwg.mxu0
        %v2438 = vadd.f32 %v2335, %v2420
        %v2439 = vadd.f32 %v2340, %v2425
        %v2440 = vadd.f32 %v2345, %v2430
        %v2441 = vadd.f32 %v2350, %v2435
        %v2443 = vlaneseq
        %v2444 = vshrl.u32 %v2443, 7
        %v2445 = vsub.s32 0, %v2444
        %v2446 = vrot.slane %v2158, %v2445
        %v2448 = vadd.f32 %v2438, %v2446
        %v2449 = vadd.f32 %v2439, %v2446
        %v2450 = vadd.f32 %v2440, %v2446
        %v2451 = vadd.f32 %v2441, %v2446
        %v2452 = vadd.f32 %v1752, %v2448
        %v2453 = vadd.f32 %v1753, %v2449
        %v2454 = vadd.f32 %v1754, %v2450
        %v2455 = vadd.f32 %v1755, %v2451
        %v2456 = vmax.f32 %v2452, 0.0
        %v2457 = vmax.f32 %v2453, 0.0
        %v2458 = vmax.f32 %v2454, 0.0
        %v2459 = vmax.f32 %v2455, 0.0
        %v2460 = vadd.f32 %v2456, %v2457
        %v2461 = vrot.slane %v2460, 4
        %v2462 = vadd.f32 %v2460, %v2461
        %v2463 = vrot.slane %v2462, 2
        %v2464 = vadd.f32 %v2462, %v2463
        %v2465 = vrot.slane %v2464, 1
        %v2466 = vadd.f32 %v2464, %v2465
        %v2467 = vadd.f32 %v2458, %v2459
        %v2468 = vrot.slane %v2467, 4
        %v2469 = vadd.f32 %v2467, %v2468
        %v2470 = vrot.slane %v2469, 2
        %v2471 = vadd.f32 %v2469, %v2470
        %v2472 = vrot.slane %v2471, 1
        %v2473 = vadd.f32 %v2471, %v2472
        %v2474 = vmul.f32 %v2466, 0.0625
        %v2475 = vmul.f32 %v2473, 0.0625
        %v2476 = vld [vmem:[#allocation10] sm:$0xff]
        %v2477 = vld [vmem:[#allocation10 + $0x8] sm:$0xff]
        %v2478 = vld [vmem:[#allocation10 + $0x10] sm:$0xff]
        %v2479 = vld [vmem:[#allocation10 + $0x18] sm:$0xff]
        %v2480 = vld [vmem:[#allocation10 + $0x20] sm:$0xff]
        %v2481 = vld [vmem:[#allocation10 + $0x28] sm:$0xff]
        %v2482 = vld [vmem:[#allocation10 + $0x30] sm:$0xff]
        %v2483 = vld [vmem:[#allocation10 + $0x38] sm:$0xff]
        %v2484 = vld [vmem:[#allocation10 + $0x40] sm:$0xff]
        %v2485 = vld [vmem:[#allocation10 + $0x48] sm:$0xff]
        %v2486 = vld [vmem:[#allocation10 + $0x50] sm:$0xff]
        %v2487 = vld [vmem:[#allocation10 + $0x58] sm:$0xff]
        %v2488 = vld [vmem:[#allocation10 + $0x60] sm:$0xff]
        %v2489 = vld [vmem:[#allocation10 + $0x68] sm:$0xff]
        %v2490 = vld [vmem:[#allocation10 + $0x70] sm:$0xff]
        %v2491 = vld [vmem:[#allocation10 + $0x78] sm:$0xff]
        %v2492 = vld [vmem:[%s9] sm:$0x1]
        %v2494 = vlaneseq
        %v2495 = vshrl.u32 %v2494, 7
        %v2496 = vsub.s32 0, %v2495
        %v2497 = vrot.slane %v2492, %v2496
        %vm2501 = vcmask 1041409
        %v2502 = vsel %vm2501, %v2475, %v2474
        %2504 = vmatprep.subr.mxu0 0.0
        %2505 = vmatpush1.msra.mxu0 %v2491
        %2506 = vmatprep.subr.mxu0 0.0
        %2507 = vmatpush1.msra.mxu0 %v2490
        %2508 = vmatprep.subr.mxu0 0.0
        %2509 = vmatpush1.msra.mxu0 %v2489
        %2510 = vmatprep.subr.mxu0 0.0
        %2511 = vmatpush1.msra.mxu0 %v2488
        %2512 = vmatprep.subr.mxu0 0.0
        %2513 = vmatpush1.msra.mxu0 %v2487
        %2514 = vmatprep.subr.mxu0 0.0
        %2515 = vmatpush1.msra.mxu0 %v2486
        %2516 = vmatprep.subr.mxu0 0.0
        %2517 = vmatpush1.msra.mxu0 %v2485
        %2518 = vmatprep.subr.mxu0 0.0
        %2519 = vmatpush1.msra.mxu0 %v2484
        %2520 = vmatprep.subr.mxu0 0.0
        %2521 = vmatpush1.msra.mxu0 %v2483
        %2522 = vmatprep.subr.mxu0 0.0
        %2523 = vmatpush1.msra.mxu0 %v2482
        %2524 = vmatprep.subr.mxu0 0.0
        %2525 = vmatpush1.msra.mxu0 %v2481
        %2526 = vmatprep.subr.mxu0 0.0
        %2527 = vmatpush1.msra.mxu0 %v2480
        %2528 = vmatprep.subr.mxu0 0.0
        %2529 = vmatpush1.msra.mxu0 %v2479
        %2530 = vmatprep.subr.mxu0 0.0
        %2531 = vmatpush1.msra.mxu0 %v2478
        %2532 = vmatprep.subr.mxu0 0.0
        %2533 = vmatpush1.msra.mxu0 %v2477
        %2534 = vmatprep.subr.mxu0 0.0
        %2535 = vmatpush1.msra.mxu0 %v2476
        %2536 = vmatprep.subr.mxu0 0.0
        %2537 = vmatpush2.msra.mxu0 0.0
        %2538 = vmatprep.subr.mxu0 0.0
        %2539 = vmatpush2.msra.mxu0 0.0
        %2540 = vmatprep.subr.mxu0 0.0
        %2541 = vmatpush2.msra.mxu0 0.0
        %2542 = vmatprep.subr.mxu0 0.0
        %2543 = vmatpush2.msra.mxu0 0.0
        %2544 = vmatprep.subr.mxu0 0.0
        %2545 = vmatpush2.msra.mxu0 0.0
        %2546 = vmatprep.subr.mxu0 0.0
        %2547 = vmatpush2.msra.mxu0 0.0
        %2548 = vmatprep.subr.mxu0 0.0
        %2549 = vmatpush2.msra.mxu0 0.0
        %2550 = vmatprep.subr.mxu0 0.0
        %2551 = vmatpush2.msra.mxu0 0.0
        %2552 = vmatprep.subr.mxu0 0.0
        %2553 = vmatpush2.msra.mxu0 0.0
        %2554 = vmatprep.subr.mxu0 0.0
        %2555 = vmatpush2.msra.mxu0 0.0
        %2556 = vmatprep.subr.mxu0 0.0
        %2557 = vmatpush2.msra.mxu0 0.0
        %2558 = vmatprep.subr.mxu0 0.0
        %2559 = vmatpush2.msra.mxu0 0.0
        %2560 = vmatprep.subr.mxu0 0.0
        %2561 = vmatpush2.msra.mxu0 0.0
        %2562 = vmatprep.subr.mxu0 0.0
        %2563 = vmatpush2.msra.mxu0 0.0
        %2564 = vmatprep.subr.mxu0 0.0
        %2565 = vmatpush2.msra.mxu0 0.0
        %2566 = vmatprep.subr.mxu0 0.0
        %2567 = vmatpush2.msra.mxu0 0.0
        %2568 = vmatprep.mubr.f32.mxu0 0.0
        %2569 = vmatmul.mubr.f32.gmra.mxu0 %v2502
        %v2570 = vpop.f32.mrf.mxu0
        %v2571 = vadd.f32 %v2497, %v2570
        %v2572 = vpop.f32.mrf.mxu0
        %2573 = vdwg.mxu0
        %2574 = vst [vmem:[%s456] sm:$0x3] %v2571
        %2575 = vst [vmem:[%s463] sm:$0x3] %v2502
        %s2576 = sand.u32 %s255, 1
        %s2577 = scalar_lea.sflag [#allocation4], %s2576
        %s2578 = sand.u32 %s255, 1
        %s2579 = smul.addr %s2578, 2
        %s2580 = scalar_lea.vmem [#allocation11], %s2579
        %s2581 = sand.u32 %s281, 1
        %s2582 = scalar_lea.sflag [#allocation13], %s2581
        %s2583 = sand.u32 %s281, 1
        %s2584 = smul.addr %s2583, 2
        %s2585 = scalar_lea.vmem [#allocation12], %s2584
        // Predicated region
        $region81: #{tpu_custom_call.1} parent=59 // pred_check
          %p2586 = pneg %p265
        $region82: #{tpu_custom_call.1} parent=59 // pred_check_branch
          %2588 = sbr.rel (%p2586) target = $region84
        $region83: #{tpu_custom_call.1} parent=59 // pred_region
          %s2590 = ssub.s32 32, 32
          %2591 = vsyncadd %s2577, %s2590
          %s2592 = smul.addr %s32, 32
          %s2593 = scalar_lea.hbm %s10, %s2592
          %s2595 = sshll.u32 %s2580, 4
          %s2596 = int_to_ptr.vmem [resolvable:$true] %s2595
          %2598 = dma.vmem_to_hbm [thread:$0]  %s2596, 32, %s2593, %s2577
        $region84: #{tpu_custom_call.1} parent=59 // pred_fallthru
          _
        // Predicated region
        $region85: #{tpu_custom_call.1} parent=59 // pred_check
          %p2599 = pneg %p291
        $region86: #{tpu_custom_call.1} parent=59 // pred_check_branch
          %2601 = sbr.rel (%p2599) target = $region88
        $region87: #{tpu_custom_call.1} parent=59 // pred_region
          %s2603 = ssub.s32 32, 32
          %2604 = vsyncadd %s2582, %s2603
          %s2605 = smul.addr %s32, 32
          %s2606 = scalar_lea.hbm %s11, %s2605
          %s2608 = sshll.u32 %s2585, 4
          %s2609 = int_to_ptr.vmem [resolvable:$true] %s2608
          %2611 = dma.vmem_to_hbm [thread:$0]  %s2609, 32, %s2606, %s2582
        $region88: #{tpu_custom_call.1} parent=59 // pred_fallthru
          _
      $region60: #{tpu_custom_call.1} parent=5 // pred_fallthru
        _
      %p2612 = scmp.le.s32.totalorder 2, %s27
      // Predicated region
      $region89: #{tpu_custom_call.1} parent=5 // pred_check
        %p2613 = pneg %p2612
      $region90: #{tpu_custom_call.1} parent=5 // pred_check_branch
        %2615 = sbr.rel (%p2613) target = $region92
      $region91: #{tpu_custom_call.1} parent=5 // pred_region
        %s2616 = ssub.s32 %s27, 2
        // Predicated region
        $region93: #{tpu_custom_call.1} parent=91 // pred_check
          %p2617 = pneg %p271
        $region94: #{tpu_custom_call.1} parent=91 // pred_check_branch
          %2619 = sbr.rel (%p2617) target = $region96
        $region95: #{tpu_custom_call.1} parent=91 // pred_region
          %s2620 = sand.u32 %s256, 1
          %s2621 = scalar_lea.sflag [#allocation4], %s2620
          %s2622 = sand.u32 %s256, 1
          %s2623 = smul.addr %s2622, 2
          %s2624 = scalar_lea.vmem [#allocation11], %s2623
          %2625 = dma.done %s2621, 32
        $region96: #{tpu_custom_call.1} parent=91 // pred_fallthru
          _
        // Predicated region
        $region97: #{tpu_custom_call.1} parent=91 // pred_check
          %p2626 = pneg %p297
        $region98: #{tpu_custom_call.1} parent=91 // pred_check_branch
          %2628 = sbr.rel (%p2626) target = $region100
        $region99: #{tpu_custom_call.1} parent=91 // pred_region
          %s2629 = sand.u32 %s282, 1
          %s2630 = scalar_lea.sflag [#allocation13], %s2629
          %s2631 = sand.u32 %s282, 1
          %s2632 = smul.addr %s2631, 2
          %s2633 = scalar_lea.vmem [#allocation12], %s2632
          %2634 = dma.done %s2630, 32
        $region100: #{tpu_custom_call.1} parent=91 // pred_fallthru
          _
      $region92: #{tpu_custom_call.1} parent=5 // pred_fallthru
        _
    $region6: #{tpu_custom_call.1} parent=1 // loop_footer
      %s31 = sadd.s32 1, %s27
    $region7: #{tpu_custom_call.1} parent=1 // loop_footer_branch
      %26 = sbr.rel target = $region3
    $region8: #{tpu_custom_call.1} parent=1 // loop_exit
      _
    %2635 = vsyncpa [#allocation3], 1
    %s2636 = scalar_lea.sflag [#allocation3], 1
    %2637 = vsyncpa %s2636, 1
    %2638 = vsyncpa [#allocation6], 1
    %2639 = vsyncpa [#allocation9], 1
    %2640 = vsyncpa [#allocation4], 1
    %s2641 = scalar_lea.sflag [#allocation4], 1
    %2642 = vsyncpa %s2641, 1
    %2643 = vsyncpa [#allocation13], 1
    %s2644 = scalar_lea.sflag [#allocation13], 1
    %2645 = vsyncpa %s2644, 1

</llo_original>
